<compile_context>
chip_gen: v7x
topology: tpu7x:2x2x1
jax: 0.10.0
libtpu: 0.0.40
codegen_flags: <defaults>
</compile_context>

<pallas_src>
import numpy as np

import jax
import jax.numpy as jnp
from jax.experimental import pallas as pl
from jax.experimental.pallas import tpu as pltpu

BN_EPS = 1e-5

# Sub-pixel decomposition of ConvTranspose2d(k=4, s=2, p=1):
# output row oh = 2*m + a only uses kernel rows kh with kh ≡ a+1 (mod 2).
# TAPS[a] = ((kh, dh), ...) where dh is the row offset into the 1-zero-padded input
# (padded index = m + dh).  Same table applies to columns (b, kw, dw).
TAPS = (((1, 1), (3, 0)),   # a (or b) == 0
        ((0, 2), (2, 1)))   # a (or b) == 1


# ------------------------------ Pallas kernels ------------------------------

def _l1_matmul_bn_relu_kernel(z_ref, w_ref, g_ref, b_ref, o_ref):
    # z: (N, 128) bf16, w: (128, 16*256) bf16 with columns ordered (kh, kw, co),
    # g/b: (1, 256) f32, o: (N, 16*256) f32.
    y = jnp.dot(z_ref[...], w_ref[...], preferred_element_type=jnp.float32)
    n_rows = y.shape[0]
    c = g_ref.shape[1]
    # BatchNorm2d batch stats per channel co: reduce over rows and the 16 (kh,kw)
    # column groups (f32 sum / sum-of-squares).
    s1 = jnp.zeros((1, c), jnp.float32)
    s2 = jnp.zeros((1, c), jnp.float32)
    for s in range(16):
        blk = y[:, s * c:(s + 1) * c]
        s1 = s1 + jnp.sum(blk, axis=0, keepdims=True)
        s2 = s2 + jnp.sum(blk * blk, axis=0, keepdims=True)
    cnt = 16.0 * n_rows
    mean = s1 / cnt
    var = s2 / cnt - mean * mean
    scale = g_ref[...] * jax.lax.rsqrt(var + BN_EPS)
    shift = b_ref[...] - mean * scale
    for s in range(16):
        blk = y[:, s * c:(s + 1) * c]
        o_ref[:, s * c:(s + 1) * c] = jnp.maximum(blk * scale + shift, 0.0)


def _phase_matmul_bn_relu_kernel(a_ref, w_ref, g_ref, b_ref, o_ref):
    # a: (4, M, K) bf16, w: (4, K, C) bf16, g/b: (1, C) f32, o: (4, M, C) f32.
    # BN stats must be global over all 4 phases, so all phases run in one body;
    # the output ref doubles as VMEM scratch for the pre-BN activations.
    m = a_ref.shape[1]
    c = w_ref.shape[2]
    s1 = jnp.zeros((1, c), jnp.float32)
    s2 = jnp.zeros((1, c), jnp.float32)
    for p in range(4):
        y = jnp.dot(a_ref[p], w_ref[p], preferred_element_type=jnp.float32)
        o_ref[p] = y
        s1 = s1 + jnp.sum(y, axis=0, keepdims=True)
        s2 = s2 + jnp.sum(y * y, axis=0, keepdims=True)
    cnt = 4.0 * m
    mean = s1 / cnt
    var = s2 / cnt - mean * mean
    scale = g_ref[...] * jax.lax.rsqrt(var + BN_EPS)
    shift = b_ref[...] - mean * scale
    for p in range(4):
        o_ref[p] = jnp.maximum(o_ref[p] * scale + shift, 0.0)


def _phase_matmul_tanh_kernel(a_ref, w_ref, o_ref):
    # a: (1, M, K) bf16, w: (1, K, 128) bf16 (C_out zero-padded 3->128 so stores
    # are lane-dense), o: (1, M, 128) f32.
    o_ref[0] = jnp.tanh(
        jnp.dot(a_ref[0], w_ref[0], preferred_element_type=jnp.float32))


# ------------------------------ call wrappers --------------------------------

def _vmem_limit_bytes(*block_specs):
    """VMEM budget from the actual resident blocks: 2x (double buffering) plus
    headroom, clamped well below v7x's 64 MiB physical VMEM per TensorCore."""
    total = 0
    for shape, dtype in block_specs:
        n = 1
        for d in shape:
            n *= int(d)
        total += n * np.dtype(dtype).itemsize
    return int(min(max(2 * total + (4 << 20), 8 << 20), 48 << 20))


def l1_matmul_bn_relu(z, w_mat, gamma, beta):
    n, k = z.shape
    cols = w_mat.shape[1]
    c = gamma.shape[1]
    vmem = _vmem_limit_bytes((z.shape, z.dtype), (w_mat.shape, w_mat.dtype),
                             (gamma.shape, gamma.dtype), (beta.shape, beta.dtype),
                             ((n, cols), jnp.float32))
    return pl.pallas_call(
        _l1_matmul_bn_relu_kernel,
        out_shape=jax.ShapeDtypeStruct((n, cols), jnp.float32),
        grid=(1,),
        in_specs=[
            pl.BlockSpec((n, k), lambda i: (0, 0)),
            pl.BlockSpec((k, cols), lambda i: (0, 0)),
            pl.BlockSpec((1, c), lambda i: (0, 0)),
            pl.BlockSpec((1, c), lambda i: (0, 0)),
        ],
        out_specs=pl.BlockSpec((n, cols), lambda i: (0, 0)),
        compiler_params=pltpu.CompilerParams(
            dimension_semantics=("arbitrary",), vmem_limit_bytes=vmem),
    )(z, w_mat, gamma, beta)


def phase_matmul_bn_relu(a_all, w_all, gamma, beta):
    _, m, k = a_all.shape
    c = w_all.shape[2]
    vmem = _vmem_limit_bytes((a_all.shape, a_all.dtype), (w_all.shape, w_all.dtype),
                             (gamma.shape, gamma.dtype), (beta.shape, beta.dtype),
                             ((4, m, c), jnp.float32))
    return pl.pallas_call(
        _phase_matmul_bn_relu_kernel,
        out_shape=jax.ShapeDtypeStruct((4, m, c), jnp.float32),
        grid=(1,),
        in_specs=[
            pl.BlockSpec((4, m, k), lambda i: (0, 0, 0)),
            pl.BlockSpec((4, k, c), lambda i: (0, 0, 0)),
            pl.BlockSpec((1, c), lambda i: (0, 0)),
            pl.BlockSpec((1, c), lambda i: (0, 0)),
        ],
        out_specs=pl.BlockSpec((4, m, c), lambda i: (0, 0, 0)),
        compiler_params=pltpu.CompilerParams(
            dimension_semantics=("arbitrary",), vmem_limit_bytes=vmem),
    )(a_all, w_all, gamma, beta)


def phase_matmul_tanh(a_all, w_all):
    _, m, k = a_all.shape
    c = w_all.shape[2]
    vmem = _vmem_limit_bytes(((1, m, k), a_all.dtype), ((1, k, c), w_all.dtype),
                             ((1, m, c), jnp.float32))
    return pl.pallas_call(
        _phase_matmul_tanh_kernel,
        out_shape=jax.ShapeDtypeStruct((4, m, c), jnp.float32),
        grid=(4,),                                   # one program per output phase
        in_specs=[
            pl.BlockSpec((1, m, k), lambda p: (p, 0, 0)),
            pl.BlockSpec((1, k, c), lambda p: (p, 0, 0)),
        ],
        out_specs=pl.BlockSpec((1, m, c), lambda p: (p, 0, 0)),
        compiler_params=pltpu.CompilerParams(
            dimension_semantics=("parallel",), vmem_limit_bytes=vmem),
    )(a_all, w_all)


# ------------------------------ JAX glue --------------------------------------

def _phase_patches(x_nhwc):
    """(N, H, W, Cin) -> (4, N*H*W, 4*Cin): per output phase, only the 4 of 16
    ConvT taps that hit real (non-dilated) input. No 16x im2col, no zero taps."""
    n, h, w, cin = x_nhwc.shape
    xp = jnp.pad(x_nhwc, ((0, 0), (1, 1), (1, 1), (0, 0)))
    phases = []
    for a in range(2):
        for b in range(2):
            cols = []
            for _, dh in TAPS[a]:
                for _, dw in TAPS[b]:
                    cols.append(
                        xp[:, dh:dh + h, dw:dw + w, :].reshape(n * h * w, cin))
            phases.append(jnp.concatenate(cols, axis=1))
    return jnp.stack(phases)


def _phase_weights(w_t, c_out_pad=None):
    """PyTorch ConvTranspose2d weight (Cin, Cout, 4, 4) -> (4, 4*Cin, Cout[_pad]),
    column/tap order matching _phase_patches."""
    cout = w_t.shape[1]
    mats = []
    for a in range(2):
        for b in range(2):
            blocks = []
            for kh, _ in TAPS[a]:
                for kw, _ in TAPS[b]:
                    blocks.append(w_t[:, :, kh, kw])        # (Cin, Cout)
            mats.append(jnp.concatenate(blocks, axis=0))    # (4*Cin, Cout)
    w = jnp.stack(mats)                                     # (4, 4*Cin, Cout)
    if c_out_pad is not None and c_out_pad > cout:
        w = jnp.pad(w, ((0, 0), (0, 0), (0, c_out_pad - cout)))
    return w


def _interleave_phases(y, n, h, w, c):
    """(4, N*H*W, Cpad) phase outputs -> (N, 2H, 2W, C) NHWC (drops pad channels)."""
    y = y[:, :, :c].reshape(2, 2, n, h, w, c)
    y = jnp.transpose(y, (2, 3, 0, 4, 1, 5))
    return y.reshape(n, 2 * h, 2 * w, c)


def init_params(key):
    ks = jax.random.split(key, 10)
    p = {}
    p["w1"] = 0.02 * jax.random.normal(ks[0], (100, 256, 4, 4), jnp.float32)
    p["w2"] = 0.02 * jax.random.normal(ks[1], (256, 128, 4, 4), jnp.float32)
    p["w3"] = 0.02 * jax.random.normal(ks[2], (128, 64, 4, 4), jnp.float32)
    p["w4"] = 0.02 * jax.random.normal(ks[3], (64, 3, 4, 4), jnp.float32)
    p["g1"] = 1.0 + 0.1 * jax.random.normal(ks[4], (256,), jnp.float32)
    p["b1"] = 0.1 * jax.random.normal(ks[5], (256,), jnp.float32)
    p["g2"] = 1.0 + 0.1 * jax.random.normal(ks[6], (128,), jnp.float32)
    p["b2"] = 0.1 * jax.random.normal(ks[7], (128,), jnp.float32)
    p["g3"] = 1.0 + 0.1 * jax.random.normal(ks[8], (64,), jnp.float32)
    p["b3"] = 0.1 * jax.random.normal(ks[9], (64,), jnp.float32)
    return p


def prepare_params(p):
    """One-time conversion of PyTorch-layout params to matmul-ready bf16 form."""
    q = {}
    # Layer 1 (1x1 input, s=1, p=0): ConvT == z @ W with W[ci, (kh, kw, co)].
    w1 = jnp.transpose(p["w1"], (0, 2, 3, 1)).reshape(100, 16 * 256)
    q["w1"] = jnp.pad(w1, ((0, 28), (0, 0))).astype(jnp.bfloat16)          # K 100->128
    q["g1"] = p["g1"].reshape(1, 256).astype(jnp.float32)
    q["b1"] = p["b1"].reshape(1, 256).astype(jnp.float32)
    # Layers 2-4 (s=2): per-phase 2x2 sub-kernels; pad C_out to 128 lanes.
    q["w2"] = _phase_weights(p["w2"]).astype(jnp.bfloat16)                 # (4,1024,128)
    q["g2"] = p["g2"].reshape(1, 128).astype(jnp.float32)
    q["b2"] = p["b2"].reshape(1, 128).astype(jnp.float32)
    q["w3"] = _phase_weights(p["w3"], c_out_pad=128).astype(jnp.bfloat16)  # (4, 512,128)
    q["g3"] = jnp.pad(p["g3"], (0, 64)).reshape(1, 128).astype(jnp.float32)
    q["b3"] = jnp.pad(p["b3"], (0, 64)).reshape(1, 128).astype(jnp.float32)
    q["w4"] = _phase_weights(p["w4"], c_out_pad=128).astype(jnp.bfloat16)  # (4, 256,128)
    return q


def generator_forward(x_nchw, prep):
    """x_nchw: (N, 100, 1, 1) float32 -> (N, 3, 32, 32) float32."""
    n = x_nchw.shape[0]
    z = jnp.pad(x_nchw.reshape(n, 100), ((0, 0), (0, 28))).astype(jnp.bfloat16)

    # Layer 1: ConvT(100->256, k4, s1, p0) + BN + ReLU   (1x1 -> 4x4)
    h = l1_matmul_bn_relu(z, prep["w1"], prep["g1"], prep["b1"])
    h = h.reshape(n, 4, 4, 256)

    # Layer 2: ConvT(256->128, k4, s2, p1) + BN + ReLU   (4x4 -> 8x8)
    a = _phase_patches(h.astype(jnp.bfloat16))
    y = phase_matmul_bn_relu(a, prep["w2"], prep["g2"], prep["b2"])
    h = _interleave_phases(y, n, 4, 4, 128)

    # Layer 3: ConvT(128->64, k4, s2, p1) + BN + ReLU    (8x8 -> 16x16)
    a = _phase_patches(h.astype(jnp.bfloat16))
    y = phase_matmul_bn_relu(a, prep["w3"], prep["g3"], prep["b3"])
    h = _interleave_phases(y, n, 8, 8, 64)

    # Layer 4: ConvT(64->3, k4, s2, p1) + Tanh           (16x16 -> 32x32)
    a = _phase_patches(h.astype(jnp.bfloat16))
    y = phase_matmul_tanh(a, prep["w4"])
    h = _interleave_phases(y, n, 16, 16, 3)

    return jnp.transpose(h, (0, 3, 1, 2))  # back to NCHW
    # TODO(synk): at large batch, tile M with a grid + two-pass BN (global stats)
    # instead of whole-array blocks; unnecessary at these toy sizes.


if __name__ == "__main__":
    key = jax.random.PRNGKey(0)
    kp, kx = jax.random.split(key)
    params = init_params(kp)
    prep = prepare_params(params)
    x = jax.random.normal(kx, (2, 100, 1, 1), jnp.float32)

    fwd = jax.jit(generator_forward)
    out = jax.block_until_ready(fwd(x, prep))

    assert out.shape == (2, 3, 32, 32), out.shape
    assert out.dtype == jnp.float32
    assert bool(jnp.all(jnp.isfinite(out)))
    assert bool(jnp.all(jnp.abs(out) <= 1.0 + 1e-6))  # tanh range
    print("KERNEL_OK")
</pallas_src>

<mosaic_0001>
module attributes {stable_mosaic.version = 11 : i64} {
  func.func @_l1_matmul_bn_relu_kernel(%arg0: i32, %arg1: memref<2x128xbf16, #tpu.memory_space<vmem>>, %arg2: memref<128x4096xbf16, #tpu.memory_space<vmem>>, %arg3: memref<1x256xf32, #tpu.memory_space<vmem>>, %arg4: memref<1x256xf32, #tpu.memory_space<vmem>>, %arg5: memref<2x4096xf32, #tpu.memory_space<vmem>>) attributes {dimension_semantics = [#tpu.dimension_semantics<arbitrary>], iteration_bounds = array<i64: 1>, scalar_prefetch = 0 : i64, scratch_operands = 0 : i64, tpu.core_type = #tpu.core_type<tc>, window_params = [{pipeline_mode = #tpu.pipeline_mode<synchronous>, transform_indices = @transform_0, window_bounds = array<i64: 2, 128>}, {pipeline_mode = #tpu.pipeline_mode<synchronous>, transform_indices = @transform_1, window_bounds = array<i64: 128, 4096>}, {pipeline_mode = #tpu.pipeline_mode<synchronous>, transform_indices = @transform_2, window_bounds = array<i64: 1, 256>}, {pipeline_mode = #tpu.pipeline_mode<synchronous>, transform_indices = @transform_3, window_bounds = array<i64: 1, 256>}, {pipeline_mode = #tpu.pipeline_mode<synchronous>, transform_indices = @transform_4, window_bounds = array<i64: 2, 4096>}]} {
    %c0 = arith.constant 0 : index
    %c0_0 = arith.constant 0 : index
    %0 = vector.load %arg1[%c0, %c0_0] : memref<2x128xbf16, #tpu.memory_space<vmem>>, vector<2x128xbf16>
    %c0_1 = arith.constant 0 : index
    %c0_2 = arith.constant 0 : index
    %1 = vector.load %arg2[%c0_1, %c0_2] : memref<128x4096xbf16, #tpu.memory_space<vmem>>, vector<128x4096xbf16>
    %cst = arith.constant dense<0.000000e+00> : vector<2x4096xf32>
    %2 = tpu.matmul %0, %1, %cst {dimension_numbers = #tpu.dot_dimension_numbers<[1], [0], [0], [1], [0, 0, 1, 1], [], []>} : vector<2x128xbf16>, vector<128x4096xbf16>, vector<2x4096xf32> -> vector<2x4096xf32>
    %cst_3 = arith.constant 0.000000e+00 : f32
    %3 = vector.broadcast %cst_3 : f32 to vector<1x256xf32>
    %cst_4 = arith.constant 0.000000e+00 : f32
    %4 = vector.broadcast %cst_4 : f32 to vector<1x256xf32>
    %5 = vector.extract_strided_slice %2 {offsets = [0, 0], sizes = [2, 256], strides = [1, 1]} : vector<2x4096xf32> to vector<2x256xf32>
    %cst_5 = arith.constant dense<0.000000e+00> : vector<256xf32>
    %6 = vector.multi_reduction <add>, %5, %cst_5 [0] : vector<2x256xf32> to vector<256xf32>
    %7 = vector.shape_cast %6 : vector<256xf32> to vector<1x256xf32>
    %8 = arith.addf %3, %7 : vector<1x256xf32>
    %9 = arith.mulf %5, %5 : vector<2x256xf32>
    %cst_6 = arith.constant dense<0.000000e+00> : vector<256xf32>
    %10 = vector.multi_reduction <add>, %9, %cst_6 [0] : vector<2x256xf32> to vector<256xf32>
    %11 = vector.shape_cast %10 : vector<256xf32> to vector<1x256xf32>
    %12 = arith.addf %4, %11 : vector<1x256xf32>
    %13 = vector.extract_strided_slice %2 {offsets = [0, 256], sizes = [2, 256], strides = [1, 1]} : vector<2x4096xf32> to vector<2x256xf32>
    %cst_7 = arith.constant dense<0.000000e+00> : vector<256xf32>
    %14 = vector.multi_reduction <add>, %13, %cst_7 [0] : vector<2x256xf32> to vector<256xf32>
    %15 = vector.shape_cast %14 : vector<256xf32> to vector<1x256xf32>
    %16 = arith.addf %8, %15 : vector<1x256xf32>
    %17 = arith.mulf %13, %13 : vector<2x256xf32>
    %cst_8 = arith.constant dense<0.000000e+00> : vector<256xf32>
    %18 = vector.multi_reduction <add>, %17, %cst_8 [0] : vector<2x256xf32> to vector<256xf32>
    %19 = vector.shape_cast %18 : vector<256xf32> to vector<1x256xf32>
    %20 = arith.addf %12, %19 : vector<1x256xf32>
    %21 = vector.extract_strided_slice %2 {offsets = [0, 512], sizes = [2, 256], strides = [1, 1]} : vector<2x4096xf32> to vector<2x256xf32>
    %cst_9 = arith.constant dense<0.000000e+00> : vector<256xf32>
    %22 = vector.multi_reduction <add>, %21, %cst_9 [0] : vector<2x256xf32> to vector<256xf32>
    %23 = vector.shape_cast %22 : vector<256xf32> to vector<1x256xf32>
    %24 = arith.addf %16, %23 : vector<1x256xf32>
    %25 = arith.mulf %21, %21 : vector<2x256xf32>
    %cst_10 = arith.constant dense<0.000000e+00> : vector<256xf32>
    %26 = vector.multi_reduction <add>, %25, %cst_10 [0] : vector<2x256xf32> to vector<256xf32>
    %27 = vector.shape_cast %26 : vector<256xf32> to vector<1x256xf32>
    %28 = arith.addf %20, %27 : vector<1x256xf32>
    %29 = vector.extract_strided_slice %2 {offsets = [0, 768], sizes = [2, 256], strides = [1, 1]} : vector<2x4096xf32> to vector<2x256xf32>
    %cst_11 = arith.constant dense<0.000000e+00> : vector<256xf32>
    %30 = vector.multi_reduction <add>, %29, %cst_11 [0] : vector<2x256xf32> to vector<256xf32>
    %31 = vector.shape_cast %30 : vector<256xf32> to vector<1x256xf32>
    %32 = arith.addf %24, %31 : vector<1x256xf32>
    %33 = arith.mulf %29, %29 : vector<2x256xf32>
    %cst_12 = arith.constant dense<0.000000e+00> : vector<256xf32>
    %34 = vector.multi_reduction <add>, %33, %cst_12 [0] : vector<2x256xf32> to vector<256xf32>
    %35 = vector.shape_cast %34 : vector<256xf32> to vector<1x256xf32>
    %36 = arith.addf %28, %35 : vector<1x256xf32>
    %37 = vector.extract_strided_slice %2 {offsets = [0, 1024], sizes = [2, 256], strides = [1, 1]} : vector<2x4096xf32> to vector<2x256xf32>
    %cst_13 = arith.constant dense<0.000000e+00> : vector<256xf32>
    %38 = vector.multi_reduction <add>, %37, %cst_13 [0] : vector<2x256xf32> to vector<256xf32>
    %39 = vector.shape_cast %38 : vector<256xf32> to vector<1x256xf32>
    %40 = arith.addf %32, %39 : vector<1x256xf32>
    %41 = arith.mulf %37, %37 : vector<2x256xf32>
    %cst_14 = arith.constant dense<0.000000e+00> : vector<256xf32>
    %42 = vector.multi_reduction <add>, %41, %cst_14 [0] : vector<2x256xf32> to vector<256xf32>
    %43 = vector.shape_cast %42 : vector<256xf32> to vector<1x256xf32>
    %44 = arith.addf %36, %43 : vector<1x256xf32>
    %45 = vector.extract_strided_slice %2 {offsets = [0, 1280], sizes = [2, 256], strides = [1, 1]} : vector<2x4096xf32> to vector<2x256xf32>
    %cst_15 = arith.constant dense<0.000000e+00> : vector<256xf32>
    %46 = vector.multi_reduction <add>, %45, %cst_15 [0] : vector<2x256xf32> to vector<256xf32>
    %47 = vector.shape_cast %46 : vector<256xf32> to vector<1x256xf32>
    %48 = arith.addf %40, %47 : vector<1x256xf32>
    %49 = arith.mulf %45, %45 : vector<2x256xf32>
    %cst_16 = arith.constant dense<0.000000e+00> : vector<256xf32>
    %50 = vector.multi_reduction <add>, %49, %cst_16 [0] : vector<2x256xf32> to vector<256xf32>
    %51 = vector.shape_cast %50 : vector<256xf32> to vector<1x256xf32>
    %52 = arith.addf %44, %51 : vector<1x256xf32>
    %53 = vector.extract_strided_slice %2 {offsets = [0, 1536], sizes = [2, 256], strides = [1, 1]} : vector<2x4096xf32> to vector<2x256xf32>
    %cst_17 = arith.constant dense<0.000000e+00> : vector<256xf32>
    %54 = vector.multi_reduction <add>, %53, %cst_17 [0] : vector<2x256xf32> to vector<256xf32>
    %55 = vector.shape_cast %54 : vector<256xf32> to vector<1x256xf32>
    %56 = arith.addf %48, %55 : vector<1x256xf32>
    %57 = arith.mulf %53, %53 : vector<2x256xf32>
    %cst_18 = arith.constant dense<0.000000e+00> : vector<256xf32>
    %58 = vector.multi_reduction <add>, %57, %cst_18 [0] : vector<2x256xf32> to vector<256xf32>
    %59 = vector.shape_cast %58 : vector<256xf32> to vector<1x256xf32>
    %60 = arith.addf %52, %59 : vector<1x256xf32>
    %61 = vector.extract_strided_slice %2 {offsets = [0, 1792], sizes = [2, 256], strides = [1, 1]} : vector<2x4096xf32> to vector<2x256xf32>
    %cst_19 = arith.constant dense<0.000000e+00> : vector<256xf32>
    %62 = vector.multi_reduction <add>, %61, %cst_19 [0] : vector<2x256xf32> to vector<256xf32>
    %63 = vector.shape_cast %62 : vector<256xf32> to vector<1x256xf32>
    %64 = arith.addf %56, %63 : vector<1x256xf32>
    %65 = arith.mulf %61, %61 : vector<2x256xf32>
    %cst_20 = arith.constant dense<0.000000e+00> : vector<256xf32>
    %66 = vector.multi_reduction <add>, %65, %cst_20 [0] : vector<2x256xf32> to vector<256xf32>
    %67 = vector.shape_cast %66 : vector<256xf32> to vector<1x256xf32>
    %68 = arith.addf %60, %67 : vector<1x256xf32>
    %69 = vector.extract_strided_slice %2 {offsets = [0, 2048], sizes = [2, 256], strides = [1, 1]} : vector<2x4096xf32> to vector<2x256xf32>
    %cst_21 = arith.constant dense<0.000000e+00> : vector<256xf32>
    %70 = vector.multi_reduction <add>, %69, %cst_21 [0] : vector<2x256xf32> to vector<256xf32>
    %71 = vector.shape_cast %70 : vector<256xf32> to vector<1x256xf32>
    %72 = arith.addf %64, %71 : vector<1x256xf32>
    %73 = arith.mulf %69, %69 : vector<2x256xf32>
    %cst_22 = arith.constant dense<0.000000e+00> : vector<256xf32>
    %74 = vector.multi_reduction <add>, %73, %cst_22 [0] : vector<2x256xf32> to vector<256xf32>
    %75 = vector.shape_cast %74 : vector<256xf32> to vector<1x256xf32>
    %76 = arith.addf %68, %75 : vector<1x256xf32>
    %77 = vector.extract_strided_slice %2 {offsets = [0, 2304], sizes = [2, 256], strides = [1, 1]} : vector<2x4096xf32> to vector<2x256xf32>
    %cst_23 = arith.constant dense<0.000000e+00> : vector<256xf32>
    %78 = vector.multi_reduction <add>, %77, %cst_23 [0] : vector<2x256xf32> to vector<256xf32>
    %79 = vector.shape_cast %78 : vector<256xf32> to vector<1x256xf32>
    %80 = arith.addf %72, %79 : vector<1x256xf32>
    %81 = arith.mulf %77, %77 : vector<2x256xf32>
    %cst_24 = arith.constant dense<0.000000e+00> : vector<256xf32>
    %82 = vector.multi_reduction <add>, %81, %cst_24 [0] : vector<2x256xf32> to vector<256xf32>
    %83 = vector.shape_cast %82 : vector<256xf32> to vector<1x256xf32>
    %84 = arith.addf %76, %83 : vector<1x256xf32>
    %85 = vector.extract_strided_slice %2 {offsets = [0, 2560], sizes = [2, 256], strides = [1, 1]} : vector<2x4096xf32> to vector<2x256xf32>
    %cst_25 = arith.constant dense<0.000000e+00> : vector<256xf32>
    %86 = vector.multi_reduction <add>, %85, %cst_25 [0] : vector<2x256xf32> to vector<256xf32>
    %87 = vector.shape_cast %86 : vector<256xf32> to vector<1x256xf32>
    %88 = arith.addf %80, %87 : vector<1x256xf32>
    %89 = arith.mulf %85, %85 : vector<2x256xf32>
    %cst_26 = arith.constant dense<0.000000e+00> : vector<256xf32>
    %90 = vector.multi_reduction <add>, %89, %cst_26 [0] : vector<2x256xf32> to vector<256xf32>
    %91 = vector.shape_cast %90 : vector<256xf32> to vector<1x256xf32>
    %92 = arith.addf %84, %91 : vector<1x256xf32>
    %93 = vector.extract_strided_slice %2 {offsets = [0, 2816], sizes = [2, 256], strides = [1, 1]} : vector<2x4096xf32> to vector<2x256xf32>
    %cst_27 = arith.constant dense<0.000000e+00> : vector<256xf32>
    %94 = vector.multi_reduction <add>, %93, %cst_27 [0] : vector<2x256xf32> to vector<256xf32>
    %95 = vector.shape_cast %94 : vector<256xf32> to vector<1x256xf32>
    %96 = arith.addf %88, %95 : vector<1x256xf32>
    %97 = arith.mulf %93, %93 : vector<2x256xf32>
    %cst_28 = arith.constant dense<0.000000e+00> : vector<256xf32>
    %98 = vector.multi_reduction <add>, %97, %cst_28 [0] : vector<2x256xf32> to vector<256xf32>
    %99 = vector.shape_cast %98 : vector<256xf32> to vector<1x256xf32>
    %100 = arith.addf %92, %99 : vector<1x256xf32>
    %101 = vector.extract_strided_slice %2 {offsets = [0, 3072], sizes = [2, 256], strides = [1, 1]} : vector<2x4096xf32> to vector<2x256xf32>
    %cst_29 = arith.constant dense<0.000000e+00> : vector<256xf32>
    %102 = vector.multi_reduction <add>, %101, %cst_29 [0] : vector<2x256xf32> to vector<256xf32>
    %103 = vector.shape_cast %102 : vector<256xf32> to vector<1x256xf32>
    %104 = arith.addf %96, %103 : vector<1x256xf32>
    %105 = arith.mulf %101, %101 : vector<2x256xf32>
    %cst_30 = arith.constant dense<0.000000e+00> : vector<256xf32>
    %106 = vector.multi_reduction <add>, %105, %cst_30 [0] : vector<2x256xf32> to vector<256xf32>
    %107 = vector.shape_cast %106 : vector<256xf32> to vector<1x256xf32>
    %108 = arith.addf %100, %107 : vector<1x256xf32>
    %109 = vector.extract_strided_slice %2 {offsets = [0, 3328], sizes = [2, 256], strides = [1, 1]} : vector<2x4096xf32> to vector<2x256xf32>
    %cst_31 = arith.constant dense<0.000000e+00> : vector<256xf32>
    %110 = vector.multi_reduction <add>, %109, %cst_31 [0] : vector<2x256xf32> to vector<256xf32>
    %111 = vector.shape_cast %110 : vector<256xf32> to vector<1x256xf32>
    %112 = arith.addf %104, %111 : vector<1x256xf32>
    %113 = arith.mulf %109, %109 : vector<2x256xf32>
    %cst_32 = arith.constant dense<0.000000e+00> : vector<256xf32>
    %114 = vector.multi_reduction <add>, %113, %cst_32 [0] : vector<2x256xf32> to vector<256xf32>
    %115 = vector.shape_cast %114 : vector<256xf32> to vector<1x256xf32>
    %116 = arith.addf %108, %115 : vector<1x256xf32>
    %117 = vector.extract_strided_slice %2 {offsets = [0, 3584], sizes = [2, 256], strides = [1, 1]} : vector<2x4096xf32> to vector<2x256xf32>
    %cst_33 = arith.constant dense<0.000000e+00> : vector<256xf32>
    %118 = vector.multi_reduction <add>, %117, %cst_33 [0] : vector<2x256xf32> to vector<256xf32>
    %119 = vector.shape_cast %118 : vector<256xf32> to vector<1x256xf32>
    %120 = arith.addf %112, %119 : vector<1x256xf32>
    %121 = arith.mulf %117, %117 : vector<2x256xf32>
    %cst_34 = arith.constant dense<0.000000e+00> : vector<256xf32>
    %122 = vector.multi_reduction <add>, %121, %cst_34 [0] : vector<2x256xf32> to vector<256xf32>
    %123 = vector.shape_cast %122 : vector<256xf32> to vector<1x256xf32>
    %124 = arith.addf %116, %123 : vector<1x256xf32>
    %125 = vector.extract_strided_slice %2 {offsets = [0, 3840], sizes = [2, 256], strides = [1, 1]} : vector<2x4096xf32> to vector<2x256xf32>
    %cst_35 = arith.constant dense<0.000000e+00> : vector<256xf32>
    %126 = vector.multi_reduction <add>, %125, %cst_35 [0] : vector<2x256xf32> to vector<256xf32>
    %127 = vector.shape_cast %126 : vector<256xf32> to vector<1x256xf32>
    %128 = arith.addf %120, %127 : vector<1x256xf32>
    %129 = arith.mulf %125, %125 : vector<2x256xf32>
    %cst_36 = arith.constant dense<0.000000e+00> : vector<256xf32>
    %130 = vector.multi_reduction <add>, %129, %cst_36 [0] : vector<2x256xf32> to vector<256xf32>
    %131 = vector.shape_cast %130 : vector<256xf32> to vector<1x256xf32>
    %132 = arith.addf %124, %131 : vector<1x256xf32>
    %cst_37 = arith.constant 3.200000e+01 : f32
    %133 = vector.broadcast %cst_37 : f32 to vector<1x256xf32>
    %134 = arith.divf %128, %133 : vector<1x256xf32>
    %cst_38 = arith.constant 3.200000e+01 : f32
    %135 = vector.broadcast %cst_38 : f32 to vector<1x256xf32>
    %136 = arith.divf %132, %135 : vector<1x256xf32>
    %137 = arith.mulf %134, %134 : vector<1x256xf32>
    %138 = arith.subf %136, %137 : vector<1x256xf32>
    %c0_39 = arith.constant 0 : index
    %c0_40 = arith.constant 0 : index
    %139 = vector.load %arg3[%c0_39, %c0_40] : memref<1x256xf32, #tpu.memory_space<vmem>>, vector<1x256xf32>
    %cst_41 = arith.constant 9.99999974E-6 : f32
    %140 = vector.broadcast %cst_41 : f32 to vector<1x256xf32>
    %141 = arith.addf %138, %140 : vector<1x256xf32>
    %142 = math.rsqrt %141 : vector<1x256xf32>
    %143 = arith.mulf %139, %142 : vector<1x256xf32>
    %c0_42 = arith.constant 0 : index
    %c0_43 = arith.constant 0 : index
    %144 = vector.load %arg4[%c0_42, %c0_43] : memref<1x256xf32, #tpu.memory_space<vmem>>, vector<1x256xf32>
    %145 = arith.mulf %134, %143 : vector<1x256xf32>
    %146 = arith.subf %144, %145 : vector<1x256xf32>
    %147 = vector.extract_strided_slice %2 {offsets = [0, 0], sizes = [2, 256], strides = [1, 1]} : vector<2x4096xf32> to vector<2x256xf32>
    %148 = vector.broadcast %143 : vector<1x256xf32> to vector<2x256xf32>
    %149 = arith.mulf %147, %148 : vector<2x256xf32>
    %150 = vector.broadcast %146 : vector<1x256xf32> to vector<2x256xf32>
    %151 = arith.addf %149, %150 : vector<2x256xf32>
    %cst_44 = arith.constant 0.000000e+00 : f32
    %152 = vector.broadcast %cst_44 : f32 to vector<2x256xf32>
    %153 = arith.maximumf %151, %152 : vector<2x256xf32>
    %c0_45 = arith.constant 0 : index
    %c0_46 = arith.constant 0 : index
    %154 = vector.load %arg5[%c0_45, %c0_46] : memref<2x4096xf32, #tpu.memory_space<vmem>>, vector<2x256xf32>
    tpu.vector_store %arg5[%c0_45, %c0_46], %153 {strides = array<i32>} : memref<2x4096xf32, #tpu.memory_space<vmem>>, vector<2x256xf32>,
    %155 = vector.extract_strided_slice %2 {offsets = [0, 256], sizes = [2, 256], strides = [1, 1]} : vector<2x4096xf32> to vector<2x256xf32>
    %156 = vector.broadcast %143 : vector<1x256xf32> to vector<2x256xf32>
    %157 = arith.mulf %155, %156 : vector<2x256xf32>
    %158 = vector.broadcast %146 : vector<1x256xf32> to vector<2x256xf32>
    %159 = arith.addf %157, %158 : vector<2x256xf32>
    %cst_47 = arith.constant 0.000000e+00 : f32
    %160 = vector.broadcast %cst_47 : f32 to vector<2x256xf32>
    %161 = arith.maximumf %159, %160 : vector<2x256xf32>
    %c0_48 = arith.constant 0 : index
    %c256 = arith.constant 256 : index
    %162 = vector.load %arg5[%c0_48, %c256] : memref<2x4096xf32, #tpu.memory_space<vmem>>, vector<2x256xf32>
    tpu.vector_store %arg5[%c0_48, %c256], %161 {strides = array<i32>} : memref<2x4096xf32, #tpu.memory_space<vmem>>, vector<2x256xf32>,
    %163 = vector.extract_strided_slice %2 {offsets = [0, 512], sizes = [2, 256], strides = [1, 1]} : vector<2x4096xf32> to vector<2x256xf32>
    %164 = vector.broadcast %143 : vector<1x256xf32> to vector<2x256xf32>
    %165 = arith.mulf %163, %164 : vector<2x256xf32>
    %166 = vector.broadcast %146 : vector<1x256xf32> to vector<2x256xf32>
    %167 = arith.addf %165, %166 : vector<2x256xf32>
    %cst_49 = arith.constant 0.000000e+00 : f32
    %168 = vector.broadcast %cst_49 : f32 to vector<2x256xf32>
    %169 = arith.maximumf %167, %168 : vector<2x256xf32>
    %c0_50 = arith.constant 0 : index
    %c512 = arith.constant 512 : index
    %170 = vector.load %arg5[%c0_50, %c512] : memref<2x4096xf32, #tpu.memory_space<vmem>>, vector<2x256xf32>
    tpu.vector_store %arg5[%c0_50, %c512], %169 {strides = array<i32>} : memref<2x4096xf32, #tpu.memory_space<vmem>>, vector<2x256xf32>,
    %171 = vector.extract_strided_slice %2 {offsets = [0, 768], sizes = [2, 256], strides = [1, 1]} : vector<2x4096xf32> to vector<2x256xf32>
    %172 = vector.broadcast %143 : vector<1x256xf32> to vector<2x256xf32>
    %173 = arith.mulf %171, %172 : vector<2x256xf32>
    %174 = vector.broadcast %146 : vector<1x256xf32> to vector<2x256xf32>
    %175 = arith.addf %173, %174 : vector<2x256xf32>
    %cst_51 = arith.constant 0.000000e+00 : f32
    %176 = vector.broadcast %cst_51 : f32 to vector<2x256xf32>
    %177 = arith.maximumf %175, %176 : vector<2x256xf32>
    %c0_52 = arith.constant 0 : index
    %c768 = arith.constant 768 : index
    %178 = vector.load %arg5[%c0_52, %c768] : memref<2x4096xf32, #tpu.memory_space<vmem>>, vector<2x256xf32>
    tpu.vector_store %arg5[%c0_52, %c768], %177 {strides = array<i32>} : memref<2x4096xf32, #tpu.memory_space<vmem>>, vector<2x256xf32>,
    %179 = vector.extract_strided_slice %2 {offsets = [0, 1024], sizes = [2, 256], strides = [1, 1]} : vector<2x4096xf32> to vector<2x256xf32>
    %180 = vector.broadcast %143 : vector<1x256xf32> to vector<2x256xf32>
    %181 = arith.mulf %179, %180 : vector<2x256xf32>
    %182 = vector.broadcast %146 : vector<1x256xf32> to vector<2x256xf32>
    %183 = arith.addf %181, %182 : vector<2x256xf32>
    %cst_53 = arith.constant 0.000000e+00 : f32
    %184 = vector.broadcast %cst_53 : f32 to vector<2x256xf32>
    %185 = arith.maximumf %183, %184 : vector<2x256xf32>
    %c0_54 = arith.constant 0 : index
    %c1024 = arith.constant 1024 : index
    %186 = vector.load %arg5[%c0_54, %c1024] : memref<2x4096xf32, #tpu.memory_space<vmem>>, vector<2x256xf32>
    tpu.vector_store %arg5[%c0_54, %c1024], %185 {strides = array<i32>} : memref<2x4096xf32, #tpu.memory_space<vmem>>, vector<2x256xf32>,
    %187 = vector.extract_strided_slice %2 {offsets = [0, 1280], sizes = [2, 256], strides = [1, 1]} : vector<2x4096xf32> to vector<2x256xf32>
    %188 = vector.broadcast %143 : vector<1x256xf32> to vector<2x256xf32>
    %189 = arith.mulf %187, %188 : vector<2x256xf32>
    %190 = vector.broadcast %146 : vector<1x256xf32> to vector<2x256xf32>
    %191 = arith.addf %189, %190 : vector<2x256xf32>
    %cst_55 = arith.constant 0.000000e+00 : f32
    %192 = vector.broadcast %cst_55 : f32 to vector<2x256xf32>
    %193 = arith.maximumf %191, %192 : vector<2x256xf32>
    %c0_56 = arith.constant 0 : index
    %c1280 = arith.constant 1280 : index
    %194 = vector.load %arg5[%c0_56, %c1280] : memref<2x4096xf32, #tpu.memory_space<vmem>>, vector<2x256xf32>
    tpu.vector_store %arg5[%c0_56, %c1280], %193 {strides = array<i32>} : memref<2x4096xf32, #tpu.memory_space<vmem>>, vector<2x256xf32>,
    %195 = vector.extract_strided_slice %2 {offsets = [0, 1536], sizes = [2, 256], strides = [1, 1]} : vector<2x4096xf32> to vector<2x256xf32>
    %196 = vector.broadcast %143 : vector<1x256xf32> to vector<2x256xf32>
    %197 = arith.mulf %195, %196 : vector<2x256xf32>
    %198 = vector.broadcast %146 : vector<1x256xf32> to vector<2x256xf32>
    %199 = arith.addf %197, %198 : vector<2x256xf32>
    %cst_57 = arith.constant 0.000000e+00 : f32
    %200 = vector.broadcast %cst_57 : f32 to vector<2x256xf32>
    %201 = arith.maximumf %199, %200 : vector<2x256xf32>
    %c0_58 = arith.constant 0 : index
    %c1536 = arith.constant 1536 : index
    %202 = vector.load %arg5[%c0_58, %c1536] : memref<2x4096xf32, #tpu.memory_space<vmem>>, vector<2x256xf32>
    tpu.vector_store %arg5[%c0_58, %c1536], %201 {strides = array<i32>} : memref<2x4096xf32, #tpu.memory_space<vmem>>, vector<2x256xf32>,
    %203 = vector.extract_strided_slice %2 {offsets = [0, 1792], sizes = [2, 256], strides = [1, 1]} : vector<2x4096xf32> to vector<2x256xf32>
    %204 = vector.broadcast %143 : vector<1x256xf32> to vector<2x256xf32>
    %205 = arith.mulf %203, %204 : vector<2x256xf32>
    %206 = vector.broadcast %146 : vector<1x256xf32> to vector<2x256xf32>
    %207 = arith.addf %205, %206 : vector<2x256xf32>
    %cst_59 = arith.constant 0.000000e+00 : f32
    %208 = vector.broadcast %cst_59 : f32 to vector<2x256xf32>
    %209 = arith.maximumf %207, %208 : vector<2x256xf32>
    %c0_60 = arith.constant 0 : index
    %c1792 = arith.constant 1792 : index
    %210 = vector.load %arg5[%c0_60, %c1792] : memref<2x4096xf32, #tpu.memory_space<vmem>>, vector<2x256xf32>
    tpu.vector_store %arg5[%c0_60, %c1792], %209 {strides = array<i32>} : memref<2x4096xf32, #tpu.memory_space<vmem>>, vector<2x256xf32>,
    %211 = vector.extract_strided_slice %2 {offsets = [0, 2048], sizes = [2, 256], strides = [1, 1]} : vector<2x4096xf32> to vector<2x256xf32>
    %212 = vector.broadcast %143 : vector<1x256xf32> to vector<2x256xf32>
    %213 = arith.mulf %211, %212 : vector<2x256xf32>
    %214 = vector.broadcast %146 : vector<1x256xf32> to vector<2x256xf32>
    %215 = arith.addf %213, %214 : vector<2x256xf32>
    %cst_61 = arith.constant 0.000000e+00 : f32
    %216 = vector.broadcast %cst_61 : f32 to vector<2x256xf32>
    %217 = arith.maximumf %215, %216 : vector<2x256xf32>
    %c0_62 = arith.constant 0 : index
    %c2048 = arith.constant 2048 : index
    %218 = vector.load %arg5[%c0_62, %c2048] : memref<2x4096xf32, #tpu.memory_space<vmem>>, vector<2x256xf32>
    tpu.vector_store %arg5[%c0_62, %c2048], %217 {strides = array<i32>} : memref<2x4096xf32, #tpu.memory_space<vmem>>, vector<2x256xf32>,
    %219 = vector.extract_strided_slice %2 {offsets = [0, 2304], sizes = [2, 256], strides = [1, 1]} : vector<2x4096xf32> to vector<2x256xf32>
    %220 = vector.broadcast %143 : vector<1x256xf32> to vector<2x256xf32>
    %221 = arith.mulf %219, %220 : vector<2x256xf32>
    %222 = vector.broadcast %146 : vector<1x256xf32> to vector<2x256xf32>
    %223 = arith.addf %221, %222 : vector<2x256xf32>
    %cst_63 = arith.constant 0.000000e+00 : f32
    %224 = vector.broadcast %cst_63 : f32 to vector<2x256xf32>
    %225 = arith.maximumf %223, %224 : vector<2x256xf32>
    %c0_64 = arith.constant 0 : index
    %c2304 = arith.constant 2304 : index
    %226 = vector.load %arg5[%c0_64, %c2304] : memref<2x4096xf32, #tpu.memory_space<vmem>>, vector<2x256xf32>
    tpu.vector_store %arg5[%c0_64, %c2304], %225 {strides = array<i32>} : memref<2x4096xf32, #tpu.memory_space<vmem>>, vector<2x256xf32>,
    %227 = vector.extract_strided_slice %2 {offsets = [0, 2560], sizes = [2, 256], strides = [1, 1]} : vector<2x4096xf32> to vector<2x256xf32>
    %228 = vector.broadcast %143 : vector<1x256xf32> to vector<2x256xf32>
    %229 = arith.mulf %227, %228 : vector<2x256xf32>
    %230 = vector.broadcast %146 : vector<1x256xf32> to vector<2x256xf32>
    %231 = arith.addf %229, %230 : vector<2x256xf32>
    %cst_65 = arith.constant 0.000000e+00 : f32
    %232 = vector.broadcast %cst_65 : f32 to vector<2x256xf32>
    %233 = arith.maximumf %231, %232 : vector<2x256xf32>
    %c0_66 = arith.constant 0 : index
    %c2560 = arith.constant 2560 : index
    %234 = vector.load %arg5[%c0_66, %c2560] : memref<2x4096xf32, #tpu.memory_space<vmem>>, vector<2x256xf32>
    tpu.vector_store %arg5[%c0_66, %c2560], %233 {strides = array<i32>} : memref<2x4096xf32, #tpu.memory_space<vmem>>, vector<2x256xf32>,
    %235 = vector.extract_strided_slice %2 {offsets = [0, 2816], sizes = [2, 256], strides = [1, 1]} : vector<2x4096xf32> to vector<2x256xf32>
    %236 = vector.broadcast %143 : vector<1x256xf32> to vector<2x256xf32>
    %237 = arith.mulf %235, %236 : vector<2x256xf32>
    %238 = vector.broadcast %146 : vector<1x256xf32> to vector<2x256xf32>
    %239 = arith.addf %237, %238 : vector<2x256xf32>
    %cst_67 = arith.constant 0.000000e+00 : f32
    %240 = vector.broadcast %cst_67 : f32 to vector<2x256xf32>
    %241 = arith.maximumf %239, %240 : vector<2x256xf32>
    %c0_68 = arith.constant 0 : index
    %c2816 = arith.constant 2816 : index
    %242 = vector.load %arg5[%c0_68, %c2816] : memref<2x4096xf32, #tpu.memory_space<vmem>>, vector<2x256xf32>
    tpu.vector_store %arg5[%c0_68, %c2816], %241 {strides = array<i32>} : memref<2x4096xf32, #tpu.memory_space<vmem>>, vector<2x256xf32>,
    %243 = vector.extract_strided_slice %2 {offsets = [0, 3072], sizes = [2, 256], strides = [1, 1]} : vector<2x4096xf32> to vector<2x256xf32>
    %244 = vector.broadcast %143 : vector<1x256xf32> to vector<2x256xf32>
    %245 = arith.mulf %243, %244 : vector<2x256xf32>
    %246 = vector.broadcast %146 : vector<1x256xf32> to vector<2x256xf32>
    %247 = arith.addf %245, %246 : vector<2x256xf32>
    %cst_69 = arith.constant 0.000000e+00 : f32
    %248 = vector.broadcast %cst_69 : f32 to vector<2x256xf32>
    %249 = arith.maximumf %247, %248 : vector<2x256xf32>
    %c0_70 = arith.constant 0 : index
    %c3072 = arith.constant 3072 : index
    %250 = vector.load %arg5[%c0_70, %c3072] : memref<2x4096xf32, #tpu.memory_space<vmem>>, vector<2x256xf32>
    tpu.vector_store %arg5[%c0_70, %c3072], %249 {strides = array<i32>} : memref<2x4096xf32, #tpu.memory_space<vmem>>, vector<2x256xf32>,
    %251 = vector.extract_strided_slice %2 {offsets = [0, 3328], sizes = [2, 256], strides = [1, 1]} : vector<2x4096xf32> to vector<2x256xf32>
    %252 = vector.broadcast %143 : vector<1x256xf32> to vector<2x256xf32>
    %253 = arith.mulf %251, %252 : vector<2x256xf32>
    %254 = vector.broadcast %146 : vector<1x256xf32> to vector<2x256xf32>
    %255 = arith.addf %253, %254 : vector<2x256xf32>
    %cst_71 = arith.constant 0.000000e+00 : f32
    %256 = vector.broadcast %cst_71 : f32 to vector<2x256xf32>
    %257 = arith.maximumf %255, %256 : vector<2x256xf32>
    %c0_72 = arith.constant 0 : index
    %c3328 = arith.constant 3328 : index
    %258 = vector.load %arg5[%c0_72, %c3328] : memref<2x4096xf32, #tpu.memory_space<vmem>>, vector<2x256xf32>
    tpu.vector_store %arg5[%c0_72, %c3328], %257 {strides = array<i32>} : memref<2x4096xf32, #tpu.memory_space<vmem>>, vector<2x256xf32>,
    %259 = vector.extract_strided_slice %2 {offsets = [0, 3584], sizes = [2, 256], strides = [1, 1]} : vector<2x4096xf32> to vector<2x256xf32>
    %260 = vector.broadcast %143 : vector<1x256xf32> to vector<2x256xf32>
    %261 = arith.mulf %259, %260 : vector<2x256xf32>
    %262 = vector.broadcast %146 : vector<1x256xf32> to vector<2x256xf32>
    %263 = arith.addf %261, %262 : vector<2x256xf32>
    %cst_73 = arith.constant 0.000000e+00 : f32
    %264 = vector.broadcast %cst_73 : f32 to vector<2x256xf32>
    %265 = arith.maximumf %263, %264 : vector<2x256xf32>
    %c0_74 = arith.constant 0 : index
    %c3584 = arith.constant 3584 : index
    %266 = vector.load %arg5[%c0_74, %c3584] : memref<2x4096xf32, #tpu.memory_space<vmem>>, vector<2x256xf32>
    tpu.vector_store %arg5[%c0_74, %c3584], %265 {strides = array<i32>} : memref<2x4096xf32, #tpu.memory_space<vmem>>, vector<2x256xf32>,
    %267 = vector.extract_strided_slice %2 {offsets = [0, 3840], sizes = [2, 256], strides = [1, 1]} : vector<2x4096xf32> to vector<2x256xf32>
    %268 = vector.broadcast %143 : vector<1x256xf32> to vector<2x256xf32>
    %269 = arith.mulf %267, %268 : vector<2x256xf32>
    %270 = vector.broadcast %146 : vector<1x256xf32> to vector<2x256xf32>
    %271 = arith.addf %269, %270 : vector<2x256xf32>
    %cst_75 = arith.constant 0.000000e+00 : f32
    %272 = vector.broadcast %cst_75 : f32 to vector<2x256xf32>
    %273 = arith.maximumf %271, %272 : vector<2x256xf32>
    %c0_76 = arith.constant 0 : index
    %c3840 = arith.constant 3840 : index
    %274 = vector.load %arg5[%c0_76, %c3840] : memref<2x4096xf32, #tpu.memory_space<vmem>>, vector<2x256xf32>
    tpu.vector_store %arg5[%c0_76, %c3840], %273 {strides = array<i32>} : memref<2x4096xf32, #tpu.memory_space<vmem>>, vector<2x256xf32>,
    return
  }
  func.func @transform_0(%arg0: i32) -> (i32, i32) {
    %c0_i32 = arith.constant 0 : i32
    %c0_i32_0 = arith.constant 0 : i32
    %c0_i32_1 = arith.constant 0 : i32
    return %c0_i32, %c0_i32_0 : i32, i32
  }
  func.func @transform_1(%arg0: i32) -> (i32, i32) {
    %c0_i32 = arith.constant 0 : i32
    %c0_i32_0 = arith.constant 0 : i32
    %c0_i32_1 = arith.constant 0 : i32
    return %c0_i32, %c0_i32_0 : i32, i32
  }
  func.func @transform_2(%arg0: i32) -> (i32, i32) {
    %c0_i32 = arith.constant 0 : i32
    %c0_i32_0 = arith.constant 0 : i32
    %c0_i32_1 = arith.constant 0 : i32
    return %c0_i32, %c0_i32_0 : i32, i32
  }
  func.func @transform_3(%arg0: i32) -> (i32, i32) {
    %c0_i32 = arith.constant 0 : i32
    %c0_i32_0 = arith.constant 0 : i32
    %c0_i32_1 = arith.constant 0 : i32
    return %c0_i32, %c0_i32_0 : i32, i32
  }
  func.func @transform_4(%arg0: i32) -> (i32, i32) {
    %c0_i32 = arith.constant 0 : i32
    %c0_i32_0 = arith.constant 0 : i32
    %c0_i32_1 = arith.constant 0 : i32
    return %c0_i32, %c0_i32_0 : i32, i32
  }
}

module attributes {stable_mosaic.version = 11 : i64} {
  func.func @_phase_matmul_bn_relu_kernel(%arg0: i32, %arg1: memref<4x32x1024xbf16, #tpu.memory_space<vmem>>, %arg2: memref<4x1024x128xbf16, #tpu.memory_space<vmem>>, %arg3: memref<1x128xf32, #tpu.memory_space<vmem>>, %arg4: memref<1x128xf32, #tpu.memory_space<vmem>>, %arg5: memref<4x32x128xf32, #tpu.memory_space<vmem>>) attributes {dimension_semantics = [#tpu.dimension_semantics<arbitrary>], iteration_bounds = array<i64: 1>, scalar_prefetch = 0 : i64, scratch_operands = 0 : i64, tpu.core_type = #tpu.core_type<tc>, window_params = [{pipeline_mode = #tpu.pipeline_mode<synchronous>, transform_indices = @transform_0, window_bounds = array<i64: 4, 32, 1024>}, {pipeline_mode = #tpu.pipeline_mode<synchronous>, transform_indices = @transform_1, window_bounds = array<i64: 4, 1024, 128>}, {pipeline_mode = #tpu.pipeline_mode<synchronous>, transform_indices = @transform_2, window_bounds = array<i64: 1, 128>}, {pipeline_mode = #tpu.pipeline_mode<synchronous>, transform_indices = @transform_3, window_bounds = array<i64: 1, 128>}, {pipeline_mode = #tpu.pipeline_mode<synchronous>, transform_indices = @transform_4, window_bounds = array<i64: 4, 32, 128>}]} {
    %cst = arith.constant 0.000000e+00 : f32
    %0 = vector.broadcast %cst : f32 to vector<1x128xf32>
    %cst_0 = arith.constant 0.000000e+00 : f32
    %1 = vector.broadcast %cst_0 : f32 to vector<1x128xf32>
    %c0 = arith.constant 0 : index
    %c0_1 = arith.constant 0 : index
    %c0_2 = arith.constant 0 : index
    %2 = vector.load %arg1[%c0, %c0_1, %c0_2] : memref<4x32x1024xbf16, #tpu.memory_space<vmem>>, vector<1x32x1024xbf16>
    %3 = vector.shape_cast %2 : vector<1x32x1024xbf16> to vector<32x1024xbf16>
    %c0_3 = arith.constant 0 : index
    %c0_4 = arith.constant 0 : index
    %c0_5 = arith.constant 0 : index
    %4 = vector.load %arg2[%c0_3, %c0_4, %c0_5] : memref<4x1024x128xbf16, #tpu.memory_space<vmem>>, vector<1x1024x128xbf16>
    %5 = vector.shape_cast %4 : vector<1x1024x128xbf16> to vector<1024x128xbf16>
    %cst_6 = arith.constant dense<0.000000e+00> : vector<32x128xf32>
    %6 = tpu.matmul %3, %5, %cst_6 {dimension_numbers = #tpu.dot_dimension_numbers<[1], [0], [0], [1], [0, 0, 1, 1], [], []>} : vector<32x1024xbf16>, vector<1024x128xbf16>, vector<32x128xf32> -> vector<32x128xf32>
    %c0_7 = arith.constant 0 : index
    %c0_8 = arith.constant 0 : index
    %c0_9 = arith.constant 0 : index
    %7 = vector.load %arg5[%c0_7, %c0_8, %c0_9] : memref<4x32x128xf32, #tpu.memory_space<vmem>>, vector<1x32x128xf32>
    %8 = vector.shape_cast %7 : vector<1x32x128xf32> to vector<32x128xf32>
    %9 = vector.shape_cast %6 : vector<32x128xf32> to vector<1x32x128xf32>
    tpu.vector_store %arg5[%c0_7, %c0_8, %c0_9], %9 {strides = array<i32>} : memref<4x32x128xf32, #tpu.memory_space<vmem>>, vector<1x32x128xf32>,
    %cst_10 = arith.constant dense<0.000000e+00> : vector<128xf32>
    %10 = vector.multi_reduction <add>, %6, %cst_10 [0] : vector<32x128xf32> to vector<128xf32>
    %11 = vector.shape_cast %10 : vector<128xf32> to vector<1x128xf32>
    %12 = arith.addf %0, %11 : vector<1x128xf32>
    %13 = arith.mulf %6, %6 : vector<32x128xf32>
    %cst_11 = arith.constant dense<0.000000e+00> : vector<128xf32>
    %14 = vector.multi_reduction <add>, %13, %cst_11 [0] : vector<32x128xf32> to vector<128xf32>
    %15 = vector.shape_cast %14 : vector<128xf32> to vector<1x128xf32>
    %16 = arith.addf %1, %15 : vector<1x128xf32>
    %c1 = arith.constant 1 : index
    %c0_12 = arith.constant 0 : index
    %c0_13 = arith.constant 0 : index
    %17 = vector.load %arg1[%c1, %c0_12, %c0_13] : memref<4x32x1024xbf16, #tpu.memory_space<vmem>>, vector<1x32x1024xbf16>
    %18 = vector.shape_cast %17 : vector<1x32x1024xbf16> to vector<32x1024xbf16>
    %c1_14 = arith.constant 1 : index
    %c0_15 = arith.constant 0 : index
    %c0_16 = arith.constant 0 : index
    %19 = vector.load %arg2[%c1_14, %c0_15, %c0_16] : memref<4x1024x128xbf16, #tpu.memory_space<vmem>>, vector<1x1024x128xbf16>
    %20 = vector.shape_cast %19 : vector<1x1024x128xbf16> to vector<1024x128xbf16>
    %cst_17 = arith.constant dense<0.000000e+00> : vector<32x128xf32>
    %21 = tpu.matmul %18, %20, %cst_17 {dimension_numbers = #tpu.dot_dimension_numbers<[1], [0], [0], [1], [0, 0, 1, 1], [], []>} : vector<32x1024xbf16>, vector<1024x128xbf16>, vector<32x128xf32> -> vector<32x128xf32>
    %c1_18 = arith.constant 1 : index
    %c0_19 = arith.constant 0 : index
    %c0_20 = arith.constant 0 : index
    %22 = vector.load %arg5[%c1_18, %c0_19, %c0_20] : memref<4x32x128xf32, #tpu.memory_space<vmem>>, vector<1x32x128xf32>
    %23 = vector.shape_cast %22 : vector<1x32x128xf32> to vector<32x128xf32>
    %24 = vector.shape_cast %21 : vector<32x128xf32> to vector<1x32x128xf32>
    tpu.vector_store %arg5[%c1_18, %c0_19, %c0_20], %24 {strides = array<i32>} : memref<4x32x128xf32, #tpu.memory_space<vmem>>, vector<1x32x128xf32>,
    %cst_21 = arith.constant dense<0.000000e+00> : vector<128xf32>
    %25 = vector.multi_reduction <add>, %21, %cst_21 [0] : vector<32x128xf32> to vector<128xf32>
    %26 = vector.shape_cast %25 : vector<128xf32> to vector<1x128xf32>
    %27 = arith.addf %12, %26 : vector<1x128xf32>
    %28 = arith.mulf %21, %21 : vector<32x128xf32>
    %cst_22 = arith.constant dense<0.000000e+00> : vector<128xf32>
    %29 = vector.multi_reduction <add>, %28, %cst_22 [0] : vector<32x128xf32> to vector<128xf32>
    %30 = vector.shape_cast %29 : vector<128xf32> to vector<1x128xf32>
    %31 = arith.addf %16, %30 : vector<1x128xf32>
    %c2 = arith.constant 2 : index
    %c0_23 = arith.constant 0 : index
    %c0_24 = arith.constant 0 : index
    %32 = vector.load %arg1[%c2, %c0_23, %c0_24] : memref<4x32x1024xbf16, #tpu.memory_space<vmem>>, vector<1x32x1024xbf16>
    %33 = vector.shape_cast %32 : vector<1x32x1024xbf16> to vector<32x1024xbf16>
    %c2_25 = arith.constant 2 : index
    %c0_26 = arith.constant 0 : index
    %c0_27 = arith.constant 0 : index
    %34 = vector.load %arg2[%c2_25, %c0_26, %c0_27] : memref<4x1024x128xbf16, #tpu.memory_space<vmem>>, vector<1x1024x128xbf16>
    %35 = vector.shape_cast %34 : vector<1x1024x128xbf16> to vector<1024x128xbf16>
    %cst_28 = arith.constant dense<0.000000e+00> : vector<32x128xf32>
    %36 = tpu.matmul %33, %35, %cst_28 {dimension_numbers = #tpu.dot_dimension_numbers<[1], [0], [0], [1], [0, 0, 1, 1], [], []>} : vector<32x1024xbf16>, vector<1024x128xbf16>, vector<32x128xf32> -> vector<32x128xf32>
    %c2_29 = arith.constant 2 : index
    %c0_30 = arith.constant 0 : index
    %c0_31 = arith.constant 0 : index
    %37 = vector.load %arg5[%c2_29, %c0_30, %c0_31] : memref<4x32x128xf32, #tpu.memory_space<vmem>>, vector<1x32x128xf32>
    %38 = vector.shape_cast %37 : vector<1x32x128xf32> to vector<32x128xf32>
    %39 = vector.shape_cast %36 : vector<32x128xf32> to vector<1x32x128xf32>
    tpu.vector_store %arg5[%c2_29, %c0_30, %c0_31], %39 {strides = array<i32>} : memref<4x32x128xf32, #tpu.memory_space<vmem>>, vector<1x32x128xf32>,
    %cst_32 = arith.constant dense<0.000000e+00> : vector<128xf32>
    %40 = vector.multi_reduction <add>, %36, %cst_32 [0] : vector<32x128xf32> to vector<128xf32>
    %41 = vector.shape_cast %40 : vector<128xf32> to vector<1x128xf32>
    %42 = arith.addf %27, %41 : vector<1x128xf32>
    %43 = arith.mulf %36, %36 : vector<32x128xf32>
    %cst_33 = arith.constant dense<0.000000e+00> : vector<128xf32>
    %44 = vector.multi_reduction <add>, %43, %cst_33 [0] : vector<32x128xf32> to vector<128xf32>
    %45 = vector.shape_cast %44 : vector<128xf32> to vector<1x128xf32>
    %46 = arith.addf %31, %45 : vector<1x128xf32>
    %c3 = arith.constant 3 : index
    %c0_34 = arith.constant 0 : index
    %c0_35 = arith.constant 0 : index
    %47 = vector.load %arg1[%c3, %c0_34, %c0_35] : memref<4x32x1024xbf16, #tpu.memory_space<vmem>>, vector<1x32x1024xbf16>
    %48 = vector.shape_cast %47 : vector<1x32x1024xbf16> to vector<32x1024xbf16>
    %c3_36 = arith.constant 3 : index
    %c0_37 = arith.constant 0 : index
    %c0_38 = arith.constant 0 : index
    %49 = vector.load %arg2[%c3_36, %c0_37, %c0_38] : memref<4x1024x128xbf16, #tpu.memory_space<vmem>>, vector<1x1024x128xbf16>
    %50 = vector.shape_cast %49 : vector<1x1024x128xbf16> to vector<1024x128xbf16>
    %cst_39 = arith.constant dense<0.000000e+00> : vector<32x128xf32>
    %51 = tpu.matmul %48, %50, %cst_39 {dimension_numbers = #tpu.dot_dimension_numbers<[1], [0], [0], [1], [0, 0, 1, 1], [], []>} : vector<32x1024xbf16>, vector<1024x128xbf16>, vector<32x128xf32> -> vector<32x128xf32>
    %c3_40 = arith.constant 3 : index
    %c0_41 = arith.constant 0 : index
    %c0_42 = arith.constant 0 : index
    %52 = vector.load %arg5[%c3_40, %c0_41, %c0_42] : memref<4x32x128xf32, #tpu.memory_space<vmem>>, vector<1x32x128xf32>
    %53 = vector.shape_cast %52 : vector<1x32x128xf32> to vector<32x128xf32>
    %54 = vector.shape_cast %51 : vector<32x128xf32> to vector<1x32x128xf32>
    tpu.vector_store %arg5[%c3_40, %c0_41, %c0_42], %54 {strides = array<i32>} : memref<4x32x128xf32, #tpu.memory_space<vmem>>, vector<1x32x128xf32>,
    %cst_43 = arith.constant dense<0.000000e+00> : vector<128xf32>
    %55 = vector.multi_reduction <add>, %51, %cst_43 [0] : vector<32x128xf32> to vector<128xf32>
    %56 = vector.shape_cast %55 : vector<128xf32> to vector<1x128xf32>
    %57 = arith.addf %42, %56 : vector<1x128xf32>
    %58 = arith.mulf %51, %51 : vector<32x128xf32>
    %cst_44 = arith.constant dense<0.000000e+00> : vector<128xf32>
    %59 = vector.multi_reduction <add>, %58, %cst_44 [0] : vector<32x128xf32> to vector<128xf32>
    %60 = vector.shape_cast %59 : vector<128xf32> to vector<1x128xf32>
    %61 = arith.addf %46, %60 : vector<1x128xf32>
    %cst_45 = arith.constant 1.280000e+02 : f32
    %62 = vector.broadcast %cst_45 : f32 to vector<1x128xf32>
    %63 = arith.divf %57, %62 : vector<1x128xf32>
    %cst_46 = arith.constant 1.280000e+02 : f32
    %64 = vector.broadcast %cst_46 : f32 to vector<1x128xf32>
    %65 = arith.divf %61, %64 : vector<1x128xf32>
    %66 = arith.mulf %63, %63 : vector<1x128xf32>
    %67 = arith.subf %65, %66 : vector<1x128xf32>
    %c0_47 = arith.constant 0 : index
    %c0_48 = arith.constant 0 : index
    %68 = vector.load %arg3[%c0_47, %c0_48] : memref<1x128xf32, #tpu.memory_space<vmem>>, vector<1x128xf32>
    %cst_49 = arith.constant 9.99999974E-6 : f32
    %69 = vector.broadcast %cst_49 : f32 to vector<1x128xf32>
    %70 = arith.addf %67, %69 : vector<1x128xf32>
    %71 = math.rsqrt %70 : vector<1x128xf32>
    %72 = arith.mulf %68, %71 : vector<1x128xf32>
    %c0_50 = arith.constant 0 : index
    %c0_51 = arith.constant 0 : index
    %73 = vector.load %arg4[%c0_50, %c0_51] : memref<1x128xf32, #tpu.memory_space<vmem>>, vector<1x128xf32>
    %74 = arith.mulf %63, %72 : vector<1x128xf32>
    %75 = arith.subf %73, %74 : vector<1x128xf32>
    %c0_52 = arith.constant 0 : index
    %c0_53 = arith.constant 0 : index
    %c0_54 = arith.constant 0 : index
    %76 = vector.load %arg5[%c0_52, %c0_53, %c0_54] : memref<4x32x128xf32, #tpu.memory_space<vmem>>, vector<1x32x128xf32>
    %77 = vector.shape_cast %76 : vector<1x32x128xf32> to vector<32x128xf32>
    %78 = vector.broadcast %72 : vector<1x128xf32> to vector<32x128xf32>
    %79 = arith.mulf %77, %78 : vector<32x128xf32>
    %80 = vector.broadcast %75 : vector<1x128xf32> to vector<32x128xf32>
    %81 = arith.addf %79, %80 : vector<32x128xf32>
    %cst_55 = arith.constant 0.000000e+00 : f32
    %82 = vector.broadcast %cst_55 : f32 to vector<32x128xf32>
    %83 = arith.maximumf %81, %82 : vector<32x128xf32>
    %c0_56 = arith.constant 0 : index
    %c0_57 = arith.constant 0 : index
    %c0_58 = arith.constant 0 : index
    %84 = vector.load %arg5[%c0_56, %c0_57, %c0_58] : memref<4x32x128xf32, #tpu.memory_space<vmem>>, vector<1x32x128xf32>
    %85 = vector.shape_cast %84 : vector<1x32x128xf32> to vector<32x128xf32>
    %86 = vector.shape_cast %83 : vector<32x128xf32> to vector<1x32x128xf32>
    tpu.vector_store %arg5[%c0_56, %c0_57, %c0_58], %86 {strides = array<i32>} : memref<4x32x128xf32, #tpu.memory_space<vmem>>, vector<1x32x128xf32>,
    %c1_59 = arith.constant 1 : index
    %c0_60 = arith.constant 0 : index
    %c0_61 = arith.constant 0 : index
    %87 = vector.load %arg5[%c1_59, %c0_60, %c0_61] : memref<4x32x128xf32, #tpu.memory_space<vmem>>, vector<1x32x128xf32>
    %88 = vector.shape_cast %87 : vector<1x32x128xf32> to vector<32x128xf32>
    %89 = vector.broadcast %72 : vector<1x128xf32> to vector<32x128xf32>
    %90 = arith.mulf %88, %89 : vector<32x128xf32>
    %91 = vector.broadcast %75 : vector<1x128xf32> to vector<32x128xf32>
    %92 = arith.addf %90, %91 : vector<32x128xf32>
    %cst_62 = arith.constant 0.000000e+00 : f32
    %93 = vector.broadcast %cst_62 : f32 to vector<32x128xf32>
    %94 = arith.maximumf %92, %93 : vector<32x128xf32>
    %c1_63 = arith.constant 1 : index
    %c0_64 = arith.constant 0 : index
    %c0_65 = arith.constant 0 : index
    %95 = vector.load %arg5[%c1_63, %c0_64, %c0_65] : memref<4x32x128xf32, #tpu.memory_space<vmem>>, vector<1x32x128xf32>
    %96 = vector.shape_cast %95 : vector<1x32x128xf32> to vector<32x128xf32>
    %97 = vector.shape_cast %94 : vector<32x128xf32> to vector<1x32x128xf32>
    tpu.vector_store %arg5[%c1_63, %c0_64, %c0_65], %97 {strides = array<i32>} : memref<4x32x128xf32, #tpu.memory_space<vmem>>, vector<1x32x128xf32>,
    %c2_66 = arith.constant 2 : index
    %c0_67 = arith.constant 0 : index
    %c0_68 = arith.constant 0 : index
    %98 = vector.load %arg5[%c2_66, %c0_67, %c0_68] : memref<4x32x128xf32, #tpu.memory_space<vmem>>, vector<1x32x128xf32>
    %99 = vector.shape_cast %98 : vector<1x32x128xf32> to vector<32x128xf32>
    %100 = vector.broadcast %72 : vector<1x128xf32> to vector<32x128xf32>
    %101 = arith.mulf %99, %100 : vector<32x128xf32>
    %102 = vector.broadcast %75 : vector<1x128xf32> to vector<32x128xf32>
    %103 = arith.addf %101, %102 : vector<32x128xf32>
    %cst_69 = arith.constant 0.000000e+00 : f32
    %104 = vector.broadcast %cst_69 : f32 to vector<32x128xf32>
    %105 = arith.maximumf %103, %104 : vector<32x128xf32>
    %c2_70 = arith.constant 2 : index
    %c0_71 = arith.constant 0 : index
    %c0_72 = arith.constant 0 : index
    %106 = vector.load %arg5[%c2_70, %c0_71, %c0_72] : memref<4x32x128xf32, #tpu.memory_space<vmem>>, vector<1x32x128xf32>
    %107 = vector.shape_cast %106 : vector<1x32x128xf32> to vector<32x128xf32>
    %108 = vector.shape_cast %105 : vector<32x128xf32> to vector<1x32x128xf32>
    tpu.vector_store %arg5[%c2_70, %c0_71, %c0_72], %108 {strides = array<i32>} : memref<4x32x128xf32, #tpu.memory_space<vmem>>, vector<1x32x128xf32>,
    %c3_73 = arith.constant 3 : index
    %c0_74 = arith.constant 0 : index
    %c0_75 = arith.constant 0 : index
    %109 = vector.load %arg5[%c3_73, %c0_74, %c0_75] : memref<4x32x128xf32, #tpu.memory_space<vmem>>, vector<1x32x128xf32>
    %110 = vector.shape_cast %109 : vector<1x32x128xf32> to vector<32x128xf32>
    %111 = vector.broadcast %72 : vector<1x128xf32> to vector<32x128xf32>
    %112 = arith.mulf %110, %111 : vector<32x128xf32>
    %113 = vector.broadcast %75 : vector<1x128xf32> to vector<32x128xf32>
    %114 = arith.addf %112, %113 : vector<32x128xf32>
    %cst_76 = arith.constant 0.000000e+00 : f32
    %115 = vector.broadcast %cst_76 : f32 to vector<32x128xf32>
    %116 = arith.maximumf %114, %115 : vector<32x128xf32>
    %c3_77 = arith.constant 3 : index
    %c0_78 = arith.constant 0 : index
    %c0_79 = arith.constant 0 : index
    %117 = vector.load %arg5[%c3_77, %c0_78, %c0_79] : memref<4x32x128xf32, #tpu.memory_space<vmem>>, vector<1x32x128xf32>
    %118 = vector.shape_cast %117 : vector<1x32x128xf32> to vector<32x128xf32>
    %119 = vector.shape_cast %116 : vector<32x128xf32> to vector<1x32x128xf32>
    tpu.vector_store %arg5[%c3_77, %c0_78, %c0_79], %119 {strides = array<i32>} : memref<4x32x128xf32, #tpu.memory_space<vmem>>, vector<1x32x128xf32>,
    return
  }
  func.func @transform_0(%arg0: i32) -> (i32, i32, i32) {
    %c0_i32 = arith.constant 0 : i32
    %c0_i32_0 = arith.constant 0 : i32
    %c0_i32_1 = arith.constant 0 : i32
    %c0_i32_2 = arith.constant 0 : i32
    return %c0_i32, %c0_i32_0, %c0_i32_1 : i32, i32, i32
  }
  func.func @transform_1(%arg0: i32) -> (i32, i32, i32) {
    %c0_i32 = arith.constant 0 : i32
    %c0_i32_0 = arith.constant 0 : i32
    %c0_i32_1 = arith.constant 0 : i32
    %c0_i32_2 = arith.constant 0 : i32
    return %c0_i32, %c0_i32_0, %c0_i32_1 : i32, i32, i32
  }
  func.func @transform_2(%arg0: i32) -> (i32, i32) {
    %c0_i32 = arith.constant 0 : i32
    %c0_i32_0 = arith.constant 0 : i32
    %c0_i32_1 = arith.constant 0 : i32
    return %c0_i32, %c0_i32_0 : i32, i32
  }
  func.func @transform_3(%arg0: i32) -> (i32, i32) {
    %c0_i32 = arith.constant 0 : i32
    %c0_i32_0 = arith.constant 0 : i32
    %c0_i32_1 = arith.constant 0 : i32
    return %c0_i32, %c0_i32_0 : i32, i32
  }
  func.func @transform_4(%arg0: i32) -> (i32, i32, i32) {
    %c0_i32 = arith.constant 0 : i32
    %c0_i32_0 = arith.constant 0 : i32
    %c0_i32_1 = arith.constant 0 : i32
    %c0_i32_2 = arith.constant 0 : i32
    return %c0_i32, %c0_i32_0, %c0_i32_1 : i32, i32, i32
  }
}

module attributes {stable_mosaic.version = 11 : i64} {
  func.func @_phase_matmul_bn_relu_kernel(%arg0: i32, %arg1: memref<4x128x512xbf16, #tpu.memory_space<vmem>>, %arg2: memref<4x512x128xbf16, #tpu.memory_space<vmem>>, %arg3: memref<1x128xf32, #tpu.memory_space<vmem>>, %arg4: memref<1x128xf32, #tpu.memory_space<vmem>>, %arg5: memref<4x128x128xf32, #tpu.memory_space<vmem>>) attributes {dimension_semantics = [#tpu.dimension_semantics<arbitrary>], iteration_bounds = array<i64: 1>, scalar_prefetch = 0 : i64, scratch_operands = 0 : i64, tpu.core_type = #tpu.core_type<tc>, window_params = [{pipeline_mode = #tpu.pipeline_mode<synchronous>, transform_indices = @transform_0, window_bounds = array<i64: 4, 128, 512>}, {pipeline_mode = #tpu.pipeline_mode<synchronous>, transform_indices = @transform_1, window_bounds = array<i64: 4, 512, 128>}, {pipeline_mode = #tpu.pipeline_mode<synchronous>, transform_indices = @transform_2, window_bounds = array<i64: 1, 128>}, {pipeline_mode = #tpu.pipeline_mode<synchronous>, transform_indices = @transform_3, window_bounds = array<i64: 1, 128>}, {pipeline_mode = #tpu.pipeline_mode<synchronous>, transform_indices = @transform_4, window_bounds = array<i64: 4, 128, 128>}]} {
    %cst = arith.constant 0.000000e+00 : f32
    %0 = vector.broadcast %cst : f32 to vector<1x128xf32>
    %cst_0 = arith.constant 0.000000e+00 : f32
    %1 = vector.broadcast %cst_0 : f32 to vector<1x128xf32>
    %c0 = arith.constant 0 : index
    %c0_1 = arith.constant 0 : index
    %c0_2 = arith.constant 0 : index
    %2 = vector.load %arg1[%c0, %c0_1, %c0_2] : memref<4x128x512xbf16, #tpu.memory_space<vmem>>, vector<1x128x512xbf16>
    %3 = vector.shape_cast %2 : vector<1x128x512xbf16> to vector<128x512xbf16>
    %c0_3 = arith.constant 0 : index
    %c0_4 = arith.constant 0 : index
    %c0_5 = arith.constant 0 : index
    %4 = vector.load %arg2[%c0_3, %c0_4, %c0_5] : memref<4x512x128xbf16, #tpu.memory_space<vmem>>, vector<1x512x128xbf16>
    %5 = vector.shape_cast %4 : vector<1x512x128xbf16> to vector<512x128xbf16>
    %cst_6 = arith.constant dense<0.000000e+00> : vector<128x128xf32>
    %6 = tpu.matmul %3, %5, %cst_6 {dimension_numbers = #tpu.dot_dimension_numbers<[1], [0], [0], [1], [0, 0, 1, 1], [], []>} : vector<128x512xbf16>, vector<512x128xbf16>, vector<128x128xf32> -> vector<128x128xf32>
    %c0_7 = arith.constant 0 : index
    %c0_8 = arith.constant 0 : index
    %c0_9 = arith.constant 0 : index
    %7 = vector.load %arg5[%c0_7, %c0_8, %c0_9] : memref<4x128x128xf32, #tpu.memory_space<vmem>>, vector<1x128x128xf32>
    %8 = vector.shape_cast %7 : vector<1x128x128xf32> to vector<128x128xf32>
    %9 = vector.shape_cast %6 : vector<128x128xf32> to vector<1x128x128xf32>
    tpu.vector_store %arg5[%c0_7, %c0_8, %c0_9], %9 {strides = array<i32>} : memref<4x128x128xf32, #tpu.memory_space<vmem>>, vector<1x128x128xf32>,
    %cst_10 = arith.constant dense<0.000000e+00> : vector<128xf32>
    %10 = vector.multi_reduction <add>, %6, %cst_10 [0] : vector<128x128xf32> to vector<128xf32>
    %11 = vector.shape_cast %10 : vector<128xf32> to vector<1x128xf32>
    %12 = arith.addf %0, %11 : vector<1x128xf32>
    %13 = arith.mulf %6, %6 : vector<128x128xf32>
    %cst_11 = arith.constant dense<0.000000e+00> : vector<128xf32>
    %14 = vector.multi_reduction <add>, %13, %cst_11 [0] : vector<128x128xf32> to vector<128xf32>
    %15 = vector.shape_cast %14 : vector<128xf32> to vector<1x128xf32>
    %16 = arith.addf %1, %15 : vector<1x128xf32>
    %c1 = arith.constant 1 : index
    %c0_12 = arith.constant 0 : index
    %c0_13 = arith.constant 0 : index
    %17 = vector.load %arg1[%c1, %c0_12, %c0_13] : memref<4x128x512xbf16, #tpu.memory_space<vmem>>, vector<1x128x512xbf16>
    %18 = vector.shape_cast %17 : vector<1x128x512xbf16> to vector<128x512xbf16>
    %c1_14 = arith.constant 1 : index
    %c0_15 = arith.constant 0 : index
    %c0_16 = arith.constant 0 : index
    %19 = vector.load %arg2[%c1_14, %c0_15, %c0_16] : memref<4x512x128xbf16, #tpu.memory_space<vmem>>, vector<1x512x128xbf16>
    %20 = vector.shape_cast %19 : vector<1x512x128xbf16> to vector<512x128xbf16>
    %cst_17 = arith.constant dense<0.000000e+00> : vector<128x128xf32>
    %21 = tpu.matmul %18, %20, %cst_17 {dimension_numbers = #tpu.dot_dimension_numbers<[1], [0], [0], [1], [0, 0, 1, 1], [], []>} : vector<128x512xbf16>, vector<512x128xbf16>, vector<128x128xf32> -> vector<128x128xf32>
    %c1_18 = arith.constant 1 : index
    %c0_19 = arith.constant 0 : index
    %c0_20 = arith.constant 0 : index
    %22 = vector.load %arg5[%c1_18, %c0_19, %c0_20] : memref<4x128x128xf32, #tpu.memory_space<vmem>>, vector<1x128x128xf32>
    %23 = vector.shape_cast %22 : vector<1x128x128xf32> to vector<128x128xf32>
    %24 = vector.shape_cast %21 : vector<128x128xf32> to vector<1x128x128xf32>
    tpu.vector_store %arg5[%c1_18, %c0_19, %c0_20], %24 {strides = array<i32>} : memref<4x128x128xf32, #tpu.memory_space<vmem>>, vector<1x128x128xf32>,
    %cst_21 = arith.constant dense<0.000000e+00> : vector<128xf32>
    %25 = vector.multi_reduction <add>, %21, %cst_21 [0] : vector<128x128xf32> to vector<128xf32>
    %26 = vector.shape_cast %25 : vector<128xf32> to vector<1x128xf32>
    %27 = arith.addf %12, %26 : vector<1x128xf32>
    %28 = arith.mulf %21, %21 : vector<128x128xf32>
    %cst_22 = arith.constant dense<0.000000e+00> : vector<128xf32>
    %29 = vector.multi_reduction <add>, %28, %cst_22 [0] : vector<128x128xf32> to vector<128xf32>
    %30 = vector.shape_cast %29 : vector<128xf32> to vector<1x128xf32>
    %31 = arith.addf %16, %30 : vector<1x128xf32>
    %c2 = arith.constant 2 : index
    %c0_23 = arith.constant 0 : index
    %c0_24 = arith.constant 0 : index
    %32 = vector.load %arg1[%c2, %c0_23, %c0_24] : memref<4x128x512xbf16, #tpu.memory_space<vmem>>, vector<1x128x512xbf16>
    %33 = vector.shape_cast %32 : vector<1x128x512xbf16> to vector<128x512xbf16>
    %c2_25 = arith.constant 2 : index
    %c0_26 = arith.constant 0 : index
    %c0_27 = arith.constant 0 : index
    %34 = vector.load %arg2[%c2_25, %c0_26, %c0_27] : memref<4x512x128xbf16, #tpu.memory_space<vmem>>, vector<1x512x128xbf16>
    %35 = vector.shape_cast %34 : vector<1x512x128xbf16> to vector<512x128xbf16>
    %cst_28 = arith.constant dense<0.000000e+00> : vector<128x128xf32>
    %36 = tpu.matmul %33, %35, %cst_28 {dimension_numbers = #tpu.dot_dimension_numbers<[1], [0], [0], [1], [0, 0, 1, 1], [], []>} : vector<128x512xbf16>, vector<512x128xbf16>, vector<128x128xf32> -> vector<128x128xf32>
    %c2_29 = arith.constant 2 : index
    %c0_30 = arith.constant 0 : index
    %c0_31 = arith.constant 0 : index
    %37 = vector.load %arg5[%c2_29, %c0_30, %c0_31] : memref<4x128x128xf32, #tpu.memory_space<vmem>>, vector<1x128x128xf32>
    %38 = vector.shape_cast %37 : vector<1x128x128xf32> to vector<128x128xf32>
    %39 = vector.shape_cast %36 : vector<128x128xf32> to vector<1x128x128xf32>
    tpu.vector_store %arg5[%c2_29, %c0_30, %c0_31], %39 {strides = array<i32>} : memref<4x128x128xf32, #tpu.memory_space<vmem>>, vector<1x128x128xf32>,
    %cst_32 = arith.constant dense<0.000000e+00> : vector<128xf32>
    %40 = vector.multi_reduction <add>, %36, %cst_32 [0] : vector<128x128xf32> to vector<128xf32>
    %41 = vector.shape_cast %40 : vector<128xf32> to vector<1x128xf32>
    %42 = arith.addf %27, %41 : vector<1x128xf32>
    %43 = arith.mulf %36, %36 : vector<128x128xf32>
    %cst_33 = arith.constant dense<0.000000e+00> : vector<128xf32>
    %44 = vector.multi_reduction <add>, %43, %cst_33 [0] : vector<128x128xf32> to vector<128xf32>
    %45 = vector.shape_cast %44 : vector<128xf32> to vector<1x128xf32>
    %46 = arith.addf %31, %45 : vector<1x128xf32>
    %c3 = arith.constant 3 : index
    %c0_34 = arith.constant 0 : index
    %c0_35 = arith.constant 0 : index
    %47 = vector.load %arg1[%c3, %c0_34, %c0_35] : memref<4x128x512xbf16, #tpu.memory_space<vmem>>, vector<1x128x512xbf16>
    %48 = vector.shape_cast %47 : vector<1x128x512xbf16> to vector<128x512xbf16>
    %c3_36 = arith.constant 3 : index
    %c0_37 = arith.constant 0 : index
    %c0_38 = arith.constant 0 : index
    %49 = vector.load %arg2[%c3_36, %c0_37, %c0_38] : memref<4x512x128xbf16, #tpu.memory_space<vmem>>, vector<1x512x128xbf16>
    %50 = vector.shape_cast %49 : vector<1x512x128xbf16> to vector<512x128xbf16>
    %cst_39 = arith.constant dense<0.000000e+00> : vector<128x128xf32>
    %51 = tpu.matmul %48, %50, %cst_39 {dimension_numbers = #tpu.dot_dimension_numbers<[1], [0], [0], [1], [0, 0, 1, 1], [], []>} : vector<128x512xbf16>, vector<512x128xbf16>, vector<128x128xf32> -> vector<128x128xf32>
    %c3_40 = arith.constant 3 : index
    %c0_41 = arith.constant 0 : index
    %c0_42 = arith.constant 0 : index
    %52 = vector.load %arg5[%c3_40, %c0_41, %c0_42] : memref<4x128x128xf32, #tpu.memory_space<vmem>>, vector<1x128x128xf32>
    %53 = vector.shape_cast %52 : vector<1x128x128xf32> to vector<128x128xf32>
    %54 = vector.shape_cast %51 : vector<128x128xf32> to vector<1x128x128xf32>
    tpu.vector_store %arg5[%c3_40, %c0_41, %c0_42], %54 {strides = array<i32>} : memref<4x128x128xf32, #tpu.memory_space<vmem>>, vector<1x128x128xf32>,
    %cst_43 = arith.constant dense<0.000000e+00> : vector<128xf32>
    %55 = vector.multi_reduction <add>, %51, %cst_43 [0] : vector<128x128xf32> to vector<128xf32>
    %56 = vector.shape_cast %55 : vector<128xf32> to vector<1x128xf32>
    %57 = arith.addf %42, %56 : vector<1x128xf32>
    %58 = arith.mulf %51, %51 : vector<128x128xf32>
    %cst_44 = arith.constant dense<0.000000e+00> : vector<128xf32>
    %59 = vector.multi_reduction <add>, %58, %cst_44 [0] : vector<128x128xf32> to vector<128xf32>
    %60 = vector.shape_cast %59 : vector<128xf32> to vector<1x128xf32>
    %61 = arith.addf %46, %60 : vector<1x128xf32>
    %cst_45 = arith.constant 5.120000e+02 : f32
    %62 = vector.broadcast %cst_45 : f32 to vector<1x128xf32>
    %63 = arith.divf %57, %62 : vector<1x128xf32>
    %cst_46 = arith.constant 5.120000e+02 : f32
    %64 = vector.broadcast %cst_46 : f32 to vector<1x128xf32>
    %65 = arith.divf %61, %64 : vector<1x128xf32>
    %66 = arith.mulf %63, %63 : vector<1x128xf32>
    %67 = arith.subf %65, %66 : vector<1x128xf32>
    %c0_47 = arith.constant 0 : index
    %c0_48 = arith.constant 0 : index
    %68 = vector.load %arg3[%c0_47, %c0_48] : memref<1x128xf32, #tpu.memory_space<vmem>>, vector<1x128xf32>
    %cst_49 = arith.constant 9.99999974E-6 : f32
    %69 = vector.broadcast %cst_49 : f32 to vector<1x128xf32>
    %70 = arith.addf %67, %69 : vector<1x128xf32>
    %71 = math.rsqrt %70 : vector<1x128xf32>
    %72 = arith.mulf %68, %71 : vector<1x128xf32>
    %c0_50 = arith.constant 0 : index
    %c0_51 = arith.constant 0 : index
    %73 = vector.load %arg4[%c0_50, %c0_51] : memref<1x128xf32, #tpu.memory_space<vmem>>, vector<1x128xf32>
    %74 = arith.mulf %63, %72 : vector<1x128xf32>
    %75 = arith.subf %73, %74 : vector<1x128xf32>
    %c0_52 = arith.constant 0 : index
    %c0_53 = arith.constant 0 : index
    %c0_54 = arith.constant 0 : index
    %76 = vector.load %arg5[%c0_52, %c0_53, %c0_54] : memref<4x128x128xf32, #tpu.memory_space<vmem>>, vector<1x128x128xf32>
    %77 = vector.shape_cast %76 : vector<1x128x128xf32> to vector<128x128xf32>
    %78 = vector.broadcast %72 : vector<1x128xf32> to vector<128x128xf32>
    %79 = arith.mulf %77, %78 : vector<128x128xf32>
    %80 = vector.broadcast %75 : vector<1x128xf32> to vector<128x128xf32>
    %81 = arith.addf %79, %80 : vector<128x128xf32>
    %cst_55 = arith.constant 0.000000e+00 : f32
    %82 = vector.broadcast %cst_55 : f32 to vector<128x128xf32>
    %83 = arith.maximumf %81, %82 : vector<128x128xf32>
    %c0_56 = arith.constant 0 : index
    %c0_57 = arith.constant 0 : index
    %c0_58 = arith.constant 0 : index
    %84 = vector.load %arg5[%c0_56, %c0_57, %c0_58] : memref<4x128x128xf32, #tpu.memory_space<vmem>>, vector<1x128x128xf32>
    %85 = vector.shape_cast %84 : vector<1x128x128xf32> to vector<128x128xf32>
    %86 = vector.shape_cast %83 : vector<128x128xf32> to vector<1x128x128xf32>
    tpu.vector_store %arg5[%c0_56, %c0_57, %c0_58], %86 {strides = array<i32>} : memref<4x128x128xf32, #tpu.memory_space<vmem>>, vector<1x128x128xf32>,
    %c1_59 = arith.constant 1 : index
    %c0_60 = arith.constant 0 : index
    %c0_61 = arith.constant 0 : index
    %87 = vector.load %arg5[%c1_59, %c0_60, %c0_61] : memref<4x128x128xf32, #tpu.memory_space<vmem>>, vector<1x128x128xf32>
    %88 = vector.shape_cast %87 : vector<1x128x128xf32> to vector<128x128xf32>
    %89 = vector.broadcast %72 : vector<1x128xf32> to vector<128x128xf32>
    %90 = arith.mulf %88, %89 : vector<128x128xf32>
    %91 = vector.broadcast %75 : vector<1x128xf32> to vector<128x128xf32>
    %92 = arith.addf %90, %91 : vector<128x128xf32>
    %cst_62 = arith.constant 0.000000e+00 : f32
    %93 = vector.broadcast %cst_62 : f32 to vector<128x128xf32>
    %94 = arith.maximumf %92, %93 : vector<128x128xf32>
    %c1_63 = arith.constant 1 : index
    %c0_64 = arith.constant 0 : index
    %c0_65 = arith.constant 0 : index
    %95 = vector.load %arg5[%c1_63, %c0_64, %c0_65] : memref<4x128x128xf32, #tpu.memory_space<vmem>>, vector<1x128x128xf32>
    %96 = vector.shape_cast %95 : vector<1x128x128xf32> to vector<128x128xf32>
    %97 = vector.shape_cast %94 : vector<128x128xf32> to vector<1x128x128xf32>
    tpu.vector_store %arg5[%c1_63, %c0_64, %c0_65], %97 {strides = array<i32>} : memref<4x128x128xf32, #tpu.memory_space<vmem>>, vector<1x128x128xf32>,
    %c2_66 = arith.constant 2 : index
    %c0_67 = arith.constant 0 : index
    %c0_68 = arith.constant 0 : index
    %98 = vector.load %arg5[%c2_66, %c0_67, %c0_68] : memref<4x128x128xf32, #tpu.memory_space<vmem>>, vector<1x128x128xf32>
    %99 = vector.shape_cast %98 : vector<1x128x128xf32> to vector<128x128xf32>
    %100 = vector.broadcast %72 : vector<1x128xf32> to vector<128x128xf32>
    %101 = arith.mulf %99, %100 : vector<128x128xf32>
    %102 = vector.broadcast %75 : vector<1x128xf32> to vector<128x128xf32>
    %103 = arith.addf %101, %102 : vector<128x128xf32>
    %cst_69 = arith.constant 0.000000e+00 : f32
    %104 = vector.broadcast %cst_69 : f32 to vector<128x128xf32>
    %105 = arith.maximumf %103, %104 : vector<128x128xf32>
    %c2_70 = arith.constant 2 : index
    %c0_71 = arith.constant 0 : index
    %c0_72 = arith.constant 0 : index
    %106 = vector.load %arg5[%c2_70, %c0_71, %c0_72] : memref<4x128x128xf32, #tpu.memory_space<vmem>>, vector<1x128x128xf32>
    %107 = vector.shape_cast %106 : vector<1x128x128xf32> to vector<128x128xf32>
    %108 = vector.shape_cast %105 : vector<128x128xf32> to vector<1x128x128xf32>
    tpu.vector_store %arg5[%c2_70, %c0_71, %c0_72], %108 {strides = array<i32>} : memref<4x128x128xf32, #tpu.memory_space<vmem>>, vector<1x128x128xf32>,
    %c3_73 = arith.constant 3 : index
    %c0_74 = arith.constant 0 : index
    %c0_75 = arith.constant 0 : index
    %109 = vector.load %arg5[%c3_73, %c0_74, %c0_75] : memref<4x128x128xf32, #tpu.memory_space<vmem>>, vector<1x128x128xf32>
    %110 = vector.shape_cast %109 : vector<1x128x128xf32> to vector<128x128xf32>
    %111 = vector.broadcast %72 : vector<1x128xf32> to vector<128x128xf32>
    %112 = arith.mulf %110, %111 : vector<128x128xf32>
    %113 = vector.broadcast %75 : vector<1x128xf32> to vector<128x128xf32>
    %114 = arith.addf %112, %113 : vector<128x128xf32>
    %cst_76 = arith.constant 0.000000e+00 : f32
    %115 = vector.broadcast %cst_76 : f32 to vector<128x128xf32>
    %116 = arith.maximumf %114, %115 : vector<128x128xf32>
    %c3_77 = arith.constant 3 : index
    %c0_78 = arith.constant 0 : index
    %c0_79 = arith.constant 0 : index
    %117 = vector.load %arg5[%c3_77, %c0_78, %c0_79] : memref<4x128x128xf32, #tpu.memory_space<vmem>>, vector<1x128x128xf32>
    %118 = vector.shape_cast %117 : vector<1x128x128xf32> to vector<128x128xf32>
    %119 = vector.shape_cast %116 : vector<128x128xf32> to vector<1x128x128xf32>
    tpu.vector_store %arg5[%c3_77, %c0_78, %c0_79], %119 {strides = array<i32>} : memref<4x128x128xf32, #tpu.memory_space<vmem>>, vector<1x128x128xf32>,
    return
  }
  func.func @transform_0(%arg0: i32) -> (i32, i32, i32) {
    %c0_i32 = arith.constant 0 : i32
    %c0_i32_0 = arith.constant 0 : i32
    %c0_i32_1 = arith.constant 0 : i32
    %c0_i32_2 = arith.constant 0 : i32
    return %c0_i32, %c0_i32_0, %c0_i32_1 : i32, i32, i32
  }
  func.func @transform_1(%arg0: i32) -> (i32, i32, i32) {
    %c0_i32 = arith.constant 0 : i32
    %c0_i32_0 = arith.constant 0 : i32
    %c0_i32_1 = arith.constant 0 : i32
    %c0_i32_2 = arith.constant 0 : i32
    return %c0_i32, %c0_i32_0, %c0_i32_1 : i32, i32, i32
  }
  func.func @transform_2(%arg0: i32) -> (i32, i32) {
    %c0_i32 = arith.constant 0 : i32
    %c0_i32_0 = arith.constant 0 : i32
    %c0_i32_1 = arith.constant 0 : i32
    return %c0_i32, %c0_i32_0 : i32, i32
  }
  func.func @transform_3(%arg0: i32) -> (i32, i32) {
    %c0_i32 = arith.constant 0 : i32
    %c0_i32_0 = arith.constant 0 : i32
    %c0_i32_1 = arith.constant 0 : i32
    return %c0_i32, %c0_i32_0 : i32, i32
  }
  func.func @transform_4(%arg0: i32) -> (i32, i32, i32) {
    %c0_i32 = arith.constant 0 : i32
    %c0_i32_0 = arith.constant 0 : i32
    %c0_i32_1 = arith.constant 0 : i32
    %c0_i32_2 = arith.constant 0 : i32
    return %c0_i32, %c0_i32_0, %c0_i32_1 : i32, i32, i32
  }
}

module attributes {stable_mosaic.version = 11 : i64} {
  func.func @_phase_matmul_tanh_kernel(%arg0: i32, %arg1: memref<1x512x256xbf16, #tpu.memory_space<vmem>>, %arg2: memref<1x256x128xbf16, #tpu.memory_space<vmem>>, %arg3: memref<1x512x128xf32, #tpu.memory_space<vmem>>) attributes {dimension_semantics = [#tpu.dimension_semantics<parallel>], iteration_bounds = array<i64: 4>, scalar_prefetch = 0 : i64, scratch_operands = 0 : i64, tpu.core_type = #tpu.core_type<tc>, window_params = [{transform_indices = @transform_0, window_bounds = array<i64: 1, 512, 256>}, {transform_indices = @transform_1, window_bounds = array<i64: 1, 256, 128>}, {transform_indices = @transform_2, window_bounds = array<i64: 1, 512, 128>}]} {
    %c0 = arith.constant 0 : index
    %c0_0 = arith.constant 0 : index
    %c0_1 = arith.constant 0 : index
    %0 = vector.load %arg1[%c0, %c0_0, %c0_1] : memref<1x512x256xbf16, #tpu.memory_space<vmem>>, vector<1x512x256xbf16>
    %1 = vector.shape_cast %0 : vector<1x512x256xbf16> to vector<512x256xbf16>
    %c0_2 = arith.constant 0 : index
    %c0_3 = arith.constant 0 : index
    %c0_4 = arith.constant 0 : index
    %2 = vector.load %arg2[%c0_2, %c0_3, %c0_4] : memref<1x256x128xbf16, #tpu.memory_space<vmem>>, vector<1x256x128xbf16>
    %3 = vector.shape_cast %2 : vector<1x256x128xbf16> to vector<256x128xbf16>
    %cst = arith.constant dense<0.000000e+00> : vector<512x128xf32>
    %4 = tpu.matmul %1, %3, %cst {dimension_numbers = #tpu.dot_dimension_numbers<[1], [0], [0], [1], [0, 0, 1, 1], [], []>} : vector<512x256xbf16>, vector<256x128xbf16>, vector<512x128xf32> -> vector<512x128xf32>
    %5 = math.tanh %4 : vector<512x128xf32>
    %c0_5 = arith.constant 0 : index
    %c0_6 = arith.constant 0 : index
    %c0_7 = arith.constant 0 : index
    %6 = vector.load %arg3[%c0_5, %c0_6, %c0_7] : memref<1x512x128xf32, #tpu.memory_space<vmem>>, vector<1x512x128xf32>
    %7 = vector.shape_cast %6 : vector<1x512x128xf32> to vector<512x128xf32>
    %8 = vector.shape_cast %5 : vector<512x128xf32> to vector<1x512x128xf32>
    tpu.vector_store %arg3[%c0_5, %c0_6, %c0_7], %8 {strides = array<i32>} : memref<1x512x128xf32, #tpu.memory_space<vmem>>, vector<1x512x128xf32>,
    return
  }
  func.func @transform_0(%arg0: i32) -> (i32, i32, i32) {
    %c0_i32 = arith.constant 0 : i32
    %c0_i32_0 = arith.constant 0 : i32
    %c0_i32_1 = arith.constant 0 : i32
    return %arg0, %c0_i32, %c0_i32_0 : i32, i32, i32
  }
  func.func @transform_1(%arg0: i32) -> (i32, i32, i32) {
    %c0_i32 = arith.constant 0 : i32
    %c0_i32_0 = arith.constant 0 : i32
    %c0_i32_1 = arith.constant 0 : i32
    return %arg0, %c0_i32, %c0_i32_0 : i32, i32, i32
  }
  func.func @transform_2(%arg0: i32) -> (i32, i32, i32) {
    %c0_i32 = arith.constant 0 : i32
    %c0_i32_0 = arith.constant 0 : i32
    %c0_i32_1 = arith.constant 0 : i32
    return %arg0, %c0_i32, %c0_i32_0 : i32, i32, i32
  }
}

</mosaic_0001>

<llo_original>
// kernel: generator_forward.4
$region0: #{generator_forward.4}
  #allocation0 [shape = 'u32[]', space=smem, size = 0x4, offset = 0x4, fixed_abs, tag = 'smem constant byte address 0x4 - core index']
  #allocation1 [shape = 'u32[144,128]{1,0:T(1,128)}', space=vmem, size = 0x12000, scoped, tag = 'internal scratch']
  %s0 = inlined_call_operand.vmem [shape: bf16[2,128], index: 0, kind: input, shape index: {}]
  %s1 = inlined_call_operand.hbm [shape: bf16[128,4096], index: 1, kind: input, shape index: {}]
  %s2 = inlined_call_operand.hbm [shape: f32[1,256], index: 2, kind: input, shape index: {}]
  %s3 = inlined_call_operand.hbm [shape: f32[1,256], index: 3, kind: input, shape index: {}]
  %s4 = inlined_call_operand.vmem [shape: f32[2,4096], index: 4, kind: output, shape index: {}]
  %s5 = sld [smem:[#allocation0]]
  $region38: #{generator_forward.4} parent=0
    _
  %s7 = ssub.s32 1, %s5
  %s8 = scalar_select 0, %s7, %s5
  $region1: #{generator_forward.4} parent=0
    #allocation2 [shape = 'u8[1048576]{0}', space=vmem, size = 0x100000, scoped, tag = 'input window, operand 1, single buffered']
    #allocation3 [shape = 's32[1]{0}', space=sflag, size = 0x4, scoped, tag = 'scoped memory for generator_forward.4']
    #allocation4 [shape = 'u8[1024]{0}', space=vmem, size = 0x400, scoped, tag = 'input window, operand 2, single buffered']
    #allocation5 [shape = 's32[1]{0}', space=sflag, size = 0x4, scoped, tag = 'scoped memory for generator_forward.4']
    #allocation6 [shape = 'u8[1024]{0}', space=vmem, size = 0x400, scoped, tag = 'input window, operand 3, single buffered']
    %9 = vsyncpa [#allocation3], 0
    %10 = vsyncpa [#allocation5], 0
    // Predicated region
    $region2: #{generator_forward.4} parent=1 // pred_check
      _
    $region3: #{generator_forward.4} parent=1 // pred_check_branch
      %12 = sbr.rel (0) target = $region5
    $region4: #{generator_forward.4} parent=1 // pred_region
      _
    $region5: #{generator_forward.4} parent=1 // pred_fallthru
      _
    // Predicated region
    $region6: #{generator_forward.4} parent=1 // pred_check
      _
    $region7: #{generator_forward.4} parent=1 // pred_check_branch
      %14 = sbr.rel (0) target = $region9
    $region8: #{generator_forward.4} parent=1 // pred_region
      %s16 = ssub.s32 32768, 32768
      %17 = vsyncadd [#allocation3], %s16
      %s18 = sshll.u32 [#allocation2], 4
      %s19 = int_to_ptr.vmem [resolvable:$true] %s18
      %24 = dma.hbm_to_vmem [thread:$0]  %s1, 32768, %s19, [#allocation3], 2048, 2048, 128
    $region9: #{generator_forward.4} parent=1 // pred_fallthru
      _
    // Predicated region
    $region10: #{generator_forward.4} parent=1 // pred_check
      _
    $region11: #{generator_forward.4} parent=1 // pred_check_branch
      %26 = sbr.rel (0) target = $region13
    $region12: #{generator_forward.4} parent=1 // pred_region
      %s28 = ssub.s32 32, 32
      %29 = vsyncadd [#allocation5], %s28
      %s31 = sshll.u32 [#allocation4], 4
      %s32 = int_to_ptr.vmem [resolvable:$true] %s31
      %34 = dma.hbm_to_vmem [thread:$0]  %s2, 32, %s32, [#allocation5]
    $region13: #{generator_forward.4} parent=1 // pred_fallthru
      _
    // Predicated region
    $region14: #{generator_forward.4} parent=1 // pred_check
      _
    $region15: #{generator_forward.4} parent=1 // pred_check_branch
      %36 = sbr.rel (0) target = $region17
    $region16: #{generator_forward.4} parent=1 // pred_region
      %s38 = ssub.s32 32, 32
      %39 = vsyncadd [#allocation5], %s38
      %s41 = sshll.u32 [#allocation6], 4
      %s42 = int_to_ptr.vmem [resolvable:$true] %s41
      %44 = dma.hbm_to_vmem [thread:$0]  %s3, 32, %s42, [#allocation5]
    $region17: #{generator_forward.4} parent=1 // pred_fallthru
      _
    // Predicated region
    $region18: #{generator_forward.4} parent=1 // pred_check
      _
    $region19: #{generator_forward.4} parent=1 // pred_check_branch
      %46 = sbr.rel (0) target = $region21
    $region20: #{generator_forward.4} parent=1 // pred_region
      %47 = dma.done [#allocation3], 32768
    $region21: #{generator_forward.4} parent=1 // pred_fallthru
      _
    // Predicated region
    $region22: #{generator_forward.4} parent=1 // pred_check
      _
    $region23: #{generator_forward.4} parent=1 // pred_check_branch
      %49 = sbr.rel (0) target = $region25
    $region24: #{generator_forward.4} parent=1 // pred_region
      %50 = dma.done [#allocation5], 32
    $region25: #{generator_forward.4} parent=1 // pred_fallthru
      _
    // Predicated region
    $region26: #{generator_forward.4} parent=1 // pred_check
      _
    $region27: #{generator_forward.4} parent=1 // pred_check_branch
      %52 = sbr.rel (0) target = $region29
    $region28: #{generator_forward.4} parent=1 // pred_region
      %53 = dma.done [#allocation5], 32
    $region29: #{generator_forward.4} parent=1 // pred_fallthru
      _
    %v55 = vld [vmem:[%s0] sm:$0x1]
    %v56 = vld [vmem:[#allocation2] sm:$0xff]
    %v57 = vld [vmem:[#allocation2 + $0x8] sm:$0xff]
    %v58 = vld [vmem:[#allocation2 + $0x10] sm:$0xff]
    %v59 = vld [vmem:[#allocation2 + $0x18] sm:$0xff]
    %v60 = vld [vmem:[#allocation2 + $0x20] sm:$0xff]
    %v61 = vld [vmem:[#allocation2 + $0x28] sm:$0xff]
    %v62 = vld [vmem:[#allocation2 + $0x30] sm:$0xff]
    %v63 = vld [vmem:[#allocation2 + $0x38] sm:$0xff]
    %v64 = vld [vmem:[#allocation2 + $0x40] sm:$0xff]
    %v65 = vld [vmem:[#allocation2 + $0x48] sm:$0xff]
    %v66 = vld [vmem:[#allocation2 + $0x50] sm:$0xff]
    %v67 = vld [vmem:[#allocation2 + $0x58] sm:$0xff]
    %v68 = vld [vmem:[#allocation2 + $0x60] sm:$0xff]
    %v69 = vld [vmem:[#allocation2 + $0x68] sm:$0xff]
    %v70 = vld [vmem:[#allocation2 + $0x70] sm:$0xff]
    %v71 = vld [vmem:[#allocation2 + $0x78] sm:$0xff]
    %v72 = vld [vmem:[#allocation2 + $0x80] sm:$0xff]
    %v73 = vld [vmem:[#allocation2 + $0x88] sm:$0xff]
    %v74 = vld [vmem:[#allocation2 + $0x90] sm:$0xff]
    %v75 = vld [vmem:[#allocation2 + $0x98] sm:$0xff]
    %v76 = vld [vmem:[#allocation2 + $0xa0] sm:$0xff]
    %v77 = vld [vmem:[#allocation2 + $0xa8] sm:$0xff]
    %v78 = vld [vmem:[#allocation2 + $0xb0] sm:$0xff]
    %v79 = vld [vmem:[#allocation2 + $0xb8] sm:$0xff]
    %v80 = vld [vmem:[#allocation2 + $0xc0] sm:$0xff]
    %v81 = vld [vmem:[#allocation2 + $0xc8] sm:$0xff]
    %v82 = vld [vmem:[#allocation2 + $0xd0] sm:$0xff]
    %v83 = vld [vmem:[#allocation2 + $0xd8] sm:$0xff]
    %v84 = vld [vmem:[#allocation2 + $0xe0] sm:$0xff]
    %v85 = vld [vmem:[#allocation2 + $0xe8] sm:$0xff]
    %v86 = vld [vmem:[#allocation2 + $0xf0] sm:$0xff]
    %v87 = vld [vmem:[#allocation2 + $0xf8] sm:$0xff]
    %v88 = vld [vmem:[#allocation2 + $0x100] sm:$0xff]
    %v89 = vld [vmem:[#allocation2 + $0x108] sm:$0xff]
    %v90 = vld [vmem:[#allocation2 + $0x110] sm:$0xff]
    %v91 = vld [vmem:[#allocation2 + $0x118] sm:$0xff]
    %v92 = vld [vmem:[#allocation2 + $0x120] sm:$0xff]
    %v93 = vld [vmem:[#allocation2 + $0x128] sm:$0xff]
    %v94 = vld [vmem:[#allocation2 + $0x130] sm:$0xff]
    %v95 = vld [vmem:[#allocation2 + $0x138] sm:$0xff]
    %v96 = vld [vmem:[#allocation2 + $0x140] sm:$0xff]
    %v97 = vld [vmem:[#allocation2 + $0x148] sm:$0xff]
    %v98 = vld [vmem:[#allocation2 + $0x150] sm:$0xff]
    %v99 = vld [vmem:[#allocation2 + $0x158] sm:$0xff]
    %v100 = vld [vmem:[#allocation2 + $0x160] sm:$0xff]
    %v101 = vld [vmem:[#allocation2 + $0x168] sm:$0xff]
    %v102 = vld [vmem:[#allocation2 + $0x170] sm:$0xff]
    %v103 = vld [vmem:[#allocation2 + $0x178] sm:$0xff]
    %v104 = vld [vmem:[#allocation2 + $0x180] sm:$0xff]
    %v105 = vld [vmem:[#allocation2 + $0x188] sm:$0xff]
    %v106 = vld [vmem:[#allocation2 + $0x190] sm:$0xff]
    %v107 = vld [vmem:[#allocation2 + $0x198] sm:$0xff]
    %v108 = vld [vmem:[#allocation2 + $0x1a0] sm:$0xff]
    %v109 = vld [vmem:[#allocation2 + $0x1a8] sm:$0xff]
    %v110 = vld [vmem:[#allocation2 + $0x1b0] sm:$0xff]
    %v111 = vld [vmem:[#allocation2 + $0x1b8] sm:$0xff]
    %v112 = vld [vmem:[#allocation2 + $0x1c0] sm:$0xff]
    %v113 = vld [vmem:[#allocation2 + $0x1c8] sm:$0xff]
    %v114 = vld [vmem:[#allocation2 + $0x1d0] sm:$0xff]
    %v115 = vld [vmem:[#allocation2 + $0x1d8] sm:$0xff]
    %v116 = vld [vmem:[#allocation2 + $0x1e0] sm:$0xff]
    %v117 = vld [vmem:[#allocation2 + $0x1e8] sm:$0xff]
    %v118 = vld [vmem:[#allocation2 + $0x1f0] sm:$0xff]
    %v119 = vld [vmem:[#allocation2 + $0x1f8] sm:$0xff]
    %v120 = vld [vmem:[#allocation2 + $0x200] sm:$0xff]
    %v121 = vld [vmem:[#allocation2 + $0x208] sm:$0xff]
    %v122 = vld [vmem:[#allocation2 + $0x210] sm:$0xff]
    %v123 = vld [vmem:[#allocation2 + $0x218] sm:$0xff]
    %v124 = vld [vmem:[#allocation2 + $0x220] sm:$0xff]
    %v125 = vld [vmem:[#allocation2 + $0x228] sm:$0xff]
    %v126 = vld [vmem:[#allocation2 + $0x230] sm:$0xff]
    %v127 = vld [vmem:[#allocation2 + $0x238] sm:$0xff]
    %v128 = vld [vmem:[#allocation2 + $0x240] sm:$0xff]
    %v129 = vld [vmem:[#allocation2 + $0x248] sm:$0xff]
    %v130 = vld [vmem:[#allocation2 + $0x250] sm:$0xff]
    %v131 = vld [vmem:[#allocation2 + $0x258] sm:$0xff]
    %v132 = vld [vmem:[#allocation2 + $0x260] sm:$0xff]
    %v133 = vld [vmem:[#allocation2 + $0x268] sm:$0xff]
    %v134 = vld [vmem:[#allocation2 + $0x270] sm:$0xff]
    %v135 = vld [vmem:[#allocation2 + $0x278] sm:$0xff]
    %v136 = vld [vmem:[#allocation2 + $0x280] sm:$0xff]
    %v137 = vld [vmem:[#allocation2 + $0x288] sm:$0xff]
    %v138 = vld [vmem:[#allocation2 + $0x290] sm:$0xff]
    %v139 = vld [vmem:[#allocation2 + $0x298] sm:$0xff]
    %v140 = vld [vmem:[#allocation2 + $0x2a0] sm:$0xff]
    %v141 = vld [vmem:[#allocation2 + $0x2a8] sm:$0xff]
    %v142 = vld [vmem:[#allocation2 + $0x2b0] sm:$0xff]
    %v143 = vld [vmem:[#allocation2 + $0x2b8] sm:$0xff]
    %v144 = vld [vmem:[#allocation2 + $0x2c0] sm:$0xff]
    %v145 = vld [vmem:[#allocation2 + $0x2c8] sm:$0xff]
    %v146 = vld [vmem:[#allocation2 + $0x2d0] sm:$0xff]
    %v147 = vld [vmem:[#allocation2 + $0x2d8] sm:$0xff]
    %v148 = vld [vmem:[#allocation2 + $0x2e0] sm:$0xff]
    %v149 = vld [vmem:[#allocation2 + $0x2e8] sm:$0xff]
    %v150 = vld [vmem:[#allocation2 + $0x2f0] sm:$0xff]
    %v151 = vld [vmem:[#allocation2 + $0x2f8] sm:$0xff]
    %v152 = vld [vmem:[#allocation2 + $0x300] sm:$0xff]
    %v153 = vld [vmem:[#allocation2 + $0x308] sm:$0xff]
    %v154 = vld [vmem:[#allocation2 + $0x310] sm:$0xff]
    %v155 = vld [vmem:[#allocation2 + $0x318] sm:$0xff]
    %v156 = vld [vmem:[#allocation2 + $0x320] sm:$0xff]
    %v157 = vld [vmem:[#allocation2 + $0x328] sm:$0xff]
    %v158 = vld [vmem:[#allocation2 + $0x330] sm:$0xff]
    %v159 = vld [vmem:[#allocation2 + $0x338] sm:$0xff]
    %v160 = vld [vmem:[#allocation2 + $0x340] sm:$0xff]
    %v161 = vld [vmem:[#allocation2 + $0x348] sm:$0xff]
    %v162 = vld [vmem:[#allocation2 + $0x350] sm:$0xff]
    %v163 = vld [vmem:[#allocation2 + $0x358] sm:$0xff]
    %v164 = vld [vmem:[#allocation2 + $0x360] sm:$0xff]
    %v165 = vld [vmem:[#allocation2 + $0x368] sm:$0xff]
    %v166 = vld [vmem:[#allocation2 + $0x370] sm:$0xff]
    %v167 = vld [vmem:[#allocation2 + $0x378] sm:$0xff]
    %v168 = vld [vmem:[#allocation2 + $0x380] sm:$0xff]
    %v169 = vld [vmem:[#allocation2 + $0x388] sm:$0xff]
    %v170 = vld [vmem:[#allocation2 + $0x390] sm:$0xff]
    %v171 = vld [vmem:[#allocation2 + $0x398] sm:$0xff]
    %v172 = vld [vmem:[#allocation2 + $0x3a0] sm:$0xff]
    %v173 = vld [vmem:[#allocation2 + $0x3a8] sm:$0xff]
    %v174 = vld [vmem:[#allocation2 + $0x3b0] sm:$0xff]
    %v175 = vld [vmem:[#allocation2 + $0x3b8] sm:$0xff]
    %v176 = vld [vmem:[#allocation2 + $0x3c0] sm:$0xff]
    %v177 = vld [vmem:[#allocation2 + $0x3c8] sm:$0xff]
    %v178 = vld [vmem:[#allocation2 + $0x3d0] sm:$0xff]
    %v179 = vld [vmem:[#allocation2 + $0x3d8] sm:$0xff]
    %v180 = vld [vmem:[#allocation2 + $0x3e0] sm:$0xff]
    %v181 = vld [vmem:[#allocation2 + $0x3e8] sm:$0xff]
    %v182 = vld [vmem:[#allocation2 + $0x3f0] sm:$0xff]
    %v183 = vld [vmem:[#allocation2 + $0x3f8] sm:$0xff]
    %v184 = vld [vmem:[#allocation2 + $0x400] sm:$0xff]
    %v185 = vld [vmem:[#allocation2 + $0x408] sm:$0xff]
    %v186 = vld [vmem:[#allocation2 + $0x410] sm:$0xff]
    %v187 = vld [vmem:[#allocation2 + $0x418] sm:$0xff]
    %v188 = vld [vmem:[#allocation2 + $0x420] sm:$0xff]
    %v189 = vld [vmem:[#allocation2 + $0x428] sm:$0xff]
    %v190 = vld [vmem:[#allocation2 + $0x430] sm:$0xff]
    %v191 = vld [vmem:[#allocation2 + $0x438] sm:$0xff]
    %v192 = vld [vmem:[#allocation2 + $0x440] sm:$0xff]
    %v193 = vld [vmem:[#allocation2 + $0x448] sm:$0xff]
    %v194 = vld [vmem:[#allocation2 + $0x450] sm:$0xff]
    %v195 = vld [vmem:[#allocation2 + $0x458] sm:$0xff]
    %v196 = vld [vmem:[#allocation2 + $0x460] sm:$0xff]
    %v197 = vld [vmem:[#allocation2 + $0x468] sm:$0xff]
    %v198 = vld [vmem:[#allocation2 + $0x470] sm:$0xff]
    %v199 = vld [vmem:[#allocation2 + $0x478] sm:$0xff]
    %v200 = vld [vmem:[#allocation2 + $0x480] sm:$0xff]
    %v201 = vld [vmem:[#allocation2 + $0x488] sm:$0xff]
    %v202 = vld [vmem:[#allocation2 + $0x490] sm:$0xff]
    %v203 = vld [vmem:[#allocation2 + $0x498] sm:$0xff]
    %v204 = vld [vmem:[#allocation2 + $0x4a0] sm:$0xff]
    %v205 = vld [vmem:[#allocation2 + $0x4a8] sm:$0xff]
    %v206 = vld [vmem:[#allocation2 + $0x4b0] sm:$0xff]
    %v207 = vld [vmem:[#allocation2 + $0x4b8] sm:$0xff]
    %v208 = vld [vmem:[#allocation2 + $0x4c0] sm:$0xff]
    %v209 = vld [vmem:[#allocation2 + $0x4c8] sm:$0xff]
    %v210 = vld [vmem:[#allocation2 + $0x4d0] sm:$0xff]
    %v211 = vld [vmem:[#allocation2 + $0x4d8] sm:$0xff]
    %v212 = vld [vmem:[#allocation2 + $0x4e0] sm:$0xff]
    %v213 = vld [vmem:[#allocation2 + $0x4e8] sm:$0xff]
    %v214 = vld [vmem:[#allocation2 + $0x4f0] sm:$0xff]
    %v215 = vld [vmem:[#allocation2 + $0x4f8] sm:$0xff]
    %v216 = vld [vmem:[#allocation2 + $0x500] sm:$0xff]
    %v217 = vld [vmem:[#allocation2 + $0x508] sm:$0xff]
    %v218 = vld [vmem:[#allocation2 + $0x510] sm:$0xff]
    %v219 = vld [vmem:[#allocation2 + $0x518] sm:$0xff]
    %v220 = vld [vmem:[#allocation2 + $0x520] sm:$0xff]
    %v221 = vld [vmem:[#allocation2 + $0x528] sm:$0xff]
    %v222 = vld [vmem:[#allocation2 + $0x530] sm:$0xff]
    %v223 = vld [vmem:[#allocation2 + $0x538] sm:$0xff]
    %v224 = vld [vmem:[#allocation2 + $0x540] sm:$0xff]
    %v225 = vld [vmem:[#allocation2 + $0x548] sm:$0xff]
    %v226 = vld [vmem:[#allocation2 + $0x550] sm:$0xff]
    %v227 = vld [vmem:[#allocation2 + $0x558] sm:$0xff]
    %v228 = vld [vmem:[#allocation2 + $0x560] sm:$0xff]
    %v229 = vld [vmem:[#allocation2 + $0x568] sm:$0xff]
    %v230 = vld [vmem:[#allocation2 + $0x570] sm:$0xff]
    %v231 = vld [vmem:[#allocation2 + $0x578] sm:$0xff]
    %v232 = vld [vmem:[#allocation2 + $0x580] sm:$0xff]
    %v233 = vld [vmem:[#allocation2 + $0x588] sm:$0xff]
    %v234 = vld [vmem:[#allocation2 + $0x590] sm:$0xff]
    %v235 = vld [vmem:[#allocation2 + $0x598] sm:$0xff]
    %v236 = vld [vmem:[#allocation2 + $0x5a0] sm:$0xff]
    %v237 = vld [vmem:[#allocation2 + $0x5a8] sm:$0xff]
    %v238 = vld [vmem:[#allocation2 + $0x5b0] sm:$0xff]
    %v239 = vld [vmem:[#allocation2 + $0x5b8] sm:$0xff]
    %v240 = vld [vmem:[#allocation2 + $0x5c0] sm:$0xff]
    %v241 = vld [vmem:[#allocation2 + $0x5c8] sm:$0xff]
    %v242 = vld [vmem:[#allocation2 + $0x5d0] sm:$0xff]
    %v243 = vld [vmem:[#allocation2 + $0x5d8] sm:$0xff]
    %v244 = vld [vmem:[#allocation2 + $0x5e0] sm:$0xff]
    %v245 = vld [vmem:[#allocation2 + $0x5e8] sm:$0xff]
    %v246 = vld [vmem:[#allocation2 + $0x5f0] sm:$0xff]
    %v247 = vld [vmem:[#allocation2 + $0x5f8] sm:$0xff]
    %v248 = vld [vmem:[#allocation2 + $0x600] sm:$0xff]
    %v249 = vld [vmem:[#allocation2 + $0x608] sm:$0xff]
    %v250 = vld [vmem:[#allocation2 + $0x610] sm:$0xff]
    %v251 = vld [vmem:[#allocation2 + $0x618] sm:$0xff]
    %v252 = vld [vmem:[#allocation2 + $0x620] sm:$0xff]
    %v253 = vld [vmem:[#allocation2 + $0x628] sm:$0xff]
    %v254 = vld [vmem:[#allocation2 + $0x630] sm:$0xff]
    %v255 = vld [vmem:[#allocation2 + $0x638] sm:$0xff]
    %v256 = vld [vmem:[#allocation2 + $0x640] sm:$0xff]
    %v257 = vld [vmem:[#allocation2 + $0x648] sm:$0xff]
    %v258 = vld [vmem:[#allocation2 + $0x650] sm:$0xff]
    %v259 = vld [vmem:[#allocation2 + $0x658] sm:$0xff]
    %v260 = vld [vmem:[#allocation2 + $0x660] sm:$0xff]
    %v261 = vld [vmem:[#allocation2 + $0x668] sm:$0xff]
    %v262 = vld [vmem:[#allocation2 + $0x670] sm:$0xff]
    %v263 = vld [vmem:[#allocation2 + $0x678] sm:$0xff]
    %v264 = vld [vmem:[#allocation2 + $0x680] sm:$0xff]
    %v265 = vld [vmem:[#allocation2 + $0x688] sm:$0xff]
    %v266 = vld [vmem:[#allocation2 + $0x690] sm:$0xff]
    %v267 = vld [vmem:[#allocation2 + $0x698] sm:$0xff]
    %v268 = vld [vmem:[#allocation2 + $0x6a0] sm:$0xff]
    %v269 = vld [vmem:[#allocation2 + $0x6a8] sm:$0xff]
    %v270 = vld [vmem:[#allocation2 + $0x6b0] sm:$0xff]
    %v271 = vld [vmem:[#allocation2 + $0x6b8] sm:$0xff]
    %v272 = vld [vmem:[#allocation2 + $0x6c0] sm:$0xff]
    %v273 = vld [vmem:[#allocation2 + $0x6c8] sm:$0xff]
    %v274 = vld [vmem:[#allocation2 + $0x6d0] sm:$0xff]
    %v275 = vld [vmem:[#allocation2 + $0x6d8] sm:$0xff]
    %v276 = vld [vmem:[#allocation2 + $0x6e0] sm:$0xff]
    %v277 = vld [vmem:[#allocation2 + $0x6e8] sm:$0xff]
    %v278 = vld [vmem:[#allocation2 + $0x6f0] sm:$0xff]
    %v279 = vld [vmem:[#allocation2 + $0x6f8] sm:$0xff]
    %v280 = vld [vmem:[#allocation2 + $0x700] sm:$0xff]
    %v281 = vld [vmem:[#allocation2 + $0x708] sm:$0xff]
    %v282 = vld [vmem:[#allocation2 + $0x710] sm:$0xff]
    %v283 = vld [vmem:[#allocation2 + $0x718] sm:$0xff]
    %v284 = vld [vmem:[#allocation2 + $0x720] sm:$0xff]
    %v285 = vld [vmem:[#allocation2 + $0x728] sm:$0xff]
    %v286 = vld [vmem:[#allocation2 + $0x730] sm:$0xff]
    %v287 = vld [vmem:[#allocation2 + $0x738] sm:$0xff]
    %v288 = vld [vmem:[#allocation2 + $0x740] sm:$0xff]
    %v289 = vld [vmem:[#allocation2 + $0x748] sm:$0xff]
    %v290 = vld [vmem:[#allocation2 + $0x750] sm:$0xff]
    %v291 = vld [vmem:[#allocation2 + $0x758] sm:$0xff]
    %v292 = vld [vmem:[#allocation2 + $0x760] sm:$0xff]
    %v293 = vld [vmem:[#allocation2 + $0x768] sm:$0xff]
    %v294 = vld [vmem:[#allocation2 + $0x770] sm:$0xff]
    %v295 = vld [vmem:[#allocation2 + $0x778] sm:$0xff]
    %v296 = vld [vmem:[#allocation2 + $0x780] sm:$0xff]
    %v297 = vld [vmem:[#allocation2 + $0x788] sm:$0xff]
    %v298 = vld [vmem:[#allocation2 + $0x790] sm:$0xff]
    %v299 = vld [vmem:[#allocation2 + $0x798] sm:$0xff]
    %v300 = vld [vmem:[#allocation2 + $0x7a0] sm:$0xff]
    %v301 = vld [vmem:[#allocation2 + $0x7a8] sm:$0xff]
    %v302 = vld [vmem:[#allocation2 + $0x7b0] sm:$0xff]
    %v303 = vld [vmem:[#allocation2 + $0x7b8] sm:$0xff]
    %v304 = vld [vmem:[#allocation2 + $0x7c0] sm:$0xff]
    %v305 = vld [vmem:[#allocation2 + $0x7c8] sm:$0xff]
    %v306 = vld [vmem:[#allocation2 + $0x7d0] sm:$0xff]
    %v307 = vld [vmem:[#allocation2 + $0x7d8] sm:$0xff]
    %v308 = vld [vmem:[#allocation2 + $0x7e0] sm:$0xff]
    %v309 = vld [vmem:[#allocation2 + $0x7e8] sm:$0xff]
    %v310 = vld [vmem:[#allocation2 + $0x7f0] sm:$0xff]
    %v311 = vld [vmem:[#allocation2 + $0x7f8] sm:$0xff]
    %v568 = vunpack.c.l.b16 %v56
    %v569 = vunpack.c.h.b16 %v56
    %v570 = vunpack.c.l.b16 %v57
    %v571 = vunpack.c.h.b16 %v57
    %v572 = vunpack.c.l.b16 %v58
    %v573 = vunpack.c.h.b16 %v58
    %v574 = vunpack.c.l.b16 %v59
    %v575 = vunpack.c.h.b16 %v59
    %v576 = vunpack.c.l.b16 %v60
    %v577 = vunpack.c.h.b16 %v60
    %v578 = vunpack.c.l.b16 %v61
    %v579 = vunpack.c.h.b16 %v61
    %v580 = vunpack.c.l.b16 %v62
    %v581 = vunpack.c.h.b16 %v62
    %v582 = vunpack.c.l.b16 %v63
    %v583 = vunpack.c.h.b16 %v63
    %v584 = vunpack.c.l.b16 %v64
    %v585 = vunpack.c.h.b16 %v64
    %v586 = vunpack.c.l.b16 %v65
    %v587 = vunpack.c.h.b16 %v65
    %v588 = vunpack.c.l.b16 %v66
    %v589 = vunpack.c.h.b16 %v66
    %v590 = vunpack.c.l.b16 %v67
    %v591 = vunpack.c.h.b16 %v67
    %v592 = vunpack.c.l.b16 %v68
    %v593 = vunpack.c.h.b16 %v68
    %v594 = vunpack.c.l.b16 %v69
    %v595 = vunpack.c.h.b16 %v69
    %v596 = vunpack.c.l.b16 %v70
    %v597 = vunpack.c.h.b16 %v70
    %v598 = vunpack.c.l.b16 %v71
    %v599 = vunpack.c.h.b16 %v71
    %v600 = vunpack.c.l.b16 %v72
    %v601 = vunpack.c.h.b16 %v72
    %v602 = vunpack.c.l.b16 %v73
    %v603 = vunpack.c.h.b16 %v73
    %v604 = vunpack.c.l.b16 %v74
    %v605 = vunpack.c.h.b16 %v74
    %v606 = vunpack.c.l.b16 %v75
    %v607 = vunpack.c.h.b16 %v75
    %v608 = vunpack.c.l.b16 %v76
    %v609 = vunpack.c.h.b16 %v76
    %v610 = vunpack.c.l.b16 %v77
    %v611 = vunpack.c.h.b16 %v77
    %v612 = vunpack.c.l.b16 %v78
    %v613 = vunpack.c.h.b16 %v78
    %v614 = vunpack.c.l.b16 %v79
    %v615 = vunpack.c.h.b16 %v79
    %v616 = vunpack.c.l.b16 %v80
    %v617 = vunpack.c.h.b16 %v80
    %v618 = vunpack.c.l.b16 %v81
    %v619 = vunpack.c.h.b16 %v81
    %v620 = vunpack.c.l.b16 %v82
    %v621 = vunpack.c.h.b16 %v82
    %v622 = vunpack.c.l.b16 %v83
    %v623 = vunpack.c.h.b16 %v83
    %v624 = vunpack.c.l.b16 %v84
    %v625 = vunpack.c.h.b16 %v84
    %v626 = vunpack.c.l.b16 %v85
    %v627 = vunpack.c.h.b16 %v85
    %v628 = vunpack.c.l.b16 %v86
    %v629 = vunpack.c.h.b16 %v86
    %v630 = vunpack.c.l.b16 %v87
    %v631 = vunpack.c.h.b16 %v87
    %v632 = vunpack.c.l.b16 %v88
    %v633 = vunpack.c.h.b16 %v88
    %v634 = vunpack.c.l.b16 %v89
    %v635 = vunpack.c.h.b16 %v89
    %v636 = vunpack.c.l.b16 %v90
    %v637 = vunpack.c.h.b16 %v90
    %v638 = vunpack.c.l.b16 %v91
    %v639 = vunpack.c.h.b16 %v91
    %v640 = vunpack.c.l.b16 %v92
    %v641 = vunpack.c.h.b16 %v92
    %v642 = vunpack.c.l.b16 %v93
    %v643 = vunpack.c.h.b16 %v93
    %v644 = vunpack.c.l.b16 %v94
    %v645 = vunpack.c.h.b16 %v94
    %v646 = vunpack.c.l.b16 %v95
    %v647 = vunpack.c.h.b16 %v95
    %v648 = vunpack.c.l.b16 %v96
    %v649 = vunpack.c.h.b16 %v96
    %v650 = vunpack.c.l.b16 %v97
    %v651 = vunpack.c.h.b16 %v97
    %v652 = vunpack.c.l.b16 %v98
    %v653 = vunpack.c.h.b16 %v98
    %v654 = vunpack.c.l.b16 %v99
    %v655 = vunpack.c.h.b16 %v99
    %v656 = vunpack.c.l.b16 %v100
    %v657 = vunpack.c.h.b16 %v100
    %v658 = vunpack.c.l.b16 %v101
    %v659 = vunpack.c.h.b16 %v101
    %v660 = vunpack.c.l.b16 %v102
    %v661 = vunpack.c.h.b16 %v102
    %v662 = vunpack.c.l.b16 %v103
    %v663 = vunpack.c.h.b16 %v103
    %v664 = vunpack.c.l.b16 %v104
    %v665 = vunpack.c.h.b16 %v104
    %v666 = vunpack.c.l.b16 %v105
    %v667 = vunpack.c.h.b16 %v105
    %v668 = vunpack.c.l.b16 %v106
    %v669 = vunpack.c.h.b16 %v106
    %v670 = vunpack.c.l.b16 %v107
    %v671 = vunpack.c.h.b16 %v107
    %v672 = vunpack.c.l.b16 %v108
    %v673 = vunpack.c.h.b16 %v108
    %v674 = vunpack.c.l.b16 %v109
    %v675 = vunpack.c.h.b16 %v109
    %v676 = vunpack.c.l.b16 %v110
    %v677 = vunpack.c.h.b16 %v110
    %v678 = vunpack.c.l.b16 %v111
    %v679 = vunpack.c.h.b16 %v111
    %v680 = vunpack.c.l.b16 %v112
    %v681 = vunpack.c.h.b16 %v112
    %v682 = vunpack.c.l.b16 %v113
    %v683 = vunpack.c.h.b16 %v113
    %v684 = vunpack.c.l.b16 %v114
    %v685 = vunpack.c.h.b16 %v114
    %v686 = vunpack.c.l.b16 %v115
    %v687 = vunpack.c.h.b16 %v115
    %v688 = vunpack.c.l.b16 %v116
    %v689 = vunpack.c.h.b16 %v116
    %v690 = vunpack.c.l.b16 %v117
    %v691 = vunpack.c.h.b16 %v117
    %v692 = vunpack.c.l.b16 %v118
    %v693 = vunpack.c.h.b16 %v118
    %v694 = vunpack.c.l.b16 %v119
    %v695 = vunpack.c.h.b16 %v119
    %v696 = vunpack.c.l.b16 %v120
    %v697 = vunpack.c.h.b16 %v120
    %v698 = vunpack.c.l.b16 %v121
    %v699 = vunpack.c.h.b16 %v121
    %v700 = vunpack.c.l.b16 %v122
    %v701 = vunpack.c.h.b16 %v122
    %v702 = vunpack.c.l.b16 %v123
    %v703 = vunpack.c.h.b16 %v123
    %v704 = vunpack.c.l.b16 %v124
    %v705 = vunpack.c.h.b16 %v124
    %v706 = vunpack.c.l.b16 %v125
    %v707 = vunpack.c.h.b16 %v125
    %v708 = vunpack.c.l.b16 %v126
    %v709 = vunpack.c.h.b16 %v126
    %v710 = vunpack.c.l.b16 %v127
    %v711 = vunpack.c.h.b16 %v127
    %v712 = vunpack.c.l.b16 %v128
    %v713 = vunpack.c.h.b16 %v128
    %v714 = vunpack.c.l.b16 %v129
    %v715 = vunpack.c.h.b16 %v129
    %v716 = vunpack.c.l.b16 %v130
    %v717 = vunpack.c.h.b16 %v130
    %v718 = vunpack.c.l.b16 %v131
    %v719 = vunpack.c.h.b16 %v131
    %v720 = vunpack.c.l.b16 %v132
    %v721 = vunpack.c.h.b16 %v132
    %v722 = vunpack.c.l.b16 %v133
    %v723 = vunpack.c.h.b16 %v133
    %v724 = vunpack.c.l.b16 %v134
    %v725 = vunpack.c.h.b16 %v134
    %v726 = vunpack.c.l.b16 %v135
    %v727 = vunpack.c.h.b16 %v135
    %v728 = vunpack.c.l.b16 %v136
    %v729 = vunpack.c.h.b16 %v136
    %v730 = vunpack.c.l.b16 %v137
    %v731 = vunpack.c.h.b16 %v137
    %v732 = vunpack.c.l.b16 %v138
    %v733 = vunpack.c.h.b16 %v138
    %v734 = vunpack.c.l.b16 %v139
    %v735 = vunpack.c.h.b16 %v139
    %v736 = vunpack.c.l.b16 %v140
    %v737 = vunpack.c.h.b16 %v140
    %v738 = vunpack.c.l.b16 %v141
    %v739 = vunpack.c.h.b16 %v141
    %v740 = vunpack.c.l.b16 %v142
    %v741 = vunpack.c.h.b16 %v142
    %v742 = vunpack.c.l.b16 %v143
    %v743 = vunpack.c.h.b16 %v143
    %v744 = vunpack.c.l.b16 %v144
    %v745 = vunpack.c.h.b16 %v144
    %v746 = vunpack.c.l.b16 %v145
    %v747 = vunpack.c.h.b16 %v145
    %v748 = vunpack.c.l.b16 %v146
    %v749 = vunpack.c.h.b16 %v146
    %v750 = vunpack.c.l.b16 %v147
    %v751 = vunpack.c.h.b16 %v147
    %v752 = vunpack.c.l.b16 %v148
    %v753 = vunpack.c.h.b16 %v148
    %v754 = vunpack.c.l.b16 %v149
    %v755 = vunpack.c.h.b16 %v149
    %v756 = vunpack.c.l.b16 %v150
    %v757 = vunpack.c.h.b16 %v150
    %v758 = vunpack.c.l.b16 %v151
    %v759 = vunpack.c.h.b16 %v151
    %v760 = vunpack.c.l.b16 %v152
    %v761 = vunpack.c.h.b16 %v152
    %v762 = vunpack.c.l.b16 %v153
    %v763 = vunpack.c.h.b16 %v153
    %v764 = vunpack.c.l.b16 %v154
    %v765 = vunpack.c.h.b16 %v154
    %v766 = vunpack.c.l.b16 %v155
    %v767 = vunpack.c.h.b16 %v155
    %v768 = vunpack.c.l.b16 %v156
    %v769 = vunpack.c.h.b16 %v156
    %v770 = vunpack.c.l.b16 %v157
    %v771 = vunpack.c.h.b16 %v157
    %v772 = vunpack.c.l.b16 %v158
    %v773 = vunpack.c.h.b16 %v158
    %v774 = vunpack.c.l.b16 %v159
    %v775 = vunpack.c.h.b16 %v159
    %v776 = vunpack.c.l.b16 %v160
    %v777 = vunpack.c.h.b16 %v160
    %v778 = vunpack.c.l.b16 %v161
    %v779 = vunpack.c.h.b16 %v161
    %v780 = vunpack.c.l.b16 %v162
    %v781 = vunpack.c.h.b16 %v162
    %v782 = vunpack.c.l.b16 %v163
    %v783 = vunpack.c.h.b16 %v163
    %v784 = vunpack.c.l.b16 %v164
    %v785 = vunpack.c.h.b16 %v164
    %v786 = vunpack.c.l.b16 %v165
    %v787 = vunpack.c.h.b16 %v165
    %v788 = vunpack.c.l.b16 %v166
    %v789 = vunpack.c.h.b16 %v166
    %v790 = vunpack.c.l.b16 %v167
    %v791 = vunpack.c.h.b16 %v167
    %v792 = vunpack.c.l.b16 %v168
    %v793 = vunpack.c.h.b16 %v168
    %v794 = vunpack.c.l.b16 %v169
    %v795 = vunpack.c.h.b16 %v169
    %v796 = vunpack.c.l.b16 %v170
    %v797 = vunpack.c.h.b16 %v170
    %v798 = vunpack.c.l.b16 %v171
    %v799 = vunpack.c.h.b16 %v171
    %v800 = vunpack.c.l.b16 %v172
    %v801 = vunpack.c.h.b16 %v172
    %v802 = vunpack.c.l.b16 %v173
    %v803 = vunpack.c.h.b16 %v173
    %v804 = vunpack.c.l.b16 %v174
    %v805 = vunpack.c.h.b16 %v174
    %v806 = vunpack.c.l.b16 %v175
    %v807 = vunpack.c.h.b16 %v175
    %v808 = vunpack.c.l.b16 %v176
    %v809 = vunpack.c.h.b16 %v176
    %v810 = vunpack.c.l.b16 %v177
    %v811 = vunpack.c.h.b16 %v177
    %v812 = vunpack.c.l.b16 %v178
    %v813 = vunpack.c.h.b16 %v178
    %v814 = vunpack.c.l.b16 %v179
    %v815 = vunpack.c.h.b16 %v179
    %v816 = vunpack.c.l.b16 %v180
    %v817 = vunpack.c.h.b16 %v180
    %v818 = vunpack.c.l.b16 %v181
    %v819 = vunpack.c.h.b16 %v181
    %v820 = vunpack.c.l.b16 %v182
    %v821 = vunpack.c.h.b16 %v182
    %v822 = vunpack.c.l.b16 %v183
    %v823 = vunpack.c.h.b16 %v183
    %v824 = vunpack.c.l.b16 %v184
    %v825 = vunpack.c.h.b16 %v184
    %v826 = vunpack.c.l.b16 %v185
    %v827 = vunpack.c.h.b16 %v185
    %v828 = vunpack.c.l.b16 %v186
    %v829 = vunpack.c.h.b16 %v186
    %v830 = vunpack.c.l.b16 %v187
    %v831 = vunpack.c.h.b16 %v187
    %v832 = vunpack.c.l.b16 %v188
    %v833 = vunpack.c.h.b16 %v188
    %v834 = vunpack.c.l.b16 %v189
    %v835 = vunpack.c.h.b16 %v189
    %v836 = vunpack.c.l.b16 %v190
    %v837 = vunpack.c.h.b16 %v190
    %v838 = vunpack.c.l.b16 %v191
    %v839 = vunpack.c.h.b16 %v191
    %v840 = vunpack.c.l.b16 %v192
    %v841 = vunpack.c.h.b16 %v192
    %v842 = vunpack.c.l.b16 %v193
    %v843 = vunpack.c.h.b16 %v193
    %v844 = vunpack.c.l.b16 %v194
    %v845 = vunpack.c.h.b16 %v194
    %v846 = vunpack.c.l.b16 %v195
    %v847 = vunpack.c.h.b16 %v195
    %v848 = vunpack.c.l.b16 %v196
    %v849 = vunpack.c.h.b16 %v196
    %v850 = vunpack.c.l.b16 %v197
    %v851 = vunpack.c.h.b16 %v197
    %v852 = vunpack.c.l.b16 %v198
    %v853 = vunpack.c.h.b16 %v198
    %v854 = vunpack.c.l.b16 %v199
    %v855 = vunpack.c.h.b16 %v199
    %v856 = vunpack.c.l.b16 %v200
    %v857 = vunpack.c.h.b16 %v200
    %v858 = vunpack.c.l.b16 %v201
    %v859 = vunpack.c.h.b16 %v201
    %v860 = vunpack.c.l.b16 %v202
    %v861 = vunpack.c.h.b16 %v202
    %v862 = vunpack.c.l.b16 %v203
    %v863 = vunpack.c.h.b16 %v203
    %v864 = vunpack.c.l.b16 %v204
    %v865 = vunpack.c.h.b16 %v204
    %v866 = vunpack.c.l.b16 %v205
    %v867 = vunpack.c.h.b16 %v205
    %v868 = vunpack.c.l.b16 %v206
    %v869 = vunpack.c.h.b16 %v206
    %v870 = vunpack.c.l.b16 %v207
    %v871 = vunpack.c.h.b16 %v207
    %v872 = vunpack.c.l.b16 %v208
    %v873 = vunpack.c.h.b16 %v208
    %v874 = vunpack.c.l.b16 %v209
    %v875 = vunpack.c.h.b16 %v209
    %v876 = vunpack.c.l.b16 %v210
    %v877 = vunpack.c.h.b16 %v210
    %v878 = vunpack.c.l.b16 %v211
    %v879 = vunpack.c.h.b16 %v211
    %v880 = vunpack.c.l.b16 %v212
    %v881 = vunpack.c.h.b16 %v212
    %v882 = vunpack.c.l.b16 %v213
    %v883 = vunpack.c.h.b16 %v213
    %v884 = vunpack.c.l.b16 %v214
    %v885 = vunpack.c.h.b16 %v214
    %v886 = vunpack.c.l.b16 %v215
    %v887 = vunpack.c.h.b16 %v215
    %v888 = vunpack.c.l.b16 %v216
    %v889 = vunpack.c.h.b16 %v216
    %v890 = vunpack.c.l.b16 %v217
    %v891 = vunpack.c.h.b16 %v217
    %v892 = vunpack.c.l.b16 %v218
    %v893 = vunpack.c.h.b16 %v218
    %v894 = vunpack.c.l.b16 %v219
    %v895 = vunpack.c.h.b16 %v219
    %v896 = vunpack.c.l.b16 %v220
    %v897 = vunpack.c.h.b16 %v220
    %v898 = vunpack.c.l.b16 %v221
    %v899 = vunpack.c.h.b16 %v221
    %v900 = vunpack.c.l.b16 %v222
    %v901 = vunpack.c.h.b16 %v222
    %v902 = vunpack.c.l.b16 %v223
    %v903 = vunpack.c.h.b16 %v223
    %v904 = vunpack.c.l.b16 %v224
    %v905 = vunpack.c.h.b16 %v224
    %v906 = vunpack.c.l.b16 %v225
    %v907 = vunpack.c.h.b16 %v225
    %v908 = vunpack.c.l.b16 %v226
    %v909 = vunpack.c.h.b16 %v226
    %v910 = vunpack.c.l.b16 %v227
    %v911 = vunpack.c.h.b16 %v227
    %v912 = vunpack.c.l.b16 %v228
    %v913 = vunpack.c.h.b16 %v228
    %v914 = vunpack.c.l.b16 %v229
    %v915 = vunpack.c.h.b16 %v229
    %v916 = vunpack.c.l.b16 %v230
    %v917 = vunpack.c.h.b16 %v230
    %v918 = vunpack.c.l.b16 %v231
    %v919 = vunpack.c.h.b16 %v231
    %v920 = vunpack.c.l.b16 %v232
    %v921 = vunpack.c.h.b16 %v232
    %v922 = vunpack.c.l.b16 %v233
    %v923 = vunpack.c.h.b16 %v233
    %v924 = vunpack.c.l.b16 %v234
    %v925 = vunpack.c.h.b16 %v234
    %v926 = vunpack.c.l.b16 %v235
    %v927 = vunpack.c.h.b16 %v235
    %v928 = vunpack.c.l.b16 %v236
    %v929 = vunpack.c.h.b16 %v236
    %v930 = vunpack.c.l.b16 %v237
    %v931 = vunpack.c.h.b16 %v237
    %v932 = vunpack.c.l.b16 %v238
    %v933 = vunpack.c.h.b16 %v238
    %v934 = vunpack.c.l.b16 %v239
    %v935 = vunpack.c.h.b16 %v239
    %v936 = vunpack.c.l.b16 %v240
    %v937 = vunpack.c.h.b16 %v240
    %v938 = vunpack.c.l.b16 %v241
    %v939 = vunpack.c.h.b16 %v241
    %v940 = vunpack.c.l.b16 %v242
    %v941 = vunpack.c.h.b16 %v242
    %v942 = vunpack.c.l.b16 %v243
    %v943 = vunpack.c.h.b16 %v243
    %v944 = vunpack.c.l.b16 %v244
    %v945 = vunpack.c.h.b16 %v244
    %v946 = vunpack.c.l.b16 %v245
    %v947 = vunpack.c.h.b16 %v245
    %v948 = vunpack.c.l.b16 %v246
    %v949 = vunpack.c.h.b16 %v246
    %v950 = vunpack.c.l.b16 %v247
    %v951 = vunpack.c.h.b16 %v247
    %v952 = vunpack.c.l.b16 %v248
    %v953 = vunpack.c.h.b16 %v248
    %v954 = vunpack.c.l.b16 %v249
    %v955 = vunpack.c.h.b16 %v249
    %v956 = vunpack.c.l.b16 %v250
    %v957 = vunpack.c.h.b16 %v250
    %v958 = vunpack.c.l.b16 %v251
    %v959 = vunpack.c.h.b16 %v251
    %v960 = vunpack.c.l.b16 %v252
    %v961 = vunpack.c.h.b16 %v252
    %v962 = vunpack.c.l.b16 %v253
    %v963 = vunpack.c.h.b16 %v253
    %v964 = vunpack.c.l.b16 %v254
    %v965 = vunpack.c.h.b16 %v254
    %v966 = vunpack.c.l.b16 %v255
    %v967 = vunpack.c.h.b16 %v255
    %v968 = vunpack.c.l.b16 %v256
    %v969 = vunpack.c.h.b16 %v256
    %v970 = vunpack.c.l.b16 %v257
    %v971 = vunpack.c.h.b16 %v257
    %v972 = vunpack.c.l.b16 %v258
    %v973 = vunpack.c.h.b16 %v258
    %v974 = vunpack.c.l.b16 %v259
    %v975 = vunpack.c.h.b16 %v259
    %v976 = vunpack.c.l.b16 %v260
    %v977 = vunpack.c.h.b16 %v260
    %v978 = vunpack.c.l.b16 %v261
    %v979 = vunpack.c.h.b16 %v261
    %v980 = vunpack.c.l.b16 %v262
    %v981 = vunpack.c.h.b16 %v262
    %v982 = vunpack.c.l.b16 %v263
    %v983 = vunpack.c.h.b16 %v263
    %v984 = vunpack.c.l.b16 %v264
    %v985 = vunpack.c.h.b16 %v264
    %v986 = vunpack.c.l.b16 %v265
    %v987 = vunpack.c.h.b16 %v265
    %v988 = vunpack.c.l.b16 %v266
    %v989 = vunpack.c.h.b16 %v266
    %v990 = vunpack.c.l.b16 %v267
    %v991 = vunpack.c.h.b16 %v267
    %v992 = vunpack.c.l.b16 %v268
    %v993 = vunpack.c.h.b16 %v268
    %v994 = vunpack.c.l.b16 %v269
    %v995 = vunpack.c.h.b16 %v269
    %v996 = vunpack.c.l.b16 %v270
    %v997 = vunpack.c.h.b16 %v270
    %v998 = vunpack.c.l.b16 %v271
    %v999 = vunpack.c.h.b16 %v271
    %v1000 = vunpack.c.l.b16 %v272
    %v1001 = vunpack.c.h.b16 %v272
    %v1002 = vunpack.c.l.b16 %v273
    %v1003 = vunpack.c.h.b16 %v273
    %v1004 = vunpack.c.l.b16 %v274
    %v1005 = vunpack.c.h.b16 %v274
    %v1006 = vunpack.c.l.b16 %v275
    %v1007 = vunpack.c.h.b16 %v275
    %v1008 = vunpack.c.l.b16 %v276
    %v1009 = vunpack.c.h.b16 %v276
    %v1010 = vunpack.c.l.b16 %v277
    %v1011 = vunpack.c.h.b16 %v277
    %v1012 = vunpack.c.l.b16 %v278
    %v1013 = vunpack.c.h.b16 %v278
    %v1014 = vunpack.c.l.b16 %v279
    %v1015 = vunpack.c.h.b16 %v279
    %v1016 = vunpack.c.l.b16 %v280
    %v1017 = vunpack.c.h.b16 %v280
    %v1018 = vunpack.c.l.b16 %v281
    %v1019 = vunpack.c.h.b16 %v281
    %v1020 = vunpack.c.l.b16 %v282
    %v1021 = vunpack.c.h.b16 %v282
    %v1022 = vunpack.c.l.b16 %v283
    %v1023 = vunpack.c.h.b16 %v283
    %v1024 = vunpack.c.l.b16 %v284
    %v1025 = vunpack.c.h.b16 %v284
    %v1026 = vunpack.c.l.b16 %v285
    %v1027 = vunpack.c.h.b16 %v285
    %v1028 = vunpack.c.l.b16 %v286
    %v1029 = vunpack.c.h.b16 %v286
    %v1030 = vunpack.c.l.b16 %v287
    %v1031 = vunpack.c.h.b16 %v287
    %v1032 = vunpack.c.l.b16 %v288
    %v1033 = vunpack.c.h.b16 %v288
    %v1034 = vunpack.c.l.b16 %v289
    %v1035 = vunpack.c.h.b16 %v289
    %v1036 = vunpack.c.l.b16 %v290
    %v1037 = vunpack.c.h.b16 %v290
    %v1038 = vunpack.c.l.b16 %v291
    %v1039 = vunpack.c.h.b16 %v291
    %v1040 = vunpack.c.l.b16 %v292
    %v1041 = vunpack.c.h.b16 %v292
    %v1042 = vunpack.c.l.b16 %v293
    %v1043 = vunpack.c.h.b16 %v293
    %v1044 = vunpack.c.l.b16 %v294
    %v1045 = vunpack.c.h.b16 %v294
    %v1046 = vunpack.c.l.b16 %v295
    %v1047 = vunpack.c.h.b16 %v295
    %v1048 = vunpack.c.l.b16 %v296
    %v1049 = vunpack.c.h.b16 %v296
    %v1050 = vunpack.c.l.b16 %v297
    %v1051 = vunpack.c.h.b16 %v297
    %v1052 = vunpack.c.l.b16 %v298
    %v1053 = vunpack.c.h.b16 %v298
    %v1054 = vunpack.c.l.b16 %v299
    %v1055 = vunpack.c.h.b16 %v299
    %v1056 = vunpack.c.l.b16 %v300
    %v1057 = vunpack.c.h.b16 %v300
    %v1058 = vunpack.c.l.b16 %v301
    %v1059 = vunpack.c.h.b16 %v301
    %v1060 = vunpack.c.l.b16 %v302
    %v1061 = vunpack.c.h.b16 %v302
    %v1062 = vunpack.c.l.b16 %v303
    %v1063 = vunpack.c.h.b16 %v303
    %v1064 = vunpack.c.l.b16 %v304
    %v1065 = vunpack.c.h.b16 %v304
    %v1066 = vunpack.c.l.b16 %v305
    %v1067 = vunpack.c.h.b16 %v305
    %v1068 = vunpack.c.l.b16 %v306
    %v1069 = vunpack.c.h.b16 %v306
    %v1070 = vunpack.c.l.b16 %v307
    %v1071 = vunpack.c.h.b16 %v307
    %v1072 = vunpack.c.l.b16 %v308
    %v1073 = vunpack.c.h.b16 %v308
    %v1074 = vunpack.c.l.b16 %v309
    %v1075 = vunpack.c.h.b16 %v309
    %v1076 = vunpack.c.l.b16 %v310
    %v1077 = vunpack.c.h.b16 %v310
    %v1078 = vunpack.c.l.b16 %v311
    %v1079 = vunpack.c.h.b16 %v311
    %v1080 = vpack.c.b16 %v600, %v568
    %v1081 = vpack.c.b16 %v601, %v569
    %v1082 = vpack.c.b16 %v602, %v570
    %v1083 = vpack.c.b16 %v603, %v571
    %v1084 = vpack.c.b16 %v604, %v572
    %v1085 = vpack.c.b16 %v605, %v573
    %v1086 = vpack.c.b16 %v606, %v574
    %v1087 = vpack.c.b16 %v607, %v575
    %v1088 = vpack.c.b16 %v608, %v576
    %v1089 = vpack.c.b16 %v609, %v577
    %v1090 = vpack.c.b16 %v610, %v578
    %v1091 = vpack.c.b16 %v611, %v579
    %v1092 = vpack.c.b16 %v612, %v580
    %v1093 = vpack.c.b16 %v613, %v581
    %v1094 = vpack.c.b16 %v614, %v582
    %v1095 = vpack.c.b16 %v615, %v583
    %v1096 = vpack.c.b16 %v616, %v584
    %v1097 = vpack.c.b16 %v617, %v585
    %v1098 = vpack.c.b16 %v618, %v586
    %v1099 = vpack.c.b16 %v619, %v587
    %v1100 = vpack.c.b16 %v620, %v588
    %v1101 = vpack.c.b16 %v621, %v589
    %v1102 = vpack.c.b16 %v622, %v590
    %v1103 = vpack.c.b16 %v623, %v591
    %v1104 = vpack.c.b16 %v624, %v592
    %v1105 = vpack.c.b16 %v625, %v593
    %v1106 = vpack.c.b16 %v626, %v594
    %v1107 = vpack.c.b16 %v627, %v595
    %v1108 = vpack.c.b16 %v628, %v596
    %v1109 = vpack.c.b16 %v629, %v597
    %v1110 = vpack.c.b16 %v630, %v598
    %v1111 = vpack.c.b16 %v631, %v599
    %v1112 = vpack.c.b16 %v664, %v632
    %v1113 = vpack.c.b16 %v665, %v633
    %v1114 = vpack.c.b16 %v666, %v634
    %v1115 = vpack.c.b16 %v667, %v635
    %v1116 = vpack.c.b16 %v668, %v636
    %v1117 = vpack.c.b16 %v669, %v637
    %v1118 = vpack.c.b16 %v670, %v638
    %v1119 = vpack.c.b16 %v671, %v639
    %v1120 = vpack.c.b16 %v672, %v640
    %v1121 = vpack.c.b16 %v673, %v641
    %v1122 = vpack.c.b16 %v674, %v642
    %v1123 = vpack.c.b16 %v675, %v643
    %v1124 = vpack.c.b16 %v676, %v644
    %v1125 = vpack.c.b16 %v677, %v645
    %v1126 = vpack.c.b16 %v678, %v646
    %v1127 = vpack.c.b16 %v679, %v647
    %v1128 = vpack.c.b16 %v680, %v648
    %v1129 = vpack.c.b16 %v681, %v649
    %v1130 = vpack.c.b16 %v682, %v650
    %v1131 = vpack.c.b16 %v683, %v651
    %v1132 = vpack.c.b16 %v684, %v652
    %v1133 = vpack.c.b16 %v685, %v653
    %v1134 = vpack.c.b16 %v686, %v654
    %v1135 = vpack.c.b16 %v687, %v655
    %v1136 = vpack.c.b16 %v688, %v656
    %v1137 = vpack.c.b16 %v689, %v657
    %v1138 = vpack.c.b16 %v690, %v658
    %v1139 = vpack.c.b16 %v691, %v659
    %v1140 = vpack.c.b16 %v692, %v660
    %v1141 = vpack.c.b16 %v693, %v661
    %v1142 = vpack.c.b16 %v694, %v662
    %v1143 = vpack.c.b16 %v695, %v663
    %v1144 = vpack.c.b16 %v728, %v696
    %v1145 = vpack.c.b16 %v729, %v697
    %v1146 = vpack.c.b16 %v730, %v698
    %v1147 = vpack.c.b16 %v731, %v699
    %v1148 = vpack.c.b16 %v732, %v700
    %v1149 = vpack.c.b16 %v733, %v701
    %v1150 = vpack.c.b16 %v734, %v702
    %v1151 = vpack.c.b16 %v735, %v703
    %v1152 = vpack.c.b16 %v736, %v704
    %v1153 = vpack.c.b16 %v737, %v705
    %v1154 = vpack.c.b16 %v738, %v706
    %v1155 = vpack.c.b16 %v739, %v707
    %v1156 = vpack.c.b16 %v740, %v708
    %v1157 = vpack.c.b16 %v741, %v709
    %v1158 = vpack.c.b16 %v742, %v710
    %v1159 = vpack.c.b16 %v743, %v711
    %v1160 = vpack.c.b16 %v744, %v712
    %v1161 = vpack.c.b16 %v745, %v713
    %v1162 = vpack.c.b16 %v746, %v714
    %v1163 = vpack.c.b16 %v747, %v715
    %v1164 = vpack.c.b16 %v748, %v716
    %v1165 = vpack.c.b16 %v749, %v717
    %v1166 = vpack.c.b16 %v750, %v718
    %v1167 = vpack.c.b16 %v751, %v719
    %v1168 = vpack.c.b16 %v752, %v720
    %v1169 = vpack.c.b16 %v753, %v721
    %v1170 = vpack.c.b16 %v754, %v722
    %v1171 = vpack.c.b16 %v755, %v723
    %v1172 = vpack.c.b16 %v756, %v724
    %v1173 = vpack.c.b16 %v757, %v725
    %v1174 = vpack.c.b16 %v758, %v726
    %v1175 = vpack.c.b16 %v759, %v727
    %v1176 = vpack.c.b16 %v792, %v760
    %v1177 = vpack.c.b16 %v793, %v761
    %v1178 = vpack.c.b16 %v794, %v762
    %v1179 = vpack.c.b16 %v795, %v763
    %v1180 = vpack.c.b16 %v796, %v764
    %v1181 = vpack.c.b16 %v797, %v765
    %v1182 = vpack.c.b16 %v798, %v766
    %v1183 = vpack.c.b16 %v799, %v767
    %v1184 = vpack.c.b16 %v800, %v768
    %v1185 = vpack.c.b16 %v801, %v769
    %v1186 = vpack.c.b16 %v802, %v770
    %v1187 = vpack.c.b16 %v803, %v771
    %v1188 = vpack.c.b16 %v804, %v772
    %v1189 = vpack.c.b16 %v805, %v773
    %v1190 = vpack.c.b16 %v806, %v774
    %v1191 = vpack.c.b16 %v807, %v775
    %v1192 = vpack.c.b16 %v808, %v776
    %v1193 = vpack.c.b16 %v809, %v777
    %v1194 = vpack.c.b16 %v810, %v778
    %v1195 = vpack.c.b16 %v811, %v779
    %v1196 = vpack.c.b16 %v812, %v780
    %v1197 = vpack.c.b16 %v813, %v781
    %v1198 = vpack.c.b16 %v814, %v782
    %v1199 = vpack.c.b16 %v815, %v783
    %v1200 = vpack.c.b16 %v816, %v784
    %v1201 = vpack.c.b16 %v817, %v785
    %v1202 = vpack.c.b16 %v818, %v786
    %v1203 = vpack.c.b16 %v819, %v787
    %v1204 = vpack.c.b16 %v820, %v788
    %v1205 = vpack.c.b16 %v821, %v789
    %v1206 = vpack.c.b16 %v822, %v790
    %v1207 = vpack.c.b16 %v823, %v791
    %v1208 = vpack.c.b16 %v856, %v824
    %v1209 = vpack.c.b16 %v857, %v825
    %v1210 = vpack.c.b16 %v858, %v826
    %v1211 = vpack.c.b16 %v859, %v827
    %v1212 = vpack.c.b16 %v860, %v828
    %v1213 = vpack.c.b16 %v861, %v829
    %v1214 = vpack.c.b16 %v862, %v830
    %v1215 = vpack.c.b16 %v863, %v831
    %v1216 = vpack.c.b16 %v864, %v832
    %v1217 = vpack.c.b16 %v865, %v833
    %v1218 = vpack.c.b16 %v866, %v834
    %v1219 = vpack.c.b16 %v867, %v835
    %v1220 = vpack.c.b16 %v868, %v836
    %v1221 = vpack.c.b16 %v869, %v837
    %v1222 = vpack.c.b16 %v870, %v838
    %v1223 = vpack.c.b16 %v871, %v839
    %v1224 = vpack.c.b16 %v872, %v840
    %v1225 = vpack.c.b16 %v873, %v841
    %v1226 = vpack.c.b16 %v874, %v842
    %v1227 = vpack.c.b16 %v875, %v843
    %v1228 = vpack.c.b16 %v876, %v844
    %v1229 = vpack.c.b16 %v877, %v845
    %v1230 = vpack.c.b16 %v878, %v846
    %v1231 = vpack.c.b16 %v879, %v847
    %v1232 = vpack.c.b16 %v880, %v848
    %v1233 = vpack.c.b16 %v881, %v849
    %v1234 = vpack.c.b16 %v882, %v850
    %v1235 = vpack.c.b16 %v883, %v851
    %v1236 = vpack.c.b16 %v884, %v852
    %v1237 = vpack.c.b16 %v885, %v853
    %v1238 = vpack.c.b16 %v886, %v854
    %v1239 = vpack.c.b16 %v887, %v855
    %v1240 = vpack.c.b16 %v920, %v888
    %v1241 = vpack.c.b16 %v921, %v889
    %v1242 = vpack.c.b16 %v922, %v890
    %v1243 = vpack.c.b16 %v923, %v891
    %v1244 = vpack.c.b16 %v924, %v892
    %v1245 = vpack.c.b16 %v925, %v893
    %v1246 = vpack.c.b16 %v926, %v894
    %v1247 = vpack.c.b16 %v927, %v895
    %v1248 = vpack.c.b16 %v928, %v896
    %v1249 = vpack.c.b16 %v929, %v897
    %v1250 = vpack.c.b16 %v930, %v898
    %v1251 = vpack.c.b16 %v931, %v899
    %v1252 = vpack.c.b16 %v932, %v900
    %v1253 = vpack.c.b16 %v933, %v901
    %v1254 = vpack.c.b16 %v934, %v902
    %v1255 = vpack.c.b16 %v935, %v903
    %v1256 = vpack.c.b16 %v936, %v904
    %v1257 = vpack.c.b16 %v937, %v905
    %v1258 = vpack.c.b16 %v938, %v906
    %v1259 = vpack.c.b16 %v939, %v907
    %v1260 = vpack.c.b16 %v940, %v908
    %v1261 = vpack.c.b16 %v941, %v909
    %v1262 = vpack.c.b16 %v942, %v910
    %v1263 = vpack.c.b16 %v943, %v911
    %v1264 = vpack.c.b16 %v944, %v912
    %v1265 = vpack.c.b16 %v945, %v913
    %v1266 = vpack.c.b16 %v946, %v914
    %v1267 = vpack.c.b16 %v947, %v915
    %v1268 = vpack.c.b16 %v948, %v916
    %v1269 = vpack.c.b16 %v949, %v917
    %v1270 = vpack.c.b16 %v950, %v918
    %v1271 = vpack.c.b16 %v951, %v919
    %v1272 = vpack.c.b16 %v984, %v952
    %v1273 = vpack.c.b16 %v985, %v953
    %v1274 = vpack.c.b16 %v986, %v954
    %v1275 = vpack.c.b16 %v987, %v955
    %v1276 = vpack.c.b16 %v988, %v956
    %v1277 = vpack.c.b16 %v989, %v957
    %v1278 = vpack.c.b16 %v990, %v958
    %v1279 = vpack.c.b16 %v991, %v959
    %v1280 = vpack.c.b16 %v992, %v960
    %v1281 = vpack.c.b16 %v993, %v961
    %v1282 = vpack.c.b16 %v994, %v962
    %v1283 = vpack.c.b16 %v995, %v963
    %v1284 = vpack.c.b16 %v996, %v964
    %v1285 = vpack.c.b16 %v997, %v965
    %v1286 = vpack.c.b16 %v998, %v966
    %v1287 = vpack.c.b16 %v999, %v967
    %v1288 = vpack.c.b16 %v1000, %v968
    %v1289 = vpack.c.b16 %v1001, %v969
    %v1290 = vpack.c.b16 %v1002, %v970
    %v1291 = vpack.c.b16 %v1003, %v971
    %v1292 = vpack.c.b16 %v1004, %v972
    %v1293 = vpack.c.b16 %v1005, %v973
    %v1294 = vpack.c.b16 %v1006, %v974
    %v1295 = vpack.c.b16 %v1007, %v975
    %v1296 = vpack.c.b16 %v1008, %v976
    %v1297 = vpack.c.b16 %v1009, %v977
    %v1298 = vpack.c.b16 %v1010, %v978
    %v1299 = vpack.c.b16 %v1011, %v979
    %v1300 = vpack.c.b16 %v1012, %v980
    %v1301 = vpack.c.b16 %v1013, %v981
    %v1302 = vpack.c.b16 %v1014, %v982
    %v1303 = vpack.c.b16 %v1015, %v983
    %v1304 = vpack.c.b16 %v1048, %v1016
    %v1305 = vpack.c.b16 %v1049, %v1017
    %v1306 = vpack.c.b16 %v1050, %v1018
    %v1307 = vpack.c.b16 %v1051, %v1019
    %v1308 = vpack.c.b16 %v1052, %v1020
    %v1309 = vpack.c.b16 %v1053, %v1021
    %v1310 = vpack.c.b16 %v1054, %v1022
    %v1311 = vpack.c.b16 %v1055, %v1023
    %v1312 = vpack.c.b16 %v1056, %v1024
    %v1313 = vpack.c.b16 %v1057, %v1025
    %v1314 = vpack.c.b16 %v1058, %v1026
    %v1315 = vpack.c.b16 %v1059, %v1027
    %v1316 = vpack.c.b16 %v1060, %v1028
    %v1317 = vpack.c.b16 %v1061, %v1029
    %v1318 = vpack.c.b16 %v1062, %v1030
    %v1319 = vpack.c.b16 %v1063, %v1031
    %v1320 = vpack.c.b16 %v1064, %v1032
    %v1321 = vpack.c.b16 %v1065, %v1033
    %v1322 = vpack.c.b16 %v1066, %v1034
    %v1323 = vpack.c.b16 %v1067, %v1035
    %v1324 = vpack.c.b16 %v1068, %v1036
    %v1325 = vpack.c.b16 %v1069, %v1037
    %v1326 = vpack.c.b16 %v1070, %v1038
    %v1327 = vpack.c.b16 %v1071, %v1039
    %v1328 = vpack.c.b16 %v1072, %v1040
    %v1329 = vpack.c.b16 %v1073, %v1041
    %v1330 = vpack.c.b16 %v1074, %v1042
    %v1331 = vpack.c.b16 %v1075, %v1043
    %v1332 = vpack.c.b16 %v1076, %v1044
    %v1333 = vpack.c.b16 %v1077, %v1045
    %v1334 = vpack.c.b16 %v1078, %v1046
    %v1335 = vpack.c.b16 %v1079, %v1047
    %1592 = vmatprep.subr.bf16.mxu0 %v1081
    %1593 = vmatpush1.bf16.msra.mxu0 %v1080
    %1594 = vmatprep.subr.bf16.mxu0 %v1113
    %1595 = vmatpush1.bf16.msra.mxu0 %v1112
    %1596 = vmatprep.subr.bf16.mxu0 %v1145
    %1597 = vmatpush1.bf16.msra.mxu0 %v1144
    %1598 = vmatprep.subr.bf16.mxu0 %v1177
    %1599 = vmatpush1.bf16.msra.mxu0 %v1176
    %1600 = vmatprep.subr.bf16.mxu0 %v1209
    %1601 = vmatpush1.bf16.msra.mxu0 %v1208
    %1602 = vmatprep.subr.bf16.mxu0 %v1241
    %1603 = vmatpush1.bf16.msra.mxu0 %v1240
    %1604 = vmatprep.subr.bf16.mxu0 %v1273
    %1605 = vmatpush1.bf16.msra.mxu0 %v1272
    %1606 = vmatprep.subr.bf16.mxu0 %v1305
    %1607 = vmatpush1.bf16.msra.mxu0 %v1304
    %1608 = vmatprep.subr.bf16.mxu0 0
    %1609 = vmatpush1.bf16.msra.mxu0 0
    %1610 = vmatprep.subr.bf16.mxu0 0
    %1611 = vmatpush1.bf16.msra.mxu0 0
    %1612 = vmatprep.subr.bf16.mxu0 0
    %1613 = vmatpush1.bf16.msra.mxu0 0
    %1614 = vmatprep.subr.bf16.mxu0 0
    %1615 = vmatpush1.bf16.msra.mxu0 0
    %1616 = vmatprep.subr.bf16.mxu0 0
    %1617 = vmatpush1.bf16.msra.mxu0 0
    %1618 = vmatprep.subr.bf16.mxu0 0
    %1619 = vmatpush1.bf16.msra.mxu0 0
    %1620 = vmatprep.subr.bf16.mxu0 0
    %1621 = vmatpush1.bf16.msra.mxu0 0
    %1622 = vmatprep.subr.bf16.mxu0 0
    %1623 = vmatpush1.bf16.msra.mxu0 0
    %1624 = vmatprep.mubr.bf16.mxu0 0
    %1625 = vmatmul.mubr.bf16.gmra.mrb[0].mxu0 %v55
    %v1626 = vpop.f32.mrb[0].mxu0
    %v1627 = vadd.f32 0.0, %v1626
    %v1628 = vpop.f32.mrb[0].mxu0
    %v1629 = vadd.f32 0.0, %v1628
    %v1630 = vpop.f32.mrb[0].mxu0
    %v1631 = vpop.f32.mrb[0].mxu0
    %1632 = vdwg.mxu0
    %1633 = vmatprep.subr.bf16.mxu0 %v1083
    %1634 = vmatpush1.bf16.msra.mxu0 %v1082
    %1635 = vmatprep.subr.bf16.mxu0 %v1115
    %1636 = vmatpush1.bf16.msra.mxu0 %v1114
    %1637 = vmatprep.subr.bf16.mxu0 %v1147
    %1638 = vmatpush1.bf16.msra.mxu0 %v1146
    %1639 = vmatprep.subr.bf16.mxu0 %v1179
    %1640 = vmatpush1.bf16.msra.mxu0 %v1178
    %1641 = vmatprep.subr.bf16.mxu0 %v1211
    %1642 = vmatpush1.bf16.msra.mxu0 %v1210
    %1643 = vmatprep.subr.bf16.mxu0 %v1243
    %1644 = vmatpush1.bf16.msra.mxu0 %v1242
    %1645 = vmatprep.subr.bf16.mxu0 %v1275
    %1646 = vmatpush1.bf16.msra.mxu0 %v1274
    %1647 = vmatprep.subr.bf16.mxu0 %v1307
    %1648 = vmatpush1.bf16.msra.mxu0 %v1306
    %1649 = vmatprep.subr.bf16.mxu0 0
    %1650 = vmatpush1.bf16.msra.mxu0 0
    %1651 = vmatprep.subr.bf16.mxu0 0
    %1652 = vmatpush1.bf16.msra.mxu0 0
    %1653 = vmatprep.subr.bf16.mxu0 0
    %1654 = vmatpush1.bf16.msra.mxu0 0
    %1655 = vmatprep.subr.bf16.mxu0 0
    %1656 = vmatpush1.bf16.msra.mxu0 0
    %1657 = vmatprep.subr.bf16.mxu0 0
    %1658 = vmatpush1.bf16.msra.mxu0 0
    %1659 = vmatprep.subr.bf16.mxu0 0
    %1660 = vmatpush1.bf16.msra.mxu0 0
    %1661 = vmatprep.subr.bf16.mxu0 0
    %1662 = vmatpush1.bf16.msra.mxu0 0
    %1663 = vmatprep.subr.bf16.mxu0 0
    %1664 = vmatpush1.bf16.msra.mxu0 0
    %1665 = vmatprep.mubr.bf16.mxu0 0
    %1666 = vmatmul.mubr.bf16.gmra.mrb[0].mxu0 %v55
    %v1667 = vpop.f32.mrb[0].mxu0
    %v1668 = vadd.f32 0.0, %v1667
    %v1669 = vpop.f32.mrb[0].mxu0
    %v1670 = vadd.f32 0.0, %v1669
    %v1671 = vpop.f32.mrb[0].mxu0
    %v1672 = vpop.f32.mrb[0].mxu0
    %1673 = vdwg.mxu0
    %1674 = vmatprep.subr.bf16.mxu0 %v1085
    %1675 = vmatpush1.bf16.msra.mxu0 %v1084
    %1676 = vmatprep.subr.bf16.mxu0 %v1117
    %1677 = vmatpush1.bf16.msra.mxu0 %v1116
    %1678 = vmatprep.subr.bf16.mxu0 %v1149
    %1679 = vmatpush1.bf16.msra.mxu0 %v1148
    %1680 = vmatprep.subr.bf16.mxu0 %v1181
    %1681 = vmatpush1.bf16.msra.mxu0 %v1180
    %1682 = vmatprep.subr.bf16.mxu0 %v1213
    %1683 = vmatpush1.bf16.msra.mxu0 %v1212
    %1684 = vmatprep.subr.bf16.mxu0 %v1245
    %1685 = vmatpush1.bf16.msra.mxu0 %v1244
    %1686 = vmatprep.subr.bf16.mxu0 %v1277
    %1687 = vmatpush1.bf16.msra.mxu0 %v1276
    %1688 = vmatprep.subr.bf16.mxu0 %v1309
    %1689 = vmatpush1.bf16.msra.mxu0 %v1308
    %1690 = vmatprep.subr.bf16.mxu0 0
    %1691 = vmatpush1.bf16.msra.mxu0 0
    %1692 = vmatprep.subr.bf16.mxu0 0
    %1693 = vmatpush1.bf16.msra.mxu0 0
    %1694 = vmatprep.subr.bf16.mxu0 0
    %1695 = vmatpush1.bf16.msra.mxu0 0
    %1696 = vmatprep.subr.bf16.mxu0 0
    %1697 = vmatpush1.bf16.msra.mxu0 0
    %1698 = vmatprep.subr.bf16.mxu0 0
    %1699 = vmatpush1.bf16.msra.mxu0 0
    %1700 = vmatprep.subr.bf16.mxu0 0
    %1701 = vmatpush1.bf16.msra.mxu0 0
    %1702 = vmatprep.subr.bf16.mxu0 0
    %1703 = vmatpush1.bf16.msra.mxu0 0
    %1704 = vmatprep.subr.bf16.mxu0 0
    %1705 = vmatpush1.bf16.msra.mxu0 0
    %1706 = vmatprep.mubr.bf16.mxu0 0
    %1707 = vmatmul.mubr.bf16.gmra.mrb[0].mxu0 %v55
    %v1708 = vpop.f32.mrb[0].mxu0
    %v1709 = vadd.f32 0.0, %v1708
    %v1710 = vpop.f32.mrb[0].mxu0
    %v1711 = vadd.f32 0.0, %v1710
    %v1712 = vpop.f32.mrb[0].mxu0
    %v1713 = vpop.f32.mrb[0].mxu0
    %1714 = vdwg.mxu0
    %1715 = vmatprep.subr.bf16.mxu0 %v1087
    %1716 = vmatpush1.bf16.msra.mxu0 %v1086
    %1717 = vmatprep.subr.bf16.mxu0 %v1119
    %1718 = vmatpush1.bf16.msra.mxu0 %v1118
    %1719 = vmatprep.subr.bf16.mxu0 %v1151
    %1720 = vmatpush1.bf16.msra.mxu0 %v1150
    %1721 = vmatprep.subr.bf16.mxu0 %v1183
    %1722 = vmatpush1.bf16.msra.mxu0 %v1182
    %1723 = vmatprep.subr.bf16.mxu0 %v1215
    %1724 = vmatpush1.bf16.msra.mxu0 %v1214
    %1725 = vmatprep.subr.bf16.mxu0 %v1247
    %1726 = vmatpush1.bf16.msra.mxu0 %v1246
    %1727 = vmatprep.subr.bf16.mxu0 %v1279
    %1728 = vmatpush1.bf16.msra.mxu0 %v1278
    %1729 = vmatprep.subr.bf16.mxu0 %v1311
    %1730 = vmatpush1.bf16.msra.mxu0 %v1310
    %1731 = vmatprep.subr.bf16.mxu0 0
    %1732 = vmatpush1.bf16.msra.mxu0 0
    %1733 = vmatprep.subr.bf16.mxu0 0
    %1734 = vmatpush1.bf16.msra.mxu0 0
    %1735 = vmatprep.subr.bf16.mxu0 0
    %1736 = vmatpush1.bf16.msra.mxu0 0
    %1737 = vmatprep.subr.bf16.mxu0 0
    %1738 = vmatpush1.bf16.msra.mxu0 0
    %1739 = vmatprep.subr.bf16.mxu0 0
    %1740 = vmatpush1.bf16.msra.mxu0 0
    %1741 = vmatprep.subr.bf16.mxu0 0
    %1742 = vmatpush1.bf16.msra.mxu0 0
    %1743 = vmatprep.subr.bf16.mxu0 0
    %1744 = vmatpush1.bf16.msra.mxu0 0
    %1745 = vmatprep.subr.bf16.mxu0 0
    %1746 = vmatpush1.bf16.msra.mxu0 0
    %1747 = vmatprep.mubr.bf16.mxu0 0
    %1748 = vmatmul.mubr.bf16.gmra.mrb[0].mxu0 %v55
    %v1749 = vpop.f32.mrb[0].mxu0
    %v1750 = vadd.f32 0.0, %v1749
    %v1751 = vpop.f32.mrb[0].mxu0
    %v1752 = vadd.f32 0.0, %v1751
    %v1753 = vpop.f32.mrb[0].mxu0
    %v1754 = vpop.f32.mrb[0].mxu0
    %1755 = vdwg.mxu0
    %1756 = vmatprep.subr.bf16.mxu0 %v1089
    %1757 = vmatpush1.bf16.msra.mxu0 %v1088
    %1758 = vmatprep.subr.bf16.mxu0 %v1121
    %1759 = vmatpush1.bf16.msra.mxu0 %v1120
    %1760 = vmatprep.subr.bf16.mxu0 %v1153
    %1761 = vmatpush1.bf16.msra.mxu0 %v1152
    %1762 = vmatprep.subr.bf16.mxu0 %v1185
    %1763 = vmatpush1.bf16.msra.mxu0 %v1184
    %1764 = vmatprep.subr.bf16.mxu0 %v1217
    %1765 = vmatpush1.bf16.msra.mxu0 %v1216
    %1766 = vmatprep.subr.bf16.mxu0 %v1249
    %1767 = vmatpush1.bf16.msra.mxu0 %v1248
    %1768 = vmatprep.subr.bf16.mxu0 %v1281
    %1769 = vmatpush1.bf16.msra.mxu0 %v1280
    %1770 = vmatprep.subr.bf16.mxu0 %v1313
    %1771 = vmatpush1.bf16.msra.mxu0 %v1312
    %1772 = vmatprep.subr.bf16.mxu0 0
    %1773 = vmatpush1.bf16.msra.mxu0 0
    %1774 = vmatprep.subr.bf16.mxu0 0
    %1775 = vmatpush1.bf16.msra.mxu0 0
    %1776 = vmatprep.subr.bf16.mxu0 0
    %1777 = vmatpush1.bf16.msra.mxu0 0
    %1778 = vmatprep.subr.bf16.mxu0 0
    %1779 = vmatpush1.bf16.msra.mxu0 0
    %1780 = vmatprep.subr.bf16.mxu0 0
    %1781 = vmatpush1.bf16.msra.mxu0 0
    %1782 = vmatprep.subr.bf16.mxu0 0
    %1783 = vmatpush1.bf16.msra.mxu0 0
    %1784 = vmatprep.subr.bf16.mxu0 0
    %1785 = vmatpush1.bf16.msra.mxu0 0
    %1786 = vmatprep.subr.bf16.mxu0 0
    %1787 = vmatpush1.bf16.msra.mxu0 0
    %1788 = vmatprep.mubr.bf16.mxu0 0
    %1789 = vmatmul.mubr.bf16.gmra.mrb[0].mxu0 %v55
    %v1790 = vpop.f32.mrb[0].mxu0
    %v1791 = vadd.f32 0.0, %v1790
    %v1792 = vpop.f32.mrb[0].mxu0
    %v1793 = vadd.f32 0.0, %v1792
    %v1794 = vpop.f32.mrb[0].mxu0
    %v1795 = vpop.f32.mrb[0].mxu0
    %1796 = vdwg.mxu0
    %1797 = vmatprep.subr.bf16.mxu0 %v1091
    %1798 = vmatpush1.bf16.msra.mxu0 %v1090
    %1799 = vmatprep.subr.bf16.mxu0 %v1123
    %1800 = vmatpush1.bf16.msra.mxu0 %v1122
    %1801 = vmatprep.subr.bf16.mxu0 %v1155
    %1802 = vmatpush1.bf16.msra.mxu0 %v1154
    %1803 = vmatprep.subr.bf16.mxu0 %v1187
    %1804 = vmatpush1.bf16.msra.mxu0 %v1186
    %1805 = vmatprep.subr.bf16.mxu0 %v1219
    %1806 = vmatpush1.bf16.msra.mxu0 %v1218
    %1807 = vmatprep.subr.bf16.mxu0 %v1251
    %1808 = vmatpush1.bf16.msra.mxu0 %v1250
    %1809 = vmatprep.subr.bf16.mxu0 %v1283
    %1810 = vmatpush1.bf16.msra.mxu0 %v1282
    %1811 = vmatprep.subr.bf16.mxu0 %v1315
    %1812 = vmatpush1.bf16.msra.mxu0 %v1314
    %1813 = vmatprep.subr.bf16.mxu0 0
    %1814 = vmatpush1.bf16.msra.mxu0 0
    %1815 = vmatprep.subr.bf16.mxu0 0
    %1816 = vmatpush1.bf16.msra.mxu0 0
    %1817 = vmatprep.subr.bf16.mxu0 0
    %1818 = vmatpush1.bf16.msra.mxu0 0
    %1819 = vmatprep.subr.bf16.mxu0 0
    %1820 = vmatpush1.bf16.msra.mxu0 0
    %1821 = vmatprep.subr.bf16.mxu0 0
    %1822 = vmatpush1.bf16.msra.mxu0 0
    %1823 = vmatprep.subr.bf16.mxu0 0
    %1824 = vmatpush1.bf16.msra.mxu0 0
    %1825 = vmatprep.subr.bf16.mxu0 0
    %1826 = vmatpush1.bf16.msra.mxu0 0
    %1827 = vmatprep.subr.bf16.mxu0 0
    %1828 = vmatpush1.bf16.msra.mxu0 0
    %1829 = vmatprep.mubr.bf16.mxu0 0
    %1830 = vmatmul.mubr.bf16.gmra.mrb[0].mxu0 %v55
    %v1831 = vpop.f32.mrb[0].mxu0
    %v1832 = vadd.f32 0.0, %v1831
    %v1833 = vpop.f32.mrb[0].mxu0
    %v1834 = vadd.f32 0.0, %v1833
    %v1835 = vpop.f32.mrb[0].mxu0
    %v1836 = vpop.f32.mrb[0].mxu0
    %1837 = vdwg.mxu0
    %1838 = vmatprep.subr.bf16.mxu0 %v1093
    %1839 = vmatpush1.bf16.msra.mxu0 %v1092
    %1840 = vmatprep.subr.bf16.mxu0 %v1125
    %1841 = vmatpush1.bf16.msra.mxu0 %v1124
    %1842 = vmatprep.subr.bf16.mxu0 %v1157
    %1843 = vmatpush1.bf16.msra.mxu0 %v1156
    %1844 = vmatprep.subr.bf16.mxu0 %v1189
    %1845 = vmatpush1.bf16.msra.mxu0 %v1188
    %1846 = vmatprep.subr.bf16.mxu0 %v1221
    %1847 = vmatpush1.bf16.msra.mxu0 %v1220
    %1848 = vmatprep.subr.bf16.mxu0 %v1253
    %1849 = vmatpush1.bf16.msra.mxu0 %v1252
    %1850 = vmatprep.subr.bf16.mxu0 %v1285
    %1851 = vmatpush1.bf16.msra.mxu0 %v1284
    %1852 = vmatprep.subr.bf16.mxu0 %v1317
    %1853 = vmatpush1.bf16.msra.mxu0 %v1316
    %1854 = vmatprep.subr.bf16.mxu0 0
    %1855 = vmatpush1.bf16.msra.mxu0 0
    %1856 = vmatprep.subr.bf16.mxu0 0
    %1857 = vmatpush1.bf16.msra.mxu0 0
    %1858 = vmatprep.subr.bf16.mxu0 0
    %1859 = vmatpush1.bf16.msra.mxu0 0
    %1860 = vmatprep.subr.bf16.mxu0 0
    %1861 = vmatpush1.bf16.msra.mxu0 0
    %1862 = vmatprep.subr.bf16.mxu0 0
    %1863 = vmatpush1.bf16.msra.mxu0 0
    %1864 = vmatprep.subr.bf16.mxu0 0
    %1865 = vmatpush1.bf16.msra.mxu0 0
    %1866 = vmatprep.subr.bf16.mxu0 0
    %1867 = vmatpush1.bf16.msra.mxu0 0
    %1868 = vmatprep.subr.bf16.mxu0 0
    %1869 = vmatpush1.bf16.msra.mxu0 0
    %1870 = vmatprep.mubr.bf16.mxu0 0
    %1871 = vmatmul.mubr.bf16.gmra.mrb[0].mxu0 %v55
    %v1872 = vpop.f32.mrb[0].mxu0
    %v1873 = vadd.f32 0.0, %v1872
    %v1874 = vpop.f32.mrb[0].mxu0
    %v1875 = vadd.f32 0.0, %v1874
    %v1876 = vpop.f32.mrb[0].mxu0
    %v1877 = vpop.f32.mrb[0].mxu0
    %1878 = vdwg.mxu0
    %1879 = vmatprep.subr.bf16.mxu0 %v1095
    %1880 = vmatpush1.bf16.msra.mxu0 %v1094
    %1881 = vmatprep.subr.bf16.mxu0 %v1127
    %1882 = vmatpush1.bf16.msra.mxu0 %v1126
    %1883 = vmatprep.subr.bf16.mxu0 %v1159
    %1884 = vmatpush1.bf16.msra.mxu0 %v1158
    %1885 = vmatprep.subr.bf16.mxu0 %v1191
    %1886 = vmatpush1.bf16.msra.mxu0 %v1190
    %1887 = vmatprep.subr.bf16.mxu0 %v1223
    %1888 = vmatpush1.bf16.msra.mxu0 %v1222
    %1889 = vmatprep.subr.bf16.mxu0 %v1255
    %1890 = vmatpush1.bf16.msra.mxu0 %v1254
    %1891 = vmatprep.subr.bf16.mxu0 %v1287
    %1892 = vmatpush1.bf16.msra.mxu0 %v1286
    %1893 = vmatprep.subr.bf16.mxu0 %v1319
    %1894 = vmatpush1.bf16.msra.mxu0 %v1318
    %1895 = vmatprep.subr.bf16.mxu0 0
    %1896 = vmatpush1.bf16.msra.mxu0 0
    %1897 = vmatprep.subr.bf16.mxu0 0
    %1898 = vmatpush1.bf16.msra.mxu0 0
    %1899 = vmatprep.subr.bf16.mxu0 0
    %1900 = vmatpush1.bf16.msra.mxu0 0
    %1901 = vmatprep.subr.bf16.mxu0 0
    %1902 = vmatpush1.bf16.msra.mxu0 0
    %1903 = vmatprep.subr.bf16.mxu0 0
    %1904 = vmatpush1.bf16.msra.mxu0 0
    %1905 = vmatprep.subr.bf16.mxu0 0
    %1906 = vmatpush1.bf16.msra.mxu0 0
    %1907 = vmatprep.subr.bf16.mxu0 0
    %1908 = vmatpush1.bf16.msra.mxu0 0
    %1909 = vmatprep.subr.bf16.mxu0 0
    %1910 = vmatpush1.bf16.msra.mxu0 0
    %1911 = vmatprep.mubr.bf16.mxu0 0
    %1912 = vmatmul.mubr.bf16.gmra.mrb[0].mxu0 %v55
    %v1913 = vpop.f32.mrb[0].mxu0
    %v1914 = vadd.f32 0.0, %v1913
    %v1915 = vpop.f32.mrb[0].mxu0
    %v1916 = vadd.f32 0.0, %v1915
    %v1917 = vpop.f32.mrb[0].mxu0
    %v1918 = vpop.f32.mrb[0].mxu0
    %1919 = vdwg.mxu0
    %1920 = vmatprep.subr.bf16.mxu0 %v1097
    %1921 = vmatpush1.bf16.msra.mxu0 %v1096
    %1922 = vmatprep.subr.bf16.mxu0 %v1129
    %1923 = vmatpush1.bf16.msra.mxu0 %v1128
    %1924 = vmatprep.subr.bf16.mxu0 %v1161
    %1925 = vmatpush1.bf16.msra.mxu0 %v1160
    %1926 = vmatprep.subr.bf16.mxu0 %v1193
    %1927 = vmatpush1.bf16.msra.mxu0 %v1192
    %1928 = vmatprep.subr.bf16.mxu0 %v1225
    %1929 = vmatpush1.bf16.msra.mxu0 %v1224
    %1930 = vmatprep.subr.bf16.mxu0 %v1257
    %1931 = vmatpush1.bf16.msra.mxu0 %v1256
    %1932 = vmatprep.subr.bf16.mxu0 %v1289
    %1933 = vmatpush1.bf16.msra.mxu0 %v1288
    %1934 = vmatprep.subr.bf16.mxu0 %v1321
    %1935 = vmatpush1.bf16.msra.mxu0 %v1320
    %1936 = vmatprep.subr.bf16.mxu0 0
    %1937 = vmatpush1.bf16.msra.mxu0 0
    %1938 = vmatprep.subr.bf16.mxu0 0
    %1939 = vmatpush1.bf16.msra.mxu0 0
    %1940 = vmatprep.subr.bf16.mxu0 0
    %1941 = vmatpush1.bf16.msra.mxu0 0
    %1942 = vmatprep.subr.bf16.mxu0 0
    %1943 = vmatpush1.bf16.msra.mxu0 0
    %1944 = vmatprep.subr.bf16.mxu0 0
    %1945 = vmatpush1.bf16.msra.mxu0 0
    %1946 = vmatprep.subr.bf16.mxu0 0
    %1947 = vmatpush1.bf16.msra.mxu0 0
    %1948 = vmatprep.subr.bf16.mxu0 0
    %1949 = vmatpush1.bf16.msra.mxu0 0
    %1950 = vmatprep.subr.bf16.mxu0 0
    %1951 = vmatpush1.bf16.msra.mxu0 0
    %1952 = vmatprep.mubr.bf16.mxu0 0
    %1953 = vmatmul.mubr.bf16.gmra.mrb[0].mxu0 %v55
    %v1954 = vpop.f32.mrb[0].mxu0
    %v1955 = vadd.f32 0.0, %v1954
    %v1956 = vpop.f32.mrb[0].mxu0
    %v1957 = vadd.f32 0.0, %v1956
    %v1958 = vpop.f32.mrb[0].mxu0
    %v1959 = vpop.f32.mrb[0].mxu0
    %1960 = vdwg.mxu0
    %1961 = vmatprep.subr.bf16.mxu0 %v1099
    %1962 = vmatpush1.bf16.msra.mxu0 %v1098
    %1963 = vmatprep.subr.bf16.mxu0 %v1131
    %1964 = vmatpush1.bf16.msra.mxu0 %v1130
    %1965 = vmatprep.subr.bf16.mxu0 %v1163
    %1966 = vmatpush1.bf16.msra.mxu0 %v1162
    %1967 = vmatprep.subr.bf16.mxu0 %v1195
    %1968 = vmatpush1.bf16.msra.mxu0 %v1194
    %1969 = vmatprep.subr.bf16.mxu0 %v1227
    %1970 = vmatpush1.bf16.msra.mxu0 %v1226
    %1971 = vmatprep.subr.bf16.mxu0 %v1259
    %1972 = vmatpush1.bf16.msra.mxu0 %v1258
    %1973 = vmatprep.subr.bf16.mxu0 %v1291
    %1974 = vmatpush1.bf16.msra.mxu0 %v1290
    %1975 = vmatprep.subr.bf16.mxu0 %v1323
    %1976 = vmatpush1.bf16.msra.mxu0 %v1322
    %1977 = vmatprep.subr.bf16.mxu0 0
    %1978 = vmatpush1.bf16.msra.mxu0 0
    %1979 = vmatprep.subr.bf16.mxu0 0
    %1980 = vmatpush1.bf16.msra.mxu0 0
    %1981 = vmatprep.subr.bf16.mxu0 0
    %1982 = vmatpush1.bf16.msra.mxu0 0
    %1983 = vmatprep.subr.bf16.mxu0 0
    %1984 = vmatpush1.bf16.msra.mxu0 0
    %1985 = vmatprep.subr.bf16.mxu0 0
    %1986 = vmatpush1.bf16.msra.mxu0 0
    %1987 = vmatprep.subr.bf16.mxu0 0
    %1988 = vmatpush1.bf16.msra.mxu0 0
    %1989 = vmatprep.subr.bf16.mxu0 0
    %1990 = vmatpush1.bf16.msra.mxu0 0
    %1991 = vmatprep.subr.bf16.mxu0 0
    %1992 = vmatpush1.bf16.msra.mxu0 0
    %1993 = vmatprep.mubr.bf16.mxu0 0
    %1994 = vmatmul.mubr.bf16.gmra.mrb[0].mxu0 %v55
    %v1995 = vpop.f32.mrb[0].mxu0
    %v1996 = vadd.f32 0.0, %v1995
    %v1997 = vpop.f32.mrb[0].mxu0
    %v1998 = vadd.f32 0.0, %v1997
    %v1999 = vpop.f32.mrb[0].mxu0
    %v2000 = vpop.f32.mrb[0].mxu0
    %2001 = vdwg.mxu0
    %2002 = vmatprep.subr.bf16.mxu0 %v1101
    %2003 = vmatpush1.bf16.msra.mxu0 %v1100
    %2004 = vmatprep.subr.bf16.mxu0 %v1133
    %2005 = vmatpush1.bf16.msra.mxu0 %v1132
    %2006 = vmatprep.subr.bf16.mxu0 %v1165
    %2007 = vmatpush1.bf16.msra.mxu0 %v1164
    %2008 = vmatprep.subr.bf16.mxu0 %v1197
    %2009 = vmatpush1.bf16.msra.mxu0 %v1196
    %2010 = vmatprep.subr.bf16.mxu0 %v1229
    %2011 = vmatpush1.bf16.msra.mxu0 %v1228
    %2012 = vmatprep.subr.bf16.mxu0 %v1261
    %2013 = vmatpush1.bf16.msra.mxu0 %v1260
    %2014 = vmatprep.subr.bf16.mxu0 %v1293
    %2015 = vmatpush1.bf16.msra.mxu0 %v1292
    %2016 = vmatprep.subr.bf16.mxu0 %v1325
    %2017 = vmatpush1.bf16.msra.mxu0 %v1324
    %2018 = vmatprep.subr.bf16.mxu0 0
    %2019 = vmatpush1.bf16.msra.mxu0 0
    %2020 = vmatprep.subr.bf16.mxu0 0
    %2021 = vmatpush1.bf16.msra.mxu0 0
    %2022 = vmatprep.subr.bf16.mxu0 0
    %2023 = vmatpush1.bf16.msra.mxu0 0
    %2024 = vmatprep.subr.bf16.mxu0 0
    %2025 = vmatpush1.bf16.msra.mxu0 0
    %2026 = vmatprep.subr.bf16.mxu0 0
    %2027 = vmatpush1.bf16.msra.mxu0 0
    %2028 = vmatprep.subr.bf16.mxu0 0
    %2029 = vmatpush1.bf16.msra.mxu0 0
    %2030 = vmatprep.subr.bf16.mxu0 0
    %2031 = vmatpush1.bf16.msra.mxu0 0
    %2032 = vmatprep.subr.bf16.mxu0 0
    %2033 = vmatpush1.bf16.msra.mxu0 0
    %2034 = vmatprep.mubr.bf16.mxu0 0
    %2035 = vmatmul.mubr.bf16.gmra.mrb[0].mxu0 %v55
    %v2036 = vpop.f32.mrb[0].mxu0
    %v2037 = vadd.f32 0.0, %v2036
    %v2038 = vpop.f32.mrb[0].mxu0
    %v2039 = vadd.f32 0.0, %v2038
    %v2040 = vpop.f32.mrb[0].mxu0
    %v2041 = vpop.f32.mrb[0].mxu0
    %2042 = vdwg.mxu0
    %2043 = vmatprep.subr.bf16.mxu0 %v1103
    %2044 = vmatpush1.bf16.msra.mxu0 %v1102
    %2045 = vmatprep.subr.bf16.mxu0 %v1135
    %2046 = vmatpush1.bf16.msra.mxu0 %v1134
    %2047 = vmatprep.subr.bf16.mxu0 %v1167
    %2048 = vmatpush1.bf16.msra.mxu0 %v1166
    %2049 = vmatprep.subr.bf16.mxu0 %v1199
    %2050 = vmatpush1.bf16.msra.mxu0 %v1198
    %2051 = vmatprep.subr.bf16.mxu0 %v1231
    %2052 = vmatpush1.bf16.msra.mxu0 %v1230
    %2053 = vmatprep.subr.bf16.mxu0 %v1263
    %2054 = vmatpush1.bf16.msra.mxu0 %v1262
    %2055 = vmatprep.subr.bf16.mxu0 %v1295
    %2056 = vmatpush1.bf16.msra.mxu0 %v1294
    %2057 = vmatprep.subr.bf16.mxu0 %v1327
    %2058 = vmatpush1.bf16.msra.mxu0 %v1326
    %2059 = vmatprep.subr.bf16.mxu0 0
    %2060 = vmatpush1.bf16.msra.mxu0 0
    %2061 = vmatprep.subr.bf16.mxu0 0
    %2062 = vmatpush1.bf16.msra.mxu0 0
    %2063 = vmatprep.subr.bf16.mxu0 0
    %2064 = vmatpush1.bf16.msra.mxu0 0
    %2065 = vmatprep.subr.bf16.mxu0 0
    %2066 = vmatpush1.bf16.msra.mxu0 0
    %2067 = vmatprep.subr.bf16.mxu0 0
    %2068 = vmatpush1.bf16.msra.mxu0 0
    %2069 = vmatprep.subr.bf16.mxu0 0
    %2070 = vmatpush1.bf16.msra.mxu0 0
    %2071 = vmatprep.subr.bf16.mxu0 0
    %2072 = vmatpush1.bf16.msra.mxu0 0
    %2073 = vmatprep.subr.bf16.mxu0 0
    %2074 = vmatpush1.bf16.msra.mxu0 0
    %2075 = vmatprep.mubr.bf16.mxu0 0
    %2076 = vmatmul.mubr.bf16.gmra.mrb[0].mxu0 %v55
    %v2077 = vpop.f32.mrb[0].mxu0
    %v2078 = vadd.f32 0.0, %v2077
    %v2079 = vpop.f32.mrb[0].mxu0
    %v2080 = vadd.f32 0.0, %v2079
    %v2081 = vpop.f32.mrb[0].mxu0
    %v2082 = vpop.f32.mrb[0].mxu0
    %2083 = vdwg.mxu0
    %2084 = vmatprep.subr.bf16.mxu0 %v1105
    %2085 = vmatpush1.bf16.msra.mxu0 %v1104
    %2086 = vmatprep.subr.bf16.mxu0 %v1137
    %2087 = vmatpush1.bf16.msra.mxu0 %v1136
    %2088 = vmatprep.subr.bf16.mxu0 %v1169
    %2089 = vmatpush1.bf16.msra.mxu0 %v1168
    %2090 = vmatprep.subr.bf16.mxu0 %v1201
    %2091 = vmatpush1.bf16.msra.mxu0 %v1200
    %2092 = vmatprep.subr.bf16.mxu0 %v1233
    %2093 = vmatpush1.bf16.msra.mxu0 %v1232
    %2094 = vmatprep.subr.bf16.mxu0 %v1265
    %2095 = vmatpush1.bf16.msra.mxu0 %v1264
    %2096 = vmatprep.subr.bf16.mxu0 %v1297
    %2097 = vmatpush1.bf16.msra.mxu0 %v1296
    %2098 = vmatprep.subr.bf16.mxu0 %v1329
    %2099 = vmatpush1.bf16.msra.mxu0 %v1328
    %2100 = vmatprep.subr.bf16.mxu0 0
    %2101 = vmatpush1.bf16.msra.mxu0 0
    %2102 = vmatprep.subr.bf16.mxu0 0
    %2103 = vmatpush1.bf16.msra.mxu0 0
    %2104 = vmatprep.subr.bf16.mxu0 0
    %2105 = vmatpush1.bf16.msra.mxu0 0
    %2106 = vmatprep.subr.bf16.mxu0 0
    %2107 = vmatpush1.bf16.msra.mxu0 0
    %2108 = vmatprep.subr.bf16.mxu0 0
    %2109 = vmatpush1.bf16.msra.mxu0 0
    %2110 = vmatprep.subr.bf16.mxu0 0
    %2111 = vmatpush1.bf16.msra.mxu0 0
    %2112 = vmatprep.subr.bf16.mxu0 0
    %2113 = vmatpush1.bf16.msra.mxu0 0
    %2114 = vmatprep.subr.bf16.mxu0 0
    %2115 = vmatpush1.bf16.msra.mxu0 0
    %2116 = vmatprep.mubr.bf16.mxu0 0
    %2117 = vmatmul.mubr.bf16.gmra.mrb[0].mxu0 %v55
    %v2118 = vpop.f32.mrb[0].mxu0
    %v2119 = vadd.f32 0.0, %v2118
    %v2120 = vpop.f32.mrb[0].mxu0
    %v2121 = vadd.f32 0.0, %v2120
    %v2122 = vpop.f32.mrb[0].mxu0
    %v2123 = vpop.f32.mrb[0].mxu0
    %2124 = vdwg.mxu0
    %2125 = vmatprep.subr.bf16.mxu0 %v1107
    %2126 = vmatpush1.bf16.msra.mxu0 %v1106
    %2127 = vmatprep.subr.bf16.mxu0 %v1139
    %2128 = vmatpush1.bf16.msra.mxu0 %v1138
    %2129 = vmatprep.subr.bf16.mxu0 %v1171
    %2130 = vmatpush1.bf16.msra.mxu0 %v1170
    %2131 = vmatprep.subr.bf16.mxu0 %v1203
    %2132 = vmatpush1.bf16.msra.mxu0 %v1202
    %2133 = vmatprep.subr.bf16.mxu0 %v1235
    %2134 = vmatpush1.bf16.msra.mxu0 %v1234
    %2135 = vmatprep.subr.bf16.mxu0 %v1267
    %2136 = vmatpush1.bf16.msra.mxu0 %v1266
    %2137 = vmatprep.subr.bf16.mxu0 %v1299
    %2138 = vmatpush1.bf16.msra.mxu0 %v1298
    %2139 = vmatprep.subr.bf16.mxu0 %v1331
    %2140 = vmatpush1.bf16.msra.mxu0 %v1330
    %2141 = vmatprep.subr.bf16.mxu0 0
    %2142 = vmatpush1.bf16.msra.mxu0 0
    %2143 = vmatprep.subr.bf16.mxu0 0
    %2144 = vmatpush1.bf16.msra.mxu0 0
    %2145 = vmatprep.subr.bf16.mxu0 0
    %2146 = vmatpush1.bf16.msra.mxu0 0
    %2147 = vmatprep.subr.bf16.mxu0 0
    %2148 = vmatpush1.bf16.msra.mxu0 0
    %2149 = vmatprep.subr.bf16.mxu0 0
    %2150 = vmatpush1.bf16.msra.mxu0 0
    %2151 = vmatprep.subr.bf16.mxu0 0
    %2152 = vmatpush1.bf16.msra.mxu0 0
    %2153 = vmatprep.subr.bf16.mxu0 0
    %2154 = vmatpush1.bf16.msra.mxu0 0
    %2155 = vmatprep.subr.bf16.mxu0 0
    %2156 = vmatpush1.bf16.msra.mxu0 0
    %2157 = vmatprep.mubr.bf16.mxu0 0
    %2158 = vmatmul.mubr.bf16.gmra.mrb[0].mxu0 %v55
    %v2159 = vpop.f32.mrb[0].mxu0
    %v2160 = vadd.f32 0.0, %v2159
    %v2161 = vpop.f32.mrb[0].mxu0
    %v2162 = vadd.f32 0.0, %v2161
    %v2163 = vpop.f32.mrb[0].mxu0
    %v2164 = vpop.f32.mrb[0].mxu0
    %2165 = vdwg.mxu0
    %2166 = vmatprep.subr.bf16.mxu0 %v1109
    %2167 = vmatpush1.bf16.msra.mxu0 %v1108
    %2168 = vmatprep.subr.bf16.mxu0 %v1141
    %2169 = vmatpush1.bf16.msra.mxu0 %v1140
    %2170 = vmatprep.subr.bf16.mxu0 %v1173
    %2171 = vmatpush1.bf16.msra.mxu0 %v1172
    %2172 = vmatprep.subr.bf16.mxu0 %v1205
    %2173 = vmatpush1.bf16.msra.mxu0 %v1204
    %2174 = vmatprep.subr.bf16.mxu0 %v1237
    %2175 = vmatpush1.bf16.msra.mxu0 %v1236
    %2176 = vmatprep.subr.bf16.mxu0 %v1269
    %2177 = vmatpush1.bf16.msra.mxu0 %v1268
    %2178 = vmatprep.subr.bf16.mxu0 %v1301
    %2179 = vmatpush1.bf16.msra.mxu0 %v1300
    %2180 = vmatprep.subr.bf16.mxu0 %v1333
    %2181 = vmatpush1.bf16.msra.mxu0 %v1332
    %2182 = vmatprep.subr.bf16.mxu0 0
    %2183 = vmatpush1.bf16.msra.mxu0 0
    %2184 = vmatprep.subr.bf16.mxu0 0
    %2185 = vmatpush1.bf16.msra.mxu0 0
    %2186 = vmatprep.subr.bf16.mxu0 0
    %2187 = vmatpush1.bf16.msra.mxu0 0
    %2188 = vmatprep.subr.bf16.mxu0 0
    %2189 = vmatpush1.bf16.msra.mxu0 0
    %2190 = vmatprep.subr.bf16.mxu0 0
    %2191 = vmatpush1.bf16.msra.mxu0 0
    %2192 = vmatprep.subr.bf16.mxu0 0
    %2193 = vmatpush1.bf16.msra.mxu0 0
    %2194 = vmatprep.subr.bf16.mxu0 0
    %2195 = vmatpush1.bf16.msra.mxu0 0
    %2196 = vmatprep.subr.bf16.mxu0 0
    %2197 = vmatpush1.bf16.msra.mxu0 0
    %2198 = vmatprep.mubr.bf16.mxu0 0
    %2199 = vmatmul.mubr.bf16.gmra.mrb[0].mxu0 %v55
    %v2200 = vpop.f32.mrb[0].mxu0
    %v2201 = vadd.f32 0.0, %v2200
    %v2202 = vpop.f32.mrb[0].mxu0
    %v2203 = vadd.f32 0.0, %v2202
    %v2204 = vpop.f32.mrb[0].mxu0
    %v2205 = vpop.f32.mrb[0].mxu0
    %2206 = vdwg.mxu0
    %2207 = vmatprep.subr.bf16.mxu0 %v1111
    %2208 = vmatpush1.bf16.msra.mxu0 %v1110
    %2209 = vmatprep.subr.bf16.mxu0 %v1143
    %2210 = vmatpush1.bf16.msra.mxu0 %v1142
    %2211 = vmatprep.subr.bf16.mxu0 %v1175
    %2212 = vmatpush1.bf16.msra.mxu0 %v1174
    %2213 = vmatprep.subr.bf16.mxu0 %v1207
    %2214 = vmatpush1.bf16.msra.mxu0 %v1206
    %2215 = vmatprep.subr.bf16.mxu0 %v1239
    %2216 = vmatpush1.bf16.msra.mxu0 %v1238
    %2217 = vmatprep.subr.bf16.mxu0 %v1271
    %2218 = vmatpush1.bf16.msra.mxu0 %v1270
    %2219 = vmatprep.subr.bf16.mxu0 %v1303
    %2220 = vmatpush1.bf16.msra.mxu0 %v1302
    %2221 = vmatprep.subr.bf16.mxu0 %v1335
    %2222 = vmatpush1.bf16.msra.mxu0 %v1334
    %2223 = vmatprep.subr.bf16.mxu0 0
    %2224 = vmatpush1.bf16.msra.mxu0 0
    %2225 = vmatprep.subr.bf16.mxu0 0
    %2226 = vmatpush1.bf16.msra.mxu0 0
    %2227 = vmatprep.subr.bf16.mxu0 0
    %2228 = vmatpush1.bf16.msra.mxu0 0
    %2229 = vmatprep.subr.bf16.mxu0 0
    %2230 = vmatpush1.bf16.msra.mxu0 0
    %2231 = vmatprep.subr.bf16.mxu0 0
    %2232 = vmatpush1.bf16.msra.mxu0 0
    %2233 = vmatprep.subr.bf16.mxu0 0
    %2234 = vmatpush1.bf16.msra.mxu0 0
    %2235 = vmatprep.subr.bf16.mxu0 0
    %2236 = vmatpush1.bf16.msra.mxu0 0
    %2237 = vmatprep.subr.bf16.mxu0 0
    %2238 = vmatpush1.bf16.msra.mxu0 0
    %2239 = vmatprep.mubr.bf16.mxu0 0
    %2240 = vmatmul.mubr.bf16.gmra.mrb[0].mxu0 %v55
    %v2241 = vpop.f32.mrb[0].mxu0
    %v2242 = vadd.f32 0.0, %v2241
    %v2243 = vpop.f32.mrb[0].mxu0
    %v2244 = vadd.f32 0.0, %v2243
    %v2245 = vpop.f32.mrb[0].mxu0
    %v2246 = vpop.f32.mrb[0].mxu0
    %2247 = vdwg.mxu0
    %vm2248 = vcmask 1041408
    %v2249 = vsel %vm2248, %v1627, 0.0
    %v2250 = vrot.slane %v2249, 4
    %v2251 = vadd.f32 %v2249, %v2250
    %v2252 = vrot.slane %v2251, 2
    %v2253 = vadd.f32 %v2251, %v2252
    %v2254 = vrot.slane %v2253, 1
    %v2255 = vadd.f32 %v2253, %v2254
    %v2256 = vsel %vm2248, %v1629, 0.0
    %v2257 = vrot.slane %v2256, 4
    %v2258 = vadd.f32 %v2256, %v2257
    %v2259 = vrot.slane %v2258, 2
    %v2260 = vadd.f32 %v2258, %v2259
    %v2261 = vrot.slane %v2260, 1
    %v2262 = vadd.f32 %v2260, %v2261
    %v2263 = vadd.f32 %v2255, 0.0
    %v2264 = vadd.f32 %v2262, 0.0
    %v2265 = vmul.f32 %v1627, %v1627
    %v2266 = vmul.f32 %v1629, %v1629
    %v2267 = vsel %vm2248, %v2265, 0.0
    %v2268 = vrot.slane %v2267, 4
    %v2269 = vadd.f32 %v2267, %v2268
    %v2270 = vrot.slane %v2269, 2
    %v2271 = vadd.f32 %v2269, %v2270
    %v2272 = vrot.slane %v2271, 1
    %v2273 = vadd.f32 %v2271, %v2272
    %v2274 = vsel %vm2248, %v2266, 0.0
    %v2275 = vrot.slane %v2274, 4
    %v2276 = vadd.f32 %v2274, %v2275
    %v2277 = vrot.slane %v2276, 2
    %v2278 = vadd.f32 %v2276, %v2277
    %v2279 = vrot.slane %v2278, 1
    %v2280 = vadd.f32 %v2278, %v2279
    %v2281 = vadd.f32 %v2273, 0.0
    %v2282 = vadd.f32 %v2280, 0.0
    %v2283 = vsel %vm2248, %v1668, 0.0
    %v2284 = vrot.slane %v2283, 4
    %v2285 = vadd.f32 %v2283, %v2284
    %v2286 = vrot.slane %v2285, 2
    %v2287 = vadd.f32 %v2285, %v2286
    %v2288 = vrot.slane %v2287, 1
    %v2289 = vadd.f32 %v2287, %v2288
    %v2290 = vsel %vm2248, %v1670, 0.0
    %v2291 = vrot.slane %v2290, 4
    %v2292 = vadd.f32 %v2290, %v2291
    %v2293 = vrot.slane %v2292, 2
    %v2294 = vadd.f32 %v2292, %v2293
    %v2295 = vrot.slane %v2294, 1
    %v2296 = vadd.f32 %v2294, %v2295
    %v2297 = vadd.f32 %v2263, %v2289
    %v2298 = vadd.f32 %v2264, %v2296
    %v2299 = vmul.f32 %v1668, %v1668
    %v2300 = vmul.f32 %v1670, %v1670
    %v2301 = vsel %vm2248, %v2299, 0.0
    %v2302 = vrot.slane %v2301, 4
    %v2303 = vadd.f32 %v2301, %v2302
    %v2304 = vrot.slane %v2303, 2
    %v2305 = vadd.f32 %v2303, %v2304
    %v2306 = vrot.slane %v2305, 1
    %v2307 = vadd.f32 %v2305, %v2306
    %v2308 = vsel %vm2248, %v2300, 0.0
    %v2309 = vrot.slane %v2308, 4
    %v2310 = vadd.f32 %v2308, %v2309
    %v2311 = vrot.slane %v2310, 2
    %v2312 = vadd.f32 %v2310, %v2311
    %v2313 = vrot.slane %v2312, 1
    %v2314 = vadd.f32 %v2312, %v2313
    %v2315 = vadd.f32 %v2281, %v2307
    %v2316 = vadd.f32 %v2282, %v2314
    %v2317 = vsel %vm2248, %v1709, 0.0
    %v2318 = vrot.slane %v2317, 4
    %v2319 = vadd.f32 %v2317, %v2318
    %v2320 = vrot.slane %v2319, 2
    %v2321 = vadd.f32 %v2319, %v2320
    %v2322 = vrot.slane %v2321, 1
    %v2323 = vadd.f32 %v2321, %v2322
    %v2324 = vsel %vm2248, %v1711, 0.0
    %v2325 = vrot.slane %v2324, 4
    %v2326 = vadd.f32 %v2324, %v2325
    %v2327 = vrot.slane %v2326, 2
    %v2328 = vadd.f32 %v2326, %v2327
    %v2329 = vrot.slane %v2328, 1
    %v2330 = vadd.f32 %v2328, %v2329
    %v2331 = vadd.f32 %v2297, %v2323
    %v2332 = vadd.f32 %v2298, %v2330
    %v2333 = vmul.f32 %v1709, %v1709
    %v2334 = vmul.f32 %v1711, %v1711
    %v2335 = vsel %vm2248, %v2333, 0.0
    %v2336 = vrot.slane %v2335, 4
    %v2337 = vadd.f32 %v2335, %v2336
    %v2338 = vrot.slane %v2337, 2
    %v2339 = vadd.f32 %v2337, %v2338
    %v2340 = vrot.slane %v2339, 1
    %v2341 = vadd.f32 %v2339, %v2340
    %v2342 = vsel %vm2248, %v2334, 0.0
    %v2343 = vrot.slane %v2342, 4
    %v2344 = vadd.f32 %v2342, %v2343
    %v2345 = vrot.slane %v2344, 2
    %v2346 = vadd.f32 %v2344, %v2345
    %v2347 = vrot.slane %v2346, 1
    %v2348 = vadd.f32 %v2346, %v2347
    %v2349 = vadd.f32 %v2315, %v2341
    %v2350 = vadd.f32 %v2316, %v2348
    %v2351 = vsel %vm2248, %v1750, 0.0
    %v2352 = vrot.slane %v2351, 4
    %v2353 = vadd.f32 %v2351, %v2352
    %v2354 = vrot.slane %v2353, 2
    %v2355 = vadd.f32 %v2353, %v2354
    %v2356 = vrot.slane %v2355, 1
    %v2357 = vadd.f32 %v2355, %v2356
    %v2358 = vsel %vm2248, %v1752, 0.0
    %v2359 = vrot.slane %v2358, 4
    %v2360 = vadd.f32 %v2358, %v2359
    %v2361 = vrot.slane %v2360, 2
    %v2362 = vadd.f32 %v2360, %v2361
    %v2363 = vrot.slane %v2362, 1
    %v2364 = vadd.f32 %v2362, %v2363
    %v2365 = vadd.f32 %v2331, %v2357
    %v2366 = vadd.f32 %v2332, %v2364
    %v2367 = vmul.f32 %v1750, %v1750
    %v2368 = vmul.f32 %v1752, %v1752
    %v2369 = vsel %vm2248, %v2367, 0.0
    %v2370 = vrot.slane %v2369, 4
    %v2371 = vadd.f32 %v2369, %v2370
    %v2372 = vrot.slane %v2371, 2
    %v2373 = vadd.f32 %v2371, %v2372
    %v2374 = vrot.slane %v2373, 1
    %v2375 = vadd.f32 %v2373, %v2374
    %v2376 = vsel %vm2248, %v2368, 0.0
    %v2377 = vrot.slane %v2376, 4
    %v2378 = vadd.f32 %v2376, %v2377
    %v2379 = vrot.slane %v2378, 2
    %v2380 = vadd.f32 %v2378, %v2379
    %v2381 = vrot.slane %v2380, 1
    %v2382 = vadd.f32 %v2380, %v2381
    %v2383 = vadd.f32 %v2349, %v2375
    %v2384 = vadd.f32 %v2350, %v2382
    %v2385 = vsel %vm2248, %v1791, 0.0
    %v2386 = vrot.slane %v2385, 4
    %v2387 = vadd.f32 %v2385, %v2386
    %v2388 = vrot.slane %v2387, 2
    %v2389 = vadd.f32 %v2387, %v2388
    %v2390 = vrot.slane %v2389, 1
    %v2391 = vadd.f32 %v2389, %v2390
    %v2392 = vsel %vm2248, %v1793, 0.0
    %v2393 = vrot.slane %v2392, 4
    %v2394 = vadd.f32 %v2392, %v2393
    %v2395 = vrot.slane %v2394, 2
    %v2396 = vadd.f32 %v2394, %v2395
    %v2397 = vrot.slane %v2396, 1
    %v2398 = vadd.f32 %v2396, %v2397
    %v2399 = vadd.f32 %v2365, %v2391
    %v2400 = vadd.f32 %v2366, %v2398
    %v2401 = vmul.f32 %v1791, %v1791
    %v2402 = vmul.f32 %v1793, %v1793
    %v2403 = vsel %vm2248, %v2401, 0.0
    %v2404 = vrot.slane %v2403, 4
    %v2405 = vadd.f32 %v2403, %v2404
    %v2406 = vrot.slane %v2405, 2
    %v2407 = vadd.f32 %v2405, %v2406
    %v2408 = vrot.slane %v2407, 1
    %v2409 = vadd.f32 %v2407, %v2408
    %v2410 = vsel %vm2248, %v2402, 0.0
    %v2411 = vrot.slane %v2410, 4
    %v2412 = vadd.f32 %v2410, %v2411
    %v2413 = vrot.slane %v2412, 2
    %v2414 = vadd.f32 %v2412, %v2413
    %v2415 = vrot.slane %v2414, 1
    %v2416 = vadd.f32 %v2414, %v2415
    %v2417 = vadd.f32 %v2383, %v2409
    %v2418 = vadd.f32 %v2384, %v2416
    %v2419 = vsel %vm2248, %v1832, 0.0
    %v2420 = vrot.slane %v2419, 4
    %v2421 = vadd.f32 %v2419, %v2420
    %v2422 = vrot.slane %v2421, 2
    %v2423 = vadd.f32 %v2421, %v2422
    %v2424 = vrot.slane %v2423, 1
    %v2425 = vadd.f32 %v2423, %v2424
    %v2426 = vsel %vm2248, %v1834, 0.0
    %v2427 = vrot.slane %v2426, 4
    %v2428 = vadd.f32 %v2426, %v2427
    %v2429 = vrot.slane %v2428, 2
    %v2430 = vadd.f32 %v2428, %v2429
    %v2431 = vrot.slane %v2430, 1
    %v2432 = vadd.f32 %v2430, %v2431
    %v2433 = vadd.f32 %v2399, %v2425
    %v2434 = vadd.f32 %v2400, %v2432
    %v2435 = vmul.f32 %v1832, %v1832
    %v2436 = vmul.f32 %v1834, %v1834
    %v2437 = vsel %vm2248, %v2435, 0.0
    %v2438 = vrot.slane %v2437, 4
    %v2439 = vadd.f32 %v2437, %v2438
    %v2440 = vrot.slane %v2439, 2
    %v2441 = vadd.f32 %v2439, %v2440
    %v2442 = vrot.slane %v2441, 1
    %v2443 = vadd.f32 %v2441, %v2442
    %v2444 = vsel %vm2248, %v2436, 0.0
    %v2445 = vrot.slane %v2444, 4
    %v2446 = vadd.f32 %v2444, %v2445
    %v2447 = vrot.slane %v2446, 2
    %v2448 = vadd.f32 %v2446, %v2447
    %v2449 = vrot.slane %v2448, 1
    %v2450 = vadd.f32 %v2448, %v2449
    %v2451 = vadd.f32 %v2417, %v2443
    %v2452 = vadd.f32 %v2418, %v2450
    %v2453 = vsel %vm2248, %v1873, 0.0
    %v2454 = vrot.slane %v2453, 4
    %v2455 = vadd.f32 %v2453, %v2454
    %v2456 = vrot.slane %v2455, 2
    %v2457 = vadd.f32 %v2455, %v2456
    %v2458 = vrot.slane %v2457, 1
    %v2459 = vadd.f32 %v2457, %v2458
    %v2460 = vsel %vm2248, %v1875, 0.0
    %v2461 = vrot.slane %v2460, 4
    %v2462 = vadd.f32 %v2460, %v2461
    %v2463 = vrot.slane %v2462, 2
    %v2464 = vadd.f32 %v2462, %v2463
    %v2465 = vrot.slane %v2464, 1
    %v2466 = vadd.f32 %v2464, %v2465
    %v2467 = vadd.f32 %v2433, %v2459
    %v2468 = vadd.f32 %v2434, %v2466
    %v2469 = vmul.f32 %v1873, %v1873
    %v2470 = vmul.f32 %v1875, %v1875
    %v2471 = vsel %vm2248, %v2469, 0.0
    %v2472 = vrot.slane %v2471, 4
    %v2473 = vadd.f32 %v2471, %v2472
    %v2474 = vrot.slane %v2473, 2
    %v2475 = vadd.f32 %v2473, %v2474
    %v2476 = vrot.slane %v2475, 1
    %v2477 = vadd.f32 %v2475, %v2476
    %v2478 = vsel %vm2248, %v2470, 0.0
    %v2479 = vrot.slane %v2478, 4
    %v2480 = vadd.f32 %v2478, %v2479
    %v2481 = vrot.slane %v2480, 2
    %v2482 = vadd.f32 %v2480, %v2481
    %v2483 = vrot.slane %v2482, 1
    %v2484 = vadd.f32 %v2482, %v2483
    %v2485 = vadd.f32 %v2451, %v2477
    %v2486 = vadd.f32 %v2452, %v2484
    %v2487 = vsel %vm2248, %v1914, 0.0
    %v2488 = vrot.slane %v2487, 4
    %v2489 = vadd.f32 %v2487, %v2488
    %v2490 = vrot.slane %v2489, 2
    %v2491 = vadd.f32 %v2489, %v2490
    %v2492 = vrot.slane %v2491, 1
    %v2493 = vadd.f32 %v2491, %v2492
    %v2494 = vsel %vm2248, %v1916, 0.0
    %v2495 = vrot.slane %v2494, 4
    %v2496 = vadd.f32 %v2494, %v2495
    %v2497 = vrot.slane %v2496, 2
    %v2498 = vadd.f32 %v2496, %v2497
    %v2499 = vrot.slane %v2498, 1
    %v2500 = vadd.f32 %v2498, %v2499
    %v2501 = vadd.f32 %v2467, %v2493
    %v2502 = vadd.f32 %v2468, %v2500
    %v2503 = vmul.f32 %v1914, %v1914
    %v2504 = vmul.f32 %v1916, %v1916
    %v2505 = vsel %vm2248, %v2503, 0.0
    %v2506 = vrot.slane %v2505, 4
    %v2507 = vadd.f32 %v2505, %v2506
    %v2508 = vrot.slane %v2507, 2
    %v2509 = vadd.f32 %v2507, %v2508
    %v2510 = vrot.slane %v2509, 1
    %v2511 = vadd.f32 %v2509, %v2510
    %v2512 = vsel %vm2248, %v2504, 0.0
    %v2513 = vrot.slane %v2512, 4
    %v2514 = vadd.f32 %v2512, %v2513
    %v2515 = vrot.slane %v2514, 2
    %v2516 = vadd.f32 %v2514, %v2515
    %v2517 = vrot.slane %v2516, 1
    %v2518 = vadd.f32 %v2516, %v2517
    %v2519 = vadd.f32 %v2485, %v2511
    %v2520 = vadd.f32 %v2486, %v2518
    %v2521 = vsel %vm2248, %v1955, 0.0
    %v2522 = vrot.slane %v2521, 4
    %v2523 = vadd.f32 %v2521, %v2522
    %v2524 = vrot.slane %v2523, 2
    %v2525 = vadd.f32 %v2523, %v2524
    %v2526 = vrot.slane %v2525, 1
    %v2527 = vadd.f32 %v2525, %v2526
    %v2528 = vsel %vm2248, %v1957, 0.0
    %v2529 = vrot.slane %v2528, 4
    %v2530 = vadd.f32 %v2528, %v2529
    %v2531 = vrot.slane %v2530, 2
    %v2532 = vadd.f32 %v2530, %v2531
    %v2533 = vrot.slane %v2532, 1
    %v2534 = vadd.f32 %v2532, %v2533
    %v2535 = vadd.f32 %v2501, %v2527
    %v2536 = vadd.f32 %v2502, %v2534
    %v2537 = vmul.f32 %v1955, %v1955
    %v2538 = vmul.f32 %v1957, %v1957
    %v2539 = vsel %vm2248, %v2537, 0.0
    %v2540 = vrot.slane %v2539, 4
    %v2541 = vadd.f32 %v2539, %v2540
    %v2542 = vrot.slane %v2541, 2
    %v2543 = vadd.f32 %v2541, %v2542
    %v2544 = vrot.slane %v2543, 1
    %v2545 = vadd.f32 %v2543, %v2544
    %v2546 = vsel %vm2248, %v2538, 0.0
    %v2547 = vrot.slane %v2546, 4
    %v2548 = vadd.f32 %v2546, %v2547
    %v2549 = vrot.slane %v2548, 2
    %v2550 = vadd.f32 %v2548, %v2549
    %v2551 = vrot.slane %v2550, 1
    %v2552 = vadd.f32 %v2550, %v2551
    %v2553 = vadd.f32 %v2519, %v2545
    %v2554 = vadd.f32 %v2520, %v2552
    %v2555 = vsel %vm2248, %v1996, 0.0
    %v2556 = vrot.slane %v2555, 4
    %v2557 = vadd.f32 %v2555, %v2556
    %v2558 = vrot.slane %v2557, 2
    %v2559 = vadd.f32 %v2557, %v2558
    %v2560 = vrot.slane %v2559, 1
    %v2561 = vadd.f32 %v2559, %v2560
    %v2562 = vsel %vm2248, %v1998, 0.0
    %v2563 = vrot.slane %v2562, 4
    %v2564 = vadd.f32 %v2562, %v2563
    %v2565 = vrot.slane %v2564, 2
    %v2566 = vadd.f32 %v2564, %v2565
    %v2567 = vrot.slane %v2566, 1
    %v2568 = vadd.f32 %v2566, %v2567
    %v2569 = vadd.f32 %v2535, %v2561
    %v2570 = vadd.f32 %v2536, %v2568
    %v2571 = vmul.f32 %v1996, %v1996
    %v2572 = vmul.f32 %v1998, %v1998
    %v2573 = vsel %vm2248, %v2571, 0.0
    %v2574 = vrot.slane %v2573, 4
    %v2575 = vadd.f32 %v2573, %v2574
    %v2576 = vrot.slane %v2575, 2
    %v2577 = vadd.f32 %v2575, %v2576
    %v2578 = vrot.slane %v2577, 1
    %v2579 = vadd.f32 %v2577, %v2578
    %v2580 = vsel %vm2248, %v2572, 0.0
    %v2581 = vrot.slane %v2580, 4
    %v2582 = vadd.f32 %v2580, %v2581
    %v2583 = vrot.slane %v2582, 2
    %v2584 = vadd.f32 %v2582, %v2583
    %v2585 = vrot.slane %v2584, 1
    %v2586 = vadd.f32 %v2584, %v2585
    %v2587 = vadd.f32 %v2553, %v2579
    %v2588 = vadd.f32 %v2554, %v2586
    %v2589 = vsel %vm2248, %v2037, 0.0
    %v2590 = vrot.slane %v2589, 4
    %v2591 = vadd.f32 %v2589, %v2590
    %v2592 = vrot.slane %v2591, 2
    %v2593 = vadd.f32 %v2591, %v2592
    %v2594 = vrot.slane %v2593, 1
    %v2595 = vadd.f32 %v2593, %v2594
    %v2596 = vsel %vm2248, %v2039, 0.0
    %v2597 = vrot.slane %v2596, 4
    %v2598 = vadd.f32 %v2596, %v2597
    %v2599 = vrot.slane %v2598, 2
    %v2600 = vadd.f32 %v2598, %v2599
    %v2601 = vrot.slane %v2600, 1
    %v2602 = vadd.f32 %v2600, %v2601
    %v2603 = vadd.f32 %v2569, %v2595
    %v2604 = vadd.f32 %v2570, %v2602
    %v2605 = vmul.f32 %v2037, %v2037
    %v2606 = vmul.f32 %v2039, %v2039
    %v2607 = vsel %vm2248, %v2605, 0.0
    %v2608 = vrot.slane %v2607, 4
    %v2609 = vadd.f32 %v2607, %v2608
    %v2610 = vrot.slane %v2609, 2
    %v2611 = vadd.f32 %v2609, %v2610
    %v2612 = vrot.slane %v2611, 1
    %v2613 = vadd.f32 %v2611, %v2612
    %v2614 = vsel %vm2248, %v2606, 0.0
    %v2615 = vrot.slane %v2614, 4
    %v2616 = vadd.f32 %v2614, %v2615
    %v2617 = vrot.slane %v2616, 2
    %v2618 = vadd.f32 %v2616, %v2617
    %v2619 = vrot.slane %v2618, 1
    %v2620 = vadd.f32 %v2618, %v2619
    %v2621 = vadd.f32 %v2587, %v2613
    %v2622 = vadd.f32 %v2588, %v2620
    %v2623 = vsel %vm2248, %v2078, 0.0
    %v2624 = vrot.slane %v2623, 4
    %v2625 = vadd.f32 %v2623, %v2624
    %v2626 = vrot.slane %v2625, 2
    %v2627 = vadd.f32 %v2625, %v2626
    %v2628 = vrot.slane %v2627, 1
    %v2629 = vadd.f32 %v2627, %v2628
    %v2630 = vsel %vm2248, %v2080, 0.0
    %v2631 = vrot.slane %v2630, 4
    %v2632 = vadd.f32 %v2630, %v2631
    %v2633 = vrot.slane %v2632, 2
    %v2634 = vadd.f32 %v2632, %v2633
    %v2635 = vrot.slane %v2634, 1
    %v2636 = vadd.f32 %v2634, %v2635
    %v2637 = vadd.f32 %v2603, %v2629
    %v2638 = vadd.f32 %v2604, %v2636
    %v2639 = vmul.f32 %v2078, %v2078
    %v2640 = vmul.f32 %v2080, %v2080
    %v2641 = vsel %vm2248, %v2639, 0.0
    %v2642 = vrot.slane %v2641, 4
    %v2643 = vadd.f32 %v2641, %v2642
    %v2644 = vrot.slane %v2643, 2
    %v2645 = vadd.f32 %v2643, %v2644
    %v2646 = vrot.slane %v2645, 1
    %v2647 = vadd.f32 %v2645, %v2646
    %v2648 = vsel %vm2248, %v2640, 0.0
    %v2649 = vrot.slane %v2648, 4
    %v2650 = vadd.f32 %v2648, %v2649
    %v2651 = vrot.slane %v2650, 2
    %v2652 = vadd.f32 %v2650, %v2651
    %v2653 = vrot.slane %v2652, 1
    %v2654 = vadd.f32 %v2652, %v2653
    %v2655 = vadd.f32 %v2621, %v2647
    %v2656 = vadd.f32 %v2622, %v2654
    %v2657 = vsel %vm2248, %v2119, 0.0
    %v2658 = vrot.slane %v2657, 4
    %v2659 = vadd.f32 %v2657, %v2658
    %v2660 = vrot.slane %v2659, 2
    %v2661 = vadd.f32 %v2659, %v2660
    %v2662 = vrot.slane %v2661, 1
    %v2663 = vadd.f32 %v2661, %v2662
    %v2664 = vsel %vm2248, %v2121, 0.0
    %v2665 = vrot.slane %v2664, 4
    %v2666 = vadd.f32 %v2664, %v2665
    %v2667 = vrot.slane %v2666, 2
    %v2668 = vadd.f32 %v2666, %v2667
    %v2669 = vrot.slane %v2668, 1
    %v2670 = vadd.f32 %v2668, %v2669
    %v2671 = vadd.f32 %v2637, %v2663
    %v2672 = vadd.f32 %v2638, %v2670
    %v2673 = vmul.f32 %v2119, %v2119
    %v2674 = vmul.f32 %v2121, %v2121
    %v2675 = vsel %vm2248, %v2673, 0.0
    %v2676 = vrot.slane %v2675, 4
    %v2677 = vadd.f32 %v2675, %v2676
    %v2678 = vrot.slane %v2677, 2
    %v2679 = vadd.f32 %v2677, %v2678
    %v2680 = vrot.slane %v2679, 1
    %v2681 = vadd.f32 %v2679, %v2680
    %v2682 = vsel %vm2248, %v2674, 0.0
    %v2683 = vrot.slane %v2682, 4
    %v2684 = vadd.f32 %v2682, %v2683
    %v2685 = vrot.slane %v2684, 2
    %v2686 = vadd.f32 %v2684, %v2685
    %v2687 = vrot.slane %v2686, 1
    %v2688 = vadd.f32 %v2686, %v2687
    %v2689 = vadd.f32 %v2655, %v2681
    %v2690 = vadd.f32 %v2656, %v2688
    %v2691 = vsel %vm2248, %v2160, 0.0
    %v2692 = vrot.slane %v2691, 4
    %v2693 = vadd.f32 %v2691, %v2692
    %v2694 = vrot.slane %v2693, 2
    %v2695 = vadd.f32 %v2693, %v2694
    %v2696 = vrot.slane %v2695, 1
    %v2697 = vadd.f32 %v2695, %v2696
    %v2698 = vsel %vm2248, %v2162, 0.0
    %v2699 = vrot.slane %v2698, 4
    %v2700 = vadd.f32 %v2698, %v2699
    %v2701 = vrot.slane %v2700, 2
    %v2702 = vadd.f32 %v2700, %v2701
    %v2703 = vrot.slane %v2702, 1
    %v2704 = vadd.f32 %v2702, %v2703
    %v2705 = vadd.f32 %v2671, %v2697
    %v2706 = vadd.f32 %v2672, %v2704
    %v2707 = vmul.f32 %v2160, %v2160
    %v2708 = vmul.f32 %v2162, %v2162
    %v2709 = vsel %vm2248, %v2707, 0.0
    %v2710 = vrot.slane %v2709, 4
    %v2711 = vadd.f32 %v2709, %v2710
    %v2712 = vrot.slane %v2711, 2
    %v2713 = vadd.f32 %v2711, %v2712
    %v2714 = vrot.slane %v2713, 1
    %v2715 = vadd.f32 %v2713, %v2714
    %v2716 = vsel %vm2248, %v2708, 0.0
    %v2717 = vrot.slane %v2716, 4
    %v2718 = vadd.f32 %v2716, %v2717
    %v2719 = vrot.slane %v2718, 2
    %v2720 = vadd.f32 %v2718, %v2719
    %v2721 = vrot.slane %v2720, 1
    %v2722 = vadd.f32 %v2720, %v2721
    %v2723 = vadd.f32 %v2689, %v2715
    %v2724 = vadd.f32 %v2690, %v2722
    %v2725 = vsel %vm2248, %v2201, 0.0
    %v2726 = vrot.slane %v2725, 4
    %v2727 = vadd.f32 %v2725, %v2726
    %v2728 = vrot.slane %v2727, 2
    %v2729 = vadd.f32 %v2727, %v2728
    %v2730 = vrot.slane %v2729, 1
    %v2731 = vadd.f32 %v2729, %v2730
    %v2732 = vsel %vm2248, %v2203, 0.0
    %v2733 = vrot.slane %v2732, 4
    %v2734 = vadd.f32 %v2732, %v2733
    %v2735 = vrot.slane %v2734, 2
    %v2736 = vadd.f32 %v2734, %v2735
    %v2737 = vrot.slane %v2736, 1
    %v2738 = vadd.f32 %v2736, %v2737
    %v2739 = vadd.f32 %v2705, %v2731
    %v2740 = vadd.f32 %v2706, %v2738
    %v2741 = vmul.f32 %v2201, %v2201
    %v2742 = vmul.f32 %v2203, %v2203
    %v2743 = vsel %vm2248, %v2741, 0.0
    %v2744 = vrot.slane %v2743, 4
    %v2745 = vadd.f32 %v2743, %v2744
    %v2746 = vrot.slane %v2745, 2
    %v2747 = vadd.f32 %v2745, %v2746
    %v2748 = vrot.slane %v2747, 1
    %v2749 = vadd.f32 %v2747, %v2748
    %v2750 = vsel %vm2248, %v2742, 0.0
    %v2751 = vrot.slane %v2750, 4
    %v2752 = vadd.f32 %v2750, %v2751
    %v2753 = vrot.slane %v2752, 2
    %v2754 = vadd.f32 %v2752, %v2753
    %v2755 = vrot.slane %v2754, 1
    %v2756 = vadd.f32 %v2754, %v2755
    %v2757 = vadd.f32 %v2723, %v2749
    %v2758 = vadd.f32 %v2724, %v2756
    %v2759 = vsel %vm2248, %v2242, 0.0
    %v2760 = vrot.slane %v2759, 4
    %v2761 = vadd.f32 %v2759, %v2760
    %v2762 = vrot.slane %v2761, 2
    %v2763 = vadd.f32 %v2761, %v2762
    %v2764 = vrot.slane %v2763, 1
    %v2765 = vadd.f32 %v2763, %v2764
    %v2766 = vsel %vm2248, %v2244, 0.0
    %v2767 = vrot.slane %v2766, 4
    %v2768 = vadd.f32 %v2766, %v2767
    %v2769 = vrot.slane %v2768, 2
    %v2770 = vadd.f32 %v2768, %v2769
    %v2771 = vrot.slane %v2770, 1
    %v2772 = vadd.f32 %v2770, %v2771
    %v2773 = vadd.f32 %v2739, %v2765
    %v2774 = vadd.f32 %v2740, %v2772
    %v2775 = vmul.f32 %v2242, %v2242
    %v2776 = vmul.f32 %v2244, %v2244
    %v2777 = vsel %vm2248, %v2775, 0.0
    %v2778 = vrot.slane %v2777, 4
    %v2779 = vadd.f32 %v2777, %v2778
    %v2780 = vrot.slane %v2779, 2
    %v2781 = vadd.f32 %v2779, %v2780
    %v2782 = vrot.slane %v2781, 1
    %v2783 = vadd.f32 %v2781, %v2782
    %v2784 = vsel %vm2248, %v2776, 0.0
    %v2785 = vrot.slane %v2784, 4
    %v2786 = vadd.f32 %v2784, %v2785
    %v2787 = vrot.slane %v2786, 2
    %v2788 = vadd.f32 %v2786, %v2787
    %v2789 = vrot.slane %v2788, 1
    %v2790 = vadd.f32 %v2788, %v2789
    %v2791 = vadd.f32 %v2757, %v2783
    %v2792 = vadd.f32 %v2758, %v2790
    %v2793 = vrcp.pop 32.0
    %v2794 = vmul.f32 %v2773, %v2793
    %v2795 = vmul.f32 %v2774, %v2793
    %v2796 = vmul.f32 %v2791, %v2793
    %v2797 = vmul.f32 %v2792, %v2793
    %v2798 = vmul.f32 %v2794, %v2794
    %v2799 = vmul.f32 %v2795, %v2795
    %v2800 = vsub.f32 %v2796, %v2798
    %v2801 = vsub.f32 %v2797, %v2799
    %v2802 = vld [vmem:[#allocation4] sm:$0x3]
    %v2803 = vadd.f32 %v2800, 1e-05
    %v2804 = vadd.f32 %v2801, 1e-05
    %v2805 = vrsqrt.pop %v2803
    %v2806 = vrsqrt.pop %v2804
    %v2809 = vcombine.low %v2805, %v2806
    %v2811 = vunpack.c.l.s4 1966171168
    %v2812 = vunpack.c.0.s8 %v2811
    %v2813 = vlaneseq
    %v2814 = vshrl.u32 %v2813, 7
    %v2815 = vsub.s32 %v2812, %v2814
    %v2816 = vrot.slane %v2809, %v2815
    %v2818 = vunpack.c.l.s4 1966171168
    %v2819 = vunpack.c.0.s8 %v2818
    %v2820 = vlaneseq
    %v2821 = vshrl.u32 %v2820, 7
    %v2822 = vsub.s32 %v2819, %v2821
    %v2823 = vrot.slane %v2816, %v2822
    %v2825 = vmul.f32 %v2802, %v2823
    %v2826 = vld [vmem:[#allocation6] sm:$0x3]
    %v2828 = vlaneseq
    %v2829 = vshrl.u32 %v2828, 7
    %v2830 = vsub.s32 0, %v2829
    %v2831 = vrot.slane %v2825, %v2830
    %v2832 = vlaneseq
    %v2833 = vshrl.u32 %v2832, 7
    %v2834 = vsub.s32 1, %v2833
    %v2835 = vrot.slane %v2825, %v2834
    %v2838 = vmul.f32 %v2794, %v2831
    %v2839 = vmul.f32 %v2795, %v2835
    %v2842 = vcombine.low %v2838, %v2839
    %v2844 = vunpack.c.l.s4 1966171168
    %v2845 = vunpack.c.0.s8 %v2844
    %v2846 = vlaneseq
    %v2847 = vshrl.u32 %v2846, 7
    %v2848 = vsub.s32 %v2845, %v2847
    %v2849 = vrot.slane %v2842, %v2848
    %v2851 = vunpack.c.l.s4 1966171168
    %v2852 = vunpack.c.0.s8 %v2851
    %v2853 = vlaneseq
    %v2854 = vshrl.u32 %v2853, 7
    %v2855 = vsub.s32 %v2852, %v2854
    %v2856 = vrot.slane %v2849, %v2855
    %v2858 = vsub.f32 %v2826, %v2856
    %v2859 = vmul.f32 %v1627, %v2831
    %v2860 = vmul.f32 %v1629, %v2835
    %v2862 = vlaneseq
    %v2863 = vshrl.u32 %v2862, 7
    %v2864 = vsub.s32 0, %v2863
    %v2865 = vrot.slane %v2858, %v2864
    %v2866 = vlaneseq
    %v2867 = vshrl.u32 %v2866, 7
    %v2868 = vsub.s32 1, %v2867
    %v2869 = vrot.slane %v2858, %v2868
    %v2872 = vadd.f32 %v2859, %v2865
    %v2873 = vadd.f32 %v2860, %v2869
    %v2874 = vmax.f32 %v2872, 0.0
    %v2875 = vmax.f32 %v2873, 0.0
    %v2878 = vcombine.low %v2874, %v2875
    %v2880 = vunpack.c.l.s4 1983009808
    %v2881 = vunpack.c.0.s8 %v2880
    %v2882 = vlaneseq
    %v2883 = vshrl.u32 %v2882, 7
    %v2884 = vsub.s32 %v2881, %v2883
    %v2885 = vrot.slane %v2878, %v2884
    %2887 = vst [vmem:[%s4] sm:$0xf] %v2885
    %v2888 = vmul.f32 %v1668, %v2831
    %v2889 = vmul.f32 %v1670, %v2835
    %v2890 = vadd.f32 %v2888, %v2865
    %v2891 = vadd.f32 %v2889, %v2869
    %v2892 = vmax.f32 %v2890, 0.0
    %v2893 = vmax.f32 %v2891, 0.0
    %v2896 = vcombine.low %v2892, %v2893
    %v2898 = vunpack.c.l.s4 1983009808
    %v2899 = vunpack.c.0.s8 %v2898
    %v2900 = vlaneseq
    %v2901 = vshrl.u32 %v2900, 7
    %v2902 = vsub.s32 %v2899, %v2901
    %v2903 = vrot.slane %v2896, %v2902
    %2905 = vst [vmem:[%s4 + $0x4] sm:$0xf] %v2903
    %v2906 = vmul.f32 %v1709, %v2831
    %v2907 = vmul.f32 %v1711, %v2835
    %v2908 = vadd.f32 %v2906, %v2865
    %v2909 = vadd.f32 %v2907, %v2869
    %v2910 = vmax.f32 %v2908, 0.0
    %v2911 = vmax.f32 %v2909, 0.0
    %v2914 = vcombine.low %v2910, %v2911
    %v2916 = vunpack.c.l.s4 1983009808
    %v2917 = vunpack.c.0.s8 %v2916
    %v2918 = vlaneseq
    %v2919 = vshrl.u32 %v2918, 7
    %v2920 = vsub.s32 %v2917, %v2919
    %v2921 = vrot.slane %v2914, %v2920
    %2923 = vst [vmem:[%s4 + $0x8] sm:$0xf] %v2921
    %v2924 = vmul.f32 %v1750, %v2831
    %v2925 = vmul.f32 %v1752, %v2835
    %v2926 = vadd.f32 %v2924, %v2865
    %v2927 = vadd.f32 %v2925, %v2869
    %v2928 = vmax.f32 %v2926, 0.0
    %v2929 = vmax.f32 %v2927, 0.0
    %v2932 = vcombine.low %v2928, %v2929
    %v2934 = vunpack.c.l.s4 1983009808
    %v2935 = vunpack.c.0.s8 %v2934
    %v2936 = vlaneseq
    %v2937 = vshrl.u32 %v2936, 7
    %v2938 = vsub.s32 %v2935, %v2937
    %v2939 = vrot.slane %v2932, %v2938
    %2941 = vst [vmem:[%s4 + $0xc] sm:$0xf] %v2939
    %v2942 = vmul.f32 %v1791, %v2831
    %v2943 = vmul.f32 %v1793, %v2835
    %v2944 = vadd.f32 %v2942, %v2865
    %v2945 = vadd.f32 %v2943, %v2869
    %v2946 = vmax.f32 %v2944, 0.0
    %v2947 = vmax.f32 %v2945, 0.0
    %v2950 = vcombine.low %v2946, %v2947
    %v2952 = vunpack.c.l.s4 1983009808
    %v2953 = vunpack.c.0.s8 %v2952
    %v2954 = vlaneseq
    %v2955 = vshrl.u32 %v2954, 7
    %v2956 = vsub.s32 %v2953, %v2955
    %v2957 = vrot.slane %v2950, %v2956
    %2959 = vst [vmem:[%s4 + $0x10] sm:$0xf] %v2957
    %v2960 = vmul.f32 %v1832, %v2831
    %v2961 = vmul.f32 %v1834, %v2835
    %v2962 = vadd.f32 %v2960, %v2865
    %v2963 = vadd.f32 %v2961, %v2869
    %v2964 = vmax.f32 %v2962, 0.0
    %v2965 = vmax.f32 %v2963, 0.0
    %v2968 = vcombine.low %v2964, %v2965
    %v2970 = vunpack.c.l.s4 1983009808
    %v2971 = vunpack.c.0.s8 %v2970
    %v2972 = vlaneseq
    %v2973 = vshrl.u32 %v2972, 7
    %v2974 = vsub.s32 %v2971, %v2973
    %v2975 = vrot.slane %v2968, %v2974
    %2977 = vst [vmem:[%s4 + $0x14] sm:$0xf] %v2975
    %v2978 = vmul.f32 %v1873, %v2831
    %v2979 = vmul.f32 %v1875, %v2835
    %v2980 = vadd.f32 %v2978, %v2865
    %v2981 = vadd.f32 %v2979, %v2869
    %v2982 = vmax.f32 %v2980, 0.0
    %v2983 = vmax.f32 %v2981, 0.0
    %v2986 = vcombine.low %v2982, %v2983
    %v2988 = vunpack.c.l.s4 1983009808
    %v2989 = vunpack.c.0.s8 %v2988
    %v2990 = vlaneseq
    %v2991 = vshrl.u32 %v2990, 7
    %v2992 = vsub.s32 %v2989, %v2991
    %v2993 = vrot.slane %v2986, %v2992
    %2995 = vst [vmem:[%s4 + $0x18] sm:$0xf] %v2993
    %v2996 = vmul.f32 %v1914, %v2831
    %v2997 = vmul.f32 %v1916, %v2835
    %v2998 = vadd.f32 %v2996, %v2865
    %v2999 = vadd.f32 %v2997, %v2869
    %v3000 = vmax.f32 %v2998, 0.0
    %v3001 = vmax.f32 %v2999, 0.0
    %v3004 = vcombine.low %v3000, %v3001
    %v3006 = vunpack.c.l.s4 1983009808
    %v3007 = vunpack.c.0.s8 %v3006
    %v3008 = vlaneseq
    %v3009 = vshrl.u32 %v3008, 7
    %v3010 = vsub.s32 %v3007, %v3009
    %v3011 = vrot.slane %v3004, %v3010
    %3013 = vst [vmem:[%s4 + $0x1c] sm:$0xf] %v3011
    %v3014 = vmul.f32 %v1955, %v2831
    %v3015 = vmul.f32 %v1957, %v2835
    %v3016 = vadd.f32 %v3014, %v2865
    %v3017 = vadd.f32 %v3015, %v2869
    %v3018 = vmax.f32 %v3016, 0.0
    %v3019 = vmax.f32 %v3017, 0.0
    %v3022 = vcombine.low %v3018, %v3019
    %v3024 = vunpack.c.l.s4 1983009808
    %v3025 = vunpack.c.0.s8 %v3024
    %v3026 = vlaneseq
    %v3027 = vshrl.u32 %v3026, 7
    %v3028 = vsub.s32 %v3025, %v3027
    %v3029 = vrot.slane %v3022, %v3028
    %3031 = vst [vmem:[%s4 + $0x20] sm:$0xf] %v3029
    %v3032 = vmul.f32 %v1996, %v2831
    %v3033 = vmul.f32 %v1998, %v2835
    %v3034 = vadd.f32 %v3032, %v2865
    %v3035 = vadd.f32 %v3033, %v2869
    %v3036 = vmax.f32 %v3034, 0.0
    %v3037 = vmax.f32 %v3035, 0.0
    %v3040 = vcombine.low %v3036, %v3037
    %v3042 = vunpack.c.l.s4 1983009808
    %v3043 = vunpack.c.0.s8 %v3042
    %v3044 = vlaneseq
    %v3045 = vshrl.u32 %v3044, 7
    %v3046 = vsub.s32 %v3043, %v3045
    %v3047 = vrot.slane %v3040, %v3046
    %3049 = vst [vmem:[%s4 + $0x24] sm:$0xf] %v3047
    %v3050 = vmul.f32 %v2037, %v2831
    %v3051 = vmul.f32 %v2039, %v2835
    %v3052 = vadd.f32 %v3050, %v2865
    %v3053 = vadd.f32 %v3051, %v2869
    %v3054 = vmax.f32 %v3052, 0.0
    %v3055 = vmax.f32 %v3053, 0.0
    %v3058 = vcombine.low %v3054, %v3055
    %v3060 = vunpack.c.l.s4 1983009808
    %v3061 = vunpack.c.0.s8 %v3060
    %v3062 = vlaneseq
    %v3063 = vshrl.u32 %v3062, 7
    %v3064 = vsub.s32 %v3061, %v3063
    %v3065 = vrot.slane %v3058, %v3064
    %3067 = vst [vmem:[%s4 + $0x28] sm:$0xf] %v3065
    %v3068 = vmul.f32 %v2078, %v2831
    %v3069 = vmul.f32 %v2080, %v2835
    %v3070 = vadd.f32 %v3068, %v2865
    %v3071 = vadd.f32 %v3069, %v2869
    %v3072 = vmax.f32 %v3070, 0.0
    %v3073 = vmax.f32 %v3071, 0.0
    %v3076 = vcombine.low %v3072, %v3073
    %v3078 = vunpack.c.l.s4 1983009808
    %v3079 = vunpack.c.0.s8 %v3078
    %v3080 = vlaneseq
    %v3081 = vshrl.u32 %v3080, 7
    %v3082 = vsub.s32 %v3079, %v3081
    %v3083 = vrot.slane %v3076, %v3082
    %3085 = vst [vmem:[%s4 + $0x2c] sm:$0xf] %v3083
    %v3086 = vmul.f32 %v2119, %v2831
    %v3087 = vmul.f32 %v2121, %v2835
    %v3088 = vadd.f32 %v3086, %v2865
    %v3089 = vadd.f32 %v3087, %v2869
    %v3090 = vmax.f32 %v3088, 0.0
    %v3091 = vmax.f32 %v3089, 0.0
    %v3094 = vcombine.low %v3090, %v3091
    %v3096 = vunpack.c.l.s4 1983009808
    %v3097 = vunpack.c.0.s8 %v3096
    %v3098 = vlaneseq
    %v3099 = vshrl.u32 %v3098, 7
    %v3100 = vsub.s32 %v3097, %v3099
    %v3101 = vrot.slane %v3094, %v3100
    %3103 = vst [vmem:[%s4 + $0x30] sm:$0xf] %v3101
    %v3104 = vmul.f32 %v2160, %v2831
    %v3105 = vmul.f32 %v2162, %v2835
    %v3106 = vadd.f32 %v3104, %v2865
    %v3107 = vadd.f32 %v3105, %v2869
    %v3108 = vmax.f32 %v3106, 0.0
    %v3109 = vmax.f32 %v3107, 0.0
    %v3112 = vcombine.low %v3108, %v3109
    %v3114 = vunpack.c.l.s4 1983009808
    %v3115 = vunpack.c.0.s8 %v3114
    %v3116 = vlaneseq
    %v3117 = vshrl.u32 %v3116, 7
    %v3118 = vsub.s32 %v3115, %v3117
    %v3119 = vrot.slane %v3112, %v3118
    %3121 = vst [vmem:[%s4 + $0x34] sm:$0xf] %v3119
    %v3122 = vmul.f32 %v2201, %v2831
    %v3123 = vmul.f32 %v2203, %v2835
    %v3124 = vadd.f32 %v3122, %v2865
    %v3125 = vadd.f32 %v3123, %v2869
    %v3126 = vmax.f32 %v3124, 0.0
    %v3127 = vmax.f32 %v3125, 0.0
    %v3130 = vcombine.low %v3126, %v3127
    %v3132 = vunpack.c.l.s4 1983009808
    %v3133 = vunpack.c.0.s8 %v3132
    %v3134 = vlaneseq
    %v3135 = vshrl.u32 %v3134, 7
    %v3136 = vsub.s32 %v3133, %v3135
    %v3137 = vrot.slane %v3130, %v3136
    %3139 = vst [vmem:[%s4 + $0x38] sm:$0xf] %v3137
    %v3140 = vmul.f32 %v2242, %v2831
    %v3141 = vmul.f32 %v2244, %v2835
    %v3142 = vadd.f32 %v3140, %v2865
    %v3143 = vadd.f32 %v3141, %v2869
    %v3144 = vmax.f32 %v3142, 0.0
    %v3145 = vmax.f32 %v3143, 0.0
    %v3148 = vcombine.low %v3144, %v3145
    %v3150 = vunpack.c.l.s4 1983009808
    %v3151 = vunpack.c.0.s8 %v3150
    %v3152 = vlaneseq
    %v3153 = vshrl.u32 %v3152, 7
    %v3154 = vsub.s32 %v3151, %v3153
    %v3155 = vrot.slane %v3148, %v3154
    %3157 = vst [vmem:[%s4 + $0x3c] sm:$0xf] %v3155
    // Predicated region
    $region30: #{generator_forward.4} parent=1 // pred_check
      _
    $region31: #{generator_forward.4} parent=1 // pred_check_branch
      %3159 = sbr.rel (0) target = $region33
    $region32: #{generator_forward.4} parent=1 // pred_region
      _
    $region33: #{generator_forward.4} parent=1 // pred_fallthru
      _
    // Predicated region
    $region34: #{generator_forward.4} parent=1 // pred_check
      _
    $region35: #{generator_forward.4} parent=1 // pred_check_branch
      %3161 = sbr.rel (0) target = $region37
    $region36: #{generator_forward.4} parent=1 // pred_region
      _
    $region37: #{generator_forward.4} parent=1 // pred_fallthru
      _
    %3162 = vsyncpa [#allocation3], 1
    %3163 = vsyncpa [#allocation5], 1

// kernel: generator_forward.5
$region0: #{generator_forward.5}
  #allocation0 [shape = 'u32[]', space=smem, size = 0x4, offset = 0x4, fixed_abs, tag = 'smem constant byte address 0x4 - core index']
  #allocation1 [shape = 'u32[144,128]{1,0:T(1,128)}', space=vmem, size = 0x12000, scoped, tag = 'internal scratch']
  %s0 = inlined_call_operand.vmem [shape: bf16[4,32,1024], index: 0, kind: input, shape index: {}]
  %s1 = inlined_call_operand.vmem [shape: bf16[4,1024,128], index: 1, kind: input, shape index: {}]
  %s2 = inlined_call_operand.vmem [shape: f32[1,128], index: 2, kind: input, shape index: {}]
  %s3 = inlined_call_operand.vmem [shape: f32[1,128], index: 3, kind: input, shape index: {}]
  %s4 = inlined_call_operand.vmem [shape: f32[4,32,128], index: 4, kind: output, shape index: {}]
  %s5 = sld [smem:[#allocation0]]
  $region26: #{generator_forward.5} parent=0
    _
  %s7 = ssub.s32 1, %s5
  %s8 = scalar_select 0, %s7, %s5
  // Predicated region
  $region2: #{generator_forward.5} parent=0 // pred_check
    _
  $region3: #{generator_forward.5} parent=0 // pred_check_branch
    %10 = sbr.rel (0) target = $region5
  $region4: #{generator_forward.5} parent=0 // pred_region
    _
  $region5: #{generator_forward.5} parent=0 // pred_fallthru
    _
  // Predicated region
  $region6: #{generator_forward.5} parent=0 // pred_check
    _
  $region7: #{generator_forward.5} parent=0 // pred_check_branch
    %12 = sbr.rel (0) target = $region9
  $region8: #{generator_forward.5} parent=0 // pred_region
    _
  $region9: #{generator_forward.5} parent=0 // pred_fallthru
    _
  // Predicated region
  $region10: #{generator_forward.5} parent=0 // pred_check
    _
  $region11: #{generator_forward.5} parent=0 // pred_check_branch
    %14 = sbr.rel (0) target = $region13
  $region12: #{generator_forward.5} parent=0 // pred_region
    _
  $region13: #{generator_forward.5} parent=0 // pred_fallthru
    _
  // Predicated region
  $region14: #{generator_forward.5} parent=0 // pred_check
    _
  $region15: #{generator_forward.5} parent=0 // pred_check_branch
    %16 = sbr.rel (0) target = $region17
  $region16: #{generator_forward.5} parent=0 // pred_region
    _
  $region17: #{generator_forward.5} parent=0 // pred_fallthru
    _
  %v18 = vld [vmem:[%s0] sm:$0xff]
  %v19 = vld [vmem:[%s0 + $0x8] sm:$0xff]
  %v20 = vld [vmem:[%s0 + $0x10] sm:$0xff]
  %v21 = vld [vmem:[%s0 + $0x18] sm:$0xff]
  %v22 = vld [vmem:[%s0 + $0x20] sm:$0xff]
  %v23 = vld [vmem:[%s0 + $0x28] sm:$0xff]
  %v24 = vld [vmem:[%s0 + $0x30] sm:$0xff]
  %v25 = vld [vmem:[%s0 + $0x38] sm:$0xff]
  %v26 = vld [vmem:[%s0 + $0x40] sm:$0xff]
  %v27 = vld [vmem:[%s0 + $0x48] sm:$0xff]
  %v28 = vld [vmem:[%s0 + $0x50] sm:$0xff]
  %v29 = vld [vmem:[%s0 + $0x58] sm:$0xff]
  %v30 = vld [vmem:[%s0 + $0x60] sm:$0xff]
  %v31 = vld [vmem:[%s0 + $0x68] sm:$0xff]
  %v32 = vld [vmem:[%s0 + $0x70] sm:$0xff]
  %v33 = vld [vmem:[%s0 + $0x78] sm:$0xff]
  %v34 = vld [vmem:[%s1] sm:$0xf]
  %v35 = vld [vmem:[%s1 + $0x4] sm:$0xf]
  %v36 = vld [vmem:[%s1 + $0x8] sm:$0xf]
  %v37 = vld [vmem:[%s1 + $0xc] sm:$0xf]
  %v38 = vld [vmem:[%s1 + $0x10] sm:$0xf]
  %v39 = vld [vmem:[%s1 + $0x14] sm:$0xf]
  %v40 = vld [vmem:[%s1 + $0x18] sm:$0xf]
  %v41 = vld [vmem:[%s1 + $0x1c] sm:$0xf]
  %v42 = vld [vmem:[%s1 + $0x20] sm:$0xf]
  %v43 = vld [vmem:[%s1 + $0x24] sm:$0xf]
  %v44 = vld [vmem:[%s1 + $0x28] sm:$0xf]
  %v45 = vld [vmem:[%s1 + $0x2c] sm:$0xf]
  %v46 = vld [vmem:[%s1 + $0x30] sm:$0xf]
  %v47 = vld [vmem:[%s1 + $0x34] sm:$0xf]
  %v48 = vld [vmem:[%s1 + $0x38] sm:$0xf]
  %v49 = vld [vmem:[%s1 + $0x3c] sm:$0xf]
  %v50 = vld [vmem:[%s1 + $0x40] sm:$0xf]
  %v51 = vld [vmem:[%s1 + $0x44] sm:$0xf]
  %v52 = vld [vmem:[%s1 + $0x48] sm:$0xf]
  %v53 = vld [vmem:[%s1 + $0x4c] sm:$0xf]
  %v54 = vld [vmem:[%s1 + $0x50] sm:$0xf]
  %v55 = vld [vmem:[%s1 + $0x54] sm:$0xf]
  %v56 = vld [vmem:[%s1 + $0x58] sm:$0xf]
  %v57 = vld [vmem:[%s1 + $0x5c] sm:$0xf]
  %v58 = vld [vmem:[%s1 + $0x60] sm:$0xf]
  %v59 = vld [vmem:[%s1 + $0x64] sm:$0xf]
  %v60 = vld [vmem:[%s1 + $0x68] sm:$0xf]
  %v61 = vld [vmem:[%s1 + $0x6c] sm:$0xf]
  %v62 = vld [vmem:[%s1 + $0x70] sm:$0xf]
  %v63 = vld [vmem:[%s1 + $0x74] sm:$0xf]
  %v64 = vld [vmem:[%s1 + $0x78] sm:$0xf]
  %v65 = vld [vmem:[%s1 + $0x7c] sm:$0xf]
  %v66 = vld [vmem:[%s1 + $0x80] sm:$0xf]
  %v67 = vld [vmem:[%s1 + $0x84] sm:$0xf]
  %v68 = vld [vmem:[%s1 + $0x88] sm:$0xf]
  %v69 = vld [vmem:[%s1 + $0x8c] sm:$0xf]
  %v70 = vld [vmem:[%s1 + $0x90] sm:$0xf]
  %v71 = vld [vmem:[%s1 + $0x94] sm:$0xf]
  %v72 = vld [vmem:[%s1 + $0x98] sm:$0xf]
  %v73 = vld [vmem:[%s1 + $0x9c] sm:$0xf]
  %v74 = vld [vmem:[%s1 + $0xa0] sm:$0xf]
  %v75 = vld [vmem:[%s1 + $0xa4] sm:$0xf]
  %v76 = vld [vmem:[%s1 + $0xa8] sm:$0xf]
  %v77 = vld [vmem:[%s1 + $0xac] sm:$0xf]
  %v78 = vld [vmem:[%s1 + $0xb0] sm:$0xf]
  %v79 = vld [vmem:[%s1 + $0xb4] sm:$0xf]
  %v80 = vld [vmem:[%s1 + $0xb8] sm:$0xf]
  %v81 = vld [vmem:[%s1 + $0xbc] sm:$0xf]
  %v82 = vld [vmem:[%s1 + $0xc0] sm:$0xf]
  %v83 = vld [vmem:[%s1 + $0xc4] sm:$0xf]
  %v84 = vld [vmem:[%s1 + $0xc8] sm:$0xf]
  %v85 = vld [vmem:[%s1 + $0xcc] sm:$0xf]
  %v86 = vld [vmem:[%s1 + $0xd0] sm:$0xf]
  %v87 = vld [vmem:[%s1 + $0xd4] sm:$0xf]
  %v88 = vld [vmem:[%s1 + $0xd8] sm:$0xf]
  %v89 = vld [vmem:[%s1 + $0xdc] sm:$0xf]
  %v90 = vld [vmem:[%s1 + $0xe0] sm:$0xf]
  %v91 = vld [vmem:[%s1 + $0xe4] sm:$0xf]
  %v92 = vld [vmem:[%s1 + $0xe8] sm:$0xf]
  %v93 = vld [vmem:[%s1 + $0xec] sm:$0xf]
  %v94 = vld [vmem:[%s1 + $0xf0] sm:$0xf]
  %v95 = vld [vmem:[%s1 + $0xf4] sm:$0xf]
  %v96 = vld [vmem:[%s1 + $0xf8] sm:$0xf]
  %v97 = vld [vmem:[%s1 + $0xfc] sm:$0xf]
  %v98 = vld [vmem:[%s1 + $0x100] sm:$0xf]
  %v99 = vld [vmem:[%s1 + $0x104] sm:$0xf]
  %v100 = vld [vmem:[%s1 + $0x108] sm:$0xf]
  %v101 = vld [vmem:[%s1 + $0x10c] sm:$0xf]
  %v102 = vld [vmem:[%s1 + $0x110] sm:$0xf]
  %v103 = vld [vmem:[%s1 + $0x114] sm:$0xf]
  %v104 = vld [vmem:[%s1 + $0x118] sm:$0xf]
  %v105 = vld [vmem:[%s1 + $0x11c] sm:$0xf]
  %v106 = vld [vmem:[%s1 + $0x120] sm:$0xf]
  %v107 = vld [vmem:[%s1 + $0x124] sm:$0xf]
  %v108 = vld [vmem:[%s1 + $0x128] sm:$0xf]
  %v109 = vld [vmem:[%s1 + $0x12c] sm:$0xf]
  %v110 = vld [vmem:[%s1 + $0x130] sm:$0xf]
  %v111 = vld [vmem:[%s1 + $0x134] sm:$0xf]
  %v112 = vld [vmem:[%s1 + $0x138] sm:$0xf]
  %v113 = vld [vmem:[%s1 + $0x13c] sm:$0xf]
  %v114 = vld [vmem:[%s1 + $0x140] sm:$0xf]
  %v115 = vld [vmem:[%s1 + $0x144] sm:$0xf]
  %v116 = vld [vmem:[%s1 + $0x148] sm:$0xf]
  %v117 = vld [vmem:[%s1 + $0x14c] sm:$0xf]
  %v118 = vld [vmem:[%s1 + $0x150] sm:$0xf]
  %v119 = vld [vmem:[%s1 + $0x154] sm:$0xf]
  %v120 = vld [vmem:[%s1 + $0x158] sm:$0xf]
  %v121 = vld [vmem:[%s1 + $0x15c] sm:$0xf]
  %v122 = vld [vmem:[%s1 + $0x160] sm:$0xf]
  %v123 = vld [vmem:[%s1 + $0x164] sm:$0xf]
  %v124 = vld [vmem:[%s1 + $0x168] sm:$0xf]
  %v125 = vld [vmem:[%s1 + $0x16c] sm:$0xf]
  %v126 = vld [vmem:[%s1 + $0x170] sm:$0xf]
  %v127 = vld [vmem:[%s1 + $0x174] sm:$0xf]
  %v128 = vld [vmem:[%s1 + $0x178] sm:$0xf]
  %v129 = vld [vmem:[%s1 + $0x17c] sm:$0xf]
  %v130 = vld [vmem:[%s1 + $0x180] sm:$0xf]
  %v131 = vld [vmem:[%s1 + $0x184] sm:$0xf]
  %v132 = vld [vmem:[%s1 + $0x188] sm:$0xf]
  %v133 = vld [vmem:[%s1 + $0x18c] sm:$0xf]
  %v134 = vld [vmem:[%s1 + $0x190] sm:$0xf]
  %v135 = vld [vmem:[%s1 + $0x194] sm:$0xf]
  %v136 = vld [vmem:[%s1 + $0x198] sm:$0xf]
  %v137 = vld [vmem:[%s1 + $0x19c] sm:$0xf]
  %v138 = vld [vmem:[%s1 + $0x1a0] sm:$0xf]
  %v139 = vld [vmem:[%s1 + $0x1a4] sm:$0xf]
  %v140 = vld [vmem:[%s1 + $0x1a8] sm:$0xf]
  %v141 = vld [vmem:[%s1 + $0x1ac] sm:$0xf]
  %v142 = vld [vmem:[%s1 + $0x1b0] sm:$0xf]
  %v143 = vld [vmem:[%s1 + $0x1b4] sm:$0xf]
  %v144 = vld [vmem:[%s1 + $0x1b8] sm:$0xf]
  %v145 = vld [vmem:[%s1 + $0x1bc] sm:$0xf]
  %v146 = vld [vmem:[%s1 + $0x1c0] sm:$0xf]
  %v147 = vld [vmem:[%s1 + $0x1c4] sm:$0xf]
  %v148 = vld [vmem:[%s1 + $0x1c8] sm:$0xf]
  %v149 = vld [vmem:[%s1 + $0x1cc] sm:$0xf]
  %v150 = vld [vmem:[%s1 + $0x1d0] sm:$0xf]
  %v151 = vld [vmem:[%s1 + $0x1d4] sm:$0xf]
  %v152 = vld [vmem:[%s1 + $0x1d8] sm:$0xf]
  %v153 = vld [vmem:[%s1 + $0x1dc] sm:$0xf]
  %v154 = vld [vmem:[%s1 + $0x1e0] sm:$0xf]
  %v155 = vld [vmem:[%s1 + $0x1e4] sm:$0xf]
  %v156 = vld [vmem:[%s1 + $0x1e8] sm:$0xf]
  %v157 = vld [vmem:[%s1 + $0x1ec] sm:$0xf]
  %v158 = vld [vmem:[%s1 + $0x1f0] sm:$0xf]
  %v159 = vld [vmem:[%s1 + $0x1f4] sm:$0xf]
  %v160 = vld [vmem:[%s1 + $0x1f8] sm:$0xf]
  %v161 = vld [vmem:[%s1 + $0x1fc] sm:$0xf]
  %v178 = vunpack.c.l.b16 %v18
  %v179 = vunpack.c.h.b16 %v18
  %v180 = vunpack.c.l.b16 %v19
  %v181 = vunpack.c.h.b16 %v19
  %v182 = vunpack.c.l.b16 %v20
  %v183 = vunpack.c.h.b16 %v20
  %v184 = vunpack.c.l.b16 %v21
  %v185 = vunpack.c.h.b16 %v21
  %v186 = vunpack.c.l.b16 %v22
  %v187 = vunpack.c.h.b16 %v22
  %v188 = vunpack.c.l.b16 %v23
  %v189 = vunpack.c.h.b16 %v23
  %v190 = vunpack.c.l.b16 %v24
  %v191 = vunpack.c.h.b16 %v24
  %v192 = vunpack.c.l.b16 %v25
  %v193 = vunpack.c.h.b16 %v25
  %v194 = vunpack.c.l.b16 %v26
  %v195 = vunpack.c.h.b16 %v26
  %v196 = vunpack.c.l.b16 %v27
  %v197 = vunpack.c.h.b16 %v27
  %v198 = vunpack.c.l.b16 %v28
  %v199 = vunpack.c.h.b16 %v28
  %v200 = vunpack.c.l.b16 %v29
  %v201 = vunpack.c.h.b16 %v29
  %v202 = vunpack.c.l.b16 %v30
  %v203 = vunpack.c.h.b16 %v30
  %v204 = vunpack.c.l.b16 %v31
  %v205 = vunpack.c.h.b16 %v31
  %v206 = vunpack.c.l.b16 %v32
  %v207 = vunpack.c.h.b16 %v32
  %v208 = vunpack.c.l.b16 %v33
  %v209 = vunpack.c.h.b16 %v33
  %v210 = vpack.c.b16 %v186, %v178
  %v211 = vpack.c.b16 %v187, %v179
  %v212 = vpack.c.b16 %v188, %v180
  %v213 = vpack.c.b16 %v189, %v181
  %v214 = vpack.c.b16 %v190, %v182
  %v215 = vpack.c.b16 %v191, %v183
  %v216 = vpack.c.b16 %v192, %v184
  %v217 = vpack.c.b16 %v193, %v185
  %v218 = vpack.c.b16 %v202, %v194
  %v219 = vpack.c.b16 %v203, %v195
  %v220 = vpack.c.b16 %v204, %v196
  %v221 = vpack.c.b16 %v205, %v197
  %v222 = vpack.c.b16 %v206, %v198
  %v223 = vpack.c.b16 %v207, %v199
  %v224 = vpack.c.b16 %v208, %v200
  %v225 = vpack.c.b16 %v209, %v201
  %v370 = vunpack.c.l.b16 %v34
  %v371 = vunpack.c.l.b16 %v35
  %v372 = vunpack.c.l.b16 %v36
  %v373 = vunpack.c.l.b16 %v37
  %v374 = vunpack.c.l.b16 %v38
  %v375 = vunpack.c.l.b16 %v39
  %v376 = vunpack.c.l.b16 %v40
  %v377 = vunpack.c.l.b16 %v41
  %v378 = vunpack.c.l.b16 %v42
  %v379 = vunpack.c.l.b16 %v43
  %v380 = vunpack.c.l.b16 %v44
  %v381 = vunpack.c.l.b16 %v45
  %v382 = vunpack.c.l.b16 %v46
  %v383 = vunpack.c.l.b16 %v47
  %v384 = vunpack.c.l.b16 %v48
  %v385 = vunpack.c.l.b16 %v49
  %v386 = vunpack.c.l.b16 %v50
  %v387 = vunpack.c.l.b16 %v51
  %v388 = vunpack.c.l.b16 %v52
  %v389 = vunpack.c.l.b16 %v53
  %v390 = vunpack.c.l.b16 %v54
  %v391 = vunpack.c.l.b16 %v55
  %v392 = vunpack.c.l.b16 %v56
  %v393 = vunpack.c.l.b16 %v57
  %v394 = vunpack.c.l.b16 %v58
  %v395 = vunpack.c.l.b16 %v59
  %v396 = vunpack.c.l.b16 %v60
  %v397 = vunpack.c.l.b16 %v61
  %v398 = vunpack.c.l.b16 %v62
  %v399 = vunpack.c.l.b16 %v63
  %v400 = vunpack.c.l.b16 %v64
  %v401 = vunpack.c.l.b16 %v65
  %v402 = vunpack.c.l.b16 %v66
  %v403 = vunpack.c.l.b16 %v67
  %v404 = vunpack.c.l.b16 %v68
  %v405 = vunpack.c.l.b16 %v69
  %v406 = vunpack.c.l.b16 %v70
  %v407 = vunpack.c.l.b16 %v71
  %v408 = vunpack.c.l.b16 %v72
  %v409 = vunpack.c.l.b16 %v73
  %v410 = vunpack.c.l.b16 %v74
  %v411 = vunpack.c.l.b16 %v75
  %v412 = vunpack.c.l.b16 %v76
  %v413 = vunpack.c.l.b16 %v77
  %v414 = vunpack.c.l.b16 %v78
  %v415 = vunpack.c.l.b16 %v79
  %v416 = vunpack.c.l.b16 %v80
  %v417 = vunpack.c.l.b16 %v81
  %v418 = vunpack.c.l.b16 %v82
  %v419 = vunpack.c.l.b16 %v83
  %v420 = vunpack.c.l.b16 %v84
  %v421 = vunpack.c.l.b16 %v85
  %v422 = vunpack.c.l.b16 %v86
  %v423 = vunpack.c.l.b16 %v87
  %v424 = vunpack.c.l.b16 %v88
  %v425 = vunpack.c.l.b16 %v89
  %v426 = vunpack.c.l.b16 %v90
  %v427 = vunpack.c.l.b16 %v91
  %v428 = vunpack.c.l.b16 %v92
  %v429 = vunpack.c.l.b16 %v93
  %v430 = vunpack.c.l.b16 %v94
  %v431 = vunpack.c.l.b16 %v95
  %v432 = vunpack.c.l.b16 %v96
  %v433 = vunpack.c.l.b16 %v97
  %v434 = vunpack.c.l.b16 %v98
  %v435 = vunpack.c.l.b16 %v99
  %v436 = vunpack.c.l.b16 %v100
  %v437 = vunpack.c.l.b16 %v101
  %v438 = vunpack.c.l.b16 %v102
  %v439 = vunpack.c.l.b16 %v103
  %v440 = vunpack.c.l.b16 %v104
  %v441 = vunpack.c.l.b16 %v105
  %v442 = vunpack.c.l.b16 %v106
  %v443 = vunpack.c.l.b16 %v107
  %v444 = vunpack.c.l.b16 %v108
  %v445 = vunpack.c.l.b16 %v109
  %v446 = vunpack.c.l.b16 %v110
  %v447 = vunpack.c.l.b16 %v111
  %v448 = vunpack.c.l.b16 %v112
  %v449 = vunpack.c.l.b16 %v113
  %v450 = vunpack.c.l.b16 %v114
  %v451 = vunpack.c.l.b16 %v115
  %v452 = vunpack.c.l.b16 %v116
  %v453 = vunpack.c.l.b16 %v117
  %v454 = vunpack.c.l.b16 %v118
  %v455 = vunpack.c.l.b16 %v119
  %v456 = vunpack.c.l.b16 %v120
  %v457 = vunpack.c.l.b16 %v121
  %v458 = vunpack.c.l.b16 %v122
  %v459 = vunpack.c.l.b16 %v123
  %v460 = vunpack.c.l.b16 %v124
  %v461 = vunpack.c.l.b16 %v125
  %v462 = vunpack.c.l.b16 %v126
  %v463 = vunpack.c.l.b16 %v127
  %v464 = vunpack.c.l.b16 %v128
  %v465 = vunpack.c.l.b16 %v129
  %v466 = vunpack.c.l.b16 %v130
  %v467 = vunpack.c.l.b16 %v131
  %v468 = vunpack.c.l.b16 %v132
  %v469 = vunpack.c.l.b16 %v133
  %v470 = vunpack.c.l.b16 %v134
  %v471 = vunpack.c.l.b16 %v135
  %v472 = vunpack.c.l.b16 %v136
  %v473 = vunpack.c.l.b16 %v137
  %v474 = vunpack.c.l.b16 %v138
  %v475 = vunpack.c.l.b16 %v139
  %v476 = vunpack.c.l.b16 %v140
  %v477 = vunpack.c.l.b16 %v141
  %v478 = vunpack.c.l.b16 %v142
  %v479 = vunpack.c.l.b16 %v143
  %v480 = vunpack.c.l.b16 %v144
  %v481 = vunpack.c.l.b16 %v145
  %v482 = vunpack.c.l.b16 %v146
  %v483 = vunpack.c.l.b16 %v147
  %v484 = vunpack.c.l.b16 %v148
  %v485 = vunpack.c.l.b16 %v149
  %v486 = vunpack.c.l.b16 %v150
  %v487 = vunpack.c.l.b16 %v151
  %v488 = vunpack.c.l.b16 %v152
  %v489 = vunpack.c.l.b16 %v153
  %v490 = vunpack.c.l.b16 %v154
  %v491 = vunpack.c.l.b16 %v155
  %v492 = vunpack.c.l.b16 %v156
  %v493 = vunpack.c.l.b16 %v157
  %v494 = vunpack.c.l.b16 %v158
  %v495 = vunpack.c.l.b16 %v159
  %v496 = vunpack.c.l.b16 %v160
  %v497 = vunpack.c.l.b16 %v161
  %v498 = vpack.c.b16 %v371, %v370
  %v499 = vpack.c.b16 %v373, %v372
  %v500 = vpack.c.b16 %v375, %v374
  %v501 = vpack.c.b16 %v377, %v376
  %v502 = vpack.c.b16 %v379, %v378
  %v503 = vpack.c.b16 %v381, %v380
  %v504 = vpack.c.b16 %v383, %v382
  %v505 = vpack.c.b16 %v385, %v384
  %v506 = vpack.c.b16 %v387, %v386
  %v507 = vpack.c.b16 %v389, %v388
  %v508 = vpack.c.b16 %v391, %v390
  %v509 = vpack.c.b16 %v393, %v392
  %v510 = vpack.c.b16 %v395, %v394
  %v511 = vpack.c.b16 %v397, %v396
  %v512 = vpack.c.b16 %v399, %v398
  %v513 = vpack.c.b16 %v401, %v400
  %v514 = vpack.c.b16 %v403, %v402
  %v515 = vpack.c.b16 %v405, %v404
  %v516 = vpack.c.b16 %v407, %v406
  %v517 = vpack.c.b16 %v409, %v408
  %v518 = vpack.c.b16 %v411, %v410
  %v519 = vpack.c.b16 %v413, %v412
  %v520 = vpack.c.b16 %v415, %v414
  %v521 = vpack.c.b16 %v417, %v416
  %v522 = vpack.c.b16 %v419, %v418
  %v523 = vpack.c.b16 %v421, %v420
  %v524 = vpack.c.b16 %v423, %v422
  %v525 = vpack.c.b16 %v425, %v424
  %v526 = vpack.c.b16 %v427, %v426
  %v527 = vpack.c.b16 %v429, %v428
  %v528 = vpack.c.b16 %v431, %v430
  %v529 = vpack.c.b16 %v433, %v432
  %v530 = vpack.c.b16 %v435, %v434
  %v531 = vpack.c.b16 %v437, %v436
  %v532 = vpack.c.b16 %v439, %v438
  %v533 = vpack.c.b16 %v441, %v440
  %v534 = vpack.c.b16 %v443, %v442
  %v535 = vpack.c.b16 %v445, %v444
  %v536 = vpack.c.b16 %v447, %v446
  %v537 = vpack.c.b16 %v449, %v448
  %v538 = vpack.c.b16 %v451, %v450
  %v539 = vpack.c.b16 %v453, %v452
  %v540 = vpack.c.b16 %v455, %v454
  %v541 = vpack.c.b16 %v457, %v456
  %v542 = vpack.c.b16 %v459, %v458
  %v543 = vpack.c.b16 %v461, %v460
  %v544 = vpack.c.b16 %v463, %v462
  %v545 = vpack.c.b16 %v465, %v464
  %v546 = vpack.c.b16 %v467, %v466
  %v547 = vpack.c.b16 %v469, %v468
  %v548 = vpack.c.b16 %v471, %v470
  %v549 = vpack.c.b16 %v473, %v472
  %v550 = vpack.c.b16 %v475, %v474
  %v551 = vpack.c.b16 %v477, %v476
  %v552 = vpack.c.b16 %v479, %v478
  %v553 = vpack.c.b16 %v481, %v480
  %v554 = vpack.c.b16 %v483, %v482
  %v555 = vpack.c.b16 %v485, %v484
  %v556 = vpack.c.b16 %v487, %v486
  %v557 = vpack.c.b16 %v489, %v488
  %v558 = vpack.c.b16 %v491, %v490
  %v559 = vpack.c.b16 %v493, %v492
  %v560 = vpack.c.b16 %v495, %v494
  %v561 = vpack.c.b16 %v497, %v496
  %626 = vmatprep.subr.bf16.mxu0 0
  %627 = vmatpush1.bf16.msra.mxu0 %v498
  %628 = vmatprep.subr.bf16.mxu0 0
  %629 = vmatpush1.bf16.msra.mxu0 %v499
  %630 = vmatprep.subr.bf16.mxu0 0
  %631 = vmatpush1.bf16.msra.mxu0 %v500
  %632 = vmatprep.subr.bf16.mxu0 0
  %633 = vmatpush1.bf16.msra.mxu0 %v501
  %634 = vmatprep.subr.bf16.mxu0 0
  %635 = vmatpush1.bf16.msra.mxu0 %v502
  %636 = vmatprep.subr.bf16.mxu0 0
  %637 = vmatpush1.bf16.msra.mxu0 %v503
  %638 = vmatprep.subr.bf16.mxu0 0
  %639 = vmatpush1.bf16.msra.mxu0 %v504
  %640 = vmatprep.subr.bf16.mxu0 0
  %641 = vmatpush1.bf16.msra.mxu0 %v505
  %642 = vmatprep.subr.bf16.mxu0 0
  %643 = vmatpush1.bf16.msra.mxu0 %v506
  %644 = vmatprep.subr.bf16.mxu0 0
  %645 = vmatpush1.bf16.msra.mxu0 %v507
  %646 = vmatprep.subr.bf16.mxu0 0
  %647 = vmatpush1.bf16.msra.mxu0 %v508
  %648 = vmatprep.subr.bf16.mxu0 0
  %649 = vmatpush1.bf16.msra.mxu0 %v509
  %650 = vmatprep.subr.bf16.mxu0 0
  %651 = vmatpush1.bf16.msra.mxu0 %v510
  %652 = vmatprep.subr.bf16.mxu0 0
  %653 = vmatpush1.bf16.msra.mxu0 %v511
  %654 = vmatprep.subr.bf16.mxu0 0
  %655 = vmatpush1.bf16.msra.mxu0 %v512
  %656 = vmatprep.subr.bf16.mxu0 0
  %657 = vmatpush1.bf16.msra.mxu0 %v513
  %658 = vmatprep.mubr.bf16.mxu0 %v211
  %659 = vmatmul.mubr.bf16.gmra.mrb[0].mxu0 %v210
  %v660 = vpop.f32.mrb[0].mxu0
  %v661 = vadd.f32 0.0, %v660
  %v662 = vpop.f32.mrb[0].mxu0
  %v663 = vpop.f32.mrb[0].mxu0
  %v664 = vadd.f32 0.0, %v663
  %v665 = vpop.f32.mrb[0].mxu0
  %666 = vmatprep.mubr.bf16.mxu0 %v219
  %667 = vmatmul.mubr.bf16.gmra.mrb[0].mxu0 %v218
  %v668 = vpop.f32.mrb[0].mxu0
  %v669 = vadd.f32 0.0, %v668
  %v670 = vpop.f32.mrb[0].mxu0
  %v671 = vpop.f32.mrb[0].mxu0
  %v672 = vadd.f32 0.0, %v671
  %v673 = vpop.f32.mrb[0].mxu0
  %674 = vdwg.mxu0
  %675 = vmatprep.subr.bf16.mxu0 0
  %676 = vmatpush1.bf16.msra.mxu0 %v514
  %677 = vmatprep.subr.bf16.mxu0 0
  %678 = vmatpush1.bf16.msra.mxu0 %v515
  %679 = vmatprep.subr.bf16.mxu0 0
  %680 = vmatpush1.bf16.msra.mxu0 %v516
  %681 = vmatprep.subr.bf16.mxu0 0
  %682 = vmatpush1.bf16.msra.mxu0 %v517
  %683 = vmatprep.subr.bf16.mxu0 0
  %684 = vmatpush1.bf16.msra.mxu0 %v518
  %685 = vmatprep.subr.bf16.mxu0 0
  %686 = vmatpush1.bf16.msra.mxu0 %v519
  %687 = vmatprep.subr.bf16.mxu0 0
  %688 = vmatpush1.bf16.msra.mxu0 %v520
  %689 = vmatprep.subr.bf16.mxu0 0
  %690 = vmatpush1.bf16.msra.mxu0 %v521
  %691 = vmatprep.subr.bf16.mxu0 0
  %692 = vmatpush1.bf16.msra.mxu0 %v522
  %693 = vmatprep.subr.bf16.mxu0 0
  %694 = vmatpush1.bf16.msra.mxu0 %v523
  %695 = vmatprep.subr.bf16.mxu0 0
  %696 = vmatpush1.bf16.msra.mxu0 %v524
  %697 = vmatprep.subr.bf16.mxu0 0
  %698 = vmatpush1.bf16.msra.mxu0 %v525
  %699 = vmatprep.subr.bf16.mxu0 0
  %700 = vmatpush1.bf16.msra.mxu0 %v526
  %701 = vmatprep.subr.bf16.mxu0 0
  %702 = vmatpush1.bf16.msra.mxu0 %v527
  %703 = vmatprep.subr.bf16.mxu0 0
  %704 = vmatpush1.bf16.msra.mxu0 %v528
  %705 = vmatprep.subr.bf16.mxu0 0
  %706 = vmatpush1.bf16.msra.mxu0 %v529
  %707 = vmatprep.mubr.bf16.mxu0 %v213
  %708 = vmatmul.mubr.bf16.gmra.mrb[0].mxu0 %v212
  %v709 = vpop.f32.mrb[0].mxu0
  %v710 = vadd.f32 %v661, %v709
  %v711 = vpop.f32.mrb[0].mxu0
  %v712 = vpop.f32.mrb[0].mxu0
  %v713 = vadd.f32 %v664, %v712
  %v714 = vpop.f32.mrb[0].mxu0
  %715 = vmatprep.mubr.bf16.mxu0 %v221
  %716 = vmatmul.mubr.bf16.gmra.mrb[0].mxu0 %v220
  %v717 = vpop.f32.mrb[0].mxu0
  %v718 = vadd.f32 %v669, %v717
  %v719 = vpop.f32.mrb[0].mxu0
  %v720 = vpop.f32.mrb[0].mxu0
  %v721 = vadd.f32 %v672, %v720
  %v722 = vpop.f32.mrb[0].mxu0
  %723 = vdwg.mxu0
  %724 = vmatprep.subr.bf16.mxu0 0
  %725 = vmatpush1.bf16.msra.mxu0 %v530
  %726 = vmatprep.subr.bf16.mxu0 0
  %727 = vmatpush1.bf16.msra.mxu0 %v531
  %728 = vmatprep.subr.bf16.mxu0 0
  %729 = vmatpush1.bf16.msra.mxu0 %v532
  %730 = vmatprep.subr.bf16.mxu0 0
  %731 = vmatpush1.bf16.msra.mxu0 %v533
  %732 = vmatprep.subr.bf16.mxu0 0
  %733 = vmatpush1.bf16.msra.mxu0 %v534
  %734 = vmatprep.subr.bf16.mxu0 0
  %735 = vmatpush1.bf16.msra.mxu0 %v535
  %736 = vmatprep.subr.bf16.mxu0 0
  %737 = vmatpush1.bf16.msra.mxu0 %v536
  %738 = vmatprep.subr.bf16.mxu0 0
  %739 = vmatpush1.bf16.msra.mxu0 %v537
  %740 = vmatprep.subr.bf16.mxu0 0
  %741 = vmatpush1.bf16.msra.mxu0 %v538
  %742 = vmatprep.subr.bf16.mxu0 0
  %743 = vmatpush1.bf16.msra.mxu0 %v539
  %744 = vmatprep.subr.bf16.mxu0 0
  %745 = vmatpush1.bf16.msra.mxu0 %v540
  %746 = vmatprep.subr.bf16.mxu0 0
  %747 = vmatpush1.bf16.msra.mxu0 %v541
  %748 = vmatprep.subr.bf16.mxu0 0
  %749 = vmatpush1.bf16.msra.mxu0 %v542
  %750 = vmatprep.subr.bf16.mxu0 0
  %751 = vmatpush1.bf16.msra.mxu0 %v543
  %752 = vmatprep.subr.bf16.mxu0 0
  %753 = vmatpush1.bf16.msra.mxu0 %v544
  %754 = vmatprep.subr.bf16.mxu0 0
  %755 = vmatpush1.bf16.msra.mxu0 %v545
  %756 = vmatprep.mubr.bf16.mxu0 %v215
  %757 = vmatmul.mubr.bf16.gmra.mrb[0].mxu0 %v214
  %v758 = vpop.f32.mrb[0].mxu0
  %v759 = vadd.f32 %v710, %v758
  %v760 = vpop.f32.mrb[0].mxu0
  %v761 = vpop.f32.mrb[0].mxu0
  %v762 = vadd.f32 %v713, %v761
  %v763 = vpop.f32.mrb[0].mxu0
  %764 = vmatprep.mubr.bf16.mxu0 %v223
  %765 = vmatmul.mubr.bf16.gmra.mrb[0].mxu0 %v222
  %v766 = vpop.f32.mrb[0].mxu0
  %v767 = vadd.f32 %v718, %v766
  %v768 = vpop.f32.mrb[0].mxu0
  %v769 = vpop.f32.mrb[0].mxu0
  %v770 = vadd.f32 %v721, %v769
  %v771 = vpop.f32.mrb[0].mxu0
  %772 = vdwg.mxu0
  %773 = vmatprep.subr.bf16.mxu0 0
  %774 = vmatpush1.bf16.msra.mxu0 %v546
  %775 = vmatprep.subr.bf16.mxu0 0
  %776 = vmatpush1.bf16.msra.mxu0 %v547
  %777 = vmatprep.subr.bf16.mxu0 0
  %778 = vmatpush1.bf16.msra.mxu0 %v548
  %779 = vmatprep.subr.bf16.mxu0 0
  %780 = vmatpush1.bf16.msra.mxu0 %v549
  %781 = vmatprep.subr.bf16.mxu0 0
  %782 = vmatpush1.bf16.msra.mxu0 %v550
  %783 = vmatprep.subr.bf16.mxu0 0
  %784 = vmatpush1.bf16.msra.mxu0 %v551
  %785 = vmatprep.subr.bf16.mxu0 0
  %786 = vmatpush1.bf16.msra.mxu0 %v552
  %787 = vmatprep.subr.bf16.mxu0 0
  %788 = vmatpush1.bf16.msra.mxu0 %v553
  %789 = vmatprep.subr.bf16.mxu0 0
  %790 = vmatpush1.bf16.msra.mxu0 %v554
  %791 = vmatprep.subr.bf16.mxu0 0
  %792 = vmatpush1.bf16.msra.mxu0 %v555
  %793 = vmatprep.subr.bf16.mxu0 0
  %794 = vmatpush1.bf16.msra.mxu0 %v556
  %795 = vmatprep.subr.bf16.mxu0 0
  %796 = vmatpush1.bf16.msra.mxu0 %v557
  %797 = vmatprep.subr.bf16.mxu0 0
  %798 = vmatpush1.bf16.msra.mxu0 %v558
  %799 = vmatprep.subr.bf16.mxu0 0
  %800 = vmatpush1.bf16.msra.mxu0 %v559
  %801 = vmatprep.subr.bf16.mxu0 0
  %802 = vmatpush1.bf16.msra.mxu0 %v560
  %803 = vmatprep.subr.bf16.mxu0 0
  %804 = vmatpush1.bf16.msra.mxu0 %v561
  %805 = vmatprep.mubr.bf16.mxu0 %v217
  %806 = vmatmul.mubr.bf16.gmra.mrb[0].mxu0 %v216
  %v807 = vpop.f32.mrb[0].mxu0
  %v808 = vadd.f32 %v759, %v807
  %v809 = vpop.f32.mrb[0].mxu0
  %v810 = vpop.f32.mrb[0].mxu0
  %v811 = vadd.f32 %v762, %v810
  %v812 = vpop.f32.mrb[0].mxu0
  %813 = vmatprep.mubr.bf16.mxu0 %v225
  %814 = vmatmul.mubr.bf16.gmra.mrb[0].mxu0 %v224
  %v815 = vpop.f32.mrb[0].mxu0
  %v816 = vadd.f32 %v767, %v815
  %v817 = vpop.f32.mrb[0].mxu0
  %v818 = vpop.f32.mrb[0].mxu0
  %v819 = vadd.f32 %v770, %v818
  %v820 = vpop.f32.mrb[0].mxu0
  %821 = vdwg.mxu0
  %822 = vst [vmem:[%s4] sm:$0xff] %v808
  %823 = vst [vmem:[%s4 + $0x8] sm:$0xff] %v811
  %824 = vst [vmem:[%s4 + $0x10] sm:$0xff] %v816
  %825 = vst [vmem:[%s4 + $0x18] sm:$0xff] %v819
  %v826 = vadd.f32 %v808, %v811
  %v827 = vadd.f32 %v826, %v816
  %v828 = vadd.f32 %v827, %v819
  %v829 = vrot.slane %v828, 4
  %v830 = vadd.f32 %v828, %v829
  %v831 = vrot.slane %v830, 2
  %v832 = vadd.f32 %v830, %v831
  %v833 = vrot.slane %v832, 1
  %v834 = vadd.f32 %v832, %v833
  %v835 = vadd.f32 %v834, 0.0
  %v836 = vmul.f32 %v808, %v808
  %v837 = vmul.f32 %v811, %v811
  %v838 = vmul.f32 %v816, %v816
  %v839 = vmul.f32 %v819, %v819
  %v840 = vadd.f32 %v836, %v837
  %v841 = vadd.f32 %v840, %v838
  %v842 = vadd.f32 %v841, %v839
  %v843 = vrot.slane %v842, 4
  %v844 = vadd.f32 %v842, %v843
  %v845 = vrot.slane %v844, 2
  %v846 = vadd.f32 %v844, %v845
  %v847 = vrot.slane %v846, 1
  %v848 = vadd.f32 %v846, %v847
  %v849 = vadd.f32 %v848, 0.0
  %s850 = scalar_lea.vmem %s0, 128
  %v851 = vld [vmem:[%s850] sm:$0xff]
  %v852 = vld [vmem:[%s850 + $0x8] sm:$0xff]
  %v853 = vld [vmem:[%s850 + $0x10] sm:$0xff]
  %v854 = vld [vmem:[%s850 + $0x18] sm:$0xff]
  %v855 = vld [vmem:[%s850 + $0x20] sm:$0xff]
  %v856 = vld [vmem:[%s850 + $0x28] sm:$0xff]
  %v857 = vld [vmem:[%s850 + $0x30] sm:$0xff]
  %v858 = vld [vmem:[%s850 + $0x38] sm:$0xff]
  %v859 = vld [vmem:[%s850 + $0x40] sm:$0xff]
  %v860 = vld [vmem:[%s850 + $0x48] sm:$0xff]
  %v861 = vld [vmem:[%s850 + $0x50] sm:$0xff]
  %v862 = vld [vmem:[%s850 + $0x58] sm:$0xff]
  %v863 = vld [vmem:[%s850 + $0x60] sm:$0xff]
  %v864 = vld [vmem:[%s850 + $0x68] sm:$0xff]
  %v865 = vld [vmem:[%s850 + $0x70] sm:$0xff]
  %v866 = vld [vmem:[%s850 + $0x78] sm:$0xff]
  %s867 = scalar_lea.vmem %s1, 512
  %v868 = vld [vmem:[%s867] sm:$0xf]
  %v869 = vld [vmem:[%s867 + $0x4] sm:$0xf]
  %v870 = vld [vmem:[%s867 + $0x8] sm:$0xf]
  %v871 = vld [vmem:[%s867 + $0xc] sm:$0xf]
  %v872 = vld [vmem:[%s867 + $0x10] sm:$0xf]
  %v873 = vld [vmem:[%s867 + $0x14] sm:$0xf]
  %v874 = vld [vmem:[%s867 + $0x18] sm:$0xf]
  %v875 = vld [vmem:[%s867 + $0x1c] sm:$0xf]
  %v876 = vld [vmem:[%s867 + $0x20] sm:$0xf]
  %v877 = vld [vmem:[%s867 + $0x24] sm:$0xf]
  %v878 = vld [vmem:[%s867 + $0x28] sm:$0xf]
  %v879 = vld [vmem:[%s867 + $0x2c] sm:$0xf]
  %v880 = vld [vmem:[%s867 + $0x30] sm:$0xf]
  %v881 = vld [vmem:[%s867 + $0x34] sm:$0xf]
  %v882 = vld [vmem:[%s867 + $0x38] sm:$0xf]
  %v883 = vld [vmem:[%s867 + $0x3c] sm:$0xf]
  %v884 = vld [vmem:[%s867 + $0x40] sm:$0xf]
  %v885 = vld [vmem:[%s867 + $0x44] sm:$0xf]
  %v886 = vld [vmem:[%s867 + $0x48] sm:$0xf]
  %v887 = vld [vmem:[%s867 + $0x4c] sm:$0xf]
  %v888 = vld [vmem:[%s867 + $0x50] sm:$0xf]
  %v889 = vld [vmem:[%s867 + $0x54] sm:$0xf]
  %v890 = vld [vmem:[%s867 + $0x58] sm:$0xf]
  %v891 = vld [vmem:[%s867 + $0x5c] sm:$0xf]
  %v892 = vld [vmem:[%s867 + $0x60] sm:$0xf]
  %v893 = vld [vmem:[%s867 + $0x64] sm:$0xf]
  %v894 = vld [vmem:[%s867 + $0x68] sm:$0xf]
  %v895 = vld [vmem:[%s867 + $0x6c] sm:$0xf]
  %v896 = vld [vmem:[%s867 + $0x70] sm:$0xf]
  %v897 = vld [vmem:[%s867 + $0x74] sm:$0xf]
  %v898 = vld [vmem:[%s867 + $0x78] sm:$0xf]
  %v899 = vld [vmem:[%s867 + $0x7c] sm:$0xf]
  %v900 = vld [vmem:[%s867 + $0x80] sm:$0xf]
  %v901 = vld [vmem:[%s867 + $0x84] sm:$0xf]
  %v902 = vld [vmem:[%s867 + $0x88] sm:$0xf]
  %v903 = vld [vmem:[%s867 + $0x8c] sm:$0xf]
  %v904 = vld [vmem:[%s867 + $0x90] sm:$0xf]
  %v905 = vld [vmem:[%s867 + $0x94] sm:$0xf]
  %v906 = vld [vmem:[%s867 + $0x98] sm:$0xf]
  %v907 = vld [vmem:[%s867 + $0x9c] sm:$0xf]
  %v908 = vld [vmem:[%s867 + $0xa0] sm:$0xf]
  %v909 = vld [vmem:[%s867 + $0xa4] sm:$0xf]
  %v910 = vld [vmem:[%s867 + $0xa8] sm:$0xf]
  %v911 = vld [vmem:[%s867 + $0xac] sm:$0xf]
  %v912 = vld [vmem:[%s867 + $0xb0] sm:$0xf]
  %v913 = vld [vmem:[%s867 + $0xb4] sm:$0xf]
  %v914 = vld [vmem:[%s867 + $0xb8] sm:$0xf]
  %v915 = vld [vmem:[%s867 + $0xbc] sm:$0xf]
  %v916 = vld [vmem:[%s867 + $0xc0] sm:$0xf]
  %v917 = vld [vmem:[%s867 + $0xc4] sm:$0xf]
  %v918 = vld [vmem:[%s867 + $0xc8] sm:$0xf]
  %v919 = vld [vmem:[%s867 + $0xcc] sm:$0xf]
  %v920 = vld [vmem:[%s867 + $0xd0] sm:$0xf]
  %v921 = vld [vmem:[%s867 + $0xd4] sm:$0xf]
  %v922 = vld [vmem:[%s867 + $0xd8] sm:$0xf]
  %v923 = vld [vmem:[%s867 + $0xdc] sm:$0xf]
  %v924 = vld [vmem:[%s867 + $0xe0] sm:$0xf]
  %v925 = vld [vmem:[%s867 + $0xe4] sm:$0xf]
  %v926 = vld [vmem:[%s867 + $0xe8] sm:$0xf]
  %v927 = vld [vmem:[%s867 + $0xec] sm:$0xf]
  %v928 = vld [vmem:[%s867 + $0xf0] sm:$0xf]
  %v929 = vld [vmem:[%s867 + $0xf4] sm:$0xf]
  %v930 = vld [vmem:[%s867 + $0xf8] sm:$0xf]
  %v931 = vld [vmem:[%s867 + $0xfc] sm:$0xf]
  %v932 = vld [vmem:[%s867 + $0x100] sm:$0xf]
  %v933 = vld [vmem:[%s867 + $0x104] sm:$0xf]
  %v934 = vld [vmem:[%s867 + $0x108] sm:$0xf]
  %v935 = vld [vmem:[%s867 + $0x10c] sm:$0xf]
  %v936 = vld [vmem:[%s867 + $0x110] sm:$0xf]
  %v937 = vld [vmem:[%s867 + $0x114] sm:$0xf]
  %v938 = vld [vmem:[%s867 + $0x118] sm:$0xf]
  %v939 = vld [vmem:[%s867 + $0x11c] sm:$0xf]
  %v940 = vld [vmem:[%s867 + $0x120] sm:$0xf]
  %v941 = vld [vmem:[%s867 + $0x124] sm:$0xf]
  %v942 = vld [vmem:[%s867 + $0x128] sm:$0xf]
  %v943 = vld [vmem:[%s867 + $0x12c] sm:$0xf]
  %v944 = vld [vmem:[%s867 + $0x130] sm:$0xf]
  %v945 = vld [vmem:[%s867 + $0x134] sm:$0xf]
  %v946 = vld [vmem:[%s867 + $0x138] sm:$0xf]
  %v947 = vld [vmem:[%s867 + $0x13c] sm:$0xf]
  %v948 = vld [vmem:[%s867 + $0x140] sm:$0xf]
  %v949 = vld [vmem:[%s867 + $0x144] sm:$0xf]
  %v950 = vld [vmem:[%s867 + $0x148] sm:$0xf]
  %v951 = vld [vmem:[%s867 + $0x14c] sm:$0xf]
  %v952 = vld [vmem:[%s867 + $0x150] sm:$0xf]
  %v953 = vld [vmem:[%s867 + $0x154] sm:$0xf]
  %v954 = vld [vmem:[%s867 + $0x158] sm:$0xf]
  %v955 = vld [vmem:[%s867 + $0x15c] sm:$0xf]
  %v956 = vld [vmem:[%s867 + $0x160] sm:$0xf]
  %v957 = vld [vmem:[%s867 + $0x164] sm:$0xf]
  %v958 = vld [vmem:[%s867 + $0x168] sm:$0xf]
  %v959 = vld [vmem:[%s867 + $0x16c] sm:$0xf]
  %v960 = vld [vmem:[%s867 + $0x170] sm:$0xf]
  %v961 = vld [vmem:[%s867 + $0x174] sm:$0xf]
  %v962 = vld [vmem:[%s867 + $0x178] sm:$0xf]
  %v963 = vld [vmem:[%s867 + $0x17c] sm:$0xf]
  %v964 = vld [vmem:[%s867 + $0x180] sm:$0xf]
  %v965 = vld [vmem:[%s867 + $0x184] sm:$0xf]
  %v966 = vld [vmem:[%s867 + $0x188] sm:$0xf]
  %v967 = vld [vmem:[%s867 + $0x18c] sm:$0xf]
  %v968 = vld [vmem:[%s867 + $0x190] sm:$0xf]
  %v969 = vld [vmem:[%s867 + $0x194] sm:$0xf]
  %v970 = vld [vmem:[%s867 + $0x198] sm:$0xf]
  %v971 = vld [vmem:[%s867 + $0x19c] sm:$0xf]
  %v972 = vld [vmem:[%s867 + $0x1a0] sm:$0xf]
  %v973 = vld [vmem:[%s867 + $0x1a4] sm:$0xf]
  %v974 = vld [vmem:[%s867 + $0x1a8] sm:$0xf]
  %v975 = vld [vmem:[%s867 + $0x1ac] sm:$0xf]
  %v976 = vld [vmem:[%s867 + $0x1b0] sm:$0xf]
  %v977 = vld [vmem:[%s867 + $0x1b4] sm:$0xf]
  %v978 = vld [vmem:[%s867 + $0x1b8] sm:$0xf]
  %v979 = vld [vmem:[%s867 + $0x1bc] sm:$0xf]
  %v980 = vld [vmem:[%s867 + $0x1c0] sm:$0xf]
  %v981 = vld [vmem:[%s867 + $0x1c4] sm:$0xf]
  %v982 = vld [vmem:[%s867 + $0x1c8] sm:$0xf]
  %v983 = vld [vmem:[%s867 + $0x1cc] sm:$0xf]
  %v984 = vld [vmem:[%s867 + $0x1d0] sm:$0xf]
  %v985 = vld [vmem:[%s867 + $0x1d4] sm:$0xf]
  %v986 = vld [vmem:[%s867 + $0x1d8] sm:$0xf]
  %v987 = vld [vmem:[%s867 + $0x1dc] sm:$0xf]
  %v988 = vld [vmem:[%s867 + $0x1e0] sm:$0xf]
  %v989 = vld [vmem:[%s867 + $0x1e4] sm:$0xf]
  %v990 = vld [vmem:[%s867 + $0x1e8] sm:$0xf]
  %v991 = vld [vmem:[%s867 + $0x1ec] sm:$0xf]
  %v992 = vld [vmem:[%s867 + $0x1f0] sm:$0xf]
  %v993 = vld [vmem:[%s867 + $0x1f4] sm:$0xf]
  %v994 = vld [vmem:[%s867 + $0x1f8] sm:$0xf]
  %v995 = vld [vmem:[%s867 + $0x1fc] sm:$0xf]
  %v1012 = vunpack.c.l.b16 %v851
  %v1013 = vunpack.c.h.b16 %v851
  %v1014 = vunpack.c.l.b16 %v852
  %v1015 = vunpack.c.h.b16 %v852
  %v1016 = vunpack.c.l.b16 %v853
  %v1017 = vunpack.c.h.b16 %v853
  %v1018 = vunpack.c.l.b16 %v854
  %v1019 = vunpack.c.h.b16 %v854
  %v1020 = vunpack.c.l.b16 %v855
  %v1021 = vunpack.c.h.b16 %v855
  %v1022 = vunpack.c.l.b16 %v856
  %v1023 = vunpack.c.h.b16 %v856
  %v1024 = vunpack.c.l.b16 %v857
  %v1025 = vunpack.c.h.b16 %v857
  %v1026 = vunpack.c.l.b16 %v858
  %v1027 = vunpack.c.h.b16 %v858
  %v1028 = vunpack.c.l.b16 %v859
  %v1029 = vunpack.c.h.b16 %v859
  %v1030 = vunpack.c.l.b16 %v860
  %v1031 = vunpack.c.h.b16 %v860
  %v1032 = vunpack.c.l.b16 %v861
  %v1033 = vunpack.c.h.b16 %v861
  %v1034 = vunpack.c.l.b16 %v862
  %v1035 = vunpack.c.h.b16 %v862
  %v1036 = vunpack.c.l.b16 %v863
  %v1037 = vunpack.c.h.b16 %v863
  %v1038 = vunpack.c.l.b16 %v864
  %v1039 = vunpack.c.h.b16 %v864
  %v1040 = vunpack.c.l.b16 %v865
  %v1041 = vunpack.c.h.b16 %v865
  %v1042 = vunpack.c.l.b16 %v866
  %v1043 = vunpack.c.h.b16 %v866
  %v1044 = vpack.c.b16 %v1020, %v1012
  %v1045 = vpack.c.b16 %v1021, %v1013
  %v1046 = vpack.c.b16 %v1022, %v1014
  %v1047 = vpack.c.b16 %v1023, %v1015
  %v1048 = vpack.c.b16 %v1024, %v1016
  %v1049 = vpack.c.b16 %v1025, %v1017
  %v1050 = vpack.c.b16 %v1026, %v1018
  %v1051 = vpack.c.b16 %v1027, %v1019
  %v1052 = vpack.c.b16 %v1036, %v1028
  %v1053 = vpack.c.b16 %v1037, %v1029
  %v1054 = vpack.c.b16 %v1038, %v1030
  %v1055 = vpack.c.b16 %v1039, %v1031
  %v1056 = vpack.c.b16 %v1040, %v1032
  %v1057 = vpack.c.b16 %v1041, %v1033
  %v1058 = vpack.c.b16 %v1042, %v1034
  %v1059 = vpack.c.b16 %v1043, %v1035
  %v1204 = vunpack.c.l.b16 %v868
  %v1205 = vunpack.c.l.b16 %v869
  %v1206 = vunpack.c.l.b16 %v870
  %v1207 = vunpack.c.l.b16 %v871
  %v1208 = vunpack.c.l.b16 %v872
  %v1209 = vunpack.c.l.b16 %v873
  %v1210 = vunpack.c.l.b16 %v874
  %v1211 = vunpack.c.l.b16 %v875
  %v1212 = vunpack.c.l.b16 %v876
  %v1213 = vunpack.c.l.b16 %v877
  %v1214 = vunpack.c.l.b16 %v878
  %v1215 = vunpack.c.l.b16 %v879
  %v1216 = vunpack.c.l.b16 %v880
  %v1217 = vunpack.c.l.b16 %v881
  %v1218 = vunpack.c.l.b16 %v882
  %v1219 = vunpack.c.l.b16 %v883
  %v1220 = vunpack.c.l.b16 %v884
  %v1221 = vunpack.c.l.b16 %v885
  %v1222 = vunpack.c.l.b16 %v886
  %v1223 = vunpack.c.l.b16 %v887
  %v1224 = vunpack.c.l.b16 %v888
  %v1225 = vunpack.c.l.b16 %v889
  %v1226 = vunpack.c.l.b16 %v890
  %v1227 = vunpack.c.l.b16 %v891
  %v1228 = vunpack.c.l.b16 %v892
  %v1229 = vunpack.c.l.b16 %v893
  %v1230 = vunpack.c.l.b16 %v894
  %v1231 = vunpack.c.l.b16 %v895
  %v1232 = vunpack.c.l.b16 %v896
  %v1233 = vunpack.c.l.b16 %v897
  %v1234 = vunpack.c.l.b16 %v898
  %v1235 = vunpack.c.l.b16 %v899
  %v1236 = vunpack.c.l.b16 %v900
  %v1237 = vunpack.c.l.b16 %v901
  %v1238 = vunpack.c.l.b16 %v902
  %v1239 = vunpack.c.l.b16 %v903
  %v1240 = vunpack.c.l.b16 %v904
  %v1241 = vunpack.c.l.b16 %v905
  %v1242 = vunpack.c.l.b16 %v906
  %v1243 = vunpack.c.l.b16 %v907
  %v1244 = vunpack.c.l.b16 %v908
  %v1245 = vunpack.c.l.b16 %v909
  %v1246 = vunpack.c.l.b16 %v910
  %v1247 = vunpack.c.l.b16 %v911
  %v1248 = vunpack.c.l.b16 %v912
  %v1249 = vunpack.c.l.b16 %v913
  %v1250 = vunpack.c.l.b16 %v914
  %v1251 = vunpack.c.l.b16 %v915
  %v1252 = vunpack.c.l.b16 %v916
  %v1253 = vunpack.c.l.b16 %v917
  %v1254 = vunpack.c.l.b16 %v918
  %v1255 = vunpack.c.l.b16 %v919
  %v1256 = vunpack.c.l.b16 %v920
  %v1257 = vunpack.c.l.b16 %v921
  %v1258 = vunpack.c.l.b16 %v922
  %v1259 = vunpack.c.l.b16 %v923
  %v1260 = vunpack.c.l.b16 %v924
  %v1261 = vunpack.c.l.b16 %v925
  %v1262 = vunpack.c.l.b16 %v926
  %v1263 = vunpack.c.l.b16 %v927
  %v1264 = vunpack.c.l.b16 %v928
  %v1265 = vunpack.c.l.b16 %v929
  %v1266 = vunpack.c.l.b16 %v930
  %v1267 = vunpack.c.l.b16 %v931
  %v1268 = vunpack.c.l.b16 %v932
  %v1269 = vunpack.c.l.b16 %v933
  %v1270 = vunpack.c.l.b16 %v934
  %v1271 = vunpack.c.l.b16 %v935
  %v1272 = vunpack.c.l.b16 %v936
  %v1273 = vunpack.c.l.b16 %v937
  %v1274 = vunpack.c.l.b16 %v938
  %v1275 = vunpack.c.l.b16 %v939
  %v1276 = vunpack.c.l.b16 %v940
  %v1277 = vunpack.c.l.b16 %v941
  %v1278 = vunpack.c.l.b16 %v942
  %v1279 = vunpack.c.l.b16 %v943
  %v1280 = vunpack.c.l.b16 %v944
  %v1281 = vunpack.c.l.b16 %v945
  %v1282 = vunpack.c.l.b16 %v946
  %v1283 = vunpack.c.l.b16 %v947
  %v1284 = vunpack.c.l.b16 %v948
  %v1285 = vunpack.c.l.b16 %v949
  %v1286 = vunpack.c.l.b16 %v950
  %v1287 = vunpack.c.l.b16 %v951
  %v1288 = vunpack.c.l.b16 %v952
  %v1289 = vunpack.c.l.b16 %v953
  %v1290 = vunpack.c.l.b16 %v954
  %v1291 = vunpack.c.l.b16 %v955
  %v1292 = vunpack.c.l.b16 %v956
  %v1293 = vunpack.c.l.b16 %v957
  %v1294 = vunpack.c.l.b16 %v958
  %v1295 = vunpack.c.l.b16 %v959
  %v1296 = vunpack.c.l.b16 %v960
  %v1297 = vunpack.c.l.b16 %v961
  %v1298 = vunpack.c.l.b16 %v962
  %v1299 = vunpack.c.l.b16 %v963
  %v1300 = vunpack.c.l.b16 %v964
  %v1301 = vunpack.c.l.b16 %v965
  %v1302 = vunpack.c.l.b16 %v966
  %v1303 = vunpack.c.l.b16 %v967
  %v1304 = vunpack.c.l.b16 %v968
  %v1305 = vunpack.c.l.b16 %v969
  %v1306 = vunpack.c.l.b16 %v970
  %v1307 = vunpack.c.l.b16 %v971
  %v1308 = vunpack.c.l.b16 %v972
  %v1309 = vunpack.c.l.b16 %v973
  %v1310 = vunpack.c.l.b16 %v974
  %v1311 = vunpack.c.l.b16 %v975
  %v1312 = vunpack.c.l.b16 %v976
  %v1313 = vunpack.c.l.b16 %v977
  %v1314 = vunpack.c.l.b16 %v978
  %v1315 = vunpack.c.l.b16 %v979
  %v1316 = vunpack.c.l.b16 %v980
  %v1317 = vunpack.c.l.b16 %v981
  %v1318 = vunpack.c.l.b16 %v982
  %v1319 = vunpack.c.l.b16 %v983
  %v1320 = vunpack.c.l.b16 %v984
  %v1321 = vunpack.c.l.b16 %v985
  %v1322 = vunpack.c.l.b16 %v986
  %v1323 = vunpack.c.l.b16 %v987
  %v1324 = vunpack.c.l.b16 %v988
  %v1325 = vunpack.c.l.b16 %v989
  %v1326 = vunpack.c.l.b16 %v990
  %v1327 = vunpack.c.l.b16 %v991
  %v1328 = vunpack.c.l.b16 %v992
  %v1329 = vunpack.c.l.b16 %v993
  %v1330 = vunpack.c.l.b16 %v994
  %v1331 = vunpack.c.l.b16 %v995
  %v1332 = vpack.c.b16 %v1205, %v1204
  %v1333 = vpack.c.b16 %v1207, %v1206
  %v1334 = vpack.c.b16 %v1209, %v1208
  %v1335 = vpack.c.b16 %v1211, %v1210
  %v1336 = vpack.c.b16 %v1213, %v1212
  %v1337 = vpack.c.b16 %v1215, %v1214
  %v1338 = vpack.c.b16 %v1217, %v1216
  %v1339 = vpack.c.b16 %v1219, %v1218
  %v1340 = vpack.c.b16 %v1221, %v1220
  %v1341 = vpack.c.b16 %v1223, %v1222
  %v1342 = vpack.c.b16 %v1225, %v1224
  %v1343 = vpack.c.b16 %v1227, %v1226
  %v1344 = vpack.c.b16 %v1229, %v1228
  %v1345 = vpack.c.b16 %v1231, %v1230
  %v1346 = vpack.c.b16 %v1233, %v1232
  %v1347 = vpack.c.b16 %v1235, %v1234
  %v1348 = vpack.c.b16 %v1237, %v1236
  %v1349 = vpack.c.b16 %v1239, %v1238
  %v1350 = vpack.c.b16 %v1241, %v1240
  %v1351 = vpack.c.b16 %v1243, %v1242
  %v1352 = vpack.c.b16 %v1245, %v1244
  %v1353 = vpack.c.b16 %v1247, %v1246
  %v1354 = vpack.c.b16 %v1249, %v1248
  %v1355 = vpack.c.b16 %v1251, %v1250
  %v1356 = vpack.c.b16 %v1253, %v1252
  %v1357 = vpack.c.b16 %v1255, %v1254
  %v1358 = vpack.c.b16 %v1257, %v1256
  %v1359 = vpack.c.b16 %v1259, %v1258
  %v1360 = vpack.c.b16 %v1261, %v1260
  %v1361 = vpack.c.b16 %v1263, %v1262
  %v1362 = vpack.c.b16 %v1265, %v1264
  %v1363 = vpack.c.b16 %v1267, %v1266
  %v1364 = vpack.c.b16 %v1269, %v1268
  %v1365 = vpack.c.b16 %v1271, %v1270
  %v1366 = vpack.c.b16 %v1273, %v1272
  %v1367 = vpack.c.b16 %v1275, %v1274
  %v1368 = vpack.c.b16 %v1277, %v1276
  %v1369 = vpack.c.b16 %v1279, %v1278
  %v1370 = vpack.c.b16 %v1281, %v1280
  %v1371 = vpack.c.b16 %v1283, %v1282
  %v1372 = vpack.c.b16 %v1285, %v1284
  %v1373 = vpack.c.b16 %v1287, %v1286
  %v1374 = vpack.c.b16 %v1289, %v1288
  %v1375 = vpack.c.b16 %v1291, %v1290
  %v1376 = vpack.c.b16 %v1293, %v1292
  %v1377 = vpack.c.b16 %v1295, %v1294
  %v1378 = vpack.c.b16 %v1297, %v1296
  %v1379 = vpack.c.b16 %v1299, %v1298
  %v1380 = vpack.c.b16 %v1301, %v1300
  %v1381 = vpack.c.b16 %v1303, %v1302
  %v1382 = vpack.c.b16 %v1305, %v1304
  %v1383 = vpack.c.b16 %v1307, %v1306
  %v1384 = vpack.c.b16 %v1309, %v1308
  %v1385 = vpack.c.b16 %v1311, %v1310
  %v1386 = vpack.c.b16 %v1313, %v1312
  %v1387 = vpack.c.b16 %v1315, %v1314
  %v1388 = vpack.c.b16 %v1317, %v1316
  %v1389 = vpack.c.b16 %v1319, %v1318
  %v1390 = vpack.c.b16 %v1321, %v1320
  %v1391 = vpack.c.b16 %v1323, %v1322
  %v1392 = vpack.c.b16 %v1325, %v1324
  %v1393 = vpack.c.b16 %v1327, %v1326
  %v1394 = vpack.c.b16 %v1329, %v1328
  %v1395 = vpack.c.b16 %v1331, %v1330
  %1460 = vmatprep.subr.bf16.mxu0 0
  %1461 = vmatpush1.bf16.msra.mxu0 %v1332
  %1462 = vmatprep.subr.bf16.mxu0 0
  %1463 = vmatpush1.bf16.msra.mxu0 %v1333
  %1464 = vmatprep.subr.bf16.mxu0 0
  %1465 = vmatpush1.bf16.msra.mxu0 %v1334
  %1466 = vmatprep.subr.bf16.mxu0 0
  %1467 = vmatpush1.bf16.msra.mxu0 %v1335
  %1468 = vmatprep.subr.bf16.mxu0 0
  %1469 = vmatpush1.bf16.msra.mxu0 %v1336
  %1470 = vmatprep.subr.bf16.mxu0 0
  %1471 = vmatpush1.bf16.msra.mxu0 %v1337
  %1472 = vmatprep.subr.bf16.mxu0 0
  %1473 = vmatpush1.bf16.msra.mxu0 %v1338
  %1474 = vmatprep.subr.bf16.mxu0 0
  %1475 = vmatpush1.bf16.msra.mxu0 %v1339
  %1476 = vmatprep.subr.bf16.mxu0 0
  %1477 = vmatpush1.bf16.msra.mxu0 %v1340
  %1478 = vmatprep.subr.bf16.mxu0 0
  %1479 = vmatpush1.bf16.msra.mxu0 %v1341
  %1480 = vmatprep.subr.bf16.mxu0 0
  %1481 = vmatpush1.bf16.msra.mxu0 %v1342
  %1482 = vmatprep.subr.bf16.mxu0 0
  %1483 = vmatpush1.bf16.msra.mxu0 %v1343
  %1484 = vmatprep.subr.bf16.mxu0 0
  %1485 = vmatpush1.bf16.msra.mxu0 %v1344
  %1486 = vmatprep.subr.bf16.mxu0 0
  %1487 = vmatpush1.bf16.msra.mxu0 %v1345
  %1488 = vmatprep.subr.bf16.mxu0 0
  %1489 = vmatpush1.bf16.msra.mxu0 %v1346
  %1490 = vmatprep.subr.bf16.mxu0 0
  %1491 = vmatpush1.bf16.msra.mxu0 %v1347
  %1492 = vmatprep.mubr.bf16.mxu0 %v1045
  %1493 = vmatmul.mubr.bf16.gmra.mrb[0].mxu0 %v1044
  %v1494 = vpop.f32.mrb[0].mxu0
  %v1495 = vadd.f32 0.0, %v1494
  %v1496 = vpop.f32.mrb[0].mxu0
  %v1497 = vpop.f32.mrb[0].mxu0
  %v1498 = vadd.f32 0.0, %v1497
  %v1499 = vpop.f32.mrb[0].mxu0
  %1500 = vmatprep.mubr.bf16.mxu0 %v1053
  %1501 = vmatmul.mubr.bf16.gmra.mrb[0].mxu0 %v1052
  %v1502 = vpop.f32.mrb[0].mxu0
  %v1503 = vadd.f32 0.0, %v1502
  %v1504 = vpop.f32.mrb[0].mxu0
  %v1505 = vpop.f32.mrb[0].mxu0
  %v1506 = vadd.f32 0.0, %v1505
  %v1507 = vpop.f32.mrb[0].mxu0
  %1508 = vdwg.mxu0
  %1509 = vmatprep.subr.bf16.mxu0 0
  %1510 = vmatpush1.bf16.msra.mxu0 %v1348
  %1511 = vmatprep.subr.bf16.mxu0 0
  %1512 = vmatpush1.bf16.msra.mxu0 %v1349
  %1513 = vmatprep.subr.bf16.mxu0 0
  %1514 = vmatpush1.bf16.msra.mxu0 %v1350
  %1515 = vmatprep.subr.bf16.mxu0 0
  %1516 = vmatpush1.bf16.msra.mxu0 %v1351
  %1517 = vmatprep.subr.bf16.mxu0 0
  %1518 = vmatpush1.bf16.msra.mxu0 %v1352
  %1519 = vmatprep.subr.bf16.mxu0 0
  %1520 = vmatpush1.bf16.msra.mxu0 %v1353
  %1521 = vmatprep.subr.bf16.mxu0 0
  %1522 = vmatpush1.bf16.msra.mxu0 %v1354
  %1523 = vmatprep.subr.bf16.mxu0 0
  %1524 = vmatpush1.bf16.msra.mxu0 %v1355
  %1525 = vmatprep.subr.bf16.mxu0 0
  %1526 = vmatpush1.bf16.msra.mxu0 %v1356
  %1527 = vmatprep.subr.bf16.mxu0 0
  %1528 = vmatpush1.bf16.msra.mxu0 %v1357
  %1529 = vmatprep.subr.bf16.mxu0 0
  %1530 = vmatpush1.bf16.msra.mxu0 %v1358
  %1531 = vmatprep.subr.bf16.mxu0 0
  %1532 = vmatpush1.bf16.msra.mxu0 %v1359
  %1533 = vmatprep.subr.bf16.mxu0 0
  %1534 = vmatpush1.bf16.msra.mxu0 %v1360
  %1535 = vmatprep.subr.bf16.mxu0 0
  %1536 = vmatpush1.bf16.msra.mxu0 %v1361
  %1537 = vmatprep.subr.bf16.mxu0 0
  %1538 = vmatpush1.bf16.msra.mxu0 %v1362
  %1539 = vmatprep.subr.bf16.mxu0 0
  %1540 = vmatpush1.bf16.msra.mxu0 %v1363
  %1541 = vmatprep.mubr.bf16.mxu0 %v1047
  %1542 = vmatmul.mubr.bf16.gmra.mrb[0].mxu0 %v1046
  %v1543 = vpop.f32.mrb[0].mxu0
  %v1544 = vadd.f32 %v1495, %v1543
  %v1545 = vpop.f32.mrb[0].mxu0
  %v1546 = vpop.f32.mrb[0].mxu0
  %v1547 = vadd.f32 %v1498, %v1546
  %v1548 = vpop.f32.mrb[0].mxu0
  %1549 = vmatprep.mubr.bf16.mxu0 %v1055
  %1550 = vmatmul.mubr.bf16.gmra.mrb[0].mxu0 %v1054
  %v1551 = vpop.f32.mrb[0].mxu0
  %v1552 = vadd.f32 %v1503, %v1551
  %v1553 = vpop.f32.mrb[0].mxu0
  %v1554 = vpop.f32.mrb[0].mxu0
  %v1555 = vadd.f32 %v1506, %v1554
  %v1556 = vpop.f32.mrb[0].mxu0
  %1557 = vdwg.mxu0
  %1558 = vmatprep.subr.bf16.mxu0 0
  %1559 = vmatpush1.bf16.msra.mxu0 %v1364
  %1560 = vmatprep.subr.bf16.mxu0 0
  %1561 = vmatpush1.bf16.msra.mxu0 %v1365
  %1562 = vmatprep.subr.bf16.mxu0 0
  %1563 = vmatpush1.bf16.msra.mxu0 %v1366
  %1564 = vmatprep.subr.bf16.mxu0 0
  %1565 = vmatpush1.bf16.msra.mxu0 %v1367
  %1566 = vmatprep.subr.bf16.mxu0 0
  %1567 = vmatpush1.bf16.msra.mxu0 %v1368
  %1568 = vmatprep.subr.bf16.mxu0 0
  %1569 = vmatpush1.bf16.msra.mxu0 %v1369
  %1570 = vmatprep.subr.bf16.mxu0 0
  %1571 = vmatpush1.bf16.msra.mxu0 %v1370
  %1572 = vmatprep.subr.bf16.mxu0 0
  %1573 = vmatpush1.bf16.msra.mxu0 %v1371
  %1574 = vmatprep.subr.bf16.mxu0 0
  %1575 = vmatpush1.bf16.msra.mxu0 %v1372
  %1576 = vmatprep.subr.bf16.mxu0 0
  %1577 = vmatpush1.bf16.msra.mxu0 %v1373
  %1578 = vmatprep.subr.bf16.mxu0 0
  %1579 = vmatpush1.bf16.msra.mxu0 %v1374
  %1580 = vmatprep.subr.bf16.mxu0 0
  %1581 = vmatpush1.bf16.msra.mxu0 %v1375
  %1582 = vmatprep.subr.bf16.mxu0 0
  %1583 = vmatpush1.bf16.msra.mxu0 %v1376
  %1584 = vmatprep.subr.bf16.mxu0 0
  %1585 = vmatpush1.bf16.msra.mxu0 %v1377
  %1586 = vmatprep.subr.bf16.mxu0 0
  %1587 = vmatpush1.bf16.msra.mxu0 %v1378
  %1588 = vmatprep.subr.bf16.mxu0 0
  %1589 = vmatpush1.bf16.msra.mxu0 %v1379
  %1590 = vmatprep.mubr.bf16.mxu0 %v1049
  %1591 = vmatmul.mubr.bf16.gmra.mrb[0].mxu0 %v1048
  %v1592 = vpop.f32.mrb[0].mxu0
  %v1593 = vadd.f32 %v1544, %v1592
  %v1594 = vpop.f32.mrb[0].mxu0
  %v1595 = vpop.f32.mrb[0].mxu0
  %v1596 = vadd.f32 %v1547, %v1595
  %v1597 = vpop.f32.mrb[0].mxu0
  %1598 = vmatprep.mubr.bf16.mxu0 %v1057
  %1599 = vmatmul.mubr.bf16.gmra.mrb[0].mxu0 %v1056
  %v1600 = vpop.f32.mrb[0].mxu0
  %v1601 = vadd.f32 %v1552, %v1600
  %v1602 = vpop.f32.mrb[0].mxu0
  %v1603 = vpop.f32.mrb[0].mxu0
  %v1604 = vadd.f32 %v1555, %v1603
  %v1605 = vpop.f32.mrb[0].mxu0
  %1606 = vdwg.mxu0
  %1607 = vmatprep.subr.bf16.mxu0 0
  %1608 = vmatpush1.bf16.msra.mxu0 %v1380
  %1609 = vmatprep.subr.bf16.mxu0 0
  %1610 = vmatpush1.bf16.msra.mxu0 %v1381
  %1611 = vmatprep.subr.bf16.mxu0 0
  %1612 = vmatpush1.bf16.msra.mxu0 %v1382
  %1613 = vmatprep.subr.bf16.mxu0 0
  %1614 = vmatpush1.bf16.msra.mxu0 %v1383
  %1615 = vmatprep.subr.bf16.mxu0 0
  %1616 = vmatpush1.bf16.msra.mxu0 %v1384
  %1617 = vmatprep.subr.bf16.mxu0 0
  %1618 = vmatpush1.bf16.msra.mxu0 %v1385
  %1619 = vmatprep.subr.bf16.mxu0 0
  %1620 = vmatpush1.bf16.msra.mxu0 %v1386
  %1621 = vmatprep.subr.bf16.mxu0 0
  %1622 = vmatpush1.bf16.msra.mxu0 %v1387
  %1623 = vmatprep.subr.bf16.mxu0 0
  %1624 = vmatpush1.bf16.msra.mxu0 %v1388
  %1625 = vmatprep.subr.bf16.mxu0 0
  %1626 = vmatpush1.bf16.msra.mxu0 %v1389
  %1627 = vmatprep.subr.bf16.mxu0 0
  %1628 = vmatpush1.bf16.msra.mxu0 %v1390
  %1629 = vmatprep.subr.bf16.mxu0 0
  %1630 = vmatpush1.bf16.msra.mxu0 %v1391
  %1631 = vmatprep.subr.bf16.mxu0 0
  %1632 = vmatpush1.bf16.msra.mxu0 %v1392
  %1633 = vmatprep.subr.bf16.mxu0 0
  %1634 = vmatpush1.bf16.msra.mxu0 %v1393
  %1635 = vmatprep.subr.bf16.mxu0 0
  %1636 = vmatpush1.bf16.msra.mxu0 %v1394
  %1637 = vmatprep.subr.bf16.mxu0 0
  %1638 = vmatpush1.bf16.msra.mxu0 %v1395
  %1639 = vmatprep.mubr.bf16.mxu0 %v1051
  %1640 = vmatmul.mubr.bf16.gmra.mrb[0].mxu0 %v1050
  %v1641 = vpop.f32.mrb[0].mxu0
  %v1642 = vadd.f32 %v1593, %v1641
  %v1643 = vpop.f32.mrb[0].mxu0
  %v1644 = vpop.f32.mrb[0].mxu0
  %v1645 = vadd.f32 %v1596, %v1644
  %v1646 = vpop.f32.mrb[0].mxu0
  %1647 = vmatprep.mubr.bf16.mxu0 %v1059
  %1648 = vmatmul.mubr.bf16.gmra.mrb[0].mxu0 %v1058
  %v1649 = vpop.f32.mrb[0].mxu0
  %v1650 = vadd.f32 %v1601, %v1649
  %v1651 = vpop.f32.mrb[0].mxu0
  %v1652 = vpop.f32.mrb[0].mxu0
  %v1653 = vadd.f32 %v1604, %v1652
  %v1654 = vpop.f32.mrb[0].mxu0
  %1655 = vdwg.mxu0
  %s1656 = scalar_lea.vmem %s4, 32
  %1657 = vst [vmem:[%s1656] sm:$0xff] %v1642
  %1658 = vst [vmem:[%s1656 + $0x8] sm:$0xff] %v1645
  %1659 = vst [vmem:[%s1656 + $0x10] sm:$0xff] %v1650
  %1660 = vst [vmem:[%s1656 + $0x18] sm:$0xff] %v1653
  %v1661 = vadd.f32 %v1642, %v1645
  %v1662 = vadd.f32 %v1661, %v1650
  %v1663 = vadd.f32 %v1662, %v1653
  %v1664 = vrot.slane %v1663, 4
  %v1665 = vadd.f32 %v1663, %v1664
  %v1666 = vrot.slane %v1665, 2
  %v1667 = vadd.f32 %v1665, %v1666
  %v1668 = vrot.slane %v1667, 1
  %v1669 = vadd.f32 %v1667, %v1668
  %v1670 = vadd.f32 %v835, %v1669
  %v1671 = vmul.f32 %v1642, %v1642
  %v1672 = vmul.f32 %v1645, %v1645
  %v1673 = vmul.f32 %v1650, %v1650
  %v1674 = vmul.f32 %v1653, %v1653
  %v1675 = vadd.f32 %v1671, %v1672
  %v1676 = vadd.f32 %v1675, %v1673
  %v1677 = vadd.f32 %v1676, %v1674
  %v1678 = vrot.slane %v1677, 4
  %v1679 = vadd.f32 %v1677, %v1678
  %v1680 = vrot.slane %v1679, 2
  %v1681 = vadd.f32 %v1679, %v1680
  %v1682 = vrot.slane %v1681, 1
  %v1683 = vadd.f32 %v1681, %v1682
  %v1684 = vadd.f32 %v849, %v1683
  %s1685 = scalar_lea.vmem %s0, 256
  %v1686 = vld [vmem:[%s1685] sm:$0xff]
  %v1687 = vld [vmem:[%s1685 + $0x8] sm:$0xff]
  %v1688 = vld [vmem:[%s1685 + $0x10] sm:$0xff]
  %v1689 = vld [vmem:[%s1685 + $0x18] sm:$0xff]
  %v1690 = vld [vmem:[%s1685 + $0x20] sm:$0xff]
  %v1691 = vld [vmem:[%s1685 + $0x28] sm:$0xff]
  %v1692 = vld [vmem:[%s1685 + $0x30] sm:$0xff]
  %v1693 = vld [vmem:[%s1685 + $0x38] sm:$0xff]
  %v1694 = vld [vmem:[%s1685 + $0x40] sm:$0xff]
  %v1695 = vld [vmem:[%s1685 + $0x48] sm:$0xff]
  %v1696 = vld [vmem:[%s1685 + $0x50] sm:$0xff]
  %v1697 = vld [vmem:[%s1685 + $0x58] sm:$0xff]
  %v1698 = vld [vmem:[%s1685 + $0x60] sm:$0xff]
  %v1699 = vld [vmem:[%s1685 + $0x68] sm:$0xff]
  %v1700 = vld [vmem:[%s1685 + $0x70] sm:$0xff]
  %v1701 = vld [vmem:[%s1685 + $0x78] sm:$0xff]
  %s1702 = scalar_lea.vmem %s1, 1024
  %v1703 = vld [vmem:[%s1702] sm:$0xf]
  %v1704 = vld [vmem:[%s1702 + $0x4] sm:$0xf]
  %v1705 = vld [vmem:[%s1702 + $0x8] sm:$0xf]
  %v1706 = vld [vmem:[%s1702 + $0xc] sm:$0xf]
  %v1707 = vld [vmem:[%s1702 + $0x10] sm:$0xf]
  %v1708 = vld [vmem:[%s1702 + $0x14] sm:$0xf]
  %v1709 = vld [vmem:[%s1702 + $0x18] sm:$0xf]
  %v1710 = vld [vmem:[%s1702 + $0x1c] sm:$0xf]
  %v1711 = vld [vmem:[%s1702 + $0x20] sm:$0xf]
  %v1712 = vld [vmem:[%s1702 + $0x24] sm:$0xf]
  %v1713 = vld [vmem:[%s1702 + $0x28] sm:$0xf]
  %v1714 = vld [vmem:[%s1702 + $0x2c] sm:$0xf]
  %v1715 = vld [vmem:[%s1702 + $0x30] sm:$0xf]
  %v1716 = vld [vmem:[%s1702 + $0x34] sm:$0xf]
  %v1717 = vld [vmem:[%s1702 + $0x38] sm:$0xf]
  %v1718 = vld [vmem:[%s1702 + $0x3c] sm:$0xf]
  %v1719 = vld [vmem:[%s1702 + $0x40] sm:$0xf]
  %v1720 = vld [vmem:[%s1702 + $0x44] sm:$0xf]
  %v1721 = vld [vmem:[%s1702 + $0x48] sm:$0xf]
  %v1722 = vld [vmem:[%s1702 + $0x4c] sm:$0xf]
  %v1723 = vld [vmem:[%s1702 + $0x50] sm:$0xf]
  %v1724 = vld [vmem:[%s1702 + $0x54] sm:$0xf]
  %v1725 = vld [vmem:[%s1702 + $0x58] sm:$0xf]
  %v1726 = vld [vmem:[%s1702 + $0x5c] sm:$0xf]
  %v1727 = vld [vmem:[%s1702 + $0x60] sm:$0xf]
  %v1728 = vld [vmem:[%s1702 + $0x64] sm:$0xf]
  %v1729 = vld [vmem:[%s1702 + $0x68] sm:$0xf]
  %v1730 = vld [vmem:[%s1702 + $0x6c] sm:$0xf]
  %v1731 = vld [vmem:[%s1702 + $0x70] sm:$0xf]
  %v1732 = vld [vmem:[%s1702 + $0x74] sm:$0xf]
  %v1733 = vld [vmem:[%s1702 + $0x78] sm:$0xf]
  %v1734 = vld [vmem:[%s1702 + $0x7c] sm:$0xf]
  %v1735 = vld [vmem:[%s1702 + $0x80] sm:$0xf]
  %v1736 = vld [vmem:[%s1702 + $0x84] sm:$0xf]
  %v1737 = vld [vmem:[%s1702 + $0x88] sm:$0xf]
  %v1738 = vld [vmem:[%s1702 + $0x8c] sm:$0xf]
  %v1739 = vld [vmem:[%s1702 + $0x90] sm:$0xf]
  %v1740 = vld [vmem:[%s1702 + $0x94] sm:$0xf]
  %v1741 = vld [vmem:[%s1702 + $0x98] sm:$0xf]
  %v1742 = vld [vmem:[%s1702 + $0x9c] sm:$0xf]
  %v1743 = vld [vmem:[%s1702 + $0xa0] sm:$0xf]
  %v1744 = vld [vmem:[%s1702 + $0xa4] sm:$0xf]
  %v1745 = vld [vmem:[%s1702 + $0xa8] sm:$0xf]
  %v1746 = vld [vmem:[%s1702 + $0xac] sm:$0xf]
  %v1747 = vld [vmem:[%s1702 + $0xb0] sm:$0xf]
  %v1748 = vld [vmem:[%s1702 + $0xb4] sm:$0xf]
  %v1749 = vld [vmem:[%s1702 + $0xb8] sm:$0xf]
  %v1750 = vld [vmem:[%s1702 + $0xbc] sm:$0xf]
  %v1751 = vld [vmem:[%s1702 + $0xc0] sm:$0xf]
  %v1752 = vld [vmem:[%s1702 + $0xc4] sm:$0xf]
  %v1753 = vld [vmem:[%s1702 + $0xc8] sm:$0xf]
  %v1754 = vld [vmem:[%s1702 + $0xcc] sm:$0xf]
  %v1755 = vld [vmem:[%s1702 + $0xd0] sm:$0xf]
  %v1756 = vld [vmem:[%s1702 + $0xd4] sm:$0xf]
  %v1757 = vld [vmem:[%s1702 + $0xd8] sm:$0xf]
  %v1758 = vld [vmem:[%s1702 + $0xdc] sm:$0xf]
  %v1759 = vld [vmem:[%s1702 + $0xe0] sm:$0xf]
  %v1760 = vld [vmem:[%s1702 + $0xe4] sm:$0xf]
  %v1761 = vld [vmem:[%s1702 + $0xe8] sm:$0xf]
  %v1762 = vld [vmem:[%s1702 + $0xec] sm:$0xf]
  %v1763 = vld [vmem:[%s1702 + $0xf0] sm:$0xf]
  %v1764 = vld [vmem:[%s1702 + $0xf4] sm:$0xf]
  %v1765 = vld [vmem:[%s1702 + $0xf8] sm:$0xf]
  %v1766 = vld [vmem:[%s1702 + $0xfc] sm:$0xf]
  %v1767 = vld [vmem:[%s1702 + $0x100] sm:$0xf]
  %v1768 = vld [vmem:[%s1702 + $0x104] sm:$0xf]
  %v1769 = vld [vmem:[%s1702 + $0x108] sm:$0xf]
  %v1770 = vld [vmem:[%s1702 + $0x10c] sm:$0xf]
  %v1771 = vld [vmem:[%s1702 + $0x110] sm:$0xf]
  %v1772 = vld [vmem:[%s1702 + $0x114] sm:$0xf]
  %v1773 = vld [vmem:[%s1702 + $0x118] sm:$0xf]
  %v1774 = vld [vmem:[%s1702 + $0x11c] sm:$0xf]
  %v1775 = vld [vmem:[%s1702 + $0x120] sm:$0xf]
  %v1776 = vld [vmem:[%s1702 + $0x124] sm:$0xf]
  %v1777 = vld [vmem:[%s1702 + $0x128] sm:$0xf]
  %v1778 = vld [vmem:[%s1702 + $0x12c] sm:$0xf]
  %v1779 = vld [vmem:[%s1702 + $0x130] sm:$0xf]
  %v1780 = vld [vmem:[%s1702 + $0x134] sm:$0xf]
  %v1781 = vld [vmem:[%s1702 + $0x138] sm:$0xf]
  %v1782 = vld [vmem:[%s1702 + $0x13c] sm:$0xf]
  %v1783 = vld [vmem:[%s1702 + $0x140] sm:$0xf]
  %v1784 = vld [vmem:[%s1702 + $0x144] sm:$0xf]
  %v1785 = vld [vmem:[%s1702 + $0x148] sm:$0xf]
  %v1786 = vld [vmem:[%s1702 + $0x14c] sm:$0xf]
  %v1787 = vld [vmem:[%s1702 + $0x150] sm:$0xf]
  %v1788 = vld [vmem:[%s1702 + $0x154] sm:$0xf]
  %v1789 = vld [vmem:[%s1702 + $0x158] sm:$0xf]
  %v1790 = vld [vmem:[%s1702 + $0x15c] sm:$0xf]
  %v1791 = vld [vmem:[%s1702 + $0x160] sm:$0xf]
  %v1792 = vld [vmem:[%s1702 + $0x164] sm:$0xf]
  %v1793 = vld [vmem:[%s1702 + $0x168] sm:$0xf]
  %v1794 = vld [vmem:[%s1702 + $0x16c] sm:$0xf]
  %v1795 = vld [vmem:[%s1702 + $0x170] sm:$0xf]
  %v1796 = vld [vmem:[%s1702 + $0x174] sm:$0xf]
  %v1797 = vld [vmem:[%s1702 + $0x178] sm:$0xf]
  %v1798 = vld [vmem:[%s1702 + $0x17c] sm:$0xf]
  %v1799 = vld [vmem:[%s1702 + $0x180] sm:$0xf]
  %v1800 = vld [vmem:[%s1702 + $0x184] sm:$0xf]
  %v1801 = vld [vmem:[%s1702 + $0x188] sm:$0xf]
  %v1802 = vld [vmem:[%s1702 + $0x18c] sm:$0xf]
  %v1803 = vld [vmem:[%s1702 + $0x190] sm:$0xf]
  %v1804 = vld [vmem:[%s1702 + $0x194] sm:$0xf]
  %v1805 = vld [vmem:[%s1702 + $0x198] sm:$0xf]
  %v1806 = vld [vmem:[%s1702 + $0x19c] sm:$0xf]
  %v1807 = vld [vmem:[%s1702 + $0x1a0] sm:$0xf]
  %v1808 = vld [vmem:[%s1702 + $0x1a4] sm:$0xf]
  %v1809 = vld [vmem:[%s1702 + $0x1a8] sm:$0xf]
  %v1810 = vld [vmem:[%s1702 + $0x1ac] sm:$0xf]
  %v1811 = vld [vmem:[%s1702 + $0x1b0] sm:$0xf]
  %v1812 = vld [vmem:[%s1702 + $0x1b4] sm:$0xf]
  %v1813 = vld [vmem:[%s1702 + $0x1b8] sm:$0xf]
  %v1814 = vld [vmem:[%s1702 + $0x1bc] sm:$0xf]
  %v1815 = vld [vmem:[%s1702 + $0x1c0] sm:$0xf]
  %v1816 = vld [vmem:[%s1702 + $0x1c4] sm:$0xf]
  %v1817 = vld [vmem:[%s1702 + $0x1c8] sm:$0xf]
  %v1818 = vld [vmem:[%s1702 + $0x1cc] sm:$0xf]
  %v1819 = vld [vmem:[%s1702 + $0x1d0] sm:$0xf]
  %v1820 = vld [vmem:[%s1702 + $0x1d4] sm:$0xf]
  %v1821 = vld [vmem:[%s1702 + $0x1d8] sm:$0xf]
  %v1822 = vld [vmem:[%s1702 + $0x1dc] sm:$0xf]
  %v1823 = vld [vmem:[%s1702 + $0x1e0] sm:$0xf]
  %v1824 = vld [vmem:[%s1702 + $0x1e4] sm:$0xf]
  %v1825 = vld [vmem:[%s1702 + $0x1e8] sm:$0xf]
  %v1826 = vld [vmem:[%s1702 + $0x1ec] sm:$0xf]
  %v1827 = vld [vmem:[%s1702 + $0x1f0] sm:$0xf]
  %v1828 = vld [vmem:[%s1702 + $0x1f4] sm:$0xf]
  %v1829 = vld [vmem:[%s1702 + $0x1f8] sm:$0xf]
  %v1830 = vld [vmem:[%s1702 + $0x1fc] sm:$0xf]
  %v1847 = vunpack.c.l.b16 %v1686
  %v1848 = vunpack.c.h.b16 %v1686
  %v1849 = vunpack.c.l.b16 %v1687
  %v1850 = vunpack.c.h.b16 %v1687
  %v1851 = vunpack.c.l.b16 %v1688
  %v1852 = vunpack.c.h.b16 %v1688
  %v1853 = vunpack.c.l.b16 %v1689
  %v1854 = vunpack.c.h.b16 %v1689
  %v1855 = vunpack.c.l.b16 %v1690
  %v1856 = vunpack.c.h.b16 %v1690
  %v1857 = vunpack.c.l.b16 %v1691
  %v1858 = vunpack.c.h.b16 %v1691
  %v1859 = vunpack.c.l.b16 %v1692
  %v1860 = vunpack.c.h.b16 %v1692
  %v1861 = vunpack.c.l.b16 %v1693
  %v1862 = vunpack.c.h.b16 %v1693
  %v1863 = vunpack.c.l.b16 %v1694
  %v1864 = vunpack.c.h.b16 %v1694
  %v1865 = vunpack.c.l.b16 %v1695
  %v1866 = vunpack.c.h.b16 %v1695
  %v1867 = vunpack.c.l.b16 %v1696
  %v1868 = vunpack.c.h.b16 %v1696
  %v1869 = vunpack.c.l.b16 %v1697
  %v1870 = vunpack.c.h.b16 %v1697
  %v1871 = vunpack.c.l.b16 %v1698
  %v1872 = vunpack.c.h.b16 %v1698
  %v1873 = vunpack.c.l.b16 %v1699
  %v1874 = vunpack.c.h.b16 %v1699
  %v1875 = vunpack.c.l.b16 %v1700
  %v1876 = vunpack.c.h.b16 %v1700
  %v1877 = vunpack.c.l.b16 %v1701
  %v1878 = vunpack.c.h.b16 %v1701
  %v1879 = vpack.c.b16 %v1855, %v1847
  %v1880 = vpack.c.b16 %v1856, %v1848
  %v1881 = vpack.c.b16 %v1857, %v1849
  %v1882 = vpack.c.b16 %v1858, %v1850
  %v1883 = vpack.c.b16 %v1859, %v1851
  %v1884 = vpack.c.b16 %v1860, %v1852
  %v1885 = vpack.c.b16 %v1861, %v1853
  %v1886 = vpack.c.b16 %v1862, %v1854
  %v1887 = vpack.c.b16 %v1871, %v1863
  %v1888 = vpack.c.b16 %v1872, %v1864
  %v1889 = vpack.c.b16 %v1873, %v1865
  %v1890 = vpack.c.b16 %v1874, %v1866
  %v1891 = vpack.c.b16 %v1875, %v1867
  %v1892 = vpack.c.b16 %v1876, %v1868
  %v1893 = vpack.c.b16 %v1877, %v1869
  %v1894 = vpack.c.b16 %v1878, %v1870
  %v2039 = vunpack.c.l.b16 %v1703
  %v2040 = vunpack.c.l.b16 %v1704
  %v2041 = vunpack.c.l.b16 %v1705
  %v2042 = vunpack.c.l.b16 %v1706
  %v2043 = vunpack.c.l.b16 %v1707
  %v2044 = vunpack.c.l.b16 %v1708
  %v2045 = vunpack.c.l.b16 %v1709
  %v2046 = vunpack.c.l.b16 %v1710
  %v2047 = vunpack.c.l.b16 %v1711
  %v2048 = vunpack.c.l.b16 %v1712
  %v2049 = vunpack.c.l.b16 %v1713
  %v2050 = vunpack.c.l.b16 %v1714
  %v2051 = vunpack.c.l.b16 %v1715
  %v2052 = vunpack.c.l.b16 %v1716
  %v2053 = vunpack.c.l.b16 %v1717
  %v2054 = vunpack.c.l.b16 %v1718
  %v2055 = vunpack.c.l.b16 %v1719
  %v2056 = vunpack.c.l.b16 %v1720
  %v2057 = vunpack.c.l.b16 %v1721
  %v2058 = vunpack.c.l.b16 %v1722
  %v2059 = vunpack.c.l.b16 %v1723
  %v2060 = vunpack.c.l.b16 %v1724
  %v2061 = vunpack.c.l.b16 %v1725
  %v2062 = vunpack.c.l.b16 %v1726
  %v2063 = vunpack.c.l.b16 %v1727
  %v2064 = vunpack.c.l.b16 %v1728
  %v2065 = vunpack.c.l.b16 %v1729
  %v2066 = vunpack.c.l.b16 %v1730
  %v2067 = vunpack.c.l.b16 %v1731
  %v2068 = vunpack.c.l.b16 %v1732
  %v2069 = vunpack.c.l.b16 %v1733
  %v2070 = vunpack.c.l.b16 %v1734
  %v2071 = vunpack.c.l.b16 %v1735
  %v2072 = vunpack.c.l.b16 %v1736
  %v2073 = vunpack.c.l.b16 %v1737
  %v2074 = vunpack.c.l.b16 %v1738
  %v2075 = vunpack.c.l.b16 %v1739
  %v2076 = vunpack.c.l.b16 %v1740
  %v2077 = vunpack.c.l.b16 %v1741
  %v2078 = vunpack.c.l.b16 %v1742
  %v2079 = vunpack.c.l.b16 %v1743
  %v2080 = vunpack.c.l.b16 %v1744
  %v2081 = vunpack.c.l.b16 %v1745
  %v2082 = vunpack.c.l.b16 %v1746
  %v2083 = vunpack.c.l.b16 %v1747
  %v2084 = vunpack.c.l.b16 %v1748
  %v2085 = vunpack.c.l.b16 %v1749
  %v2086 = vunpack.c.l.b16 %v1750
  %v2087 = vunpack.c.l.b16 %v1751
  %v2088 = vunpack.c.l.b16 %v1752
  %v2089 = vunpack.c.l.b16 %v1753
  %v2090 = vunpack.c.l.b16 %v1754
  %v2091 = vunpack.c.l.b16 %v1755
  %v2092 = vunpack.c.l.b16 %v1756
  %v2093 = vunpack.c.l.b16 %v1757
  %v2094 = vunpack.c.l.b16 %v1758
  %v2095 = vunpack.c.l.b16 %v1759
  %v2096 = vunpack.c.l.b16 %v1760
  %v2097 = vunpack.c.l.b16 %v1761
  %v2098 = vunpack.c.l.b16 %v1762
  %v2099 = vunpack.c.l.b16 %v1763
  %v2100 = vunpack.c.l.b16 %v1764
  %v2101 = vunpack.c.l.b16 %v1765
  %v2102 = vunpack.c.l.b16 %v1766
  %v2103 = vunpack.c.l.b16 %v1767
  %v2104 = vunpack.c.l.b16 %v1768
  %v2105 = vunpack.c.l.b16 %v1769
  %v2106 = vunpack.c.l.b16 %v1770
  %v2107 = vunpack.c.l.b16 %v1771
  %v2108 = vunpack.c.l.b16 %v1772
  %v2109 = vunpack.c.l.b16 %v1773
  %v2110 = vunpack.c.l.b16 %v1774
  %v2111 = vunpack.c.l.b16 %v1775
  %v2112 = vunpack.c.l.b16 %v1776
  %v2113 = vunpack.c.l.b16 %v1777
  %v2114 = vunpack.c.l.b16 %v1778
  %v2115 = vunpack.c.l.b16 %v1779
  %v2116 = vunpack.c.l.b16 %v1780
  %v2117 = vunpack.c.l.b16 %v1781
  %v2118 = vunpack.c.l.b16 %v1782
  %v2119 = vunpack.c.l.b16 %v1783
  %v2120 = vunpack.c.l.b16 %v1784
  %v2121 = vunpack.c.l.b16 %v1785
  %v2122 = vunpack.c.l.b16 %v1786
  %v2123 = vunpack.c.l.b16 %v1787
  %v2124 = vunpack.c.l.b16 %v1788
  %v2125 = vunpack.c.l.b16 %v1789
  %v2126 = vunpack.c.l.b16 %v1790
  %v2127 = vunpack.c.l.b16 %v1791
  %v2128 = vunpack.c.l.b16 %v1792
  %v2129 = vunpack.c.l.b16 %v1793
  %v2130 = vunpack.c.l.b16 %v1794
  %v2131 = vunpack.c.l.b16 %v1795
  %v2132 = vunpack.c.l.b16 %v1796
  %v2133 = vunpack.c.l.b16 %v1797
  %v2134 = vunpack.c.l.b16 %v1798
  %v2135 = vunpack.c.l.b16 %v1799
  %v2136 = vunpack.c.l.b16 %v1800
  %v2137 = vunpack.c.l.b16 %v1801
  %v2138 = vunpack.c.l.b16 %v1802
  %v2139 = vunpack.c.l.b16 %v1803
  %v2140 = vunpack.c.l.b16 %v1804
  %v2141 = vunpack.c.l.b16 %v1805
  %v2142 = vunpack.c.l.b16 %v1806
  %v2143 = vunpack.c.l.b16 %v1807
  %v2144 = vunpack.c.l.b16 %v1808
  %v2145 = vunpack.c.l.b16 %v1809
  %v2146 = vunpack.c.l.b16 %v1810
  %v2147 = vunpack.c.l.b16 %v1811
  %v2148 = vunpack.c.l.b16 %v1812
  %v2149 = vunpack.c.l.b16 %v1813
  %v2150 = vunpack.c.l.b16 %v1814
  %v2151 = vunpack.c.l.b16 %v1815
  %v2152 = vunpack.c.l.b16 %v1816
  %v2153 = vunpack.c.l.b16 %v1817
  %v2154 = vunpack.c.l.b16 %v1818
  %v2155 = vunpack.c.l.b16 %v1819
  %v2156 = vunpack.c.l.b16 %v1820
  %v2157 = vunpack.c.l.b16 %v1821
  %v2158 = vunpack.c.l.b16 %v1822
  %v2159 = vunpack.c.l.b16 %v1823
  %v2160 = vunpack.c.l.b16 %v1824
  %v2161 = vunpack.c.l.b16 %v1825
  %v2162 = vunpack.c.l.b16 %v1826
  %v2163 = vunpack.c.l.b16 %v1827
  %v2164 = vunpack.c.l.b16 %v1828
  %v2165 = vunpack.c.l.b16 %v1829
  %v2166 = vunpack.c.l.b16 %v1830
  %v2167 = vpack.c.b16 %v2040, %v2039
  %v2168 = vpack.c.b16 %v2042, %v2041
  %v2169 = vpack.c.b16 %v2044, %v2043
  %v2170 = vpack.c.b16 %v2046, %v2045
  %v2171 = vpack.c.b16 %v2048, %v2047
  %v2172 = vpack.c.b16 %v2050, %v2049
  %v2173 = vpack.c.b16 %v2052, %v2051
  %v2174 = vpack.c.b16 %v2054, %v2053
  %v2175 = vpack.c.b16 %v2056, %v2055
  %v2176 = vpack.c.b16 %v2058, %v2057
  %v2177 = vpack.c.b16 %v2060, %v2059
  %v2178 = vpack.c.b16 %v2062, %v2061
  %v2179 = vpack.c.b16 %v2064, %v2063
  %v2180 = vpack.c.b16 %v2066, %v2065
  %v2181 = vpack.c.b16 %v2068, %v2067
  %v2182 = vpack.c.b16 %v2070, %v2069
  %v2183 = vpack.c.b16 %v2072, %v2071
  %v2184 = vpack.c.b16 %v2074, %v2073
  %v2185 = vpack.c.b16 %v2076, %v2075
  %v2186 = vpack.c.b16 %v2078, %v2077
  %v2187 = vpack.c.b16 %v2080, %v2079
  %v2188 = vpack.c.b16 %v2082, %v2081
  %v2189 = vpack.c.b16 %v2084, %v2083
  %v2190 = vpack.c.b16 %v2086, %v2085
  %v2191 = vpack.c.b16 %v2088, %v2087
  %v2192 = vpack.c.b16 %v2090, %v2089
  %v2193 = vpack.c.b16 %v2092, %v2091
  %v2194 = vpack.c.b16 %v2094, %v2093
  %v2195 = vpack.c.b16 %v2096, %v2095
  %v2196 = vpack.c.b16 %v2098, %v2097
  %v2197 = vpack.c.b16 %v2100, %v2099
  %v2198 = vpack.c.b16 %v2102, %v2101
  %v2199 = vpack.c.b16 %v2104, %v2103
  %v2200 = vpack.c.b16 %v2106, %v2105
  %v2201 = vpack.c.b16 %v2108, %v2107
  %v2202 = vpack.c.b16 %v2110, %v2109
  %v2203 = vpack.c.b16 %v2112, %v2111
  %v2204 = vpack.c.b16 %v2114, %v2113
  %v2205 = vpack.c.b16 %v2116, %v2115
  %v2206 = vpack.c.b16 %v2118, %v2117
  %v2207 = vpack.c.b16 %v2120, %v2119
  %v2208 = vpack.c.b16 %v2122, %v2121
  %v2209 = vpack.c.b16 %v2124, %v2123
  %v2210 = vpack.c.b16 %v2126, %v2125
  %v2211 = vpack.c.b16 %v2128, %v2127
  %v2212 = vpack.c.b16 %v2130, %v2129
  %v2213 = vpack.c.b16 %v2132, %v2131
  %v2214 = vpack.c.b16 %v2134, %v2133
  %v2215 = vpack.c.b16 %v2136, %v2135
  %v2216 = vpack.c.b16 %v2138, %v2137
  %v2217 = vpack.c.b16 %v2140, %v2139
  %v2218 = vpack.c.b16 %v2142, %v2141
  %v2219 = vpack.c.b16 %v2144, %v2143
  %v2220 = vpack.c.b16 %v2146, %v2145
  %v2221 = vpack.c.b16 %v2148, %v2147
  %v2222 = vpack.c.b16 %v2150, %v2149
  %v2223 = vpack.c.b16 %v2152, %v2151
  %v2224 = vpack.c.b16 %v2154, %v2153
  %v2225 = vpack.c.b16 %v2156, %v2155
  %v2226 = vpack.c.b16 %v2158, %v2157
  %v2227 = vpack.c.b16 %v2160, %v2159
  %v2228 = vpack.c.b16 %v2162, %v2161
  %v2229 = vpack.c.b16 %v2164, %v2163
  %v2230 = vpack.c.b16 %v2166, %v2165
  %2295 = vmatprep.subr.bf16.mxu0 0
  %2296 = vmatpush1.bf16.msra.mxu0 %v2167
  %2297 = vmatprep.subr.bf16.mxu0 0
  %2298 = vmatpush1.bf16.msra.mxu0 %v2168
  %2299 = vmatprep.subr.bf16.mxu0 0
  %2300 = vmatpush1.bf16.msra.mxu0 %v2169
  %2301 = vmatprep.subr.bf16.mxu0 0
  %2302 = vmatpush1.bf16.msra.mxu0 %v2170
  %2303 = vmatprep.subr.bf16.mxu0 0
  %2304 = vmatpush1.bf16.msra.mxu0 %v2171
  %2305 = vmatprep.subr.bf16.mxu0 0
  %2306 = vmatpush1.bf16.msra.mxu0 %v2172
  %2307 = vmatprep.subr.bf16.mxu0 0
  %2308 = vmatpush1.bf16.msra.mxu0 %v2173
  %2309 = vmatprep.subr.bf16.mxu0 0
  %2310 = vmatpush1.bf16.msra.mxu0 %v2174
  %2311 = vmatprep.subr.bf16.mxu0 0
  %2312 = vmatpush1.bf16.msra.mxu0 %v2175
  %2313 = vmatprep.subr.bf16.mxu0 0
  %2314 = vmatpush1.bf16.msra.mxu0 %v2176
  %2315 = vmatprep.subr.bf16.mxu0 0
  %2316 = vmatpush1.bf16.msra.mxu0 %v2177
  %2317 = vmatprep.subr.bf16.mxu0 0
  %2318 = vmatpush1.bf16.msra.mxu0 %v2178
  %2319 = vmatprep.subr.bf16.mxu0 0
  %2320 = vmatpush1.bf16.msra.mxu0 %v2179
  %2321 = vmatprep.subr.bf16.mxu0 0
  %2322 = vmatpush1.bf16.msra.mxu0 %v2180
  %2323 = vmatprep.subr.bf16.mxu0 0
  %2324 = vmatpush1.bf16.msra.mxu0 %v2181
  %2325 = vmatprep.subr.bf16.mxu0 0
  %2326 = vmatpush1.bf16.msra.mxu0 %v2182
  %2327 = vmatprep.mubr.bf16.mxu0 %v1880
  %2328 = vmatmul.mubr.bf16.gmra.mrb[0].mxu0 %v1879
  %v2329 = vpop.f32.mrb[0].mxu0
  %v2330 = vadd.f32 0.0, %v2329
  %v2331 = vpop.f32.mrb[0].mxu0
  %v2332 = vpop.f32.mrb[0].mxu0
  %v2333 = vadd.f32 0.0, %v2332
  %v2334 = vpop.f32.mrb[0].mxu0
  %2335 = vmatprep.mubr.bf16.mxu0 %v1888
  %2336 = vmatmul.mubr.bf16.gmra.mrb[0].mxu0 %v1887
  %v2337 = vpop.f32.mrb[0].mxu0
  %v2338 = vadd.f32 0.0, %v2337
  %v2339 = vpop.f32.mrb[0].mxu0
  %v2340 = vpop.f32.mrb[0].mxu0
  %v2341 = vadd.f32 0.0, %v2340
  %v2342 = vpop.f32.mrb[0].mxu0
  %2343 = vdwg.mxu0
  %2344 = vmatprep.subr.bf16.mxu0 0
  %2345 = vmatpush1.bf16.msra.mxu0 %v2183
  %2346 = vmatprep.subr.bf16.mxu0 0
  %2347 = vmatpush1.bf16.msra.mxu0 %v2184
  %2348 = vmatprep.subr.bf16.mxu0 0
  %2349 = vmatpush1.bf16.msra.mxu0 %v2185
  %2350 = vmatprep.subr.bf16.mxu0 0
  %2351 = vmatpush1.bf16.msra.mxu0 %v2186
  %2352 = vmatprep.subr.bf16.mxu0 0
  %2353 = vmatpush1.bf16.msra.mxu0 %v2187
  %2354 = vmatprep.subr.bf16.mxu0 0
  %2355 = vmatpush1.bf16.msra.mxu0 %v2188
  %2356 = vmatprep.subr.bf16.mxu0 0
  %2357 = vmatpush1.bf16.msra.mxu0 %v2189
  %2358 = vmatprep.subr.bf16.mxu0 0
  %2359 = vmatpush1.bf16.msra.mxu0 %v2190
  %2360 = vmatprep.subr.bf16.mxu0 0
  %2361 = vmatpush1.bf16.msra.mxu0 %v2191
  %2362 = vmatprep.subr.bf16.mxu0 0
  %2363 = vmatpush1.bf16.msra.mxu0 %v2192
  %2364 = vmatprep.subr.bf16.mxu0 0
  %2365 = vmatpush1.bf16.msra.mxu0 %v2193
  %2366 = vmatprep.subr.bf16.mxu0 0
  %2367 = vmatpush1.bf16.msra.mxu0 %v2194
  %2368 = vmatprep.subr.bf16.mxu0 0
  %2369 = vmatpush1.bf16.msra.mxu0 %v2195
  %2370 = vmatprep.subr.bf16.mxu0 0
  %2371 = vmatpush1.bf16.msra.mxu0 %v2196
  %2372 = vmatprep.subr.bf16.mxu0 0
  %2373 = vmatpush1.bf16.msra.mxu0 %v2197
  %2374 = vmatprep.subr.bf16.mxu0 0
  %2375 = vmatpush1.bf16.msra.mxu0 %v2198
  %2376 = vmatprep.mubr.bf16.mxu0 %v1882
  %2377 = vmatmul.mubr.bf16.gmra.mrb[0].mxu0 %v1881
  %v2378 = vpop.f32.mrb[0].mxu0
  %v2379 = vadd.f32 %v2330, %v2378
  %v2380 = vpop.f32.mrb[0].mxu0
  %v2381 = vpop.f32.mrb[0].mxu0
  %v2382 = vadd.f32 %v2333, %v2381
  %v2383 = vpop.f32.mrb[0].mxu0
  %2384 = vmatprep.mubr.bf16.mxu0 %v1890
  %2385 = vmatmul.mubr.bf16.gmra.mrb[0].mxu0 %v1889
  %v2386 = vpop.f32.mrb[0].mxu0
  %v2387 = vadd.f32 %v2338, %v2386
  %v2388 = vpop.f32.mrb[0].mxu0
  %v2389 = vpop.f32.mrb[0].mxu0
  %v2390 = vadd.f32 %v2341, %v2389
  %v2391 = vpop.f32.mrb[0].mxu0
  %2392 = vdwg.mxu0
  %2393 = vmatprep.subr.bf16.mxu0 0
  %2394 = vmatpush1.bf16.msra.mxu0 %v2199
  %2395 = vmatprep.subr.bf16.mxu0 0
  %2396 = vmatpush1.bf16.msra.mxu0 %v2200
  %2397 = vmatprep.subr.bf16.mxu0 0
  %2398 = vmatpush1.bf16.msra.mxu0 %v2201
  %2399 = vmatprep.subr.bf16.mxu0 0
  %2400 = vmatpush1.bf16.msra.mxu0 %v2202
  %2401 = vmatprep.subr.bf16.mxu0 0
  %2402 = vmatpush1.bf16.msra.mxu0 %v2203
  %2403 = vmatprep.subr.bf16.mxu0 0
  %2404 = vmatpush1.bf16.msra.mxu0 %v2204
  %2405 = vmatprep.subr.bf16.mxu0 0
  %2406 = vmatpush1.bf16.msra.mxu0 %v2205
  %2407 = vmatprep.subr.bf16.mxu0 0
  %2408 = vmatpush1.bf16.msra.mxu0 %v2206
  %2409 = vmatprep.subr.bf16.mxu0 0
  %2410 = vmatpush1.bf16.msra.mxu0 %v2207
  %2411 = vmatprep.subr.bf16.mxu0 0
  %2412 = vmatpush1.bf16.msra.mxu0 %v2208
  %2413 = vmatprep.subr.bf16.mxu0 0
  %2414 = vmatpush1.bf16.msra.mxu0 %v2209
  %2415 = vmatprep.subr.bf16.mxu0 0
  %2416 = vmatpush1.bf16.msra.mxu0 %v2210
  %2417 = vmatprep.subr.bf16.mxu0 0
  %2418 = vmatpush1.bf16.msra.mxu0 %v2211
  %2419 = vmatprep.subr.bf16.mxu0 0
  %2420 = vmatpush1.bf16.msra.mxu0 %v2212
  %2421 = vmatprep.subr.bf16.mxu0 0
  %2422 = vmatpush1.bf16.msra.mxu0 %v2213
  %2423 = vmatprep.subr.bf16.mxu0 0
  %2424 = vmatpush1.bf16.msra.mxu0 %v2214
  %2425 = vmatprep.mubr.bf16.mxu0 %v1884
  %2426 = vmatmul.mubr.bf16.gmra.mrb[0].mxu0 %v1883
  %v2427 = vpop.f32.mrb[0].mxu0
  %v2428 = vadd.f32 %v2379, %v2427
  %v2429 = vpop.f32.mrb[0].mxu0
  %v2430 = vpop.f32.mrb[0].mxu0
  %v2431 = vadd.f32 %v2382, %v2430
  %v2432 = vpop.f32.mrb[0].mxu0
  %2433 = vmatprep.mubr.bf16.mxu0 %v1892
  %2434 = vmatmul.mubr.bf16.gmra.mrb[0].mxu0 %v1891
  %v2435 = vpop.f32.mrb[0].mxu0
  %v2436 = vadd.f32 %v2387, %v2435
  %v2437 = vpop.f32.mrb[0].mxu0
  %v2438 = vpop.f32.mrb[0].mxu0
  %v2439 = vadd.f32 %v2390, %v2438
  %v2440 = vpop.f32.mrb[0].mxu0
  %2441 = vdwg.mxu0
  %2442 = vmatprep.subr.bf16.mxu0 0
  %2443 = vmatpush1.bf16.msra.mxu0 %v2215
  %2444 = vmatprep.subr.bf16.mxu0 0
  %2445 = vmatpush1.bf16.msra.mxu0 %v2216
  %2446 = vmatprep.subr.bf16.mxu0 0
  %2447 = vmatpush1.bf16.msra.mxu0 %v2217
  %2448 = vmatprep.subr.bf16.mxu0 0
  %2449 = vmatpush1.bf16.msra.mxu0 %v2218
  %2450 = vmatprep.subr.bf16.mxu0 0
  %2451 = vmatpush1.bf16.msra.mxu0 %v2219
  %2452 = vmatprep.subr.bf16.mxu0 0
  %2453 = vmatpush1.bf16.msra.mxu0 %v2220
  %2454 = vmatprep.subr.bf16.mxu0 0
  %2455 = vmatpush1.bf16.msra.mxu0 %v2221
  %2456 = vmatprep.subr.bf16.mxu0 0
  %2457 = vmatpush1.bf16.msra.mxu0 %v2222
  %2458 = vmatprep.subr.bf16.mxu0 0
  %2459 = vmatpush1.bf16.msra.mxu0 %v2223
  %2460 = vmatprep.subr.bf16.mxu0 0
  %2461 = vmatpush1.bf16.msra.mxu0 %v2224
  %2462 = vmatprep.subr.bf16.mxu0 0
  %2463 = vmatpush1.bf16.msra.mxu0 %v2225
  %2464 = vmatprep.subr.bf16.mxu0 0
  %2465 = vmatpush1.bf16.msra.mxu0 %v2226
  %2466 = vmatprep.subr.bf16.mxu0 0
  %2467 = vmatpush1.bf16.msra.mxu0 %v2227
  %2468 = vmatprep.subr.bf16.mxu0 0
  %2469 = vmatpush1.bf16.msra.mxu0 %v2228
  %2470 = vmatprep.subr.bf16.mxu0 0
  %2471 = vmatpush1.bf16.msra.mxu0 %v2229
  %2472 = vmatprep.subr.bf16.mxu0 0
  %2473 = vmatpush1.bf16.msra.mxu0 %v2230
  %2474 = vmatprep.mubr.bf16.mxu0 %v1886
  %2475 = vmatmul.mubr.bf16.gmra.mrb[0].mxu0 %v1885
  %v2476 = vpop.f32.mrb[0].mxu0
  %v2477 = vadd.f32 %v2428, %v2476
  %v2478 = vpop.f32.mrb[0].mxu0
  %v2479 = vpop.f32.mrb[0].mxu0
  %v2480 = vadd.f32 %v2431, %v2479
  %v2481 = vpop.f32.mrb[0].mxu0
  %2482 = vmatprep.mubr.bf16.mxu0 %v1894
  %2483 = vmatmul.mubr.bf16.gmra.mrb[0].mxu0 %v1893
  %v2484 = vpop.f32.mrb[0].mxu0
  %v2485 = vadd.f32 %v2436, %v2484
  %v2486 = vpop.f32.mrb[0].mxu0
  %v2487 = vpop.f32.mrb[0].mxu0
  %v2488 = vadd.f32 %v2439, %v2487
  %v2489 = vpop.f32.mrb[0].mxu0
  %2490 = vdwg.mxu0
  %s2491 = scalar_lea.vmem %s4, 64
  %2492 = vst [vmem:[%s2491] sm:$0xff] %v2477
  %2493 = vst [vmem:[%s2491 + $0x8] sm:$0xff] %v2480
  %2494 = vst [vmem:[%s2491 + $0x10] sm:$0xff] %v2485
  %2495 = vst [vmem:[%s2491 + $0x18] sm:$0xff] %v2488
  %v2496 = vadd.f32 %v2477, %v2480
  %v2497 = vadd.f32 %v2496, %v2485
  %v2498 = vadd.f32 %v2497, %v2488
  %v2499 = vrot.slane %v2498, 4
  %v2500 = vadd.f32 %v2498, %v2499
  %v2501 = vrot.slane %v2500, 2
  %v2502 = vadd.f32 %v2500, %v2501
  %v2503 = vrot.slane %v2502, 1
  %v2504 = vadd.f32 %v2502, %v2503
  %v2505 = vadd.f32 %v1670, %v2504
  %v2506 = vmul.f32 %v2477, %v2477
  %v2507 = vmul.f32 %v2480, %v2480
  %v2508 = vmul.f32 %v2485, %v2485
  %v2509 = vmul.f32 %v2488, %v2488
  %v2510 = vadd.f32 %v2506, %v2507
  %v2511 = vadd.f32 %v2510, %v2508
  %v2512 = vadd.f32 %v2511, %v2509
  %v2513 = vrot.slane %v2512, 4
  %v2514 = vadd.f32 %v2512, %v2513
  %v2515 = vrot.slane %v2514, 2
  %v2516 = vadd.f32 %v2514, %v2515
  %v2517 = vrot.slane %v2516, 1
  %v2518 = vadd.f32 %v2516, %v2517
  %v2519 = vadd.f32 %v1684, %v2518
  %s2520 = scalar_lea.vmem %s0, 384
  %v2521 = vld [vmem:[%s2520] sm:$0xff]
  %v2522 = vld [vmem:[%s2520 + $0x8] sm:$0xff]
  %v2523 = vld [vmem:[%s2520 + $0x10] sm:$0xff]
  %v2524 = vld [vmem:[%s2520 + $0x18] sm:$0xff]
  %v2525 = vld [vmem:[%s2520 + $0x20] sm:$0xff]
  %v2526 = vld [vmem:[%s2520 + $0x28] sm:$0xff]
  %v2527 = vld [vmem:[%s2520 + $0x30] sm:$0xff]
  %v2528 = vld [vmem:[%s2520 + $0x38] sm:$0xff]
  %v2529 = vld [vmem:[%s2520 + $0x40] sm:$0xff]
  %v2530 = vld [vmem:[%s2520 + $0x48] sm:$0xff]
  %v2531 = vld [vmem:[%s2520 + $0x50] sm:$0xff]
  %v2532 = vld [vmem:[%s2520 + $0x58] sm:$0xff]
  %v2533 = vld [vmem:[%s2520 + $0x60] sm:$0xff]
  %v2534 = vld [vmem:[%s2520 + $0x68] sm:$0xff]
  %v2535 = vld [vmem:[%s2520 + $0x70] sm:$0xff]
  %v2536 = vld [vmem:[%s2520 + $0x78] sm:$0xff]
  %s2537 = scalar_lea.vmem %s1, 1536
  %v2538 = vld [vmem:[%s2537] sm:$0xf]
  %v2539 = vld [vmem:[%s2537 + $0x4] sm:$0xf]
  %v2540 = vld [vmem:[%s2537 + $0x8] sm:$0xf]
  %v2541 = vld [vmem:[%s2537 + $0xc] sm:$0xf]
  %v2542 = vld [vmem:[%s2537 + $0x10] sm:$0xf]
  %v2543 = vld [vmem:[%s2537 + $0x14] sm:$0xf]
  %v2544 = vld [vmem:[%s2537 + $0x18] sm:$0xf]
  %v2545 = vld [vmem:[%s2537 + $0x1c] sm:$0xf]
  %v2546 = vld [vmem:[%s2537 + $0x20] sm:$0xf]
  %v2547 = vld [vmem:[%s2537 + $0x24] sm:$0xf]
  %v2548 = vld [vmem:[%s2537 + $0x28] sm:$0xf]
  %v2549 = vld [vmem:[%s2537 + $0x2c] sm:$0xf]
  %v2550 = vld [vmem:[%s2537 + $0x30] sm:$0xf]
  %v2551 = vld [vmem:[%s2537 + $0x34] sm:$0xf]
  %v2552 = vld [vmem:[%s2537 + $0x38] sm:$0xf]
  %v2553 = vld [vmem:[%s2537 + $0x3c] sm:$0xf]
  %v2554 = vld [vmem:[%s2537 + $0x40] sm:$0xf]
  %v2555 = vld [vmem:[%s2537 + $0x44] sm:$0xf]
  %v2556 = vld [vmem:[%s2537 + $0x48] sm:$0xf]
  %v2557 = vld [vmem:[%s2537 + $0x4c] sm:$0xf]
  %v2558 = vld [vmem:[%s2537 + $0x50] sm:$0xf]
  %v2559 = vld [vmem:[%s2537 + $0x54] sm:$0xf]
  %v2560 = vld [vmem:[%s2537 + $0x58] sm:$0xf]
  %v2561 = vld [vmem:[%s2537 + $0x5c] sm:$0xf]
  %v2562 = vld [vmem:[%s2537 + $0x60] sm:$0xf]
  %v2563 = vld [vmem:[%s2537 + $0x64] sm:$0xf]
  %v2564 = vld [vmem:[%s2537 + $0x68] sm:$0xf]
  %v2565 = vld [vmem:[%s2537 + $0x6c] sm:$0xf]
  %v2566 = vld [vmem:[%s2537 + $0x70] sm:$0xf]
  %v2567 = vld [vmem:[%s2537 + $0x74] sm:$0xf]
  %v2568 = vld [vmem:[%s2537 + $0x78] sm:$0xf]
  %v2569 = vld [vmem:[%s2537 + $0x7c] sm:$0xf]
  %v2570 = vld [vmem:[%s2537 + $0x80] sm:$0xf]
  %v2571 = vld [vmem:[%s2537 + $0x84] sm:$0xf]
  %v2572 = vld [vmem:[%s2537 + $0x88] sm:$0xf]
  %v2573 = vld [vmem:[%s2537 + $0x8c] sm:$0xf]
  %v2574 = vld [vmem:[%s2537 + $0x90] sm:$0xf]
  %v2575 = vld [vmem:[%s2537 + $0x94] sm:$0xf]
  %v2576 = vld [vmem:[%s2537 + $0x98] sm:$0xf]
  %v2577 = vld [vmem:[%s2537 + $0x9c] sm:$0xf]
  %v2578 = vld [vmem:[%s2537 + $0xa0] sm:$0xf]
  %v2579 = vld [vmem:[%s2537 + $0xa4] sm:$0xf]
  %v2580 = vld [vmem:[%s2537 + $0xa8] sm:$0xf]
  %v2581 = vld [vmem:[%s2537 + $0xac] sm:$0xf]
  %v2582 = vld [vmem:[%s2537 + $0xb0] sm:$0xf]
  %v2583 = vld [vmem:[%s2537 + $0xb4] sm:$0xf]
  %v2584 = vld [vmem:[%s2537 + $0xb8] sm:$0xf]
  %v2585 = vld [vmem:[%s2537 + $0xbc] sm:$0xf]
  %v2586 = vld [vmem:[%s2537 + $0xc0] sm:$0xf]
  %v2587 = vld [vmem:[%s2537 + $0xc4] sm:$0xf]
  %v2588 = vld [vmem:[%s2537 + $0xc8] sm:$0xf]
  %v2589 = vld [vmem:[%s2537 + $0xcc] sm:$0xf]
  %v2590 = vld [vmem:[%s2537 + $0xd0] sm:$0xf]
  %v2591 = vld [vmem:[%s2537 + $0xd4] sm:$0xf]
  %v2592 = vld [vmem:[%s2537 + $0xd8] sm:$0xf]
  %v2593 = vld [vmem:[%s2537 + $0xdc] sm:$0xf]
  %v2594 = vld [vmem:[%s2537 + $0xe0] sm:$0xf]
  %v2595 = vld [vmem:[%s2537 + $0xe4] sm:$0xf]
  %v2596 = vld [vmem:[%s2537 + $0xe8] sm:$0xf]
  %v2597 = vld [vmem:[%s2537 + $0xec] sm:$0xf]
  %v2598 = vld [vmem:[%s2537 + $0xf0] sm:$0xf]
  %v2599 = vld [vmem:[%s2537 + $0xf4] sm:$0xf]
  %v2600 = vld [vmem:[%s2537 + $0xf8] sm:$0xf]
  %v2601 = vld [vmem:[%s2537 + $0xfc] sm:$0xf]
  %v2602 = vld [vmem:[%s2537 + $0x100] sm:$0xf]
  %v2603 = vld [vmem:[%s2537 + $0x104] sm:$0xf]
  %v2604 = vld [vmem:[%s2537 + $0x108] sm:$0xf]
  %v2605 = vld [vmem:[%s2537 + $0x10c] sm:$0xf]
  %v2606 = vld [vmem:[%s2537 + $0x110] sm:$0xf]
  %v2607 = vld [vmem:[%s2537 + $0x114] sm:$0xf]
  %v2608 = vld [vmem:[%s2537 + $0x118] sm:$0xf]
  %v2609 = vld [vmem:[%s2537 + $0x11c] sm:$0xf]
  %v2610 = vld [vmem:[%s2537 + $0x120] sm:$0xf]
  %v2611 = vld [vmem:[%s2537 + $0x124] sm:$0xf]
  %v2612 = vld [vmem:[%s2537 + $0x128] sm:$0xf]
  %v2613 = vld [vmem:[%s2537 + $0x12c] sm:$0xf]
  %v2614 = vld [vmem:[%s2537 + $0x130] sm:$0xf]
  %v2615 = vld [vmem:[%s2537 + $0x134] sm:$0xf]
  %v2616 = vld [vmem:[%s2537 + $0x138] sm:$0xf]
  %v2617 = vld [vmem:[%s2537 + $0x13c] sm:$0xf]
  %v2618 = vld [vmem:[%s2537 + $0x140] sm:$0xf]
  %v2619 = vld [vmem:[%s2537 + $0x144] sm:$0xf]
  %v2620 = vld [vmem:[%s2537 + $0x148] sm:$0xf]
  %v2621 = vld [vmem:[%s2537 + $0x14c] sm:$0xf]
  %v2622 = vld [vmem:[%s2537 + $0x150] sm:$0xf]
  %v2623 = vld [vmem:[%s2537 + $0x154] sm:$0xf]
  %v2624 = vld [vmem:[%s2537 + $0x158] sm:$0xf]
  %v2625 = vld [vmem:[%s2537 + $0x15c] sm:$0xf]
  %v2626 = vld [vmem:[%s2537 + $0x160] sm:$0xf]
  %v2627 = vld [vmem:[%s2537 + $0x164] sm:$0xf]
  %v2628 = vld [vmem:[%s2537 + $0x168] sm:$0xf]
  %v2629 = vld [vmem:[%s2537 + $0x16c] sm:$0xf]
  %v2630 = vld [vmem:[%s2537 + $0x170] sm:$0xf]
  %v2631 = vld [vmem:[%s2537 + $0x174] sm:$0xf]
  %v2632 = vld [vmem:[%s2537 + $0x178] sm:$0xf]
  %v2633 = vld [vmem:[%s2537 + $0x17c] sm:$0xf]
  %v2634 = vld [vmem:[%s2537 + $0x180] sm:$0xf]
  %v2635 = vld [vmem:[%s2537 + $0x184] sm:$0xf]
  %v2636 = vld [vmem:[%s2537 + $0x188] sm:$0xf]
  %v2637 = vld [vmem:[%s2537 + $0x18c] sm:$0xf]
  %v2638 = vld [vmem:[%s2537 + $0x190] sm:$0xf]
  %v2639 = vld [vmem:[%s2537 + $0x194] sm:$0xf]
  %v2640 = vld [vmem:[%s2537 + $0x198] sm:$0xf]
  %v2641 = vld [vmem:[%s2537 + $0x19c] sm:$0xf]
  %v2642 = vld [vmem:[%s2537 + $0x1a0] sm:$0xf]
  %v2643 = vld [vmem:[%s2537 + $0x1a4] sm:$0xf]
  %v2644 = vld [vmem:[%s2537 + $0x1a8] sm:$0xf]
  %v2645 = vld [vmem:[%s2537 + $0x1ac] sm:$0xf]
  %v2646 = vld [vmem:[%s2537 + $0x1b0] sm:$0xf]
  %v2647 = vld [vmem:[%s2537 + $0x1b4] sm:$0xf]
  %v2648 = vld [vmem:[%s2537 + $0x1b8] sm:$0xf]
  %v2649 = vld [vmem:[%s2537 + $0x1bc] sm:$0xf]
  %v2650 = vld [vmem:[%s2537 + $0x1c0] sm:$0xf]
  %v2651 = vld [vmem:[%s2537 + $0x1c4] sm:$0xf]
  %v2652 = vld [vmem:[%s2537 + $0x1c8] sm:$0xf]
  %v2653 = vld [vmem:[%s2537 + $0x1cc] sm:$0xf]
  %v2654 = vld [vmem:[%s2537 + $0x1d0] sm:$0xf]
  %v2655 = vld [vmem:[%s2537 + $0x1d4] sm:$0xf]
  %v2656 = vld [vmem:[%s2537 + $0x1d8] sm:$0xf]
  %v2657 = vld [vmem:[%s2537 + $0x1dc] sm:$0xf]
  %v2658 = vld [vmem:[%s2537 + $0x1e0] sm:$0xf]
  %v2659 = vld [vmem:[%s2537 + $0x1e4] sm:$0xf]
  %v2660 = vld [vmem:[%s2537 + $0x1e8] sm:$0xf]
  %v2661 = vld [vmem:[%s2537 + $0x1ec] sm:$0xf]
  %v2662 = vld [vmem:[%s2537 + $0x1f0] sm:$0xf]
  %v2663 = vld [vmem:[%s2537 + $0x1f4] sm:$0xf]
  %v2664 = vld [vmem:[%s2537 + $0x1f8] sm:$0xf]
  %v2665 = vld [vmem:[%s2537 + $0x1fc] sm:$0xf]
  %v2682 = vunpack.c.l.b16 %v2521
  %v2683 = vunpack.c.h.b16 %v2521
  %v2684 = vunpack.c.l.b16 %v2522
  %v2685 = vunpack.c.h.b16 %v2522
  %v2686 = vunpack.c.l.b16 %v2523
  %v2687 = vunpack.c.h.b16 %v2523
  %v2688 = vunpack.c.l.b16 %v2524
  %v2689 = vunpack.c.h.b16 %v2524
  %v2690 = vunpack.c.l.b16 %v2525
  %v2691 = vunpack.c.h.b16 %v2525
  %v2692 = vunpack.c.l.b16 %v2526
  %v2693 = vunpack.c.h.b16 %v2526
  %v2694 = vunpack.c.l.b16 %v2527
  %v2695 = vunpack.c.h.b16 %v2527
  %v2696 = vunpack.c.l.b16 %v2528
  %v2697 = vunpack.c.h.b16 %v2528
  %v2698 = vunpack.c.l.b16 %v2529
  %v2699 = vunpack.c.h.b16 %v2529
  %v2700 = vunpack.c.l.b16 %v2530
  %v2701 = vunpack.c.h.b16 %v2530
  %v2702 = vunpack.c.l.b16 %v2531
  %v2703 = vunpack.c.h.b16 %v2531
  %v2704 = vunpack.c.l.b16 %v2532
  %v2705 = vunpack.c.h.b16 %v2532
  %v2706 = vunpack.c.l.b16 %v2533
  %v2707 = vunpack.c.h.b16 %v2533
  %v2708 = vunpack.c.l.b16 %v2534
  %v2709 = vunpack.c.h.b16 %v2534
  %v2710 = vunpack.c.l.b16 %v2535
  %v2711 = vunpack.c.h.b16 %v2535
  %v2712 = vunpack.c.l.b16 %v2536
  %v2713 = vunpack.c.h.b16 %v2536
  %v2714 = vpack.c.b16 %v2690, %v2682
  %v2715 = vpack.c.b16 %v2691, %v2683
  %v2716 = vpack.c.b16 %v2692, %v2684
  %v2717 = vpack.c.b16 %v2693, %v2685
  %v2718 = vpack.c.b16 %v2694, %v2686
  %v2719 = vpack.c.b16 %v2695, %v2687
  %v2720 = vpack.c.b16 %v2696, %v2688
  %v2721 = vpack.c.b16 %v2697, %v2689
  %v2722 = vpack.c.b16 %v2706, %v2698
  %v2723 = vpack.c.b16 %v2707, %v2699
  %v2724 = vpack.c.b16 %v2708, %v2700
  %v2725 = vpack.c.b16 %v2709, %v2701
  %v2726 = vpack.c.b16 %v2710, %v2702
  %v2727 = vpack.c.b16 %v2711, %v2703
  %v2728 = vpack.c.b16 %v2712, %v2704
  %v2729 = vpack.c.b16 %v2713, %v2705
  %v2874 = vunpack.c.l.b16 %v2538
  %v2875 = vunpack.c.l.b16 %v2539
  %v2876 = vunpack.c.l.b16 %v2540
  %v2877 = vunpack.c.l.b16 %v2541
  %v2878 = vunpack.c.l.b16 %v2542
  %v2879 = vunpack.c.l.b16 %v2543
  %v2880 = vunpack.c.l.b16 %v2544
  %v2881 = vunpack.c.l.b16 %v2545
  %v2882 = vunpack.c.l.b16 %v2546
  %v2883 = vunpack.c.l.b16 %v2547
  %v2884 = vunpack.c.l.b16 %v2548
  %v2885 = vunpack.c.l.b16 %v2549
  %v2886 = vunpack.c.l.b16 %v2550
  %v2887 = vunpack.c.l.b16 %v2551
  %v2888 = vunpack.c.l.b16 %v2552
  %v2889 = vunpack.c.l.b16 %v2553
  %v2890 = vunpack.c.l.b16 %v2554
  %v2891 = vunpack.c.l.b16 %v2555
  %v2892 = vunpack.c.l.b16 %v2556
  %v2893 = vunpack.c.l.b16 %v2557
  %v2894 = vunpack.c.l.b16 %v2558
  %v2895 = vunpack.c.l.b16 %v2559
  %v2896 = vunpack.c.l.b16 %v2560
  %v2897 = vunpack.c.l.b16 %v2561
  %v2898 = vunpack.c.l.b16 %v2562
  %v2899 = vunpack.c.l.b16 %v2563
  %v2900 = vunpack.c.l.b16 %v2564
  %v2901 = vunpack.c.l.b16 %v2565
  %v2902 = vunpack.c.l.b16 %v2566
  %v2903 = vunpack.c.l.b16 %v2567
  %v2904 = vunpack.c.l.b16 %v2568
  %v2905 = vunpack.c.l.b16 %v2569
  %v2906 = vunpack.c.l.b16 %v2570
  %v2907 = vunpack.c.l.b16 %v2571
  %v2908 = vunpack.c.l.b16 %v2572
  %v2909 = vunpack.c.l.b16 %v2573
  %v2910 = vunpack.c.l.b16 %v2574
  %v2911 = vunpack.c.l.b16 %v2575
  %v2912 = vunpack.c.l.b16 %v2576
  %v2913 = vunpack.c.l.b16 %v2577
  %v2914 = vunpack.c.l.b16 %v2578
  %v2915 = vunpack.c.l.b16 %v2579
  %v2916 = vunpack.c.l.b16 %v2580
  %v2917 = vunpack.c.l.b16 %v2581
  %v2918 = vunpack.c.l.b16 %v2582
  %v2919 = vunpack.c.l.b16 %v2583
  %v2920 = vunpack.c.l.b16 %v2584
  %v2921 = vunpack.c.l.b16 %v2585
  %v2922 = vunpack.c.l.b16 %v2586
  %v2923 = vunpack.c.l.b16 %v2587
  %v2924 = vunpack.c.l.b16 %v2588
  %v2925 = vunpack.c.l.b16 %v2589
  %v2926 = vunpack.c.l.b16 %v2590
  %v2927 = vunpack.c.l.b16 %v2591
  %v2928 = vunpack.c.l.b16 %v2592
  %v2929 = vunpack.c.l.b16 %v2593
  %v2930 = vunpack.c.l.b16 %v2594
  %v2931 = vunpack.c.l.b16 %v2595
  %v2932 = vunpack.c.l.b16 %v2596
  %v2933 = vunpack.c.l.b16 %v2597
  %v2934 = vunpack.c.l.b16 %v2598
  %v2935 = vunpack.c.l.b16 %v2599
  %v2936 = vunpack.c.l.b16 %v2600
  %v2937 = vunpack.c.l.b16 %v2601
  %v2938 = vunpack.c.l.b16 %v2602
  %v2939 = vunpack.c.l.b16 %v2603
  %v2940 = vunpack.c.l.b16 %v2604
  %v2941 = vunpack.c.l.b16 %v2605
  %v2942 = vunpack.c.l.b16 %v2606
  %v2943 = vunpack.c.l.b16 %v2607
  %v2944 = vunpack.c.l.b16 %v2608
  %v2945 = vunpack.c.l.b16 %v2609
  %v2946 = vunpack.c.l.b16 %v2610
  %v2947 = vunpack.c.l.b16 %v2611
  %v2948 = vunpack.c.l.b16 %v2612
  %v2949 = vunpack.c.l.b16 %v2613
  %v2950 = vunpack.c.l.b16 %v2614
  %v2951 = vunpack.c.l.b16 %v2615
  %v2952 = vunpack.c.l.b16 %v2616
  %v2953 = vunpack.c.l.b16 %v2617
  %v2954 = vunpack.c.l.b16 %v2618
  %v2955 = vunpack.c.l.b16 %v2619
  %v2956 = vunpack.c.l.b16 %v2620
  %v2957 = vunpack.c.l.b16 %v2621
  %v2958 = vunpack.c.l.b16 %v2622
  %v2959 = vunpack.c.l.b16 %v2623
  %v2960 = vunpack.c.l.b16 %v2624
  %v2961 = vunpack.c.l.b16 %v2625
  %v2962 = vunpack.c.l.b16 %v2626
  %v2963 = vunpack.c.l.b16 %v2627
  %v2964 = vunpack.c.l.b16 %v2628
  %v2965 = vunpack.c.l.b16 %v2629
  %v2966 = vunpack.c.l.b16 %v2630
  %v2967 = vunpack.c.l.b16 %v2631
  %v2968 = vunpack.c.l.b16 %v2632
  %v2969 = vunpack.c.l.b16 %v2633
  %v2970 = vunpack.c.l.b16 %v2634
  %v2971 = vunpack.c.l.b16 %v2635
  %v2972 = vunpack.c.l.b16 %v2636
  %v2973 = vunpack.c.l.b16 %v2637
  %v2974 = vunpack.c.l.b16 %v2638
  %v2975 = vunpack.c.l.b16 %v2639
  %v2976 = vunpack.c.l.b16 %v2640
  %v2977 = vunpack.c.l.b16 %v2641
  %v2978 = vunpack.c.l.b16 %v2642
  %v2979 = vunpack.c.l.b16 %v2643
  %v2980 = vunpack.c.l.b16 %v2644
  %v2981 = vunpack.c.l.b16 %v2645
  %v2982 = vunpack.c.l.b16 %v2646
  %v2983 = vunpack.c.l.b16 %v2647
  %v2984 = vunpack.c.l.b16 %v2648
  %v2985 = vunpack.c.l.b16 %v2649
  %v2986 = vunpack.c.l.b16 %v2650
  %v2987 = vunpack.c.l.b16 %v2651
  %v2988 = vunpack.c.l.b16 %v2652
  %v2989 = vunpack.c.l.b16 %v2653
  %v2990 = vunpack.c.l.b16 %v2654
  %v2991 = vunpack.c.l.b16 %v2655
  %v2992 = vunpack.c.l.b16 %v2656
  %v2993 = vunpack.c.l.b16 %v2657
  %v2994 = vunpack.c.l.b16 %v2658
  %v2995 = vunpack.c.l.b16 %v2659
  %v2996 = vunpack.c.l.b16 %v2660
  %v2997 = vunpack.c.l.b16 %v2661
  %v2998 = vunpack.c.l.b16 %v2662
  %v2999 = vunpack.c.l.b16 %v2663
  %v3000 = vunpack.c.l.b16 %v2664
  %v3001 = vunpack.c.l.b16 %v2665
  %v3002 = vpack.c.b16 %v2875, %v2874
  %v3003 = vpack.c.b16 %v2877, %v2876
  %v3004 = vpack.c.b16 %v2879, %v2878
  %v3005 = vpack.c.b16 %v2881, %v2880
  %v3006 = vpack.c.b16 %v2883, %v2882
  %v3007 = vpack.c.b16 %v2885, %v2884
  %v3008 = vpack.c.b16 %v2887, %v2886
  %v3009 = vpack.c.b16 %v2889, %v2888
  %v3010 = vpack.c.b16 %v2891, %v2890
  %v3011 = vpack.c.b16 %v2893, %v2892
  %v3012 = vpack.c.b16 %v2895, %v2894
  %v3013 = vpack.c.b16 %v2897, %v2896
  %v3014 = vpack.c.b16 %v2899, %v2898
  %v3015 = vpack.c.b16 %v2901, %v2900
  %v3016 = vpack.c.b16 %v2903, %v2902
  %v3017 = vpack.c.b16 %v2905, %v2904
  %v3018 = vpack.c.b16 %v2907, %v2906
  %v3019 = vpack.c.b16 %v2909, %v2908
  %v3020 = vpack.c.b16 %v2911, %v2910
  %v3021 = vpack.c.b16 %v2913, %v2912
  %v3022 = vpack.c.b16 %v2915, %v2914
  %v3023 = vpack.c.b16 %v2917, %v2916
  %v3024 = vpack.c.b16 %v2919, %v2918
  %v3025 = vpack.c.b16 %v2921, %v2920
  %v3026 = vpack.c.b16 %v2923, %v2922
  %v3027 = vpack.c.b16 %v2925, %v2924
  %v3028 = vpack.c.b16 %v2927, %v2926
  %v3029 = vpack.c.b16 %v2929, %v2928
  %v3030 = vpack.c.b16 %v2931, %v2930
  %v3031 = vpack.c.b16 %v2933, %v2932
  %v3032 = vpack.c.b16 %v2935, %v2934
  %v3033 = vpack.c.b16 %v2937, %v2936
  %v3034 = vpack.c.b16 %v2939, %v2938
  %v3035 = vpack.c.b16 %v2941, %v2940
  %v3036 = vpack.c.b16 %v2943, %v2942
  %v3037 = vpack.c.b16 %v2945, %v2944
  %v3038 = vpack.c.b16 %v2947, %v2946
  %v3039 = vpack.c.b16 %v2949, %v2948
  %v3040 = vpack.c.b16 %v2951, %v2950
  %v3041 = vpack.c.b16 %v2953, %v2952
  %v3042 = vpack.c.b16 %v2955, %v2954
  %v3043 = vpack.c.b16 %v2957, %v2956
  %v3044 = vpack.c.b16 %v2959, %v2958
  %v3045 = vpack.c.b16 %v2961, %v2960
  %v3046 = vpack.c.b16 %v2963, %v2962
  %v3047 = vpack.c.b16 %v2965, %v2964
  %v3048 = vpack.c.b16 %v2967, %v2966
  %v3049 = vpack.c.b16 %v2969, %v2968
  %v3050 = vpack.c.b16 %v2971, %v2970
  %v3051 = vpack.c.b16 %v2973, %v2972
  %v3052 = vpack.c.b16 %v2975, %v2974
  %v3053 = vpack.c.b16 %v2977, %v2976
  %v3054 = vpack.c.b16 %v2979, %v2978
  %v3055 = vpack.c.b16 %v2981, %v2980
  %v3056 = vpack.c.b16 %v2983, %v2982
  %v3057 = vpack.c.b16 %v2985, %v2984
  %v3058 = vpack.c.b16 %v2987, %v2986
  %v3059 = vpack.c.b16 %v2989, %v2988
  %v3060 = vpack.c.b16 %v2991, %v2990
  %v3061 = vpack.c.b16 %v2993, %v2992
  %v3062 = vpack.c.b16 %v2995, %v2994
  %v3063 = vpack.c.b16 %v2997, %v2996
  %v3064 = vpack.c.b16 %v2999, %v2998
  %v3065 = vpack.c.b16 %v3001, %v3000
  %3130 = vmatprep.subr.bf16.mxu0 0
  %3131 = vmatpush1.bf16.msra.mxu0 %v3002
  %3132 = vmatprep.subr.bf16.mxu0 0
  %3133 = vmatpush1.bf16.msra.mxu0 %v3003
  %3134 = vmatprep.subr.bf16.mxu0 0
  %3135 = vmatpush1.bf16.msra.mxu0 %v3004
  %3136 = vmatprep.subr.bf16.mxu0 0
  %3137 = vmatpush1.bf16.msra.mxu0 %v3005
  %3138 = vmatprep.subr.bf16.mxu0 0
  %3139 = vmatpush1.bf16.msra.mxu0 %v3006
  %3140 = vmatprep.subr.bf16.mxu0 0
  %3141 = vmatpush1.bf16.msra.mxu0 %v3007
  %3142 = vmatprep.subr.bf16.mxu0 0
  %3143 = vmatpush1.bf16.msra.mxu0 %v3008
  %3144 = vmatprep.subr.bf16.mxu0 0
  %3145 = vmatpush1.bf16.msra.mxu0 %v3009
  %3146 = vmatprep.subr.bf16.mxu0 0
  %3147 = vmatpush1.bf16.msra.mxu0 %v3010
  %3148 = vmatprep.subr.bf16.mxu0 0
  %3149 = vmatpush1.bf16.msra.mxu0 %v3011
  %3150 = vmatprep.subr.bf16.mxu0 0
  %3151 = vmatpush1.bf16.msra.mxu0 %v3012
  %3152 = vmatprep.subr.bf16.mxu0 0
  %3153 = vmatpush1.bf16.msra.mxu0 %v3013
  %3154 = vmatprep.subr.bf16.mxu0 0
  %3155 = vmatpush1.bf16.msra.mxu0 %v3014
  %3156 = vmatprep.subr.bf16.mxu0 0
  %3157 = vmatpush1.bf16.msra.mxu0 %v3015
  %3158 = vmatprep.subr.bf16.mxu0 0
  %3159 = vmatpush1.bf16.msra.mxu0 %v3016
  %3160 = vmatprep.subr.bf16.mxu0 0
  %3161 = vmatpush1.bf16.msra.mxu0 %v3017
  %3162 = vmatprep.mubr.bf16.mxu0 %v2715
  %3163 = vmatmul.mubr.bf16.gmra.mrb[0].mxu0 %v2714
  %v3164 = vpop.f32.mrb[0].mxu0
  %v3165 = vadd.f32 0.0, %v3164
  %v3166 = vpop.f32.mrb[0].mxu0
  %v3167 = vpop.f32.mrb[0].mxu0
  %v3168 = vadd.f32 0.0, %v3167
  %v3169 = vpop.f32.mrb[0].mxu0
  %3170 = vmatprep.mubr.bf16.mxu0 %v2723
  %3171 = vmatmul.mubr.bf16.gmra.mrb[0].mxu0 %v2722
  %v3172 = vpop.f32.mrb[0].mxu0
  %v3173 = vadd.f32 0.0, %v3172
  %v3174 = vpop.f32.mrb[0].mxu0
  %v3175 = vpop.f32.mrb[0].mxu0
  %v3176 = vadd.f32 0.0, %v3175
  %v3177 = vpop.f32.mrb[0].mxu0
  %3178 = vdwg.mxu0
  %3179 = vmatprep.subr.bf16.mxu0 0
  %3180 = vmatpush1.bf16.msra.mxu0 %v3018
  %3181 = vmatprep.subr.bf16.mxu0 0
  %3182 = vmatpush1.bf16.msra.mxu0 %v3019
  %3183 = vmatprep.subr.bf16.mxu0 0
  %3184 = vmatpush1.bf16.msra.mxu0 %v3020
  %3185 = vmatprep.subr.bf16.mxu0 0
  %3186 = vmatpush1.bf16.msra.mxu0 %v3021
  %3187 = vmatprep.subr.bf16.mxu0 0
  %3188 = vmatpush1.bf16.msra.mxu0 %v3022
  %3189 = vmatprep.subr.bf16.mxu0 0
  %3190 = vmatpush1.bf16.msra.mxu0 %v3023
  %3191 = vmatprep.subr.bf16.mxu0 0
  %3192 = vmatpush1.bf16.msra.mxu0 %v3024
  %3193 = vmatprep.subr.bf16.mxu0 0
  %3194 = vmatpush1.bf16.msra.mxu0 %v3025
  %3195 = vmatprep.subr.bf16.mxu0 0
  %3196 = vmatpush1.bf16.msra.mxu0 %v3026
  %3197 = vmatprep.subr.bf16.mxu0 0
  %3198 = vmatpush1.bf16.msra.mxu0 %v3027
  %3199 = vmatprep.subr.bf16.mxu0 0
  %3200 = vmatpush1.bf16.msra.mxu0 %v3028
  %3201 = vmatprep.subr.bf16.mxu0 0
  %3202 = vmatpush1.bf16.msra.mxu0 %v3029
  %3203 = vmatprep.subr.bf16.mxu0 0
  %3204 = vmatpush1.bf16.msra.mxu0 %v3030
  %3205 = vmatprep.subr.bf16.mxu0 0
  %3206 = vmatpush1.bf16.msra.mxu0 %v3031
  %3207 = vmatprep.subr.bf16.mxu0 0
  %3208 = vmatpush1.bf16.msra.mxu0 %v3032
  %3209 = vmatprep.subr.bf16.mxu0 0
  %3210 = vmatpush1.bf16.msra.mxu0 %v3033
  %3211 = vmatprep.mubr.bf16.mxu0 %v2717
  %3212 = vmatmul.mubr.bf16.gmra.mrb[0].mxu0 %v2716
  %v3213 = vpop.f32.mrb[0].mxu0
  %v3214 = vadd.f32 %v3165, %v3213
  %v3215 = vpop.f32.mrb[0].mxu0
  %v3216 = vpop.f32.mrb[0].mxu0
  %v3217 = vadd.f32 %v3168, %v3216
  %v3218 = vpop.f32.mrb[0].mxu0
  %3219 = vmatprep.mubr.bf16.mxu0 %v2725
  %3220 = vmatmul.mubr.bf16.gmra.mrb[0].mxu0 %v2724
  %v3221 = vpop.f32.mrb[0].mxu0
  %v3222 = vadd.f32 %v3173, %v3221
  %v3223 = vpop.f32.mrb[0].mxu0
  %v3224 = vpop.f32.mrb[0].mxu0
  %v3225 = vadd.f32 %v3176, %v3224
  %v3226 = vpop.f32.mrb[0].mxu0
  %3227 = vdwg.mxu0
  %3228 = vmatprep.subr.bf16.mxu0 0
  %3229 = vmatpush1.bf16.msra.mxu0 %v3034
  %3230 = vmatprep.subr.bf16.mxu0 0
  %3231 = vmatpush1.bf16.msra.mxu0 %v3035
  %3232 = vmatprep.subr.bf16.mxu0 0
  %3233 = vmatpush1.bf16.msra.mxu0 %v3036
  %3234 = vmatprep.subr.bf16.mxu0 0
  %3235 = vmatpush1.bf16.msra.mxu0 %v3037
  %3236 = vmatprep.subr.bf16.mxu0 0
  %3237 = vmatpush1.bf16.msra.mxu0 %v3038
  %3238 = vmatprep.subr.bf16.mxu0 0
  %3239 = vmatpush1.bf16.msra.mxu0 %v3039
  %3240 = vmatprep.subr.bf16.mxu0 0
  %3241 = vmatpush1.bf16.msra.mxu0 %v3040
  %3242 = vmatprep.subr.bf16.mxu0 0
  %3243 = vmatpush1.bf16.msra.mxu0 %v3041
  %3244 = vmatprep.subr.bf16.mxu0 0
  %3245 = vmatpush1.bf16.msra.mxu0 %v3042
  %3246 = vmatprep.subr.bf16.mxu0 0
  %3247 = vmatpush1.bf16.msra.mxu0 %v3043
  %3248 = vmatprep.subr.bf16.mxu0 0
  %3249 = vmatpush1.bf16.msra.mxu0 %v3044
  %3250 = vmatprep.subr.bf16.mxu0 0
  %3251 = vmatpush1.bf16.msra.mxu0 %v3045
  %3252 = vmatprep.subr.bf16.mxu0 0
  %3253 = vmatpush1.bf16.msra.mxu0 %v3046
  %3254 = vmatprep.subr.bf16.mxu0 0
  %3255 = vmatpush1.bf16.msra.mxu0 %v3047
  %3256 = vmatprep.subr.bf16.mxu0 0
  %3257 = vmatpush1.bf16.msra.mxu0 %v3048
  %3258 = vmatprep.subr.bf16.mxu0 0
  %3259 = vmatpush1.bf16.msra.mxu0 %v3049
  %3260 = vmatprep.mubr.bf16.mxu0 %v2719
  %3261 = vmatmul.mubr.bf16.gmra.mrb[0].mxu0 %v2718
  %v3262 = vpop.f32.mrb[0].mxu0
  %v3263 = vadd.f32 %v3214, %v3262
  %v3264 = vpop.f32.mrb[0].mxu0
  %v3265 = vpop.f32.mrb[0].mxu0
  %v3266 = vadd.f32 %v3217, %v3265
  %v3267 = vpop.f32.mrb[0].mxu0
  %3268 = vmatprep.mubr.bf16.mxu0 %v2727
  %3269 = vmatmul.mubr.bf16.gmra.mrb[0].mxu0 %v2726
  %v3270 = vpop.f32.mrb[0].mxu0
  %v3271 = vadd.f32 %v3222, %v3270
  %v3272 = vpop.f32.mrb[0].mxu0
  %v3273 = vpop.f32.mrb[0].mxu0
  %v3274 = vadd.f32 %v3225, %v3273
  %v3275 = vpop.f32.mrb[0].mxu0
  %3276 = vdwg.mxu0
  %3277 = vmatprep.subr.bf16.mxu0 0
  %3278 = vmatpush1.bf16.msra.mxu0 %v3050
  %3279 = vmatprep.subr.bf16.mxu0 0
  %3280 = vmatpush1.bf16.msra.mxu0 %v3051
  %3281 = vmatprep.subr.bf16.mxu0 0
  %3282 = vmatpush1.bf16.msra.mxu0 %v3052
  %3283 = vmatprep.subr.bf16.mxu0 0
  %3284 = vmatpush1.bf16.msra.mxu0 %v3053
  %3285 = vmatprep.subr.bf16.mxu0 0
  %3286 = vmatpush1.bf16.msra.mxu0 %v3054
  %3287 = vmatprep.subr.bf16.mxu0 0
  %3288 = vmatpush1.bf16.msra.mxu0 %v3055
  %3289 = vmatprep.subr.bf16.mxu0 0
  %3290 = vmatpush1.bf16.msra.mxu0 %v3056
  %3291 = vmatprep.subr.bf16.mxu0 0
  %3292 = vmatpush1.bf16.msra.mxu0 %v3057
  %3293 = vmatprep.subr.bf16.mxu0 0
  %3294 = vmatpush1.bf16.msra.mxu0 %v3058
  %3295 = vmatprep.subr.bf16.mxu0 0
  %3296 = vmatpush1.bf16.msra.mxu0 %v3059
  %3297 = vmatprep.subr.bf16.mxu0 0
  %3298 = vmatpush1.bf16.msra.mxu0 %v3060
  %3299 = vmatprep.subr.bf16.mxu0 0
  %3300 = vmatpush1.bf16.msra.mxu0 %v3061
  %3301 = vmatprep.subr.bf16.mxu0 0
  %3302 = vmatpush1.bf16.msra.mxu0 %v3062
  %3303 = vmatprep.subr.bf16.mxu0 0
  %3304 = vmatpush1.bf16.msra.mxu0 %v3063
  %3305 = vmatprep.subr.bf16.mxu0 0
  %3306 = vmatpush1.bf16.msra.mxu0 %v3064
  %3307 = vmatprep.subr.bf16.mxu0 0
  %3308 = vmatpush1.bf16.msra.mxu0 %v3065
  %3309 = vmatprep.mubr.bf16.mxu0 %v2721
  %3310 = vmatmul.mubr.bf16.gmra.mrb[0].mxu0 %v2720
  %v3311 = vpop.f32.mrb[0].mxu0
  %v3312 = vadd.f32 %v3263, %v3311
  %v3313 = vpop.f32.mrb[0].mxu0
  %v3314 = vpop.f32.mrb[0].mxu0
  %v3315 = vadd.f32 %v3266, %v3314
  %v3316 = vpop.f32.mrb[0].mxu0
  %3317 = vmatprep.mubr.bf16.mxu0 %v2729
  %3318 = vmatmul.mubr.bf16.gmra.mrb[0].mxu0 %v2728
  %v3319 = vpop.f32.mrb[0].mxu0
  %v3320 = vadd.f32 %v3271, %v3319
  %v3321 = vpop.f32.mrb[0].mxu0
  %v3322 = vpop.f32.mrb[0].mxu0
  %v3323 = vadd.f32 %v3274, %v3322
  %v3324 = vpop.f32.mrb[0].mxu0
  %3325 = vdwg.mxu0
  %s3326 = scalar_lea.vmem %s4, 96
  %3327 = vst [vmem:[%s3326] sm:$0xff] %v3312
  %3328 = vst [vmem:[%s3326 + $0x8] sm:$0xff] %v3315
  %3329 = vst [vmem:[%s3326 + $0x10] sm:$0xff] %v3320
  %3330 = vst [vmem:[%s3326 + $0x18] sm:$0xff] %v3323
  %v3331 = vadd.f32 %v3312, %v3315
  %v3332 = vadd.f32 %v3331, %v3320
  %v3333 = vadd.f32 %v3332, %v3323
  %v3334 = vrot.slane %v3333, 4
  %v3335 = vadd.f32 %v3333, %v3334
  %v3336 = vrot.slane %v3335, 2
  %v3337 = vadd.f32 %v3335, %v3336
  %v3338 = vrot.slane %v3337, 1
  %v3339 = vadd.f32 %v3337, %v3338
  %v3340 = vadd.f32 %v2505, %v3339
  %v3341 = vmul.f32 %v3312, %v3312
  %v3342 = vmul.f32 %v3315, %v3315
  %v3343 = vmul.f32 %v3320, %v3320
  %v3344 = vmul.f32 %v3323, %v3323
  %v3345 = vadd.f32 %v3341, %v3342
  %v3346 = vadd.f32 %v3345, %v3343
  %v3347 = vadd.f32 %v3346, %v3344
  %v3348 = vrot.slane %v3347, 4
  %v3349 = vadd.f32 %v3347, %v3348
  %v3350 = vrot.slane %v3349, 2
  %v3351 = vadd.f32 %v3349, %v3350
  %v3352 = vrot.slane %v3351, 1
  %v3353 = vadd.f32 %v3351, %v3352
  %v3354 = vadd.f32 %v2519, %v3353
  %v3355 = vrcp.pop 128.0
  %v3356 = vmul.f32 %v3340, %v3355
  %v3357 = vmul.f32 %v3354, %v3355
  %v3358 = vmul.f32 %v3356, %v3356
  %v3359 = vsub.f32 %v3357, %v3358
  %v3360 = vld [vmem:[%s2] sm:$0x1]
  %v3361 = vadd.f32 %v3359, 1e-05
  %v3362 = vrsqrt.pop %v3361
  %v3363 = vmul.f32 %v3360, %v3362
  %v3364 = vld [vmem:[%s3] sm:$0x1]
  %v3365 = vmul.f32 %v3356, %v3363
  %v3366 = vsub.f32 %v3364, %v3365
  %v3367 = vld [vmem:[%s4] sm:$0xff]
  %v3368 = vld [vmem:[%s4 + $0x8] sm:$0xff]
  %v3369 = vld [vmem:[%s4 + $0x10] sm:$0xff]
  %v3370 = vld [vmem:[%s4 + $0x18] sm:$0xff]
  %v3372 = vlaneseq
  %v3373 = vshrl.u32 %v3372, 7
  %v3374 = vsub.s32 0, %v3373
  %v3375 = vrot.slane %v3363, %v3374
  %v3377 = vmul.f32 %v3367, %v3375
  %v3378 = vmul.f32 %v3368, %v3375
  %v3379 = vmul.f32 %v3369, %v3375
  %v3380 = vmul.f32 %v3370, %v3375
  %v3382 = vlaneseq
  %v3383 = vshrl.u32 %v3382, 7
  %v3384 = vsub.s32 0, %v3383
  %v3385 = vrot.slane %v3366, %v3384
  %v3387 = vadd.f32 %v3377, %v3385
  %v3388 = vadd.f32 %v3378, %v3385
  %v3389 = vadd.f32 %v3379, %v3385
  %v3390 = vadd.f32 %v3380, %v3385
  %v3391 = vmax.f32 %v3387, 0.0
  %v3392 = vmax.f32 %v3388, 0.0
  %v3393 = vmax.f32 %v3389, 0.0
  %v3394 = vmax.f32 %v3390, 0.0
  %3395 = vst [vmem:[%s4] sm:$0xff] %v3391
  %3396 = vst [vmem:[%s4 + $0x8] sm:$0xff] %v3392
  %3397 = vst [vmem:[%s4 + $0x10] sm:$0xff] %v3393
  %3398 = vst [vmem:[%s4 + $0x18] sm:$0xff] %v3394
  %v3399 = vld [vmem:[%s1656] sm:$0xff]
  %v3400 = vld [vmem:[%s1656 + $0x8] sm:$0xff]
  %v3401 = vld [vmem:[%s1656 + $0x10] sm:$0xff]
  %v3402 = vld [vmem:[%s1656 + $0x18] sm:$0xff]
  %v3403 = vmul.f32 %v3399, %v3375
  %v3404 = vmul.f32 %v3400, %v3375
  %v3405 = vmul.f32 %v3401, %v3375
  %v3406 = vmul.f32 %v3402, %v3375
  %v3407 = vadd.f32 %v3403, %v3385
  %v3408 = vadd.f32 %v3404, %v3385
  %v3409 = vadd.f32 %v3405, %v3385
  %v3410 = vadd.f32 %v3406, %v3385
  %v3411 = vmax.f32 %v3407, 0.0
  %v3412 = vmax.f32 %v3408, 0.0
  %v3413 = vmax.f32 %v3409, 0.0
  %v3414 = vmax.f32 %v3410, 0.0
  %3415 = vst [vmem:[%s1656] sm:$0xff] %v3411
  %3416 = vst [vmem:[%s1656 + $0x8] sm:$0xff] %v3412
  %3417 = vst [vmem:[%s1656 + $0x10] sm:$0xff] %v3413
  %3418 = vst [vmem:[%s1656 + $0x18] sm:$0xff] %v3414
  %v3419 = vld [vmem:[%s2491] sm:$0xff]
  %v3420 = vld [vmem:[%s2491 + $0x8] sm:$0xff]
  %v3421 = vld [vmem:[%s2491 + $0x10] sm:$0xff]
  %v3422 = vld [vmem:[%s2491 + $0x18] sm:$0xff]
  %v3423 = vmul.f32 %v3419, %v3375
  %v3424 = vmul.f32 %v3420, %v3375
  %v3425 = vmul.f32 %v3421, %v3375
  %v3426 = vmul.f32 %v3422, %v3375
  %v3427 = vadd.f32 %v3423, %v3385
  %v3428 = vadd.f32 %v3424, %v3385
  %v3429 = vadd.f32 %v3425, %v3385
  %v3430 = vadd.f32 %v3426, %v3385
  %v3431 = vmax.f32 %v3427, 0.0
  %v3432 = vmax.f32 %v3428, 0.0
  %v3433 = vmax.f32 %v3429, 0.0
  %v3434 = vmax.f32 %v3430, 0.0
  %3435 = vst [vmem:[%s2491] sm:$0xff] %v3431
  %3436 = vst [vmem:[%s2491 + $0x8] sm:$0xff] %v3432
  %3437 = vst [vmem:[%s2491 + $0x10] sm:$0xff] %v3433
  %3438 = vst [vmem:[%s2491 + $0x18] sm:$0xff] %v3434
  %v3439 = vld [vmem:[%s3326] sm:$0xff]
  %v3440 = vld [vmem:[%s3326 + $0x8] sm:$0xff]
  %v3441 = vld [vmem:[%s3326 + $0x10] sm:$0xff]
  %v3442 = vld [vmem:[%s3326 + $0x18] sm:$0xff]
  %v3443 = vmul.f32 %v3439, %v3375
  %v3444 = vmul.f32 %v3440, %v3375
  %v3445 = vmul.f32 %v3441, %v3375
  %v3446 = vmul.f32 %v3442, %v3375
  %v3447 = vadd.f32 %v3443, %v3385
  %v3448 = vadd.f32 %v3444, %v3385
  %v3449 = vadd.f32 %v3445, %v3385
  %v3450 = vadd.f32 %v3446, %v3385
  %v3451 = vmax.f32 %v3447, 0.0
  %v3452 = vmax.f32 %v3448, 0.0
  %v3453 = vmax.f32 %v3449, 0.0
  %v3454 = vmax.f32 %v3450, 0.0
  %3455 = vst [vmem:[%s3326] sm:$0xff] %v3451
  %3456 = vst [vmem:[%s3326 + $0x8] sm:$0xff] %v3452
  %3457 = vst [vmem:[%s3326 + $0x10] sm:$0xff] %v3453
  %3458 = vst [vmem:[%s3326 + $0x18] sm:$0xff] %v3454
  // Predicated region
  $region18: #{generator_forward.5} parent=0 // pred_check
    _
  $region19: #{generator_forward.5} parent=0 // pred_check_branch
    %3460 = sbr.rel (0) target = $region21
  $region20: #{generator_forward.5} parent=0 // pred_region
    _
  $region21: #{generator_forward.5} parent=0 // pred_fallthru
    _
  // Predicated region
  $region22: #{generator_forward.5} parent=0 // pred_check
    _
  $region23: #{generator_forward.5} parent=0 // pred_check_branch
    %3462 = sbr.rel (0) target = $region25
  $region24: #{generator_forward.5} parent=0 // pred_region
    _
  $region25: #{generator_forward.5} parent=0 // pred_fallthru
    _

// kernel: generator_forward.6
$region0: #{generator_forward.6}
  #allocation0 [shape = 'u32[]', space=smem, size = 0x4, offset = 0x4, fixed_abs, tag = 'smem constant byte address 0x4 - core index']
  #allocation1 [shape = 'u32[144,128]{1,0:T(1,128)}', space=vmem, size = 0x12000, scoped, tag = 'internal scratch']
  %s0 = inlined_call_operand.vmem [shape: bf16[4,128,512], index: 0, kind: input, shape index: {}]
  %s1 = inlined_call_operand.vmem [shape: bf16[4,512,128], index: 1, kind: input, shape index: {}]
  %s2 = inlined_call_operand.vmem [shape: f32[1,128], index: 2, kind: input, shape index: {}]
  %s3 = inlined_call_operand.vmem [shape: f32[1,128], index: 3, kind: input, shape index: {}]
  %s4 = inlined_call_operand.vmem [shape: f32[4,128,128], index: 4, kind: output, shape index: {}]
  %s5 = sld [smem:[#allocation0]]
  $region26: #{generator_forward.6} parent=0
    _
  %s7 = ssub.s32 1, %s5
  %s8 = scalar_select 0, %s7, %s5
  // Predicated region
  $region2: #{generator_forward.6} parent=0 // pred_check
    _
  $region3: #{generator_forward.6} parent=0 // pred_check_branch
    %10 = sbr.rel (0) target = $region5
  $region4: #{generator_forward.6} parent=0 // pred_region
    _
  $region5: #{generator_forward.6} parent=0 // pred_fallthru
    _
  // Predicated region
  $region6: #{generator_forward.6} parent=0 // pred_check
    _
  $region7: #{generator_forward.6} parent=0 // pred_check_branch
    %12 = sbr.rel (0) target = $region9
  $region8: #{generator_forward.6} parent=0 // pred_region
    _
  $region9: #{generator_forward.6} parent=0 // pred_fallthru
    _
  // Predicated region
  $region10: #{generator_forward.6} parent=0 // pred_check
    _
  $region11: #{generator_forward.6} parent=0 // pred_check_branch
    %14 = sbr.rel (0) target = $region13
  $region12: #{generator_forward.6} parent=0 // pred_region
    _
  $region13: #{generator_forward.6} parent=0 // pred_fallthru
    _
  // Predicated region
  $region14: #{generator_forward.6} parent=0 // pred_check
    _
  $region15: #{generator_forward.6} parent=0 // pred_check_branch
    %16 = sbr.rel (0) target = $region17
  $region16: #{generator_forward.6} parent=0 // pred_region
    _
  $region17: #{generator_forward.6} parent=0 // pred_fallthru
    _
  %v18 = vld [vmem:[%s0] sm:$0xff]
  %v19 = vld [vmem:[%s0 + $0x8] sm:$0xff]
  %v20 = vld [vmem:[%s0 + $0x10] sm:$0xff]
  %v21 = vld [vmem:[%s0 + $0x18] sm:$0xff]
  %v22 = vld [vmem:[%s0 + $0x20] sm:$0xff]
  %v23 = vld [vmem:[%s0 + $0x28] sm:$0xff]
  %v24 = vld [vmem:[%s0 + $0x30] sm:$0xff]
  %v25 = vld [vmem:[%s0 + $0x38] sm:$0xff]
  %v26 = vld [vmem:[%s0 + $0x40] sm:$0xff]
  %v27 = vld [vmem:[%s0 + $0x48] sm:$0xff]
  %v28 = vld [vmem:[%s0 + $0x50] sm:$0xff]
  %v29 = vld [vmem:[%s0 + $0x58] sm:$0xff]
  %v30 = vld [vmem:[%s0 + $0x60] sm:$0xff]
  %v31 = vld [vmem:[%s0 + $0x68] sm:$0xff]
  %v32 = vld [vmem:[%s0 + $0x70] sm:$0xff]
  %v33 = vld [vmem:[%s0 + $0x78] sm:$0xff]
  %v34 = vld [vmem:[%s0 + $0x80] sm:$0xff]
  %v35 = vld [vmem:[%s0 + $0x88] sm:$0xff]
  %v36 = vld [vmem:[%s0 + $0x90] sm:$0xff]
  %v37 = vld [vmem:[%s0 + $0x98] sm:$0xff]
  %v38 = vld [vmem:[%s0 + $0xa0] sm:$0xff]
  %v39 = vld [vmem:[%s0 + $0xa8] sm:$0xff]
  %v40 = vld [vmem:[%s0 + $0xb0] sm:$0xff]
  %v41 = vld [vmem:[%s0 + $0xb8] sm:$0xff]
  %v42 = vld [vmem:[%s0 + $0xc0] sm:$0xff]
  %v43 = vld [vmem:[%s0 + $0xc8] sm:$0xff]
  %v44 = vld [vmem:[%s0 + $0xd0] sm:$0xff]
  %v45 = vld [vmem:[%s0 + $0xd8] sm:$0xff]
  %v46 = vld [vmem:[%s0 + $0xe0] sm:$0xff]
  %v47 = vld [vmem:[%s0 + $0xe8] sm:$0xff]
  %v48 = vld [vmem:[%s0 + $0xf0] sm:$0xff]
  %v49 = vld [vmem:[%s0 + $0xf8] sm:$0xff]
  %v50 = vld [vmem:[%s1] sm:$0xf]
  %v51 = vld [vmem:[%s1 + $0x4] sm:$0xf]
  %v52 = vld [vmem:[%s1 + $0x8] sm:$0xf]
  %v53 = vld [vmem:[%s1 + $0xc] sm:$0xf]
  %v54 = vld [vmem:[%s1 + $0x10] sm:$0xf]
  %v55 = vld [vmem:[%s1 + $0x14] sm:$0xf]
  %v56 = vld [vmem:[%s1 + $0x18] sm:$0xf]
  %v57 = vld [vmem:[%s1 + $0x1c] sm:$0xf]
  %v58 = vld [vmem:[%s1 + $0x20] sm:$0xf]
  %v59 = vld [vmem:[%s1 + $0x24] sm:$0xf]
  %v60 = vld [vmem:[%s1 + $0x28] sm:$0xf]
  %v61 = vld [vmem:[%s1 + $0x2c] sm:$0xf]
  %v62 = vld [vmem:[%s1 + $0x30] sm:$0xf]
  %v63 = vld [vmem:[%s1 + $0x34] sm:$0xf]
  %v64 = vld [vmem:[%s1 + $0x38] sm:$0xf]
  %v65 = vld [vmem:[%s1 + $0x3c] sm:$0xf]
  %v66 = vld [vmem:[%s1 + $0x40] sm:$0xf]
  %v67 = vld [vmem:[%s1 + $0x44] sm:$0xf]
  %v68 = vld [vmem:[%s1 + $0x48] sm:$0xf]
  %v69 = vld [vmem:[%s1 + $0x4c] sm:$0xf]
  %v70 = vld [vmem:[%s1 + $0x50] sm:$0xf]
  %v71 = vld [vmem:[%s1 + $0x54] sm:$0xf]
  %v72 = vld [vmem:[%s1 + $0x58] sm:$0xf]
  %v73 = vld [vmem:[%s1 + $0x5c] sm:$0xf]
  %v74 = vld [vmem:[%s1 + $0x60] sm:$0xf]
  %v75 = vld [vmem:[%s1 + $0x64] sm:$0xf]
  %v76 = vld [vmem:[%s1 + $0x68] sm:$0xf]
  %v77 = vld [vmem:[%s1 + $0x6c] sm:$0xf]
  %v78 = vld [vmem:[%s1 + $0x70] sm:$0xf]
  %v79 = vld [vmem:[%s1 + $0x74] sm:$0xf]
  %v80 = vld [vmem:[%s1 + $0x78] sm:$0xf]
  %v81 = vld [vmem:[%s1 + $0x7c] sm:$0xf]
  %v82 = vld [vmem:[%s1 + $0x80] sm:$0xf]
  %v83 = vld [vmem:[%s1 + $0x84] sm:$0xf]
  %v84 = vld [vmem:[%s1 + $0x88] sm:$0xf]
  %v85 = vld [vmem:[%s1 + $0x8c] sm:$0xf]
  %v86 = vld [vmem:[%s1 + $0x90] sm:$0xf]
  %v87 = vld [vmem:[%s1 + $0x94] sm:$0xf]
  %v88 = vld [vmem:[%s1 + $0x98] sm:$0xf]
  %v89 = vld [vmem:[%s1 + $0x9c] sm:$0xf]
  %v90 = vld [vmem:[%s1 + $0xa0] sm:$0xf]
  %v91 = vld [vmem:[%s1 + $0xa4] sm:$0xf]
  %v92 = vld [vmem:[%s1 + $0xa8] sm:$0xf]
  %v93 = vld [vmem:[%s1 + $0xac] sm:$0xf]
  %v94 = vld [vmem:[%s1 + $0xb0] sm:$0xf]
  %v95 = vld [vmem:[%s1 + $0xb4] sm:$0xf]
  %v96 = vld [vmem:[%s1 + $0xb8] sm:$0xf]
  %v97 = vld [vmem:[%s1 + $0xbc] sm:$0xf]
  %v98 = vld [vmem:[%s1 + $0xc0] sm:$0xf]
  %v99 = vld [vmem:[%s1 + $0xc4] sm:$0xf]
  %v100 = vld [vmem:[%s1 + $0xc8] sm:$0xf]
  %v101 = vld [vmem:[%s1 + $0xcc] sm:$0xf]
  %v102 = vld [vmem:[%s1 + $0xd0] sm:$0xf]
  %v103 = vld [vmem:[%s1 + $0xd4] sm:$0xf]
  %v104 = vld [vmem:[%s1 + $0xd8] sm:$0xf]
  %v105 = vld [vmem:[%s1 + $0xdc] sm:$0xf]
  %v106 = vld [vmem:[%s1 + $0xe0] sm:$0xf]
  %v107 = vld [vmem:[%s1 + $0xe4] sm:$0xf]
  %v108 = vld [vmem:[%s1 + $0xe8] sm:$0xf]
  %v109 = vld [vmem:[%s1 + $0xec] sm:$0xf]
  %v110 = vld [vmem:[%s1 + $0xf0] sm:$0xf]
  %v111 = vld [vmem:[%s1 + $0xf4] sm:$0xf]
  %v112 = vld [vmem:[%s1 + $0xf8] sm:$0xf]
  %v113 = vld [vmem:[%s1 + $0xfc] sm:$0xf]
  %v146 = vunpack.c.l.b16 %v18
  %v147 = vunpack.c.h.b16 %v18
  %v148 = vunpack.c.l.b16 %v19
  %v149 = vunpack.c.h.b16 %v19
  %v150 = vunpack.c.l.b16 %v20
  %v151 = vunpack.c.h.b16 %v20
  %v152 = vunpack.c.l.b16 %v21
  %v153 = vunpack.c.h.b16 %v21
  %v154 = vunpack.c.l.b16 %v22
  %v155 = vunpack.c.h.b16 %v22
  %v156 = vunpack.c.l.b16 %v23
  %v157 = vunpack.c.h.b16 %v23
  %v158 = vunpack.c.l.b16 %v24
  %v159 = vunpack.c.h.b16 %v24
  %v160 = vunpack.c.l.b16 %v25
  %v161 = vunpack.c.h.b16 %v25
  %v162 = vunpack.c.l.b16 %v26
  %v163 = vunpack.c.h.b16 %v26
  %v164 = vunpack.c.l.b16 %v27
  %v165 = vunpack.c.h.b16 %v27
  %v166 = vunpack.c.l.b16 %v28
  %v167 = vunpack.c.h.b16 %v28
  %v168 = vunpack.c.l.b16 %v29
  %v169 = vunpack.c.h.b16 %v29
  %v170 = vunpack.c.l.b16 %v30
  %v171 = vunpack.c.h.b16 %v30
  %v172 = vunpack.c.l.b16 %v31
  %v173 = vunpack.c.h.b16 %v31
  %v174 = vunpack.c.l.b16 %v32
  %v175 = vunpack.c.h.b16 %v32
  %v176 = vunpack.c.l.b16 %v33
  %v177 = vunpack.c.h.b16 %v33
  %v178 = vunpack.c.l.b16 %v34
  %v179 = vunpack.c.h.b16 %v34
  %v180 = vunpack.c.l.b16 %v35
  %v181 = vunpack.c.h.b16 %v35
  %v182 = vunpack.c.l.b16 %v36
  %v183 = vunpack.c.h.b16 %v36
  %v184 = vunpack.c.l.b16 %v37
  %v185 = vunpack.c.h.b16 %v37
  %v186 = vunpack.c.l.b16 %v38
  %v187 = vunpack.c.h.b16 %v38
  %v188 = vunpack.c.l.b16 %v39
  %v189 = vunpack.c.h.b16 %v39
  %v190 = vunpack.c.l.b16 %v40
  %v191 = vunpack.c.h.b16 %v40
  %v192 = vunpack.c.l.b16 %v41
  %v193 = vunpack.c.h.b16 %v41
  %v194 = vunpack.c.l.b16 %v42
  %v195 = vunpack.c.h.b16 %v42
  %v196 = vunpack.c.l.b16 %v43
  %v197 = vunpack.c.h.b16 %v43
  %v198 = vunpack.c.l.b16 %v44
  %v199 = vunpack.c.h.b16 %v44
  %v200 = vunpack.c.l.b16 %v45
  %v201 = vunpack.c.h.b16 %v45
  %v202 = vunpack.c.l.b16 %v46
  %v203 = vunpack.c.h.b16 %v46
  %v204 = vunpack.c.l.b16 %v47
  %v205 = vunpack.c.h.b16 %v47
  %v206 = vunpack.c.l.b16 %v48
  %v207 = vunpack.c.h.b16 %v48
  %v208 = vunpack.c.l.b16 %v49
  %v209 = vunpack.c.h.b16 %v49
  %v210 = vpack.c.b16 %v150, %v146
  %v211 = vpack.c.b16 %v151, %v147
  %v212 = vpack.c.b16 %v152, %v148
  %v213 = vpack.c.b16 %v153, %v149
  %v214 = vpack.c.b16 %v158, %v154
  %v215 = vpack.c.b16 %v159, %v155
  %v216 = vpack.c.b16 %v160, %v156
  %v217 = vpack.c.b16 %v161, %v157
  %v218 = vpack.c.b16 %v166, %v162
  %v219 = vpack.c.b16 %v167, %v163
  %v220 = vpack.c.b16 %v168, %v164
  %v221 = vpack.c.b16 %v169, %v165
  %v222 = vpack.c.b16 %v174, %v170
  %v223 = vpack.c.b16 %v175, %v171
  %v224 = vpack.c.b16 %v176, %v172
  %v225 = vpack.c.b16 %v177, %v173
  %v226 = vpack.c.b16 %v182, %v178
  %v227 = vpack.c.b16 %v183, %v179
  %v228 = vpack.c.b16 %v184, %v180
  %v229 = vpack.c.b16 %v185, %v181
  %v230 = vpack.c.b16 %v190, %v186
  %v231 = vpack.c.b16 %v191, %v187
  %v232 = vpack.c.b16 %v192, %v188
  %v233 = vpack.c.b16 %v193, %v189
  %v234 = vpack.c.b16 %v198, %v194
  %v235 = vpack.c.b16 %v199, %v195
  %v236 = vpack.c.b16 %v200, %v196
  %v237 = vpack.c.b16 %v201, %v197
  %v238 = vpack.c.b16 %v206, %v202
  %v239 = vpack.c.b16 %v207, %v203
  %v240 = vpack.c.b16 %v208, %v204
  %v241 = vpack.c.b16 %v209, %v205
  %v338 = vunpack.c.l.b16 %v50
  %v339 = vunpack.c.l.b16 %v51
  %v340 = vunpack.c.l.b16 %v52
  %v341 = vunpack.c.l.b16 %v53
  %v342 = vunpack.c.l.b16 %v54
  %v343 = vunpack.c.l.b16 %v55
  %v344 = vunpack.c.l.b16 %v56
  %v345 = vunpack.c.l.b16 %v57
  %v346 = vunpack.c.l.b16 %v58
  %v347 = vunpack.c.l.b16 %v59
  %v348 = vunpack.c.l.b16 %v60
  %v349 = vunpack.c.l.b16 %v61
  %v350 = vunpack.c.l.b16 %v62
  %v351 = vunpack.c.l.b16 %v63
  %v352 = vunpack.c.l.b16 %v64
  %v353 = vunpack.c.l.b16 %v65
  %v354 = vunpack.c.l.b16 %v66
  %v355 = vunpack.c.l.b16 %v67
  %v356 = vunpack.c.l.b16 %v68
  %v357 = vunpack.c.l.b16 %v69
  %v358 = vunpack.c.l.b16 %v70
  %v359 = vunpack.c.l.b16 %v71
  %v360 = vunpack.c.l.b16 %v72
  %v361 = vunpack.c.l.b16 %v73
  %v362 = vunpack.c.l.b16 %v74
  %v363 = vunpack.c.l.b16 %v75
  %v364 = vunpack.c.l.b16 %v76
  %v365 = vunpack.c.l.b16 %v77
  %v366 = vunpack.c.l.b16 %v78
  %v367 = vunpack.c.l.b16 %v79
  %v368 = vunpack.c.l.b16 %v80
  %v369 = vunpack.c.l.b16 %v81
  %v370 = vunpack.c.l.b16 %v82
  %v371 = vunpack.c.l.b16 %v83
  %v372 = vunpack.c.l.b16 %v84
  %v373 = vunpack.c.l.b16 %v85
  %v374 = vunpack.c.l.b16 %v86
  %v375 = vunpack.c.l.b16 %v87
  %v376 = vunpack.c.l.b16 %v88
  %v377 = vunpack.c.l.b16 %v89
  %v378 = vunpack.c.l.b16 %v90
  %v379 = vunpack.c.l.b16 %v91
  %v380 = vunpack.c.l.b16 %v92
  %v381 = vunpack.c.l.b16 %v93
  %v382 = vunpack.c.l.b16 %v94
  %v383 = vunpack.c.l.b16 %v95
  %v384 = vunpack.c.l.b16 %v96
  %v385 = vunpack.c.l.b16 %v97
  %v386 = vunpack.c.l.b16 %v98
  %v387 = vunpack.c.l.b16 %v99
  %v388 = vunpack.c.l.b16 %v100
  %v389 = vunpack.c.l.b16 %v101
  %v390 = vunpack.c.l.b16 %v102
  %v391 = vunpack.c.l.b16 %v103
  %v392 = vunpack.c.l.b16 %v104
  %v393 = vunpack.c.l.b16 %v105
  %v394 = vunpack.c.l.b16 %v106
  %v395 = vunpack.c.l.b16 %v107
  %v396 = vunpack.c.l.b16 %v108
  %v397 = vunpack.c.l.b16 %v109
  %v398 = vunpack.c.l.b16 %v110
  %v399 = vunpack.c.l.b16 %v111
  %v400 = vunpack.c.l.b16 %v112
  %v401 = vunpack.c.l.b16 %v113
  %v402 = vpack.c.b16 %v339, %v338
  %v403 = vpack.c.b16 %v341, %v340
  %v404 = vpack.c.b16 %v343, %v342
  %v405 = vpack.c.b16 %v345, %v344
  %v406 = vpack.c.b16 %v347, %v346
  %v407 = vpack.c.b16 %v349, %v348
  %v408 = vpack.c.b16 %v351, %v350
  %v409 = vpack.c.b16 %v353, %v352
  %v410 = vpack.c.b16 %v355, %v354
  %v411 = vpack.c.b16 %v357, %v356
  %v412 = vpack.c.b16 %v359, %v358
  %v413 = vpack.c.b16 %v361, %v360
  %v414 = vpack.c.b16 %v363, %v362
  %v415 = vpack.c.b16 %v365, %v364
  %v416 = vpack.c.b16 %v367, %v366
  %v417 = vpack.c.b16 %v369, %v368
  %v418 = vpack.c.b16 %v371, %v370
  %v419 = vpack.c.b16 %v373, %v372
  %v420 = vpack.c.b16 %v375, %v374
  %v421 = vpack.c.b16 %v377, %v376
  %v422 = vpack.c.b16 %v379, %v378
  %v423 = vpack.c.b16 %v381, %v380
  %v424 = vpack.c.b16 %v383, %v382
  %v425 = vpack.c.b16 %v385, %v384
  %v426 = vpack.c.b16 %v387, %v386
  %v427 = vpack.c.b16 %v389, %v388
  %v428 = vpack.c.b16 %v391, %v390
  %v429 = vpack.c.b16 %v393, %v392
  %v430 = vpack.c.b16 %v395, %v394
  %v431 = vpack.c.b16 %v397, %v396
  %v432 = vpack.c.b16 %v399, %v398
  %v433 = vpack.c.b16 %v401, %v400
  %466 = vmatprep.subr.bf16.mxu0 0
  %467 = vmatpush1.bf16.msra.mxu0 %v402
  %468 = vmatprep.subr.bf16.mxu0 0
  %469 = vmatpush1.bf16.msra.mxu0 %v403
  %470 = vmatprep.subr.bf16.mxu0 0
  %471 = vmatpush1.bf16.msra.mxu0 %v404
  %472 = vmatprep.subr.bf16.mxu0 0
  %473 = vmatpush1.bf16.msra.mxu0 %v405
  %474 = vmatprep.subr.bf16.mxu0 0
  %475 = vmatpush1.bf16.msra.mxu0 %v406
  %476 = vmatprep.subr.bf16.mxu0 0
  %477 = vmatpush1.bf16.msra.mxu0 %v407
  %478 = vmatprep.subr.bf16.mxu0 0
  %479 = vmatpush1.bf16.msra.mxu0 %v408
  %480 = vmatprep.subr.bf16.mxu0 0
  %481 = vmatpush1.bf16.msra.mxu0 %v409
  %482 = vmatprep.subr.bf16.mxu0 0
  %483 = vmatpush1.bf16.msra.mxu0 %v410
  %484 = vmatprep.subr.bf16.mxu0 0
  %485 = vmatpush1.bf16.msra.mxu0 %v411
  %486 = vmatprep.subr.bf16.mxu0 0
  %487 = vmatpush1.bf16.msra.mxu0 %v412
  %488 = vmatprep.subr.bf16.mxu0 0
  %489 = vmatpush1.bf16.msra.mxu0 %v413
  %490 = vmatprep.subr.bf16.mxu0 0
  %491 = vmatpush1.bf16.msra.mxu0 %v414
  %492 = vmatprep.subr.bf16.mxu0 0
  %493 = vmatpush1.bf16.msra.mxu0 %v415
  %494 = vmatprep.subr.bf16.mxu0 0
  %495 = vmatpush1.bf16.msra.mxu0 %v416
  %496 = vmatprep.subr.bf16.mxu0 0
  %497 = vmatpush1.bf16.msra.mxu0 %v417
  %498 = vmatprep.mubr.bf16.mxu0 %v211
  %499 = vmatmul.mubr.bf16.gmra.mrb[0].mxu0 %v210
  %v500 = vpop.f32.mrb[0].mxu0
  %v501 = vadd.f32 0.0, %v500
  %v502 = vpop.f32.mrb[0].mxu0
  %v503 = vpop.f32.mrb[0].mxu0
  %v504 = vadd.f32 0.0, %v503
  %v505 = vpop.f32.mrb[0].mxu0
  %506 = vmatprep.mubr.bf16.mxu0 %v215
  %507 = vmatmul.mubr.bf16.gmra.mrb[0].mxu0 %v214
  %v508 = vpop.f32.mrb[0].mxu0
  %v509 = vadd.f32 0.0, %v508
  %v510 = vpop.f32.mrb[0].mxu0
  %v511 = vpop.f32.mrb[0].mxu0
  %v512 = vadd.f32 0.0, %v511
  %v513 = vpop.f32.mrb[0].mxu0
  %514 = vmatprep.mubr.bf16.mxu0 %v219
  %515 = vmatmul.mubr.bf16.gmra.mrb[0].mxu0 %v218
  %v516 = vpop.f32.mrb[0].mxu0
  %v517 = vadd.f32 0.0, %v516
  %v518 = vpop.f32.mrb[0].mxu0
  %v519 = vpop.f32.mrb[0].mxu0
  %v520 = vadd.f32 0.0, %v519
  %v521 = vpop.f32.mrb[0].mxu0
  %522 = vmatprep.mubr.bf16.mxu0 %v223
  %523 = vmatmul.mubr.bf16.gmra.mrb[0].mxu0 %v222
  %v524 = vpop.f32.mrb[0].mxu0
  %v525 = vadd.f32 0.0, %v524
  %v526 = vpop.f32.mrb[0].mxu0
  %v527 = vpop.f32.mrb[0].mxu0
  %v528 = vadd.f32 0.0, %v527
  %v529 = vpop.f32.mrb[0].mxu0
  %530 = vmatprep.mubr.bf16.mxu0 %v227
  %531 = vmatmul.mubr.bf16.gmra.mrb[0].mxu0 %v226
  %v532 = vpop.f32.mrb[0].mxu0
  %v533 = vadd.f32 0.0, %v532
  %v534 = vpop.f32.mrb[0].mxu0
  %v535 = vpop.f32.mrb[0].mxu0
  %v536 = vadd.f32 0.0, %v535
  %v537 = vpop.f32.mrb[0].mxu0
  %538 = vmatprep.mubr.bf16.mxu0 %v231
  %539 = vmatmul.mubr.bf16.gmra.mrb[0].mxu0 %v230
  %v540 = vpop.f32.mrb[0].mxu0
  %v541 = vadd.f32 0.0, %v540
  %v542 = vpop.f32.mrb[0].mxu0
  %v543 = vpop.f32.mrb[0].mxu0
  %v544 = vadd.f32 0.0, %v543
  %v545 = vpop.f32.mrb[0].mxu0
  %546 = vmatprep.mubr.bf16.mxu0 %v235
  %547 = vmatmul.mubr.bf16.gmra.mrb[0].mxu0 %v234
  %v548 = vpop.f32.mrb[0].mxu0
  %v549 = vadd.f32 0.0, %v548
  %v550 = vpop.f32.mrb[0].mxu0
  %v551 = vpop.f32.mrb[0].mxu0
  %v552 = vadd.f32 0.0, %v551
  %v553 = vpop.f32.mrb[0].mxu0
  %554 = vmatprep.mubr.bf16.mxu0 %v239
  %555 = vmatmul.mubr.bf16.gmra.mrb[0].mxu0 %v238
  %v556 = vpop.f32.mrb[0].mxu0
  %v557 = vadd.f32 0.0, %v556
  %v558 = vpop.f32.mrb[0].mxu0
  %v559 = vpop.f32.mrb[0].mxu0
  %v560 = vadd.f32 0.0, %v559
  %v561 = vpop.f32.mrb[0].mxu0
  %562 = vdwg.mxu0
  %563 = vmatprep.subr.bf16.mxu0 0
  %564 = vmatpush1.bf16.msra.mxu0 %v418
  %565 = vmatprep.subr.bf16.mxu0 0
  %566 = vmatpush1.bf16.msra.mxu0 %v419
  %567 = vmatprep.subr.bf16.mxu0 0
  %568 = vmatpush1.bf16.msra.mxu0 %v420
  %569 = vmatprep.subr.bf16.mxu0 0
  %570 = vmatpush1.bf16.msra.mxu0 %v421
  %571 = vmatprep.subr.bf16.mxu0 0
  %572 = vmatpush1.bf16.msra.mxu0 %v422
  %573 = vmatprep.subr.bf16.mxu0 0
  %574 = vmatpush1.bf16.msra.mxu0 %v423
  %575 = vmatprep.subr.bf16.mxu0 0
  %576 = vmatpush1.bf16.msra.mxu0 %v424
  %577 = vmatprep.subr.bf16.mxu0 0
  %578 = vmatpush1.bf16.msra.mxu0 %v425
  %579 = vmatprep.subr.bf16.mxu0 0
  %580 = vmatpush1.bf16.msra.mxu0 %v426
  %581 = vmatprep.subr.bf16.mxu0 0
  %582 = vmatpush1.bf16.msra.mxu0 %v427
  %583 = vmatprep.subr.bf16.mxu0 0
  %584 = vmatpush1.bf16.msra.mxu0 %v428
  %585 = vmatprep.subr.bf16.mxu0 0
  %586 = vmatpush1.bf16.msra.mxu0 %v429
  %587 = vmatprep.subr.bf16.mxu0 0
  %588 = vmatpush1.bf16.msra.mxu0 %v430
  %589 = vmatprep.subr.bf16.mxu0 0
  %590 = vmatpush1.bf16.msra.mxu0 %v431
  %591 = vmatprep.subr.bf16.mxu0 0
  %592 = vmatpush1.bf16.msra.mxu0 %v432
  %593 = vmatprep.subr.bf16.mxu0 0
  %594 = vmatpush1.bf16.msra.mxu0 %v433
  %595 = vmatprep.mubr.bf16.mxu0 %v213
  %596 = vmatmul.mubr.bf16.gmra.mrb[0].mxu0 %v212
  %v597 = vpop.f32.mrb[0].mxu0
  %v598 = vadd.f32 %v501, %v597
  %v599 = vpop.f32.mrb[0].mxu0
  %v600 = vpop.f32.mrb[0].mxu0
  %v601 = vadd.f32 %v504, %v600
  %v602 = vpop.f32.mrb[0].mxu0
  %603 = vmatprep.mubr.bf16.mxu0 %v217
  %604 = vmatmul.mubr.bf16.gmra.mrb[0].mxu0 %v216
  %v605 = vpop.f32.mrb[0].mxu0
  %v606 = vadd.f32 %v509, %v605
  %v607 = vpop.f32.mrb[0].mxu0
  %v608 = vpop.f32.mrb[0].mxu0
  %v609 = vadd.f32 %v512, %v608
  %v610 = vpop.f32.mrb[0].mxu0
  %611 = vmatprep.mubr.bf16.mxu0 %v221
  %612 = vmatmul.mubr.bf16.gmra.mrb[0].mxu0 %v220
  %v613 = vpop.f32.mrb[0].mxu0
  %v614 = vadd.f32 %v517, %v613
  %v615 = vpop.f32.mrb[0].mxu0
  %v616 = vpop.f32.mrb[0].mxu0
  %v617 = vadd.f32 %v520, %v616
  %v618 = vpop.f32.mrb[0].mxu0
  %619 = vmatprep.mubr.bf16.mxu0 %v225
  %620 = vmatmul.mubr.bf16.gmra.mrb[0].mxu0 %v224
  %v621 = vpop.f32.mrb[0].mxu0
  %v622 = vadd.f32 %v525, %v621
  %v623 = vpop.f32.mrb[0].mxu0
  %v624 = vpop.f32.mrb[0].mxu0
  %v625 = vadd.f32 %v528, %v624
  %v626 = vpop.f32.mrb[0].mxu0
  %627 = vmatprep.mubr.bf16.mxu0 %v229
  %628 = vmatmul.mubr.bf16.gmra.mrb[0].mxu0 %v228
  %v629 = vpop.f32.mrb[0].mxu0
  %v630 = vadd.f32 %v533, %v629
  %v631 = vpop.f32.mrb[0].mxu0
  %v632 = vpop.f32.mrb[0].mxu0
  %v633 = vadd.f32 %v536, %v632
  %v634 = vpop.f32.mrb[0].mxu0
  %635 = vmatprep.mubr.bf16.mxu0 %v233
  %636 = vmatmul.mubr.bf16.gmra.mrb[0].mxu0 %v232
  %v637 = vpop.f32.mrb[0].mxu0
  %v638 = vadd.f32 %v541, %v637
  %v639 = vpop.f32.mrb[0].mxu0
  %v640 = vpop.f32.mrb[0].mxu0
  %v641 = vadd.f32 %v544, %v640
  %v642 = vpop.f32.mrb[0].mxu0
  %643 = vmatprep.mubr.bf16.mxu0 %v237
  %644 = vmatmul.mubr.bf16.gmra.mrb[0].mxu0 %v236
  %v645 = vpop.f32.mrb[0].mxu0
  %v646 = vadd.f32 %v549, %v645
  %v647 = vpop.f32.mrb[0].mxu0
  %v648 = vpop.f32.mrb[0].mxu0
  %v649 = vadd.f32 %v552, %v648
  %v650 = vpop.f32.mrb[0].mxu0
  %651 = vmatprep.mubr.bf16.mxu0 %v241
  %652 = vmatmul.mubr.bf16.gmra.mrb[0].mxu0 %v240
  %v653 = vpop.f32.mrb[0].mxu0
  %v654 = vadd.f32 %v557, %v653
  %v655 = vpop.f32.mrb[0].mxu0
  %v656 = vpop.f32.mrb[0].mxu0
  %v657 = vadd.f32 %v560, %v656
  %v658 = vpop.f32.mrb[0].mxu0
  %659 = vdwg.mxu0
  %660 = vst [vmem:[%s4] sm:$0xff] %v598
  %661 = vst [vmem:[%s4 + $0x8] sm:$0xff] %v601
  %662 = vst [vmem:[%s4 + $0x10] sm:$0xff] %v606
  %663 = vst [vmem:[%s4 + $0x18] sm:$0xff] %v609
  %664 = vst [vmem:[%s4 + $0x20] sm:$0xff] %v614
  %665 = vst [vmem:[%s4 + $0x28] sm:$0xff] %v617
  %666 = vst [vmem:[%s4 + $0x30] sm:$0xff] %v622
  %667 = vst [vmem:[%s4 + $0x38] sm:$0xff] %v625
  %668 = vst [vmem:[%s4 + $0x40] sm:$0xff] %v630
  %669 = vst [vmem:[%s4 + $0x48] sm:$0xff] %v633
  %670 = vst [vmem:[%s4 + $0x50] sm:$0xff] %v638
  %671 = vst [vmem:[%s4 + $0x58] sm:$0xff] %v641
  %672 = vst [vmem:[%s4 + $0x60] sm:$0xff] %v646
  %673 = vst [vmem:[%s4 + $0x68] sm:$0xff] %v649
  %674 = vst [vmem:[%s4 + $0x70] sm:$0xff] %v654
  %675 = vst [vmem:[%s4 + $0x78] sm:$0xff] %v657
  %v676 = vadd.f32 %v598, %v601
  %v677 = vadd.f32 %v676, %v606
  %v678 = vadd.f32 %v677, %v609
  %v679 = vadd.f32 %v678, %v614
  %v680 = vadd.f32 %v679, %v617
  %v681 = vadd.f32 %v680, %v622
  %v682 = vadd.f32 %v681, %v625
  %v683 = vadd.f32 %v682, %v630
  %v684 = vadd.f32 %v683, %v633
  %v685 = vadd.f32 %v684, %v638
  %v686 = vadd.f32 %v685, %v641
  %v687 = vadd.f32 %v686, %v646
  %v688 = vadd.f32 %v687, %v649
  %v689 = vadd.f32 %v688, %v654
  %v690 = vadd.f32 %v689, %v657
  %v691 = vrot.slane %v690, 4
  %v692 = vadd.f32 %v690, %v691
  %v693 = vrot.slane %v692, 2
  %v694 = vadd.f32 %v692, %v693
  %v695 = vrot.slane %v694, 1
  %v696 = vadd.f32 %v694, %v695
  %v697 = vadd.f32 %v696, 0.0
  %v698 = vmul.f32 %v598, %v598
  %v699 = vmul.f32 %v601, %v601
  %v700 = vmul.f32 %v606, %v606
  %v701 = vmul.f32 %v609, %v609
  %v702 = vmul.f32 %v614, %v614
  %v703 = vmul.f32 %v617, %v617
  %v704 = vmul.f32 %v622, %v622
  %v705 = vmul.f32 %v625, %v625
  %v706 = vmul.f32 %v630, %v630
  %v707 = vmul.f32 %v633, %v633
  %v708 = vmul.f32 %v638, %v638
  %v709 = vmul.f32 %v641, %v641
  %v710 = vmul.f32 %v646, %v646
  %v711 = vmul.f32 %v649, %v649
  %v712 = vmul.f32 %v654, %v654
  %v713 = vmul.f32 %v657, %v657
  %v714 = vadd.f32 %v698, %v699
  %v715 = vadd.f32 %v714, %v700
  %v716 = vadd.f32 %v715, %v701
  %v717 = vadd.f32 %v716, %v702
  %v718 = vadd.f32 %v717, %v703
  %v719 = vadd.f32 %v718, %v704
  %v720 = vadd.f32 %v719, %v705
  %v721 = vadd.f32 %v720, %v706
  %v722 = vadd.f32 %v721, %v707
  %v723 = vadd.f32 %v722, %v708
  %v724 = vadd.f32 %v723, %v709
  %v725 = vadd.f32 %v724, %v710
  %v726 = vadd.f32 %v725, %v711
  %v727 = vadd.f32 %v726, %v712
  %v728 = vadd.f32 %v727, %v713
  %v729 = vrot.slane %v728, 4
  %v730 = vadd.f32 %v728, %v729
  %v731 = vrot.slane %v730, 2
  %v732 = vadd.f32 %v730, %v731
  %v733 = vrot.slane %v732, 1
  %v734 = vadd.f32 %v732, %v733
  %v735 = vadd.f32 %v734, 0.0
  %s736 = scalar_lea.vmem %s0, 256
  %v737 = vld [vmem:[%s736] sm:$0xff]
  %v738 = vld [vmem:[%s736 + $0x8] sm:$0xff]
  %v739 = vld [vmem:[%s736 + $0x10] sm:$0xff]
  %v740 = vld [vmem:[%s736 + $0x18] sm:$0xff]
  %v741 = vld [vmem:[%s736 + $0x20] sm:$0xff]
  %v742 = vld [vmem:[%s736 + $0x28] sm:$0xff]
  %v743 = vld [vmem:[%s736 + $0x30] sm:$0xff]
  %v744 = vld [vmem:[%s736 + $0x38] sm:$0xff]
  %v745 = vld [vmem:[%s736 + $0x40] sm:$0xff]
  %v746 = vld [vmem:[%s736 + $0x48] sm:$0xff]
  %v747 = vld [vmem:[%s736 + $0x50] sm:$0xff]
  %v748 = vld [vmem:[%s736 + $0x58] sm:$0xff]
  %v749 = vld [vmem:[%s736 + $0x60] sm:$0xff]
  %v750 = vld [vmem:[%s736 + $0x68] sm:$0xff]
  %v751 = vld [vmem:[%s736 + $0x70] sm:$0xff]
  %v752 = vld [vmem:[%s736 + $0x78] sm:$0xff]
  %v753 = vld [vmem:[%s736 + $0x80] sm:$0xff]
  %v754 = vld [vmem:[%s736 + $0x88] sm:$0xff]
  %v755 = vld [vmem:[%s736 + $0x90] sm:$0xff]
  %v756 = vld [vmem:[%s736 + $0x98] sm:$0xff]
  %v757 = vld [vmem:[%s736 + $0xa0] sm:$0xff]
  %v758 = vld [vmem:[%s736 + $0xa8] sm:$0xff]
  %v759 = vld [vmem:[%s736 + $0xb0] sm:$0xff]
  %v760 = vld [vmem:[%s736 + $0xb8] sm:$0xff]
  %v761 = vld [vmem:[%s736 + $0xc0] sm:$0xff]
  %v762 = vld [vmem:[%s736 + $0xc8] sm:$0xff]
  %v763 = vld [vmem:[%s736 + $0xd0] sm:$0xff]
  %v764 = vld [vmem:[%s736 + $0xd8] sm:$0xff]
  %v765 = vld [vmem:[%s736 + $0xe0] sm:$0xff]
  %v766 = vld [vmem:[%s736 + $0xe8] sm:$0xff]
  %v767 = vld [vmem:[%s736 + $0xf0] sm:$0xff]
  %v768 = vld [vmem:[%s736 + $0xf8] sm:$0xff]
  %s769 = scalar_lea.vmem %s1, 256
  %v770 = vld [vmem:[%s769] sm:$0xf]
  %v771 = vld [vmem:[%s769 + $0x4] sm:$0xf]
  %v772 = vld [vmem:[%s769 + $0x8] sm:$0xf]
  %v773 = vld [vmem:[%s769 + $0xc] sm:$0xf]
  %v774 = vld [vmem:[%s769 + $0x10] sm:$0xf]
  %v775 = vld [vmem:[%s769 + $0x14] sm:$0xf]
  %v776 = vld [vmem:[%s769 + $0x18] sm:$0xf]
  %v777 = vld [vmem:[%s769 + $0x1c] sm:$0xf]
  %v778 = vld [vmem:[%s769 + $0x20] sm:$0xf]
  %v779 = vld [vmem:[%s769 + $0x24] sm:$0xf]
  %v780 = vld [vmem:[%s769 + $0x28] sm:$0xf]
  %v781 = vld [vmem:[%s769 + $0x2c] sm:$0xf]
  %v782 = vld [vmem:[%s769 + $0x30] sm:$0xf]
  %v783 = vld [vmem:[%s769 + $0x34] sm:$0xf]
  %v784 = vld [vmem:[%s769 + $0x38] sm:$0xf]
  %v785 = vld [vmem:[%s769 + $0x3c] sm:$0xf]
  %v786 = vld [vmem:[%s769 + $0x40] sm:$0xf]
  %v787 = vld [vmem:[%s769 + $0x44] sm:$0xf]
  %v788 = vld [vmem:[%s769 + $0x48] sm:$0xf]
  %v789 = vld [vmem:[%s769 + $0x4c] sm:$0xf]
  %v790 = vld [vmem:[%s769 + $0x50] sm:$0xf]
  %v791 = vld [vmem:[%s769 + $0x54] sm:$0xf]
  %v792 = vld [vmem:[%s769 + $0x58] sm:$0xf]
  %v793 = vld [vmem:[%s769 + $0x5c] sm:$0xf]
  %v794 = vld [vmem:[%s769 + $0x60] sm:$0xf]
  %v795 = vld [vmem:[%s769 + $0x64] sm:$0xf]
  %v796 = vld [vmem:[%s769 + $0x68] sm:$0xf]
  %v797 = vld [vmem:[%s769 + $0x6c] sm:$0xf]
  %v798 = vld [vmem:[%s769 + $0x70] sm:$0xf]
  %v799 = vld [vmem:[%s769 + $0x74] sm:$0xf]
  %v800 = vld [vmem:[%s769 + $0x78] sm:$0xf]
  %v801 = vld [vmem:[%s769 + $0x7c] sm:$0xf]
  %v802 = vld [vmem:[%s769 + $0x80] sm:$0xf]
  %v803 = vld [vmem:[%s769 + $0x84] sm:$0xf]
  %v804 = vld [vmem:[%s769 + $0x88] sm:$0xf]
  %v805 = vld [vmem:[%s769 + $0x8c] sm:$0xf]
  %v806 = vld [vmem:[%s769 + $0x90] sm:$0xf]
  %v807 = vld [vmem:[%s769 + $0x94] sm:$0xf]
  %v808 = vld [vmem:[%s769 + $0x98] sm:$0xf]
  %v809 = vld [vmem:[%s769 + $0x9c] sm:$0xf]
  %v810 = vld [vmem:[%s769 + $0xa0] sm:$0xf]
  %v811 = vld [vmem:[%s769 + $0xa4] sm:$0xf]
  %v812 = vld [vmem:[%s769 + $0xa8] sm:$0xf]
  %v813 = vld [vmem:[%s769 + $0xac] sm:$0xf]
  %v814 = vld [vmem:[%s769 + $0xb0] sm:$0xf]
  %v815 = vld [vmem:[%s769 + $0xb4] sm:$0xf]
  %v816 = vld [vmem:[%s769 + $0xb8] sm:$0xf]
  %v817 = vld [vmem:[%s769 + $0xbc] sm:$0xf]
  %v818 = vld [vmem:[%s769 + $0xc0] sm:$0xf]
  %v819 = vld [vmem:[%s769 + $0xc4] sm:$0xf]
  %v820 = vld [vmem:[%s769 + $0xc8] sm:$0xf]
  %v821 = vld [vmem:[%s769 + $0xcc] sm:$0xf]
  %v822 = vld [vmem:[%s769 + $0xd0] sm:$0xf]
  %v823 = vld [vmem:[%s769 + $0xd4] sm:$0xf]
  %v824 = vld [vmem:[%s769 + $0xd8] sm:$0xf]
  %v825 = vld [vmem:[%s769 + $0xdc] sm:$0xf]
  %v826 = vld [vmem:[%s769 + $0xe0] sm:$0xf]
  %v827 = vld [vmem:[%s769 + $0xe4] sm:$0xf]
  %v828 = vld [vmem:[%s769 + $0xe8] sm:$0xf]
  %v829 = vld [vmem:[%s769 + $0xec] sm:$0xf]
  %v830 = vld [vmem:[%s769 + $0xf0] sm:$0xf]
  %v831 = vld [vmem:[%s769 + $0xf4] sm:$0xf]
  %v832 = vld [vmem:[%s769 + $0xf8] sm:$0xf]
  %v833 = vld [vmem:[%s769 + $0xfc] sm:$0xf]
  %v866 = vunpack.c.l.b16 %v737
  %v867 = vunpack.c.h.b16 %v737
  %v868 = vunpack.c.l.b16 %v738
  %v869 = vunpack.c.h.b16 %v738
  %v870 = vunpack.c.l.b16 %v739
  %v871 = vunpack.c.h.b16 %v739
  %v872 = vunpack.c.l.b16 %v740
  %v873 = vunpack.c.h.b16 %v740
  %v874 = vunpack.c.l.b16 %v741
  %v875 = vunpack.c.h.b16 %v741
  %v876 = vunpack.c.l.b16 %v742
  %v877 = vunpack.c.h.b16 %v742
  %v878 = vunpack.c.l.b16 %v743
  %v879 = vunpack.c.h.b16 %v743
  %v880 = vunpack.c.l.b16 %v744
  %v881 = vunpack.c.h.b16 %v744
  %v882 = vunpack.c.l.b16 %v745
  %v883 = vunpack.c.h.b16 %v745
  %v884 = vunpack.c.l.b16 %v746
  %v885 = vunpack.c.h.b16 %v746
  %v886 = vunpack.c.l.b16 %v747
  %v887 = vunpack.c.h.b16 %v747
  %v888 = vunpack.c.l.b16 %v748
  %v889 = vunpack.c.h.b16 %v748
  %v890 = vunpack.c.l.b16 %v749
  %v891 = vunpack.c.h.b16 %v749
  %v892 = vunpack.c.l.b16 %v750
  %v893 = vunpack.c.h.b16 %v750
  %v894 = vunpack.c.l.b16 %v751
  %v895 = vunpack.c.h.b16 %v751
  %v896 = vunpack.c.l.b16 %v752
  %v897 = vunpack.c.h.b16 %v752
  %v898 = vunpack.c.l.b16 %v753
  %v899 = vunpack.c.h.b16 %v753
  %v900 = vunpack.c.l.b16 %v754
  %v901 = vunpack.c.h.b16 %v754
  %v902 = vunpack.c.l.b16 %v755
  %v903 = vunpack.c.h.b16 %v755
  %v904 = vunpack.c.l.b16 %v756
  %v905 = vunpack.c.h.b16 %v756
  %v906 = vunpack.c.l.b16 %v757
  %v907 = vunpack.c.h.b16 %v757
  %v908 = vunpack.c.l.b16 %v758
  %v909 = vunpack.c.h.b16 %v758
  %v910 = vunpack.c.l.b16 %v759
  %v911 = vunpack.c.h.b16 %v759
  %v912 = vunpack.c.l.b16 %v760
  %v913 = vunpack.c.h.b16 %v760
  %v914 = vunpack.c.l.b16 %v761
  %v915 = vunpack.c.h.b16 %v761
  %v916 = vunpack.c.l.b16 %v762
  %v917 = vunpack.c.h.b16 %v762
  %v918 = vunpack.c.l.b16 %v763
  %v919 = vunpack.c.h.b16 %v763
  %v920 = vunpack.c.l.b16 %v764
  %v921 = vunpack.c.h.b16 %v764
  %v922 = vunpack.c.l.b16 %v765
  %v923 = vunpack.c.h.b16 %v765
  %v924 = vunpack.c.l.b16 %v766
  %v925 = vunpack.c.h.b16 %v766
  %v926 = vunpack.c.l.b16 %v767
  %v927 = vunpack.c.h.b16 %v767
  %v928 = vunpack.c.l.b16 %v768
  %v929 = vunpack.c.h.b16 %v768
  %v930 = vpack.c.b16 %v870, %v866
  %v931 = vpack.c.b16 %v871, %v867
  %v932 = vpack.c.b16 %v872, %v868
  %v933 = vpack.c.b16 %v873, %v869
  %v934 = vpack.c.b16 %v878, %v874
  %v935 = vpack.c.b16 %v879, %v875
  %v936 = vpack.c.b16 %v880, %v876
  %v937 = vpack.c.b16 %v881, %v877
  %v938 = vpack.c.b16 %v886, %v882
  %v939 = vpack.c.b16 %v887, %v883
  %v940 = vpack.c.b16 %v888, %v884
  %v941 = vpack.c.b16 %v889, %v885
  %v942 = vpack.c.b16 %v894, %v890
  %v943 = vpack.c.b16 %v895, %v891
  %v944 = vpack.c.b16 %v896, %v892
  %v945 = vpack.c.b16 %v897, %v893
  %v946 = vpack.c.b16 %v902, %v898
  %v947 = vpack.c.b16 %v903, %v899
  %v948 = vpack.c.b16 %v904, %v900
  %v949 = vpack.c.b16 %v905, %v901
  %v950 = vpack.c.b16 %v910, %v906
  %v951 = vpack.c.b16 %v911, %v907
  %v952 = vpack.c.b16 %v912, %v908
  %v953 = vpack.c.b16 %v913, %v909
  %v954 = vpack.c.b16 %v918, %v914
  %v955 = vpack.c.b16 %v919, %v915
  %v956 = vpack.c.b16 %v920, %v916
  %v957 = vpack.c.b16 %v921, %v917
  %v958 = vpack.c.b16 %v926, %v922
  %v959 = vpack.c.b16 %v927, %v923
  %v960 = vpack.c.b16 %v928, %v924
  %v961 = vpack.c.b16 %v929, %v925
  %v1058 = vunpack.c.l.b16 %v770
  %v1059 = vunpack.c.l.b16 %v771
  %v1060 = vunpack.c.l.b16 %v772
  %v1061 = vunpack.c.l.b16 %v773
  %v1062 = vunpack.c.l.b16 %v774
  %v1063 = vunpack.c.l.b16 %v775
  %v1064 = vunpack.c.l.b16 %v776
  %v1065 = vunpack.c.l.b16 %v777
  %v1066 = vunpack.c.l.b16 %v778
  %v1067 = vunpack.c.l.b16 %v779
  %v1068 = vunpack.c.l.b16 %v780
  %v1069 = vunpack.c.l.b16 %v781
  %v1070 = vunpack.c.l.b16 %v782
  %v1071 = vunpack.c.l.b16 %v783
  %v1072 = vunpack.c.l.b16 %v784
  %v1073 = vunpack.c.l.b16 %v785
  %v1074 = vunpack.c.l.b16 %v786
  %v1075 = vunpack.c.l.b16 %v787
  %v1076 = vunpack.c.l.b16 %v788
  %v1077 = vunpack.c.l.b16 %v789
  %v1078 = vunpack.c.l.b16 %v790
  %v1079 = vunpack.c.l.b16 %v791
  %v1080 = vunpack.c.l.b16 %v792
  %v1081 = vunpack.c.l.b16 %v793
  %v1082 = vunpack.c.l.b16 %v794
  %v1083 = vunpack.c.l.b16 %v795
  %v1084 = vunpack.c.l.b16 %v796
  %v1085 = vunpack.c.l.b16 %v797
  %v1086 = vunpack.c.l.b16 %v798
  %v1087 = vunpack.c.l.b16 %v799
  %v1088 = vunpack.c.l.b16 %v800
  %v1089 = vunpack.c.l.b16 %v801
  %v1090 = vunpack.c.l.b16 %v802
  %v1091 = vunpack.c.l.b16 %v803
  %v1092 = vunpack.c.l.b16 %v804
  %v1093 = vunpack.c.l.b16 %v805
  %v1094 = vunpack.c.l.b16 %v806
  %v1095 = vunpack.c.l.b16 %v807
  %v1096 = vunpack.c.l.b16 %v808
  %v1097 = vunpack.c.l.b16 %v809
  %v1098 = vunpack.c.l.b16 %v810
  %v1099 = vunpack.c.l.b16 %v811
  %v1100 = vunpack.c.l.b16 %v812
  %v1101 = vunpack.c.l.b16 %v813
  %v1102 = vunpack.c.l.b16 %v814
  %v1103 = vunpack.c.l.b16 %v815
  %v1104 = vunpack.c.l.b16 %v816
  %v1105 = vunpack.c.l.b16 %v817
  %v1106 = vunpack.c.l.b16 %v818
  %v1107 = vunpack.c.l.b16 %v819
  %v1108 = vunpack.c.l.b16 %v820
  %v1109 = vunpack.c.l.b16 %v821
  %v1110 = vunpack.c.l.b16 %v822
  %v1111 = vunpack.c.l.b16 %v823
  %v1112 = vunpack.c.l.b16 %v824
  %v1113 = vunpack.c.l.b16 %v825
  %v1114 = vunpack.c.l.b16 %v826
  %v1115 = vunpack.c.l.b16 %v827
  %v1116 = vunpack.c.l.b16 %v828
  %v1117 = vunpack.c.l.b16 %v829
  %v1118 = vunpack.c.l.b16 %v830
  %v1119 = vunpack.c.l.b16 %v831
  %v1120 = vunpack.c.l.b16 %v832
  %v1121 = vunpack.c.l.b16 %v833
  %v1122 = vpack.c.b16 %v1059, %v1058
  %v1123 = vpack.c.b16 %v1061, %v1060
  %v1124 = vpack.c.b16 %v1063, %v1062
  %v1125 = vpack.c.b16 %v1065, %v1064
  %v1126 = vpack.c.b16 %v1067, %v1066
  %v1127 = vpack.c.b16 %v1069, %v1068
  %v1128 = vpack.c.b16 %v1071, %v1070
  %v1129 = vpack.c.b16 %v1073, %v1072
  %v1130 = vpack.c.b16 %v1075, %v1074
  %v1131 = vpack.c.b16 %v1077, %v1076
  %v1132 = vpack.c.b16 %v1079, %v1078
  %v1133 = vpack.c.b16 %v1081, %v1080
  %v1134 = vpack.c.b16 %v1083, %v1082
  %v1135 = vpack.c.b16 %v1085, %v1084
  %v1136 = vpack.c.b16 %v1087, %v1086
  %v1137 = vpack.c.b16 %v1089, %v1088
  %v1138 = vpack.c.b16 %v1091, %v1090
  %v1139 = vpack.c.b16 %v1093, %v1092
  %v1140 = vpack.c.b16 %v1095, %v1094
  %v1141 = vpack.c.b16 %v1097, %v1096
  %v1142 = vpack.c.b16 %v1099, %v1098
  %v1143 = vpack.c.b16 %v1101, %v1100
  %v1144 = vpack.c.b16 %v1103, %v1102
  %v1145 = vpack.c.b16 %v1105, %v1104
  %v1146 = vpack.c.b16 %v1107, %v1106
  %v1147 = vpack.c.b16 %v1109, %v1108
  %v1148 = vpack.c.b16 %v1111, %v1110
  %v1149 = vpack.c.b16 %v1113, %v1112
  %v1150 = vpack.c.b16 %v1115, %v1114
  %v1151 = vpack.c.b16 %v1117, %v1116
  %v1152 = vpack.c.b16 %v1119, %v1118
  %v1153 = vpack.c.b16 %v1121, %v1120
  %1186 = vmatprep.subr.bf16.mxu0 0
  %1187 = vmatpush1.bf16.msra.mxu0 %v1122
  %1188 = vmatprep.subr.bf16.mxu0 0
  %1189 = vmatpush1.bf16.msra.mxu0 %v1123
  %1190 = vmatprep.subr.bf16.mxu0 0
  %1191 = vmatpush1.bf16.msra.mxu0 %v1124
  %1192 = vmatprep.subr.bf16.mxu0 0
  %1193 = vmatpush1.bf16.msra.mxu0 %v1125
  %1194 = vmatprep.subr.bf16.mxu0 0
  %1195 = vmatpush1.bf16.msra.mxu0 %v1126
  %1196 = vmatprep.subr.bf16.mxu0 0
  %1197 = vmatpush1.bf16.msra.mxu0 %v1127
  %1198 = vmatprep.subr.bf16.mxu0 0
  %1199 = vmatpush1.bf16.msra.mxu0 %v1128
  %1200 = vmatprep.subr.bf16.mxu0 0
  %1201 = vmatpush1.bf16.msra.mxu0 %v1129
  %1202 = vmatprep.subr.bf16.mxu0 0
  %1203 = vmatpush1.bf16.msra.mxu0 %v1130
  %1204 = vmatprep.subr.bf16.mxu0 0
  %1205 = vmatpush1.bf16.msra.mxu0 %v1131
  %1206 = vmatprep.subr.bf16.mxu0 0
  %1207 = vmatpush1.bf16.msra.mxu0 %v1132
  %1208 = vmatprep.subr.bf16.mxu0 0
  %1209 = vmatpush1.bf16.msra.mxu0 %v1133
  %1210 = vmatprep.subr.bf16.mxu0 0
  %1211 = vmatpush1.bf16.msra.mxu0 %v1134
  %1212 = vmatprep.subr.bf16.mxu0 0
  %1213 = vmatpush1.bf16.msra.mxu0 %v1135
  %1214 = vmatprep.subr.bf16.mxu0 0
  %1215 = vmatpush1.bf16.msra.mxu0 %v1136
  %1216 = vmatprep.subr.bf16.mxu0 0
  %1217 = vmatpush1.bf16.msra.mxu0 %v1137
  %1218 = vmatprep.mubr.bf16.mxu0 %v931
  %1219 = vmatmul.mubr.bf16.gmra.mrb[0].mxu0 %v930
  %v1220 = vpop.f32.mrb[0].mxu0
  %v1221 = vadd.f32 0.0, %v1220
  %v1222 = vpop.f32.mrb[0].mxu0
  %v1223 = vpop.f32.mrb[0].mxu0
  %v1224 = vadd.f32 0.0, %v1223
  %v1225 = vpop.f32.mrb[0].mxu0
  %1226 = vmatprep.mubr.bf16.mxu0 %v935
  %1227 = vmatmul.mubr.bf16.gmra.mrb[0].mxu0 %v934
  %v1228 = vpop.f32.mrb[0].mxu0
  %v1229 = vadd.f32 0.0, %v1228
  %v1230 = vpop.f32.mrb[0].mxu0
  %v1231 = vpop.f32.mrb[0].mxu0
  %v1232 = vadd.f32 0.0, %v1231
  %v1233 = vpop.f32.mrb[0].mxu0
  %1234 = vmatprep.mubr.bf16.mxu0 %v939
  %1235 = vmatmul.mubr.bf16.gmra.mrb[0].mxu0 %v938
  %v1236 = vpop.f32.mrb[0].mxu0
  %v1237 = vadd.f32 0.0, %v1236
  %v1238 = vpop.f32.mrb[0].mxu0
  %v1239 = vpop.f32.mrb[0].mxu0
  %v1240 = vadd.f32 0.0, %v1239
  %v1241 = vpop.f32.mrb[0].mxu0
  %1242 = vmatprep.mubr.bf16.mxu0 %v943
  %1243 = vmatmul.mubr.bf16.gmra.mrb[0].mxu0 %v942
  %v1244 = vpop.f32.mrb[0].mxu0
  %v1245 = vadd.f32 0.0, %v1244
  %v1246 = vpop.f32.mrb[0].mxu0
  %v1247 = vpop.f32.mrb[0].mxu0
  %v1248 = vadd.f32 0.0, %v1247
  %v1249 = vpop.f32.mrb[0].mxu0
  %1250 = vmatprep.mubr.bf16.mxu0 %v947
  %1251 = vmatmul.mubr.bf16.gmra.mrb[0].mxu0 %v946
  %v1252 = vpop.f32.mrb[0].mxu0
  %v1253 = vadd.f32 0.0, %v1252
  %v1254 = vpop.f32.mrb[0].mxu0
  %v1255 = vpop.f32.mrb[0].mxu0
  %v1256 = vadd.f32 0.0, %v1255
  %v1257 = vpop.f32.mrb[0].mxu0
  %1258 = vmatprep.mubr.bf16.mxu0 %v951
  %1259 = vmatmul.mubr.bf16.gmra.mrb[0].mxu0 %v950
  %v1260 = vpop.f32.mrb[0].mxu0
  %v1261 = vadd.f32 0.0, %v1260
  %v1262 = vpop.f32.mrb[0].mxu0
  %v1263 = vpop.f32.mrb[0].mxu0
  %v1264 = vadd.f32 0.0, %v1263
  %v1265 = vpop.f32.mrb[0].mxu0
  %1266 = vmatprep.mubr.bf16.mxu0 %v955
  %1267 = vmatmul.mubr.bf16.gmra.mrb[0].mxu0 %v954
  %v1268 = vpop.f32.mrb[0].mxu0
  %v1269 = vadd.f32 0.0, %v1268
  %v1270 = vpop.f32.mrb[0].mxu0
  %v1271 = vpop.f32.mrb[0].mxu0
  %v1272 = vadd.f32 0.0, %v1271
  %v1273 = vpop.f32.mrb[0].mxu0
  %1274 = vmatprep.mubr.bf16.mxu0 %v959
  %1275 = vmatmul.mubr.bf16.gmra.mrb[0].mxu0 %v958
  %v1276 = vpop.f32.mrb[0].mxu0
  %v1277 = vadd.f32 0.0, %v1276
  %v1278 = vpop.f32.mrb[0].mxu0
  %v1279 = vpop.f32.mrb[0].mxu0
  %v1280 = vadd.f32 0.0, %v1279
  %v1281 = vpop.f32.mrb[0].mxu0
  %1282 = vdwg.mxu0
  %1283 = vmatprep.subr.bf16.mxu0 0
  %1284 = vmatpush1.bf16.msra.mxu0 %v1138
  %1285 = vmatprep.subr.bf16.mxu0 0
  %1286 = vmatpush1.bf16.msra.mxu0 %v1139
  %1287 = vmatprep.subr.bf16.mxu0 0
  %1288 = vmatpush1.bf16.msra.mxu0 %v1140
  %1289 = vmatprep.subr.bf16.mxu0 0
  %1290 = vmatpush1.bf16.msra.mxu0 %v1141
  %1291 = vmatprep.subr.bf16.mxu0 0
  %1292 = vmatpush1.bf16.msra.mxu0 %v1142
  %1293 = vmatprep.subr.bf16.mxu0 0
  %1294 = vmatpush1.bf16.msra.mxu0 %v1143
  %1295 = vmatprep.subr.bf16.mxu0 0
  %1296 = vmatpush1.bf16.msra.mxu0 %v1144
  %1297 = vmatprep.subr.bf16.mxu0 0
  %1298 = vmatpush1.bf16.msra.mxu0 %v1145
  %1299 = vmatprep.subr.bf16.mxu0 0
  %1300 = vmatpush1.bf16.msra.mxu0 %v1146
  %1301 = vmatprep.subr.bf16.mxu0 0
  %1302 = vmatpush1.bf16.msra.mxu0 %v1147
  %1303 = vmatprep.subr.bf16.mxu0 0
  %1304 = vmatpush1.bf16.msra.mxu0 %v1148
  %1305 = vmatprep.subr.bf16.mxu0 0
  %1306 = vmatpush1.bf16.msra.mxu0 %v1149
  %1307 = vmatprep.subr.bf16.mxu0 0
  %1308 = vmatpush1.bf16.msra.mxu0 %v1150
  %1309 = vmatprep.subr.bf16.mxu0 0
  %1310 = vmatpush1.bf16.msra.mxu0 %v1151
  %1311 = vmatprep.subr.bf16.mxu0 0
  %1312 = vmatpush1.bf16.msra.mxu0 %v1152
  %1313 = vmatprep.subr.bf16.mxu0 0
  %1314 = vmatpush1.bf16.msra.mxu0 %v1153
  %1315 = vmatprep.mubr.bf16.mxu0 %v933
  %1316 = vmatmul.mubr.bf16.gmra.mrb[0].mxu0 %v932
  %v1317 = vpop.f32.mrb[0].mxu0
  %v1318 = vadd.f32 %v1221, %v1317
  %v1319 = vpop.f32.mrb[0].mxu0
  %v1320 = vpop.f32.mrb[0].mxu0
  %v1321 = vadd.f32 %v1224, %v1320
  %v1322 = vpop.f32.mrb[0].mxu0
  %1323 = vmatprep.mubr.bf16.mxu0 %v937
  %1324 = vmatmul.mubr.bf16.gmra.mrb[0].mxu0 %v936
  %v1325 = vpop.f32.mrb[0].mxu0
  %v1326 = vadd.f32 %v1229, %v1325
  %v1327 = vpop.f32.mrb[0].mxu0
  %v1328 = vpop.f32.mrb[0].mxu0
  %v1329 = vadd.f32 %v1232, %v1328
  %v1330 = vpop.f32.mrb[0].mxu0
  %1331 = vmatprep.mubr.bf16.mxu0 %v941
  %1332 = vmatmul.mubr.bf16.gmra.mrb[0].mxu0 %v940
  %v1333 = vpop.f32.mrb[0].mxu0
  %v1334 = vadd.f32 %v1237, %v1333
  %v1335 = vpop.f32.mrb[0].mxu0
  %v1336 = vpop.f32.mrb[0].mxu0
  %v1337 = vadd.f32 %v1240, %v1336
  %v1338 = vpop.f32.mrb[0].mxu0
  %1339 = vmatprep.mubr.bf16.mxu0 %v945
  %1340 = vmatmul.mubr.bf16.gmra.mrb[0].mxu0 %v944
  %v1341 = vpop.f32.mrb[0].mxu0
  %v1342 = vadd.f32 %v1245, %v1341
  %v1343 = vpop.f32.mrb[0].mxu0
  %v1344 = vpop.f32.mrb[0].mxu0
  %v1345 = vadd.f32 %v1248, %v1344
  %v1346 = vpop.f32.mrb[0].mxu0
  %1347 = vmatprep.mubr.bf16.mxu0 %v949
  %1348 = vmatmul.mubr.bf16.gmra.mrb[0].mxu0 %v948
  %v1349 = vpop.f32.mrb[0].mxu0
  %v1350 = vadd.f32 %v1253, %v1349
  %v1351 = vpop.f32.mrb[0].mxu0
  %v1352 = vpop.f32.mrb[0].mxu0
  %v1353 = vadd.f32 %v1256, %v1352
  %v1354 = vpop.f32.mrb[0].mxu0
  %1355 = vmatprep.mubr.bf16.mxu0 %v953
  %1356 = vmatmul.mubr.bf16.gmra.mrb[0].mxu0 %v952
  %v1357 = vpop.f32.mrb[0].mxu0
  %v1358 = vadd.f32 %v1261, %v1357
  %v1359 = vpop.f32.mrb[0].mxu0
  %v1360 = vpop.f32.mrb[0].mxu0
  %v1361 = vadd.f32 %v1264, %v1360
  %v1362 = vpop.f32.mrb[0].mxu0
  %1363 = vmatprep.mubr.bf16.mxu0 %v957
  %1364 = vmatmul.mubr.bf16.gmra.mrb[0].mxu0 %v956
  %v1365 = vpop.f32.mrb[0].mxu0
  %v1366 = vadd.f32 %v1269, %v1365
  %v1367 = vpop.f32.mrb[0].mxu0
  %v1368 = vpop.f32.mrb[0].mxu0
  %v1369 = vadd.f32 %v1272, %v1368
  %v1370 = vpop.f32.mrb[0].mxu0
  %1371 = vmatprep.mubr.bf16.mxu0 %v961
  %1372 = vmatmul.mubr.bf16.gmra.mrb[0].mxu0 %v960
  %v1373 = vpop.f32.mrb[0].mxu0
  %v1374 = vadd.f32 %v1277, %v1373
  %v1375 = vpop.f32.mrb[0].mxu0
  %v1376 = vpop.f32.mrb[0].mxu0
  %v1377 = vadd.f32 %v1280, %v1376
  %v1378 = vpop.f32.mrb[0].mxu0
  %1379 = vdwg.mxu0
  %s1380 = scalar_lea.vmem %s4, 128
  %1381 = vst [vmem:[%s1380] sm:$0xff] %v1318
  %1382 = vst [vmem:[%s1380 + $0x8] sm:$0xff] %v1321
  %1383 = vst [vmem:[%s1380 + $0x10] sm:$0xff] %v1326
  %1384 = vst [vmem:[%s1380 + $0x18] sm:$0xff] %v1329
  %1385 = vst [vmem:[%s1380 + $0x20] sm:$0xff] %v1334
  %1386 = vst [vmem:[%s1380 + $0x28] sm:$0xff] %v1337
  %1387 = vst [vmem:[%s1380 + $0x30] sm:$0xff] %v1342
  %1388 = vst [vmem:[%s1380 + $0x38] sm:$0xff] %v1345
  %1389 = vst [vmem:[%s1380 + $0x40] sm:$0xff] %v1350
  %1390 = vst [vmem:[%s1380 + $0x48] sm:$0xff] %v1353
  %1391 = vst [vmem:[%s1380 + $0x50] sm:$0xff] %v1358
  %1392 = vst [vmem:[%s1380 + $0x58] sm:$0xff] %v1361
  %1393 = vst [vmem:[%s1380 + $0x60] sm:$0xff] %v1366
  %1394 = vst [vmem:[%s1380 + $0x68] sm:$0xff] %v1369
  %1395 = vst [vmem:[%s1380 + $0x70] sm:$0xff] %v1374
  %1396 = vst [vmem:[%s1380 + $0x78] sm:$0xff] %v1377
  %v1397 = vadd.f32 %v1318, %v1321
  %v1398 = vadd.f32 %v1397, %v1326
  %v1399 = vadd.f32 %v1398, %v1329
  %v1400 = vadd.f32 %v1399, %v1334
  %v1401 = vadd.f32 %v1400, %v1337
  %v1402 = vadd.f32 %v1401, %v1342
  %v1403 = vadd.f32 %v1402, %v1345
  %v1404 = vadd.f32 %v1403, %v1350
  %v1405 = vadd.f32 %v1404, %v1353
  %v1406 = vadd.f32 %v1405, %v1358
  %v1407 = vadd.f32 %v1406, %v1361
  %v1408 = vadd.f32 %v1407, %v1366
  %v1409 = vadd.f32 %v1408, %v1369
  %v1410 = vadd.f32 %v1409, %v1374
  %v1411 = vadd.f32 %v1410, %v1377
  %v1412 = vrot.slane %v1411, 4
  %v1413 = vadd.f32 %v1411, %v1412
  %v1414 = vrot.slane %v1413, 2
  %v1415 = vadd.f32 %v1413, %v1414
  %v1416 = vrot.slane %v1415, 1
  %v1417 = vadd.f32 %v1415, %v1416
  %v1418 = vadd.f32 %v697, %v1417
  %v1419 = vmul.f32 %v1318, %v1318
  %v1420 = vmul.f32 %v1321, %v1321
  %v1421 = vmul.f32 %v1326, %v1326
  %v1422 = vmul.f32 %v1329, %v1329
  %v1423 = vmul.f32 %v1334, %v1334
  %v1424 = vmul.f32 %v1337, %v1337
  %v1425 = vmul.f32 %v1342, %v1342
  %v1426 = vmul.f32 %v1345, %v1345
  %v1427 = vmul.f32 %v1350, %v1350
  %v1428 = vmul.f32 %v1353, %v1353
  %v1429 = vmul.f32 %v1358, %v1358
  %v1430 = vmul.f32 %v1361, %v1361
  %v1431 = vmul.f32 %v1366, %v1366
  %v1432 = vmul.f32 %v1369, %v1369
  %v1433 = vmul.f32 %v1374, %v1374
  %v1434 = vmul.f32 %v1377, %v1377
  %v1435 = vadd.f32 %v1419, %v1420
  %v1436 = vadd.f32 %v1435, %v1421
  %v1437 = vadd.f32 %v1436, %v1422
  %v1438 = vadd.f32 %v1437, %v1423
  %v1439 = vadd.f32 %v1438, %v1424
  %v1440 = vadd.f32 %v1439, %v1425
  %v1441 = vadd.f32 %v1440, %v1426
  %v1442 = vadd.f32 %v1441, %v1427
  %v1443 = vadd.f32 %v1442, %v1428
  %v1444 = vadd.f32 %v1443, %v1429
  %v1445 = vadd.f32 %v1444, %v1430
  %v1446 = vadd.f32 %v1445, %v1431
  %v1447 = vadd.f32 %v1446, %v1432
  %v1448 = vadd.f32 %v1447, %v1433
  %v1449 = vadd.f32 %v1448, %v1434
  %v1450 = vrot.slane %v1449, 4
  %v1451 = vadd.f32 %v1449, %v1450
  %v1452 = vrot.slane %v1451, 2
  %v1453 = vadd.f32 %v1451, %v1452
  %v1454 = vrot.slane %v1453, 1
  %v1455 = vadd.f32 %v1453, %v1454
  %v1456 = vadd.f32 %v735, %v1455
  %s1457 = scalar_lea.vmem %s0, 512
  %v1458 = vld [vmem:[%s1457] sm:$0xff]
  %v1459 = vld [vmem:[%s1457 + $0x8] sm:$0xff]
  %v1460 = vld [vmem:[%s1457 + $0x10] sm:$0xff]
  %v1461 = vld [vmem:[%s1457 + $0x18] sm:$0xff]
  %v1462 = vld [vmem:[%s1457 + $0x20] sm:$0xff]
  %v1463 = vld [vmem:[%s1457 + $0x28] sm:$0xff]
  %v1464 = vld [vmem:[%s1457 + $0x30] sm:$0xff]
  %v1465 = vld [vmem:[%s1457 + $0x38] sm:$0xff]
  %v1466 = vld [vmem:[%s1457 + $0x40] sm:$0xff]
  %v1467 = vld [vmem:[%s1457 + $0x48] sm:$0xff]
  %v1468 = vld [vmem:[%s1457 + $0x50] sm:$0xff]
  %v1469 = vld [vmem:[%s1457 + $0x58] sm:$0xff]
  %v1470 = vld [vmem:[%s1457 + $0x60] sm:$0xff]
  %v1471 = vld [vmem:[%s1457 + $0x68] sm:$0xff]
  %v1472 = vld [vmem:[%s1457 + $0x70] sm:$0xff]
  %v1473 = vld [vmem:[%s1457 + $0x78] sm:$0xff]
  %v1474 = vld [vmem:[%s1457 + $0x80] sm:$0xff]
  %v1475 = vld [vmem:[%s1457 + $0x88] sm:$0xff]
  %v1476 = vld [vmem:[%s1457 + $0x90] sm:$0xff]
  %v1477 = vld [vmem:[%s1457 + $0x98] sm:$0xff]
  %v1478 = vld [vmem:[%s1457 + $0xa0] sm:$0xff]
  %v1479 = vld [vmem:[%s1457 + $0xa8] sm:$0xff]
  %v1480 = vld [vmem:[%s1457 + $0xb0] sm:$0xff]
  %v1481 = vld [vmem:[%s1457 + $0xb8] sm:$0xff]
  %v1482 = vld [vmem:[%s1457 + $0xc0] sm:$0xff]
  %v1483 = vld [vmem:[%s1457 + $0xc8] sm:$0xff]
  %v1484 = vld [vmem:[%s1457 + $0xd0] sm:$0xff]
  %v1485 = vld [vmem:[%s1457 + $0xd8] sm:$0xff]
  %v1486 = vld [vmem:[%s1457 + $0xe0] sm:$0xff]
  %v1487 = vld [vmem:[%s1457 + $0xe8] sm:$0xff]
  %v1488 = vld [vmem:[%s1457 + $0xf0] sm:$0xff]
  %v1489 = vld [vmem:[%s1457 + $0xf8] sm:$0xff]
  %s1490 = scalar_lea.vmem %s1, 512
  %v1491 = vld [vmem:[%s1490] sm:$0xf]
  %v1492 = vld [vmem:[%s1490 + $0x4] sm:$0xf]
  %v1493 = vld [vmem:[%s1490 + $0x8] sm:$0xf]
  %v1494 = vld [vmem:[%s1490 + $0xc] sm:$0xf]
  %v1495 = vld [vmem:[%s1490 + $0x10] sm:$0xf]
  %v1496 = vld [vmem:[%s1490 + $0x14] sm:$0xf]
  %v1497 = vld [vmem:[%s1490 + $0x18] sm:$0xf]
  %v1498 = vld [vmem:[%s1490 + $0x1c] sm:$0xf]
  %v1499 = vld [vmem:[%s1490 + $0x20] sm:$0xf]
  %v1500 = vld [vmem:[%s1490 + $0x24] sm:$0xf]
  %v1501 = vld [vmem:[%s1490 + $0x28] sm:$0xf]
  %v1502 = vld [vmem:[%s1490 + $0x2c] sm:$0xf]
  %v1503 = vld [vmem:[%s1490 + $0x30] sm:$0xf]
  %v1504 = vld [vmem:[%s1490 + $0x34] sm:$0xf]
  %v1505 = vld [vmem:[%s1490 + $0x38] sm:$0xf]
  %v1506 = vld [vmem:[%s1490 + $0x3c] sm:$0xf]
  %v1507 = vld [vmem:[%s1490 + $0x40] sm:$0xf]
  %v1508 = vld [vmem:[%s1490 + $0x44] sm:$0xf]
  %v1509 = vld [vmem:[%s1490 + $0x48] sm:$0xf]
  %v1510 = vld [vmem:[%s1490 + $0x4c] sm:$0xf]
  %v1511 = vld [vmem:[%s1490 + $0x50] sm:$0xf]
  %v1512 = vld [vmem:[%s1490 + $0x54] sm:$0xf]
  %v1513 = vld [vmem:[%s1490 + $0x58] sm:$0xf]
  %v1514 = vld [vmem:[%s1490 + $0x5c] sm:$0xf]
  %v1515 = vld [vmem:[%s1490 + $0x60] sm:$0xf]
  %v1516 = vld [vmem:[%s1490 + $0x64] sm:$0xf]
  %v1517 = vld [vmem:[%s1490 + $0x68] sm:$0xf]
  %v1518 = vld [vmem:[%s1490 + $0x6c] sm:$0xf]
  %v1519 = vld [vmem:[%s1490 + $0x70] sm:$0xf]
  %v1520 = vld [vmem:[%s1490 + $0x74] sm:$0xf]
  %v1521 = vld [vmem:[%s1490 + $0x78] sm:$0xf]
  %v1522 = vld [vmem:[%s1490 + $0x7c] sm:$0xf]
  %v1523 = vld [vmem:[%s1490 + $0x80] sm:$0xf]
  %v1524 = vld [vmem:[%s1490 + $0x84] sm:$0xf]
  %v1525 = vld [vmem:[%s1490 + $0x88] sm:$0xf]
  %v1526 = vld [vmem:[%s1490 + $0x8c] sm:$0xf]
  %v1527 = vld [vmem:[%s1490 + $0x90] sm:$0xf]
  %v1528 = vld [vmem:[%s1490 + $0x94] sm:$0xf]
  %v1529 = vld [vmem:[%s1490 + $0x98] sm:$0xf]
  %v1530 = vld [vmem:[%s1490 + $0x9c] sm:$0xf]
  %v1531 = vld [vmem:[%s1490 + $0xa0] sm:$0xf]
  %v1532 = vld [vmem:[%s1490 + $0xa4] sm:$0xf]
  %v1533 = vld [vmem:[%s1490 + $0xa8] sm:$0xf]
  %v1534 = vld [vmem:[%s1490 + $0xac] sm:$0xf]
  %v1535 = vld [vmem:[%s1490 + $0xb0] sm:$0xf]
  %v1536 = vld [vmem:[%s1490 + $0xb4] sm:$0xf]
  %v1537 = vld [vmem:[%s1490 + $0xb8] sm:$0xf]
  %v1538 = vld [vmem:[%s1490 + $0xbc] sm:$0xf]
  %v1539 = vld [vmem:[%s1490 + $0xc0] sm:$0xf]
  %v1540 = vld [vmem:[%s1490 + $0xc4] sm:$0xf]
  %v1541 = vld [vmem:[%s1490 + $0xc8] sm:$0xf]
  %v1542 = vld [vmem:[%s1490 + $0xcc] sm:$0xf]
  %v1543 = vld [vmem:[%s1490 + $0xd0] sm:$0xf]
  %v1544 = vld [vmem:[%s1490 + $0xd4] sm:$0xf]
  %v1545 = vld [vmem:[%s1490 + $0xd8] sm:$0xf]
  %v1546 = vld [vmem:[%s1490 + $0xdc] sm:$0xf]
  %v1547 = vld [vmem:[%s1490 + $0xe0] sm:$0xf]
  %v1548 = vld [vmem:[%s1490 + $0xe4] sm:$0xf]
  %v1549 = vld [vmem:[%s1490 + $0xe8] sm:$0xf]
  %v1550 = vld [vmem:[%s1490 + $0xec] sm:$0xf]
  %v1551 = vld [vmem:[%s1490 + $0xf0] sm:$0xf]
  %v1552 = vld [vmem:[%s1490 + $0xf4] sm:$0xf]
  %v1553 = vld [vmem:[%s1490 + $0xf8] sm:$0xf]
  %v1554 = vld [vmem:[%s1490 + $0xfc] sm:$0xf]
  %v1587 = vunpack.c.l.b16 %v1458
  %v1588 = vunpack.c.h.b16 %v1458
  %v1589 = vunpack.c.l.b16 %v1459
  %v1590 = vunpack.c.h.b16 %v1459
  %v1591 = vunpack.c.l.b16 %v1460
  %v1592 = vunpack.c.h.b16 %v1460
  %v1593 = vunpack.c.l.b16 %v1461
  %v1594 = vunpack.c.h.b16 %v1461
  %v1595 = vunpack.c.l.b16 %v1462
  %v1596 = vunpack.c.h.b16 %v1462
  %v1597 = vunpack.c.l.b16 %v1463
  %v1598 = vunpack.c.h.b16 %v1463
  %v1599 = vunpack.c.l.b16 %v1464
  %v1600 = vunpack.c.h.b16 %v1464
  %v1601 = vunpack.c.l.b16 %v1465
  %v1602 = vunpack.c.h.b16 %v1465
  %v1603 = vunpack.c.l.b16 %v1466
  %v1604 = vunpack.c.h.b16 %v1466
  %v1605 = vunpack.c.l.b16 %v1467
  %v1606 = vunpack.c.h.b16 %v1467
  %v1607 = vunpack.c.l.b16 %v1468
  %v1608 = vunpack.c.h.b16 %v1468
  %v1609 = vunpack.c.l.b16 %v1469
  %v1610 = vunpack.c.h.b16 %v1469
  %v1611 = vunpack.c.l.b16 %v1470
  %v1612 = vunpack.c.h.b16 %v1470
  %v1613 = vunpack.c.l.b16 %v1471
  %v1614 = vunpack.c.h.b16 %v1471
  %v1615 = vunpack.c.l.b16 %v1472
  %v1616 = vunpack.c.h.b16 %v1472
  %v1617 = vunpack.c.l.b16 %v1473
  %v1618 = vunpack.c.h.b16 %v1473
  %v1619 = vunpack.c.l.b16 %v1474
  %v1620 = vunpack.c.h.b16 %v1474
  %v1621 = vunpack.c.l.b16 %v1475
  %v1622 = vunpack.c.h.b16 %v1475
  %v1623 = vunpack.c.l.b16 %v1476
  %v1624 = vunpack.c.h.b16 %v1476
  %v1625 = vunpack.c.l.b16 %v1477
  %v1626 = vunpack.c.h.b16 %v1477
  %v1627 = vunpack.c.l.b16 %v1478
  %v1628 = vunpack.c.h.b16 %v1478
  %v1629 = vunpack.c.l.b16 %v1479
  %v1630 = vunpack.c.h.b16 %v1479
  %v1631 = vunpack.c.l.b16 %v1480
  %v1632 = vunpack.c.h.b16 %v1480
  %v1633 = vunpack.c.l.b16 %v1481
  %v1634 = vunpack.c.h.b16 %v1481
  %v1635 = vunpack.c.l.b16 %v1482
  %v1636 = vunpack.c.h.b16 %v1482
  %v1637 = vunpack.c.l.b16 %v1483
  %v1638 = vunpack.c.h.b16 %v1483
  %v1639 = vunpack.c.l.b16 %v1484
  %v1640 = vunpack.c.h.b16 %v1484
  %v1641 = vunpack.c.l.b16 %v1485
  %v1642 = vunpack.c.h.b16 %v1485
  %v1643 = vunpack.c.l.b16 %v1486
  %v1644 = vunpack.c.h.b16 %v1486
  %v1645 = vunpack.c.l.b16 %v1487
  %v1646 = vunpack.c.h.b16 %v1487
  %v1647 = vunpack.c.l.b16 %v1488
  %v1648 = vunpack.c.h.b16 %v1488
  %v1649 = vunpack.c.l.b16 %v1489
  %v1650 = vunpack.c.h.b16 %v1489
  %v1651 = vpack.c.b16 %v1591, %v1587
  %v1652 = vpack.c.b16 %v1592, %v1588
  %v1653 = vpack.c.b16 %v1593, %v1589
  %v1654 = vpack.c.b16 %v1594, %v1590
  %v1655 = vpack.c.b16 %v1599, %v1595
  %v1656 = vpack.c.b16 %v1600, %v1596
  %v1657 = vpack.c.b16 %v1601, %v1597
  %v1658 = vpack.c.b16 %v1602, %v1598
  %v1659 = vpack.c.b16 %v1607, %v1603
  %v1660 = vpack.c.b16 %v1608, %v1604
  %v1661 = vpack.c.b16 %v1609, %v1605
  %v1662 = vpack.c.b16 %v1610, %v1606
  %v1663 = vpack.c.b16 %v1615, %v1611
  %v1664 = vpack.c.b16 %v1616, %v1612
  %v1665 = vpack.c.b16 %v1617, %v1613
  %v1666 = vpack.c.b16 %v1618, %v1614
  %v1667 = vpack.c.b16 %v1623, %v1619
  %v1668 = vpack.c.b16 %v1624, %v1620
  %v1669 = vpack.c.b16 %v1625, %v1621
  %v1670 = vpack.c.b16 %v1626, %v1622
  %v1671 = vpack.c.b16 %v1631, %v1627
  %v1672 = vpack.c.b16 %v1632, %v1628
  %v1673 = vpack.c.b16 %v1633, %v1629
  %v1674 = vpack.c.b16 %v1634, %v1630
  %v1675 = vpack.c.b16 %v1639, %v1635
  %v1676 = vpack.c.b16 %v1640, %v1636
  %v1677 = vpack.c.b16 %v1641, %v1637
  %v1678 = vpack.c.b16 %v1642, %v1638
  %v1679 = vpack.c.b16 %v1647, %v1643
  %v1680 = vpack.c.b16 %v1648, %v1644
  %v1681 = vpack.c.b16 %v1649, %v1645
  %v1682 = vpack.c.b16 %v1650, %v1646
  %v1779 = vunpack.c.l.b16 %v1491
  %v1780 = vunpack.c.l.b16 %v1492
  %v1781 = vunpack.c.l.b16 %v1493
  %v1782 = vunpack.c.l.b16 %v1494
  %v1783 = vunpack.c.l.b16 %v1495
  %v1784 = vunpack.c.l.b16 %v1496
  %v1785 = vunpack.c.l.b16 %v1497
  %v1786 = vunpack.c.l.b16 %v1498
  %v1787 = vunpack.c.l.b16 %v1499
  %v1788 = vunpack.c.l.b16 %v1500
  %v1789 = vunpack.c.l.b16 %v1501
  %v1790 = vunpack.c.l.b16 %v1502
  %v1791 = vunpack.c.l.b16 %v1503
  %v1792 = vunpack.c.l.b16 %v1504
  %v1793 = vunpack.c.l.b16 %v1505
  %v1794 = vunpack.c.l.b16 %v1506
  %v1795 = vunpack.c.l.b16 %v1507
  %v1796 = vunpack.c.l.b16 %v1508
  %v1797 = vunpack.c.l.b16 %v1509
  %v1798 = vunpack.c.l.b16 %v1510
  %v1799 = vunpack.c.l.b16 %v1511
  %v1800 = vunpack.c.l.b16 %v1512
  %v1801 = vunpack.c.l.b16 %v1513
  %v1802 = vunpack.c.l.b16 %v1514
  %v1803 = vunpack.c.l.b16 %v1515
  %v1804 = vunpack.c.l.b16 %v1516
  %v1805 = vunpack.c.l.b16 %v1517
  %v1806 = vunpack.c.l.b16 %v1518
  %v1807 = vunpack.c.l.b16 %v1519
  %v1808 = vunpack.c.l.b16 %v1520
  %v1809 = vunpack.c.l.b16 %v1521
  %v1810 = vunpack.c.l.b16 %v1522
  %v1811 = vunpack.c.l.b16 %v1523
  %v1812 = vunpack.c.l.b16 %v1524
  %v1813 = vunpack.c.l.b16 %v1525
  %v1814 = vunpack.c.l.b16 %v1526
  %v1815 = vunpack.c.l.b16 %v1527
  %v1816 = vunpack.c.l.b16 %v1528
  %v1817 = vunpack.c.l.b16 %v1529
  %v1818 = vunpack.c.l.b16 %v1530
  %v1819 = vunpack.c.l.b16 %v1531
  %v1820 = vunpack.c.l.b16 %v1532
  %v1821 = vunpack.c.l.b16 %v1533
  %v1822 = vunpack.c.l.b16 %v1534
  %v1823 = vunpack.c.l.b16 %v1535
  %v1824 = vunpack.c.l.b16 %v1536
  %v1825 = vunpack.c.l.b16 %v1537
  %v1826 = vunpack.c.l.b16 %v1538
  %v1827 = vunpack.c.l.b16 %v1539
  %v1828 = vunpack.c.l.b16 %v1540
  %v1829 = vunpack.c.l.b16 %v1541
  %v1830 = vunpack.c.l.b16 %v1542
  %v1831 = vunpack.c.l.b16 %v1543
  %v1832 = vunpack.c.l.b16 %v1544
  %v1833 = vunpack.c.l.b16 %v1545
  %v1834 = vunpack.c.l.b16 %v1546
  %v1835 = vunpack.c.l.b16 %v1547
  %v1836 = vunpack.c.l.b16 %v1548
  %v1837 = vunpack.c.l.b16 %v1549
  %v1838 = vunpack.c.l.b16 %v1550
  %v1839 = vunpack.c.l.b16 %v1551
  %v1840 = vunpack.c.l.b16 %v1552
  %v1841 = vunpack.c.l.b16 %v1553
  %v1842 = vunpack.c.l.b16 %v1554
  %v1843 = vpack.c.b16 %v1780, %v1779
  %v1844 = vpack.c.b16 %v1782, %v1781
  %v1845 = vpack.c.b16 %v1784, %v1783
  %v1846 = vpack.c.b16 %v1786, %v1785
  %v1847 = vpack.c.b16 %v1788, %v1787
  %v1848 = vpack.c.b16 %v1790, %v1789
  %v1849 = vpack.c.b16 %v1792, %v1791
  %v1850 = vpack.c.b16 %v1794, %v1793
  %v1851 = vpack.c.b16 %v1796, %v1795
  %v1852 = vpack.c.b16 %v1798, %v1797
  %v1853 = vpack.c.b16 %v1800, %v1799
  %v1854 = vpack.c.b16 %v1802, %v1801
  %v1855 = vpack.c.b16 %v1804, %v1803
  %v1856 = vpack.c.b16 %v1806, %v1805
  %v1857 = vpack.c.b16 %v1808, %v1807
  %v1858 = vpack.c.b16 %v1810, %v1809
  %v1859 = vpack.c.b16 %v1812, %v1811
  %v1860 = vpack.c.b16 %v1814, %v1813
  %v1861 = vpack.c.b16 %v1816, %v1815
  %v1862 = vpack.c.b16 %v1818, %v1817
  %v1863 = vpack.c.b16 %v1820, %v1819
  %v1864 = vpack.c.b16 %v1822, %v1821
  %v1865 = vpack.c.b16 %v1824, %v1823
  %v1866 = vpack.c.b16 %v1826, %v1825
  %v1867 = vpack.c.b16 %v1828, %v1827
  %v1868 = vpack.c.b16 %v1830, %v1829
  %v1869 = vpack.c.b16 %v1832, %v1831
  %v1870 = vpack.c.b16 %v1834, %v1833
  %v1871 = vpack.c.b16 %v1836, %v1835
  %v1872 = vpack.c.b16 %v1838, %v1837
  %v1873 = vpack.c.b16 %v1840, %v1839
  %v1874 = vpack.c.b16 %v1842, %v1841
  %1907 = vmatprep.subr.bf16.mxu0 0
  %1908 = vmatpush1.bf16.msra.mxu0 %v1843
  %1909 = vmatprep.subr.bf16.mxu0 0
  %1910 = vmatpush1.bf16.msra.mxu0 %v1844
  %1911 = vmatprep.subr.bf16.mxu0 0
  %1912 = vmatpush1.bf16.msra.mxu0 %v1845
  %1913 = vmatprep.subr.bf16.mxu0 0
  %1914 = vmatpush1.bf16.msra.mxu0 %v1846
  %1915 = vmatprep.subr.bf16.mxu0 0
  %1916 = vmatpush1.bf16.msra.mxu0 %v1847
  %1917 = vmatprep.subr.bf16.mxu0 0
  %1918 = vmatpush1.bf16.msra.mxu0 %v1848
  %1919 = vmatprep.subr.bf16.mxu0 0
  %1920 = vmatpush1.bf16.msra.mxu0 %v1849
  %1921 = vmatprep.subr.bf16.mxu0 0
  %1922 = vmatpush1.bf16.msra.mxu0 %v1850
  %1923 = vmatprep.subr.bf16.mxu0 0
  %1924 = vmatpush1.bf16.msra.mxu0 %v1851
  %1925 = vmatprep.subr.bf16.mxu0 0
  %1926 = vmatpush1.bf16.msra.mxu0 %v1852
  %1927 = vmatprep.subr.bf16.mxu0 0
  %1928 = vmatpush1.bf16.msra.mxu0 %v1853
  %1929 = vmatprep.subr.bf16.mxu0 0
  %1930 = vmatpush1.bf16.msra.mxu0 %v1854
  %1931 = vmatprep.subr.bf16.mxu0 0
  %1932 = vmatpush1.bf16.msra.mxu0 %v1855
  %1933 = vmatprep.subr.bf16.mxu0 0
  %1934 = vmatpush1.bf16.msra.mxu0 %v1856
  %1935 = vmatprep.subr.bf16.mxu0 0
  %1936 = vmatpush1.bf16.msra.mxu0 %v1857
  %1937 = vmatprep.subr.bf16.mxu0 0
  %1938 = vmatpush1.bf16.msra.mxu0 %v1858
  %1939 = vmatprep.mubr.bf16.mxu0 %v1652
  %1940 = vmatmul.mubr.bf16.gmra.mrb[0].mxu0 %v1651
  %v1941 = vpop.f32.mrb[0].mxu0
  %v1942 = vadd.f32 0.0, %v1941
  %v1943 = vpop.f32.mrb[0].mxu0
  %v1944 = vpop.f32.mrb[0].mxu0
  %v1945 = vadd.f32 0.0, %v1944
  %v1946 = vpop.f32.mrb[0].mxu0
  %1947 = vmatprep.mubr.bf16.mxu0 %v1656
  %1948 = vmatmul.mubr.bf16.gmra.mrb[0].mxu0 %v1655
  %v1949 = vpop.f32.mrb[0].mxu0
  %v1950 = vadd.f32 0.0, %v1949
  %v1951 = vpop.f32.mrb[0].mxu0
  %v1952 = vpop.f32.mrb[0].mxu0
  %v1953 = vadd.f32 0.0, %v1952
  %v1954 = vpop.f32.mrb[0].mxu0
  %1955 = vmatprep.mubr.bf16.mxu0 %v1660
  %1956 = vmatmul.mubr.bf16.gmra.mrb[0].mxu0 %v1659
  %v1957 = vpop.f32.mrb[0].mxu0
  %v1958 = vadd.f32 0.0, %v1957
  %v1959 = vpop.f32.mrb[0].mxu0
  %v1960 = vpop.f32.mrb[0].mxu0
  %v1961 = vadd.f32 0.0, %v1960
  %v1962 = vpop.f32.mrb[0].mxu0
  %1963 = vmatprep.mubr.bf16.mxu0 %v1664
  %1964 = vmatmul.mubr.bf16.gmra.mrb[0].mxu0 %v1663
  %v1965 = vpop.f32.mrb[0].mxu0
  %v1966 = vadd.f32 0.0, %v1965
  %v1967 = vpop.f32.mrb[0].mxu0
  %v1968 = vpop.f32.mrb[0].mxu0
  %v1969 = vadd.f32 0.0, %v1968
  %v1970 = vpop.f32.mrb[0].mxu0
  %1971 = vmatprep.mubr.bf16.mxu0 %v1668
  %1972 = vmatmul.mubr.bf16.gmra.mrb[0].mxu0 %v1667
  %v1973 = vpop.f32.mrb[0].mxu0
  %v1974 = vadd.f32 0.0, %v1973
  %v1975 = vpop.f32.mrb[0].mxu0
  %v1976 = vpop.f32.mrb[0].mxu0
  %v1977 = vadd.f32 0.0, %v1976
  %v1978 = vpop.f32.mrb[0].mxu0
  %1979 = vmatprep.mubr.bf16.mxu0 %v1672
  %1980 = vmatmul.mubr.bf16.gmra.mrb[0].mxu0 %v1671
  %v1981 = vpop.f32.mrb[0].mxu0
  %v1982 = vadd.f32 0.0, %v1981
  %v1983 = vpop.f32.mrb[0].mxu0
  %v1984 = vpop.f32.mrb[0].mxu0
  %v1985 = vadd.f32 0.0, %v1984
  %v1986 = vpop.f32.mrb[0].mxu0
  %1987 = vmatprep.mubr.bf16.mxu0 %v1676
  %1988 = vmatmul.mubr.bf16.gmra.mrb[0].mxu0 %v1675
  %v1989 = vpop.f32.mrb[0].mxu0
  %v1990 = vadd.f32 0.0, %v1989
  %v1991 = vpop.f32.mrb[0].mxu0
  %v1992 = vpop.f32.mrb[0].mxu0
  %v1993 = vadd.f32 0.0, %v1992
  %v1994 = vpop.f32.mrb[0].mxu0
  %1995 = vmatprep.mubr.bf16.mxu0 %v1680
  %1996 = vmatmul.mubr.bf16.gmra.mrb[0].mxu0 %v1679
  %v1997 = vpop.f32.mrb[0].mxu0
  %v1998 = vadd.f32 0.0, %v1997
  %v1999 = vpop.f32.mrb[0].mxu0
  %v2000 = vpop.f32.mrb[0].mxu0
  %v2001 = vadd.f32 0.0, %v2000
  %v2002 = vpop.f32.mrb[0].mxu0
  %2003 = vdwg.mxu0
  %2004 = vmatprep.subr.bf16.mxu0 0
  %2005 = vmatpush1.bf16.msra.mxu0 %v1859
  %2006 = vmatprep.subr.bf16.mxu0 0
  %2007 = vmatpush1.bf16.msra.mxu0 %v1860
  %2008 = vmatprep.subr.bf16.mxu0 0
  %2009 = vmatpush1.bf16.msra.mxu0 %v1861
  %2010 = vmatprep.subr.bf16.mxu0 0
  %2011 = vmatpush1.bf16.msra.mxu0 %v1862
  %2012 = vmatprep.subr.bf16.mxu0 0
  %2013 = vmatpush1.bf16.msra.mxu0 %v1863
  %2014 = vmatprep.subr.bf16.mxu0 0
  %2015 = vmatpush1.bf16.msra.mxu0 %v1864
  %2016 = vmatprep.subr.bf16.mxu0 0
  %2017 = vmatpush1.bf16.msra.mxu0 %v1865
  %2018 = vmatprep.subr.bf16.mxu0 0
  %2019 = vmatpush1.bf16.msra.mxu0 %v1866
  %2020 = vmatprep.subr.bf16.mxu0 0
  %2021 = vmatpush1.bf16.msra.mxu0 %v1867
  %2022 = vmatprep.subr.bf16.mxu0 0
  %2023 = vmatpush1.bf16.msra.mxu0 %v1868
  %2024 = vmatprep.subr.bf16.mxu0 0
  %2025 = vmatpush1.bf16.msra.mxu0 %v1869
  %2026 = vmatprep.subr.bf16.mxu0 0
  %2027 = vmatpush1.bf16.msra.mxu0 %v1870
  %2028 = vmatprep.subr.bf16.mxu0 0
  %2029 = vmatpush1.bf16.msra.mxu0 %v1871
  %2030 = vmatprep.subr.bf16.mxu0 0
  %2031 = vmatpush1.bf16.msra.mxu0 %v1872
  %2032 = vmatprep.subr.bf16.mxu0 0
  %2033 = vmatpush1.bf16.msra.mxu0 %v1873
  %2034 = vmatprep.subr.bf16.mxu0 0
  %2035 = vmatpush1.bf16.msra.mxu0 %v1874
  %2036 = vmatprep.mubr.bf16.mxu0 %v1654
  %2037 = vmatmul.mubr.bf16.gmra.mrb[0].mxu0 %v1653
  %v2038 = vpop.f32.mrb[0].mxu0
  %v2039 = vadd.f32 %v1942, %v2038
  %v2040 = vpop.f32.mrb[0].mxu0
  %v2041 = vpop.f32.mrb[0].mxu0
  %v2042 = vadd.f32 %v1945, %v2041
  %v2043 = vpop.f32.mrb[0].mxu0
  %2044 = vmatprep.mubr.bf16.mxu0 %v1658
  %2045 = vmatmul.mubr.bf16.gmra.mrb[0].mxu0 %v1657
  %v2046 = vpop.f32.mrb[0].mxu0
  %v2047 = vadd.f32 %v1950, %v2046
  %v2048 = vpop.f32.mrb[0].mxu0
  %v2049 = vpop.f32.mrb[0].mxu0
  %v2050 = vadd.f32 %v1953, %v2049
  %v2051 = vpop.f32.mrb[0].mxu0
  %2052 = vmatprep.mubr.bf16.mxu0 %v1662
  %2053 = vmatmul.mubr.bf16.gmra.mrb[0].mxu0 %v1661
  %v2054 = vpop.f32.mrb[0].mxu0
  %v2055 = vadd.f32 %v1958, %v2054
  %v2056 = vpop.f32.mrb[0].mxu0
  %v2057 = vpop.f32.mrb[0].mxu0
  %v2058 = vadd.f32 %v1961, %v2057
  %v2059 = vpop.f32.mrb[0].mxu0
  %2060 = vmatprep.mubr.bf16.mxu0 %v1666
  %2061 = vmatmul.mubr.bf16.gmra.mrb[0].mxu0 %v1665
  %v2062 = vpop.f32.mrb[0].mxu0
  %v2063 = vadd.f32 %v1966, %v2062
  %v2064 = vpop.f32.mrb[0].mxu0
  %v2065 = vpop.f32.mrb[0].mxu0
  %v2066 = vadd.f32 %v1969, %v2065
  %v2067 = vpop.f32.mrb[0].mxu0
  %2068 = vmatprep.mubr.bf16.mxu0 %v1670
  %2069 = vmatmul.mubr.bf16.gmra.mrb[0].mxu0 %v1669
  %v2070 = vpop.f32.mrb[0].mxu0
  %v2071 = vadd.f32 %v1974, %v2070
  %v2072 = vpop.f32.mrb[0].mxu0
  %v2073 = vpop.f32.mrb[0].mxu0
  %v2074 = vadd.f32 %v1977, %v2073
  %v2075 = vpop.f32.mrb[0].mxu0
  %2076 = vmatprep.mubr.bf16.mxu0 %v1674
  %2077 = vmatmul.mubr.bf16.gmra.mrb[0].mxu0 %v1673
  %v2078 = vpop.f32.mrb[0].mxu0
  %v2079 = vadd.f32 %v1982, %v2078
  %v2080 = vpop.f32.mrb[0].mxu0
  %v2081 = vpop.f32.mrb[0].mxu0
  %v2082 = vadd.f32 %v1985, %v2081
  %v2083 = vpop.f32.mrb[0].mxu0
  %2084 = vmatprep.mubr.bf16.mxu0 %v1678
  %2085 = vmatmul.mubr.bf16.gmra.mrb[0].mxu0 %v1677
  %v2086 = vpop.f32.mrb[0].mxu0
  %v2087 = vadd.f32 %v1990, %v2086
  %v2088 = vpop.f32.mrb[0].mxu0
  %v2089 = vpop.f32.mrb[0].mxu0
  %v2090 = vadd.f32 %v1993, %v2089
  %v2091 = vpop.f32.mrb[0].mxu0
  %2092 = vmatprep.mubr.bf16.mxu0 %v1682
  %2093 = vmatmul.mubr.bf16.gmra.mrb[0].mxu0 %v1681
  %v2094 = vpop.f32.mrb[0].mxu0
  %v2095 = vadd.f32 %v1998, %v2094
  %v2096 = vpop.f32.mrb[0].mxu0
  %v2097 = vpop.f32.mrb[0].mxu0
  %v2098 = vadd.f32 %v2001, %v2097
  %v2099 = vpop.f32.mrb[0].mxu0
  %2100 = vdwg.mxu0
  %s2101 = scalar_lea.vmem %s4, 256
  %2102 = vst [vmem:[%s2101] sm:$0xff] %v2039
  %2103 = vst [vmem:[%s2101 + $0x8] sm:$0xff] %v2042
  %2104 = vst [vmem:[%s2101 + $0x10] sm:$0xff] %v2047
  %2105 = vst [vmem:[%s2101 + $0x18] sm:$0xff] %v2050
  %2106 = vst [vmem:[%s2101 + $0x20] sm:$0xff] %v2055
  %2107 = vst [vmem:[%s2101 + $0x28] sm:$0xff] %v2058
  %2108 = vst [vmem:[%s2101 + $0x30] sm:$0xff] %v2063
  %2109 = vst [vmem:[%s2101 + $0x38] sm:$0xff] %v2066
  %2110 = vst [vmem:[%s2101 + $0x40] sm:$0xff] %v2071
  %2111 = vst [vmem:[%s2101 + $0x48] sm:$0xff] %v2074
  %2112 = vst [vmem:[%s2101 + $0x50] sm:$0xff] %v2079
  %2113 = vst [vmem:[%s2101 + $0x58] sm:$0xff] %v2082
  %2114 = vst [vmem:[%s2101 + $0x60] sm:$0xff] %v2087
  %2115 = vst [vmem:[%s2101 + $0x68] sm:$0xff] %v2090
  %2116 = vst [vmem:[%s2101 + $0x70] sm:$0xff] %v2095
  %2117 = vst [vmem:[%s2101 + $0x78] sm:$0xff] %v2098
  %v2118 = vadd.f32 %v2039, %v2042
  %v2119 = vadd.f32 %v2118, %v2047
  %v2120 = vadd.f32 %v2119, %v2050
  %v2121 = vadd.f32 %v2120, %v2055
  %v2122 = vadd.f32 %v2121, %v2058
  %v2123 = vadd.f32 %v2122, %v2063
  %v2124 = vadd.f32 %v2123, %v2066
  %v2125 = vadd.f32 %v2124, %v2071
  %v2126 = vadd.f32 %v2125, %v2074
  %v2127 = vadd.f32 %v2126, %v2079
  %v2128 = vadd.f32 %v2127, %v2082
  %v2129 = vadd.f32 %v2128, %v2087
  %v2130 = vadd.f32 %v2129, %v2090
  %v2131 = vadd.f32 %v2130, %v2095
  %v2132 = vadd.f32 %v2131, %v2098
  %v2133 = vrot.slane %v2132, 4
  %v2134 = vadd.f32 %v2132, %v2133
  %v2135 = vrot.slane %v2134, 2
  %v2136 = vadd.f32 %v2134, %v2135
  %v2137 = vrot.slane %v2136, 1
  %v2138 = vadd.f32 %v2136, %v2137
  %v2139 = vadd.f32 %v1418, %v2138
  %v2140 = vmul.f32 %v2039, %v2039
  %v2141 = vmul.f32 %v2042, %v2042
  %v2142 = vmul.f32 %v2047, %v2047
  %v2143 = vmul.f32 %v2050, %v2050
  %v2144 = vmul.f32 %v2055, %v2055
  %v2145 = vmul.f32 %v2058, %v2058
  %v2146 = vmul.f32 %v2063, %v2063
  %v2147 = vmul.f32 %v2066, %v2066
  %v2148 = vmul.f32 %v2071, %v2071
  %v2149 = vmul.f32 %v2074, %v2074
  %v2150 = vmul.f32 %v2079, %v2079
  %v2151 = vmul.f32 %v2082, %v2082
  %v2152 = vmul.f32 %v2087, %v2087
  %v2153 = vmul.f32 %v2090, %v2090
  %v2154 = vmul.f32 %v2095, %v2095
  %v2155 = vmul.f32 %v2098, %v2098
  %v2156 = vadd.f32 %v2140, %v2141
  %v2157 = vadd.f32 %v2156, %v2142
  %v2158 = vadd.f32 %v2157, %v2143
  %v2159 = vadd.f32 %v2158, %v2144
  %v2160 = vadd.f32 %v2159, %v2145
  %v2161 = vadd.f32 %v2160, %v2146
  %v2162 = vadd.f32 %v2161, %v2147
  %v2163 = vadd.f32 %v2162, %v2148
  %v2164 = vadd.f32 %v2163, %v2149
  %v2165 = vadd.f32 %v2164, %v2150
  %v2166 = vadd.f32 %v2165, %v2151
  %v2167 = vadd.f32 %v2166, %v2152
  %v2168 = vadd.f32 %v2167, %v2153
  %v2169 = vadd.f32 %v2168, %v2154
  %v2170 = vadd.f32 %v2169, %v2155
  %v2171 = vrot.slane %v2170, 4
  %v2172 = vadd.f32 %v2170, %v2171
  %v2173 = vrot.slane %v2172, 2
  %v2174 = vadd.f32 %v2172, %v2173
  %v2175 = vrot.slane %v2174, 1
  %v2176 = vadd.f32 %v2174, %v2175
  %v2177 = vadd.f32 %v1456, %v2176
  %s2178 = scalar_lea.vmem %s0, 768
  %v2179 = vld [vmem:[%s2178] sm:$0xff]
  %v2180 = vld [vmem:[%s2178 + $0x8] sm:$0xff]
  %v2181 = vld [vmem:[%s2178 + $0x10] sm:$0xff]
  %v2182 = vld [vmem:[%s2178 + $0x18] sm:$0xff]
  %v2183 = vld [vmem:[%s2178 + $0x20] sm:$0xff]
  %v2184 = vld [vmem:[%s2178 + $0x28] sm:$0xff]
  %v2185 = vld [vmem:[%s2178 + $0x30] sm:$0xff]
  %v2186 = vld [vmem:[%s2178 + $0x38] sm:$0xff]
  %v2187 = vld [vmem:[%s2178 + $0x40] sm:$0xff]
  %v2188 = vld [vmem:[%s2178 + $0x48] sm:$0xff]
  %v2189 = vld [vmem:[%s2178 + $0x50] sm:$0xff]
  %v2190 = vld [vmem:[%s2178 + $0x58] sm:$0xff]
  %v2191 = vld [vmem:[%s2178 + $0x60] sm:$0xff]
  %v2192 = vld [vmem:[%s2178 + $0x68] sm:$0xff]
  %v2193 = vld [vmem:[%s2178 + $0x70] sm:$0xff]
  %v2194 = vld [vmem:[%s2178 + $0x78] sm:$0xff]
  %v2195 = vld [vmem:[%s2178 + $0x80] sm:$0xff]
  %v2196 = vld [vmem:[%s2178 + $0x88] sm:$0xff]
  %v2197 = vld [vmem:[%s2178 + $0x90] sm:$0xff]
  %v2198 = vld [vmem:[%s2178 + $0x98] sm:$0xff]
  %v2199 = vld [vmem:[%s2178 + $0xa0] sm:$0xff]
  %v2200 = vld [vmem:[%s2178 + $0xa8] sm:$0xff]
  %v2201 = vld [vmem:[%s2178 + $0xb0] sm:$0xff]
  %v2202 = vld [vmem:[%s2178 + $0xb8] sm:$0xff]
  %v2203 = vld [vmem:[%s2178 + $0xc0] sm:$0xff]
  %v2204 = vld [vmem:[%s2178 + $0xc8] sm:$0xff]
  %v2205 = vld [vmem:[%s2178 + $0xd0] sm:$0xff]
  %v2206 = vld [vmem:[%s2178 + $0xd8] sm:$0xff]
  %v2207 = vld [vmem:[%s2178 + $0xe0] sm:$0xff]
  %v2208 = vld [vmem:[%s2178 + $0xe8] sm:$0xff]
  %v2209 = vld [vmem:[%s2178 + $0xf0] sm:$0xff]
  %v2210 = vld [vmem:[%s2178 + $0xf8] sm:$0xff]
  %s2211 = scalar_lea.vmem %s1, 768
  %v2212 = vld [vmem:[%s2211] sm:$0xf]
  %v2213 = vld [vmem:[%s2211 + $0x4] sm:$0xf]
  %v2214 = vld [vmem:[%s2211 + $0x8] sm:$0xf]
  %v2215 = vld [vmem:[%s2211 + $0xc] sm:$0xf]
  %v2216 = vld [vmem:[%s2211 + $0x10] sm:$0xf]
  %v2217 = vld [vmem:[%s2211 + $0x14] sm:$0xf]
  %v2218 = vld [vmem:[%s2211 + $0x18] sm:$0xf]
  %v2219 = vld [vmem:[%s2211 + $0x1c] sm:$0xf]
  %v2220 = vld [vmem:[%s2211 + $0x20] sm:$0xf]
  %v2221 = vld [vmem:[%s2211 + $0x24] sm:$0xf]
  %v2222 = vld [vmem:[%s2211 + $0x28] sm:$0xf]
  %v2223 = vld [vmem:[%s2211 + $0x2c] sm:$0xf]
  %v2224 = vld [vmem:[%s2211 + $0x30] sm:$0xf]
  %v2225 = vld [vmem:[%s2211 + $0x34] sm:$0xf]
  %v2226 = vld [vmem:[%s2211 + $0x38] sm:$0xf]
  %v2227 = vld [vmem:[%s2211 + $0x3c] sm:$0xf]
  %v2228 = vld [vmem:[%s2211 + $0x40] sm:$0xf]
  %v2229 = vld [vmem:[%s2211 + $0x44] sm:$0xf]
  %v2230 = vld [vmem:[%s2211 + $0x48] sm:$0xf]
  %v2231 = vld [vmem:[%s2211 + $0x4c] sm:$0xf]
  %v2232 = vld [vmem:[%s2211 + $0x50] sm:$0xf]
  %v2233 = vld [vmem:[%s2211 + $0x54] sm:$0xf]
  %v2234 = vld [vmem:[%s2211 + $0x58] sm:$0xf]
  %v2235 = vld [vmem:[%s2211 + $0x5c] sm:$0xf]
  %v2236 = vld [vmem:[%s2211 + $0x60] sm:$0xf]
  %v2237 = vld [vmem:[%s2211 + $0x64] sm:$0xf]
  %v2238 = vld [vmem:[%s2211 + $0x68] sm:$0xf]
  %v2239 = vld [vmem:[%s2211 + $0x6c] sm:$0xf]
  %v2240 = vld [vmem:[%s2211 + $0x70] sm:$0xf]
  %v2241 = vld [vmem:[%s2211 + $0x74] sm:$0xf]
  %v2242 = vld [vmem:[%s2211 + $0x78] sm:$0xf]
  %v2243 = vld [vmem:[%s2211 + $0x7c] sm:$0xf]
  %v2244 = vld [vmem:[%s2211 + $0x80] sm:$0xf]
  %v2245 = vld [vmem:[%s2211 + $0x84] sm:$0xf]
  %v2246 = vld [vmem:[%s2211 + $0x88] sm:$0xf]
  %v2247 = vld [vmem:[%s2211 + $0x8c] sm:$0xf]
  %v2248 = vld [vmem:[%s2211 + $0x90] sm:$0xf]
  %v2249 = vld [vmem:[%s2211 + $0x94] sm:$0xf]
  %v2250 = vld [vmem:[%s2211 + $0x98] sm:$0xf]
  %v2251 = vld [vmem:[%s2211 + $0x9c] sm:$0xf]
  %v2252 = vld [vmem:[%s2211 + $0xa0] sm:$0xf]
  %v2253 = vld [vmem:[%s2211 + $0xa4] sm:$0xf]
  %v2254 = vld [vmem:[%s2211 + $0xa8] sm:$0xf]
  %v2255 = vld [vmem:[%s2211 + $0xac] sm:$0xf]
  %v2256 = vld [vmem:[%s2211 + $0xb0] sm:$0xf]
  %v2257 = vld [vmem:[%s2211 + $0xb4] sm:$0xf]
  %v2258 = vld [vmem:[%s2211 + $0xb8] sm:$0xf]
  %v2259 = vld [vmem:[%s2211 + $0xbc] sm:$0xf]
  %v2260 = vld [vmem:[%s2211 + $0xc0] sm:$0xf]
  %v2261 = vld [vmem:[%s2211 + $0xc4] sm:$0xf]
  %v2262 = vld [vmem:[%s2211 + $0xc8] sm:$0xf]
  %v2263 = vld [vmem:[%s2211 + $0xcc] sm:$0xf]
  %v2264 = vld [vmem:[%s2211 + $0xd0] sm:$0xf]
  %v2265 = vld [vmem:[%s2211 + $0xd4] sm:$0xf]
  %v2266 = vld [vmem:[%s2211 + $0xd8] sm:$0xf]
  %v2267 = vld [vmem:[%s2211 + $0xdc] sm:$0xf]
  %v2268 = vld [vmem:[%s2211 + $0xe0] sm:$0xf]
  %v2269 = vld [vmem:[%s2211 + $0xe4] sm:$0xf]
  %v2270 = vld [vmem:[%s2211 + $0xe8] sm:$0xf]
  %v2271 = vld [vmem:[%s2211 + $0xec] sm:$0xf]
  %v2272 = vld [vmem:[%s2211 + $0xf0] sm:$0xf]
  %v2273 = vld [vmem:[%s2211 + $0xf4] sm:$0xf]
  %v2274 = vld [vmem:[%s2211 + $0xf8] sm:$0xf]
  %v2275 = vld [vmem:[%s2211 + $0xfc] sm:$0xf]
  %v2308 = vunpack.c.l.b16 %v2179
  %v2309 = vunpack.c.h.b16 %v2179
  %v2310 = vunpack.c.l.b16 %v2180
  %v2311 = vunpack.c.h.b16 %v2180
  %v2312 = vunpack.c.l.b16 %v2181
  %v2313 = vunpack.c.h.b16 %v2181
  %v2314 = vunpack.c.l.b16 %v2182
  %v2315 = vunpack.c.h.b16 %v2182
  %v2316 = vunpack.c.l.b16 %v2183
  %v2317 = vunpack.c.h.b16 %v2183
  %v2318 = vunpack.c.l.b16 %v2184
  %v2319 = vunpack.c.h.b16 %v2184
  %v2320 = vunpack.c.l.b16 %v2185
  %v2321 = vunpack.c.h.b16 %v2185
  %v2322 = vunpack.c.l.b16 %v2186
  %v2323 = vunpack.c.h.b16 %v2186
  %v2324 = vunpack.c.l.b16 %v2187
  %v2325 = vunpack.c.h.b16 %v2187
  %v2326 = vunpack.c.l.b16 %v2188
  %v2327 = vunpack.c.h.b16 %v2188
  %v2328 = vunpack.c.l.b16 %v2189
  %v2329 = vunpack.c.h.b16 %v2189
  %v2330 = vunpack.c.l.b16 %v2190
  %v2331 = vunpack.c.h.b16 %v2190
  %v2332 = vunpack.c.l.b16 %v2191
  %v2333 = vunpack.c.h.b16 %v2191
  %v2334 = vunpack.c.l.b16 %v2192
  %v2335 = vunpack.c.h.b16 %v2192
  %v2336 = vunpack.c.l.b16 %v2193
  %v2337 = vunpack.c.h.b16 %v2193
  %v2338 = vunpack.c.l.b16 %v2194
  %v2339 = vunpack.c.h.b16 %v2194
  %v2340 = vunpack.c.l.b16 %v2195
  %v2341 = vunpack.c.h.b16 %v2195
  %v2342 = vunpack.c.l.b16 %v2196
  %v2343 = vunpack.c.h.b16 %v2196
  %v2344 = vunpack.c.l.b16 %v2197
  %v2345 = vunpack.c.h.b16 %v2197
  %v2346 = vunpack.c.l.b16 %v2198
  %v2347 = vunpack.c.h.b16 %v2198
  %v2348 = vunpack.c.l.b16 %v2199
  %v2349 = vunpack.c.h.b16 %v2199
  %v2350 = vunpack.c.l.b16 %v2200
  %v2351 = vunpack.c.h.b16 %v2200
  %v2352 = vunpack.c.l.b16 %v2201
  %v2353 = vunpack.c.h.b16 %v2201
  %v2354 = vunpack.c.l.b16 %v2202
  %v2355 = vunpack.c.h.b16 %v2202
  %v2356 = vunpack.c.l.b16 %v2203
  %v2357 = vunpack.c.h.b16 %v2203
  %v2358 = vunpack.c.l.b16 %v2204
  %v2359 = vunpack.c.h.b16 %v2204
  %v2360 = vunpack.c.l.b16 %v2205
  %v2361 = vunpack.c.h.b16 %v2205
  %v2362 = vunpack.c.l.b16 %v2206
  %v2363 = vunpack.c.h.b16 %v2206
  %v2364 = vunpack.c.l.b16 %v2207
  %v2365 = vunpack.c.h.b16 %v2207
  %v2366 = vunpack.c.l.b16 %v2208
  %v2367 = vunpack.c.h.b16 %v2208
  %v2368 = vunpack.c.l.b16 %v2209
  %v2369 = vunpack.c.h.b16 %v2209
  %v2370 = vunpack.c.l.b16 %v2210
  %v2371 = vunpack.c.h.b16 %v2210
  %v2372 = vpack.c.b16 %v2312, %v2308
  %v2373 = vpack.c.b16 %v2313, %v2309
  %v2374 = vpack.c.b16 %v2314, %v2310
  %v2375 = vpack.c.b16 %v2315, %v2311
  %v2376 = vpack.c.b16 %v2320, %v2316
  %v2377 = vpack.c.b16 %v2321, %v2317
  %v2378 = vpack.c.b16 %v2322, %v2318
  %v2379 = vpack.c.b16 %v2323, %v2319
  %v2380 = vpack.c.b16 %v2328, %v2324
  %v2381 = vpack.c.b16 %v2329, %v2325
  %v2382 = vpack.c.b16 %v2330, %v2326
  %v2383 = vpack.c.b16 %v2331, %v2327
  %v2384 = vpack.c.b16 %v2336, %v2332
  %v2385 = vpack.c.b16 %v2337, %v2333
  %v2386 = vpack.c.b16 %v2338, %v2334
  %v2387 = vpack.c.b16 %v2339, %v2335
  %v2388 = vpack.c.b16 %v2344, %v2340
  %v2389 = vpack.c.b16 %v2345, %v2341
  %v2390 = vpack.c.b16 %v2346, %v2342
  %v2391 = vpack.c.b16 %v2347, %v2343
  %v2392 = vpack.c.b16 %v2352, %v2348
  %v2393 = vpack.c.b16 %v2353, %v2349
  %v2394 = vpack.c.b16 %v2354, %v2350
  %v2395 = vpack.c.b16 %v2355, %v2351
  %v2396 = vpack.c.b16 %v2360, %v2356
  %v2397 = vpack.c.b16 %v2361, %v2357
  %v2398 = vpack.c.b16 %v2362, %v2358
  %v2399 = vpack.c.b16 %v2363, %v2359
  %v2400 = vpack.c.b16 %v2368, %v2364
  %v2401 = vpack.c.b16 %v2369, %v2365
  %v2402 = vpack.c.b16 %v2370, %v2366
  %v2403 = vpack.c.b16 %v2371, %v2367
  %v2500 = vunpack.c.l.b16 %v2212
  %v2501 = vunpack.c.l.b16 %v2213
  %v2502 = vunpack.c.l.b16 %v2214
  %v2503 = vunpack.c.l.b16 %v2215
  %v2504 = vunpack.c.l.b16 %v2216
  %v2505 = vunpack.c.l.b16 %v2217
  %v2506 = vunpack.c.l.b16 %v2218
  %v2507 = vunpack.c.l.b16 %v2219
  %v2508 = vunpack.c.l.b16 %v2220
  %v2509 = vunpack.c.l.b16 %v2221
  %v2510 = vunpack.c.l.b16 %v2222
  %v2511 = vunpack.c.l.b16 %v2223
  %v2512 = vunpack.c.l.b16 %v2224
  %v2513 = vunpack.c.l.b16 %v2225
  %v2514 = vunpack.c.l.b16 %v2226
  %v2515 = vunpack.c.l.b16 %v2227
  %v2516 = vunpack.c.l.b16 %v2228
  %v2517 = vunpack.c.l.b16 %v2229
  %v2518 = vunpack.c.l.b16 %v2230
  %v2519 = vunpack.c.l.b16 %v2231
  %v2520 = vunpack.c.l.b16 %v2232
  %v2521 = vunpack.c.l.b16 %v2233
  %v2522 = vunpack.c.l.b16 %v2234
  %v2523 = vunpack.c.l.b16 %v2235
  %v2524 = vunpack.c.l.b16 %v2236
  %v2525 = vunpack.c.l.b16 %v2237
  %v2526 = vunpack.c.l.b16 %v2238
  %v2527 = vunpack.c.l.b16 %v2239
  %v2528 = vunpack.c.l.b16 %v2240
  %v2529 = vunpack.c.l.b16 %v2241
  %v2530 = vunpack.c.l.b16 %v2242
  %v2531 = vunpack.c.l.b16 %v2243
  %v2532 = vunpack.c.l.b16 %v2244
  %v2533 = vunpack.c.l.b16 %v2245
  %v2534 = vunpack.c.l.b16 %v2246
  %v2535 = vunpack.c.l.b16 %v2247
  %v2536 = vunpack.c.l.b16 %v2248
  %v2537 = vunpack.c.l.b16 %v2249
  %v2538 = vunpack.c.l.b16 %v2250
  %v2539 = vunpack.c.l.b16 %v2251
  %v2540 = vunpack.c.l.b16 %v2252
  %v2541 = vunpack.c.l.b16 %v2253
  %v2542 = vunpack.c.l.b16 %v2254
  %v2543 = vunpack.c.l.b16 %v2255
  %v2544 = vunpack.c.l.b16 %v2256
  %v2545 = vunpack.c.l.b16 %v2257
  %v2546 = vunpack.c.l.b16 %v2258
  %v2547 = vunpack.c.l.b16 %v2259
  %v2548 = vunpack.c.l.b16 %v2260
  %v2549 = vunpack.c.l.b16 %v2261
  %v2550 = vunpack.c.l.b16 %v2262
  %v2551 = vunpack.c.l.b16 %v2263
  %v2552 = vunpack.c.l.b16 %v2264
  %v2553 = vunpack.c.l.b16 %v2265
  %v2554 = vunpack.c.l.b16 %v2266
  %v2555 = vunpack.c.l.b16 %v2267
  %v2556 = vunpack.c.l.b16 %v2268
  %v2557 = vunpack.c.l.b16 %v2269
  %v2558 = vunpack.c.l.b16 %v2270
  %v2559 = vunpack.c.l.b16 %v2271
  %v2560 = vunpack.c.l.b16 %v2272
  %v2561 = vunpack.c.l.b16 %v2273
  %v2562 = vunpack.c.l.b16 %v2274
  %v2563 = vunpack.c.l.b16 %v2275
  %v2564 = vpack.c.b16 %v2501, %v2500
  %v2565 = vpack.c.b16 %v2503, %v2502
  %v2566 = vpack.c.b16 %v2505, %v2504
  %v2567 = vpack.c.b16 %v2507, %v2506
  %v2568 = vpack.c.b16 %v2509, %v2508
  %v2569 = vpack.c.b16 %v2511, %v2510
  %v2570 = vpack.c.b16 %v2513, %v2512
  %v2571 = vpack.c.b16 %v2515, %v2514
  %v2572 = vpack.c.b16 %v2517, %v2516
  %v2573 = vpack.c.b16 %v2519, %v2518
  %v2574 = vpack.c.b16 %v2521, %v2520
  %v2575 = vpack.c.b16 %v2523, %v2522
  %v2576 = vpack.c.b16 %v2525, %v2524
  %v2577 = vpack.c.b16 %v2527, %v2526
  %v2578 = vpack.c.b16 %v2529, %v2528
  %v2579 = vpack.c.b16 %v2531, %v2530
  %v2580 = vpack.c.b16 %v2533, %v2532
  %v2581 = vpack.c.b16 %v2535, %v2534
  %v2582 = vpack.c.b16 %v2537, %v2536
  %v2583 = vpack.c.b16 %v2539, %v2538
  %v2584 = vpack.c.b16 %v2541, %v2540
  %v2585 = vpack.c.b16 %v2543, %v2542
  %v2586 = vpack.c.b16 %v2545, %v2544
  %v2587 = vpack.c.b16 %v2547, %v2546
  %v2588 = vpack.c.b16 %v2549, %v2548
  %v2589 = vpack.c.b16 %v2551, %v2550
  %v2590 = vpack.c.b16 %v2553, %v2552
  %v2591 = vpack.c.b16 %v2555, %v2554
  %v2592 = vpack.c.b16 %v2557, %v2556
  %v2593 = vpack.c.b16 %v2559, %v2558
  %v2594 = vpack.c.b16 %v2561, %v2560
  %v2595 = vpack.c.b16 %v2563, %v2562
  %2628 = vmatprep.subr.bf16.mxu0 0
  %2629 = vmatpush1.bf16.msra.mxu0 %v2564
  %2630 = vmatprep.subr.bf16.mxu0 0
  %2631 = vmatpush1.bf16.msra.mxu0 %v2565
  %2632 = vmatprep.subr.bf16.mxu0 0
  %2633 = vmatpush1.bf16.msra.mxu0 %v2566
  %2634 = vmatprep.subr.bf16.mxu0 0
  %2635 = vmatpush1.bf16.msra.mxu0 %v2567
  %2636 = vmatprep.subr.bf16.mxu0 0
  %2637 = vmatpush1.bf16.msra.mxu0 %v2568
  %2638 = vmatprep.subr.bf16.mxu0 0
  %2639 = vmatpush1.bf16.msra.mxu0 %v2569
  %2640 = vmatprep.subr.bf16.mxu0 0
  %2641 = vmatpush1.bf16.msra.mxu0 %v2570
  %2642 = vmatprep.subr.bf16.mxu0 0
  %2643 = vmatpush1.bf16.msra.mxu0 %v2571
  %2644 = vmatprep.subr.bf16.mxu0 0
  %2645 = vmatpush1.bf16.msra.mxu0 %v2572
  %2646 = vmatprep.subr.bf16.mxu0 0
  %2647 = vmatpush1.bf16.msra.mxu0 %v2573
  %2648 = vmatprep.subr.bf16.mxu0 0
  %2649 = vmatpush1.bf16.msra.mxu0 %v2574
  %2650 = vmatprep.subr.bf16.mxu0 0
  %2651 = vmatpush1.bf16.msra.mxu0 %v2575
  %2652 = vmatprep.subr.bf16.mxu0 0
  %2653 = vmatpush1.bf16.msra.mxu0 %v2576
  %2654 = vmatprep.subr.bf16.mxu0 0
  %2655 = vmatpush1.bf16.msra.mxu0 %v2577
  %2656 = vmatprep.subr.bf16.mxu0 0
  %2657 = vmatpush1.bf16.msra.mxu0 %v2578
  %2658 = vmatprep.subr.bf16.mxu0 0
  %2659 = vmatpush1.bf16.msra.mxu0 %v2579
  %2660 = vmatprep.mubr.bf16.mxu0 %v2373
  %2661 = vmatmul.mubr.bf16.gmra.mrb[0].mxu0 %v2372
  %v2662 = vpop.f32.mrb[0].mxu0
  %v2663 = vadd.f32 0.0, %v2662
  %v2664 = vpop.f32.mrb[0].mxu0
  %v2665 = vpop.f32.mrb[0].mxu0
  %v2666 = vadd.f32 0.0, %v2665
  %v2667 = vpop.f32.mrb[0].mxu0
  %2668 = vmatprep.mubr.bf16.mxu0 %v2377
  %2669 = vmatmul.mubr.bf16.gmra.mrb[0].mxu0 %v2376
  %v2670 = vpop.f32.mrb[0].mxu0
  %v2671 = vadd.f32 0.0, %v2670
  %v2672 = vpop.f32.mrb[0].mxu0
  %v2673 = vpop.f32.mrb[0].mxu0
  %v2674 = vadd.f32 0.0, %v2673
  %v2675 = vpop.f32.mrb[0].mxu0
  %2676 = vmatprep.mubr.bf16.mxu0 %v2381
  %2677 = vmatmul.mubr.bf16.gmra.mrb[0].mxu0 %v2380
  %v2678 = vpop.f32.mrb[0].mxu0
  %v2679 = vadd.f32 0.0, %v2678
  %v2680 = vpop.f32.mrb[0].mxu0
  %v2681 = vpop.f32.mrb[0].mxu0
  %v2682 = vadd.f32 0.0, %v2681
  %v2683 = vpop.f32.mrb[0].mxu0
  %2684 = vmatprep.mubr.bf16.mxu0 %v2385
  %2685 = vmatmul.mubr.bf16.gmra.mrb[0].mxu0 %v2384
  %v2686 = vpop.f32.mrb[0].mxu0
  %v2687 = vadd.f32 0.0, %v2686
  %v2688 = vpop.f32.mrb[0].mxu0
  %v2689 = vpop.f32.mrb[0].mxu0
  %v2690 = vadd.f32 0.0, %v2689
  %v2691 = vpop.f32.mrb[0].mxu0
  %2692 = vmatprep.mubr.bf16.mxu0 %v2389
  %2693 = vmatmul.mubr.bf16.gmra.mrb[0].mxu0 %v2388
  %v2694 = vpop.f32.mrb[0].mxu0
  %v2695 = vadd.f32 0.0, %v2694
  %v2696 = vpop.f32.mrb[0].mxu0
  %v2697 = vpop.f32.mrb[0].mxu0
  %v2698 = vadd.f32 0.0, %v2697
  %v2699 = vpop.f32.mrb[0].mxu0
  %2700 = vmatprep.mubr.bf16.mxu0 %v2393
  %2701 = vmatmul.mubr.bf16.gmra.mrb[0].mxu0 %v2392
  %v2702 = vpop.f32.mrb[0].mxu0
  %v2703 = vadd.f32 0.0, %v2702
  %v2704 = vpop.f32.mrb[0].mxu0
  %v2705 = vpop.f32.mrb[0].mxu0
  %v2706 = vadd.f32 0.0, %v2705
  %v2707 = vpop.f32.mrb[0].mxu0
  %2708 = vmatprep.mubr.bf16.mxu0 %v2397
  %2709 = vmatmul.mubr.bf16.gmra.mrb[0].mxu0 %v2396
  %v2710 = vpop.f32.mrb[0].mxu0
  %v2711 = vadd.f32 0.0, %v2710
  %v2712 = vpop.f32.mrb[0].mxu0
  %v2713 = vpop.f32.mrb[0].mxu0
  %v2714 = vadd.f32 0.0, %v2713
  %v2715 = vpop.f32.mrb[0].mxu0
  %2716 = vmatprep.mubr.bf16.mxu0 %v2401
  %2717 = vmatmul.mubr.bf16.gmra.mrb[0].mxu0 %v2400
  %v2718 = vpop.f32.mrb[0].mxu0
  %v2719 = vadd.f32 0.0, %v2718
  %v2720 = vpop.f32.mrb[0].mxu0
  %v2721 = vpop.f32.mrb[0].mxu0
  %v2722 = vadd.f32 0.0, %v2721
  %v2723 = vpop.f32.mrb[0].mxu0
  %2724 = vdwg.mxu0
  %2725 = vmatprep.subr.bf16.mxu0 0
  %2726 = vmatpush1.bf16.msra.mxu0 %v2580
  %2727 = vmatprep.subr.bf16.mxu0 0
  %2728 = vmatpush1.bf16.msra.mxu0 %v2581
  %2729 = vmatprep.subr.bf16.mxu0 0
  %2730 = vmatpush1.bf16.msra.mxu0 %v2582
  %2731 = vmatprep.subr.bf16.mxu0 0
  %2732 = vmatpush1.bf16.msra.mxu0 %v2583
  %2733 = vmatprep.subr.bf16.mxu0 0
  %2734 = vmatpush1.bf16.msra.mxu0 %v2584
  %2735 = vmatprep.subr.bf16.mxu0 0
  %2736 = vmatpush1.bf16.msra.mxu0 %v2585
  %2737 = vmatprep.subr.bf16.mxu0 0
  %2738 = vmatpush1.bf16.msra.mxu0 %v2586
  %2739 = vmatprep.subr.bf16.mxu0 0
  %2740 = vmatpush1.bf16.msra.mxu0 %v2587
  %2741 = vmatprep.subr.bf16.mxu0 0
  %2742 = vmatpush1.bf16.msra.mxu0 %v2588
  %2743 = vmatprep.subr.bf16.mxu0 0
  %2744 = vmatpush1.bf16.msra.mxu0 %v2589
  %2745 = vmatprep.subr.bf16.mxu0 0
  %2746 = vmatpush1.bf16.msra.mxu0 %v2590
  %2747 = vmatprep.subr.bf16.mxu0 0
  %2748 = vmatpush1.bf16.msra.mxu0 %v2591
  %2749 = vmatprep.subr.bf16.mxu0 0
  %2750 = vmatpush1.bf16.msra.mxu0 %v2592
  %2751 = vmatprep.subr.bf16.mxu0 0
  %2752 = vmatpush1.bf16.msra.mxu0 %v2593
  %2753 = vmatprep.subr.bf16.mxu0 0
  %2754 = vmatpush1.bf16.msra.mxu0 %v2594
  %2755 = vmatprep.subr.bf16.mxu0 0
  %2756 = vmatpush1.bf16.msra.mxu0 %v2595
  %2757 = vmatprep.mubr.bf16.mxu0 %v2375
  %2758 = vmatmul.mubr.bf16.gmra.mrb[0].mxu0 %v2374
  %v2759 = vpop.f32.mrb[0].mxu0
  %v2760 = vadd.f32 %v2663, %v2759
  %v2761 = vpop.f32.mrb[0].mxu0
  %v2762 = vpop.f32.mrb[0].mxu0
  %v2763 = vadd.f32 %v2666, %v2762
  %v2764 = vpop.f32.mrb[0].mxu0
  %2765 = vmatprep.mubr.bf16.mxu0 %v2379
  %2766 = vmatmul.mubr.bf16.gmra.mrb[0].mxu0 %v2378
  %v2767 = vpop.f32.mrb[0].mxu0
  %v2768 = vadd.f32 %v2671, %v2767
  %v2769 = vpop.f32.mrb[0].mxu0
  %v2770 = vpop.f32.mrb[0].mxu0
  %v2771 = vadd.f32 %v2674, %v2770
  %v2772 = vpop.f32.mrb[0].mxu0
  %2773 = vmatprep.mubr.bf16.mxu0 %v2383
  %2774 = vmatmul.mubr.bf16.gmra.mrb[0].mxu0 %v2382
  %v2775 = vpop.f32.mrb[0].mxu0
  %v2776 = vadd.f32 %v2679, %v2775
  %v2777 = vpop.f32.mrb[0].mxu0
  %v2778 = vpop.f32.mrb[0].mxu0
  %v2779 = vadd.f32 %v2682, %v2778
  %v2780 = vpop.f32.mrb[0].mxu0
  %2781 = vmatprep.mubr.bf16.mxu0 %v2387
  %2782 = vmatmul.mubr.bf16.gmra.mrb[0].mxu0 %v2386
  %v2783 = vpop.f32.mrb[0].mxu0
  %v2784 = vadd.f32 %v2687, %v2783
  %v2785 = vpop.f32.mrb[0].mxu0
  %v2786 = vpop.f32.mrb[0].mxu0
  %v2787 = vadd.f32 %v2690, %v2786
  %v2788 = vpop.f32.mrb[0].mxu0
  %2789 = vmatprep.mubr.bf16.mxu0 %v2391
  %2790 = vmatmul.mubr.bf16.gmra.mrb[0].mxu0 %v2390
  %v2791 = vpop.f32.mrb[0].mxu0
  %v2792 = vadd.f32 %v2695, %v2791
  %v2793 = vpop.f32.mrb[0].mxu0
  %v2794 = vpop.f32.mrb[0].mxu0
  %v2795 = vadd.f32 %v2698, %v2794
  %v2796 = vpop.f32.mrb[0].mxu0
  %2797 = vmatprep.mubr.bf16.mxu0 %v2395
  %2798 = vmatmul.mubr.bf16.gmra.mrb[0].mxu0 %v2394
  %v2799 = vpop.f32.mrb[0].mxu0
  %v2800 = vadd.f32 %v2703, %v2799
  %v2801 = vpop.f32.mrb[0].mxu0
  %v2802 = vpop.f32.mrb[0].mxu0
  %v2803 = vadd.f32 %v2706, %v2802
  %v2804 = vpop.f32.mrb[0].mxu0
  %2805 = vmatprep.mubr.bf16.mxu0 %v2399
  %2806 = vmatmul.mubr.bf16.gmra.mrb[0].mxu0 %v2398
  %v2807 = vpop.f32.mrb[0].mxu0
  %v2808 = vadd.f32 %v2711, %v2807
  %v2809 = vpop.f32.mrb[0].mxu0
  %v2810 = vpop.f32.mrb[0].mxu0
  %v2811 = vadd.f32 %v2714, %v2810
  %v2812 = vpop.f32.mrb[0].mxu0
  %2813 = vmatprep.mubr.bf16.mxu0 %v2403
  %2814 = vmatmul.mubr.bf16.gmra.mrb[0].mxu0 %v2402
  %v2815 = vpop.f32.mrb[0].mxu0
  %v2816 = vadd.f32 %v2719, %v2815
  %v2817 = vpop.f32.mrb[0].mxu0
  %v2818 = vpop.f32.mrb[0].mxu0
  %v2819 = vadd.f32 %v2722, %v2818
  %v2820 = vpop.f32.mrb[0].mxu0
  %2821 = vdwg.mxu0
  %s2822 = scalar_lea.vmem %s4, 384
  %2823 = vst [vmem:[%s2822] sm:$0xff] %v2760
  %2824 = vst [vmem:[%s2822 + $0x8] sm:$0xff] %v2763
  %2825 = vst [vmem:[%s2822 + $0x10] sm:$0xff] %v2768
  %2826 = vst [vmem:[%s2822 + $0x18] sm:$0xff] %v2771
  %2827 = vst [vmem:[%s2822 + $0x20] sm:$0xff] %v2776
  %2828 = vst [vmem:[%s2822 + $0x28] sm:$0xff] %v2779
  %2829 = vst [vmem:[%s2822 + $0x30] sm:$0xff] %v2784
  %2830 = vst [vmem:[%s2822 + $0x38] sm:$0xff] %v2787
  %2831 = vst [vmem:[%s2822 + $0x40] sm:$0xff] %v2792
  %2832 = vst [vmem:[%s2822 + $0x48] sm:$0xff] %v2795
  %2833 = vst [vmem:[%s2822 + $0x50] sm:$0xff] %v2800
  %2834 = vst [vmem:[%s2822 + $0x58] sm:$0xff] %v2803
  %2835 = vst [vmem:[%s2822 + $0x60] sm:$0xff] %v2808
  %2836 = vst [vmem:[%s2822 + $0x68] sm:$0xff] %v2811
  %2837 = vst [vmem:[%s2822 + $0x70] sm:$0xff] %v2816
  %2838 = vst [vmem:[%s2822 + $0x78] sm:$0xff] %v2819
  %v2839 = vadd.f32 %v2760, %v2763
  %v2840 = vadd.f32 %v2839, %v2768
  %v2841 = vadd.f32 %v2840, %v2771
  %v2842 = vadd.f32 %v2841, %v2776
  %v2843 = vadd.f32 %v2842, %v2779
  %v2844 = vadd.f32 %v2843, %v2784
  %v2845 = vadd.f32 %v2844, %v2787
  %v2846 = vadd.f32 %v2845, %v2792
  %v2847 = vadd.f32 %v2846, %v2795
  %v2848 = vadd.f32 %v2847, %v2800
  %v2849 = vadd.f32 %v2848, %v2803
  %v2850 = vadd.f32 %v2849, %v2808
  %v2851 = vadd.f32 %v2850, %v2811
  %v2852 = vadd.f32 %v2851, %v2816
  %v2853 = vadd.f32 %v2852, %v2819
  %v2854 = vrot.slane %v2853, 4
  %v2855 = vadd.f32 %v2853, %v2854
  %v2856 = vrot.slane %v2855, 2
  %v2857 = vadd.f32 %v2855, %v2856
  %v2858 = vrot.slane %v2857, 1
  %v2859 = vadd.f32 %v2857, %v2858
  %v2860 = vadd.f32 %v2139, %v2859
  %v2861 = vmul.f32 %v2760, %v2760
  %v2862 = vmul.f32 %v2763, %v2763
  %v2863 = vmul.f32 %v2768, %v2768
  %v2864 = vmul.f32 %v2771, %v2771
  %v2865 = vmul.f32 %v2776, %v2776
  %v2866 = vmul.f32 %v2779, %v2779
  %v2867 = vmul.f32 %v2784, %v2784
  %v2868 = vmul.f32 %v2787, %v2787
  %v2869 = vmul.f32 %v2792, %v2792
  %v2870 = vmul.f32 %v2795, %v2795
  %v2871 = vmul.f32 %v2800, %v2800
  %v2872 = vmul.f32 %v2803, %v2803
  %v2873 = vmul.f32 %v2808, %v2808
  %v2874 = vmul.f32 %v2811, %v2811
  %v2875 = vmul.f32 %v2816, %v2816
  %v2876 = vmul.f32 %v2819, %v2819
  %v2877 = vadd.f32 %v2861, %v2862
  %v2878 = vadd.f32 %v2877, %v2863
  %v2879 = vadd.f32 %v2878, %v2864
  %v2880 = vadd.f32 %v2879, %v2865
  %v2881 = vadd.f32 %v2880, %v2866
  %v2882 = vadd.f32 %v2881, %v2867
  %v2883 = vadd.f32 %v2882, %v2868
  %v2884 = vadd.f32 %v2883, %v2869
  %v2885 = vadd.f32 %v2884, %v2870
  %v2886 = vadd.f32 %v2885, %v2871
  %v2887 = vadd.f32 %v2886, %v2872
  %v2888 = vadd.f32 %v2887, %v2873
  %v2889 = vadd.f32 %v2888, %v2874
  %v2890 = vadd.f32 %v2889, %v2875
  %v2891 = vadd.f32 %v2890, %v2876
  %v2892 = vrot.slane %v2891, 4
  %v2893 = vadd.f32 %v2891, %v2892
  %v2894 = vrot.slane %v2893, 2
  %v2895 = vadd.f32 %v2893, %v2894
  %v2896 = vrot.slane %v2895, 1
  %v2897 = vadd.f32 %v2895, %v2896
  %v2898 = vadd.f32 %v2177, %v2897
  %v2899 = vrcp.pop 512.0
  %v2900 = vmul.f32 %v2860, %v2899
  %v2901 = vmul.f32 %v2898, %v2899
  %v2902 = vmul.f32 %v2900, %v2900
  %v2903 = vsub.f32 %v2901, %v2902
  %v2904 = vld [vmem:[%s2] sm:$0x1]
  %v2905 = vadd.f32 %v2903, 1e-05
  %v2906 = vrsqrt.pop %v2905
  %v2907 = vmul.f32 %v2904, %v2906
  %v2908 = vld [vmem:[%s3] sm:$0x1]
  %v2909 = vmul.f32 %v2900, %v2907
  %v2910 = vsub.f32 %v2908, %v2909
  %v2911 = vld [vmem:[%s4] sm:$0xff]
  %v2912 = vld [vmem:[%s4 + $0x8] sm:$0xff]
  %v2913 = vld [vmem:[%s4 + $0x10] sm:$0xff]
  %v2914 = vld [vmem:[%s4 + $0x18] sm:$0xff]
  %v2915 = vld [vmem:[%s4 + $0x20] sm:$0xff]
  %v2916 = vld [vmem:[%s4 + $0x28] sm:$0xff]
  %v2917 = vld [vmem:[%s4 + $0x30] sm:$0xff]
  %v2918 = vld [vmem:[%s4 + $0x38] sm:$0xff]
  %v2919 = vld [vmem:[%s4 + $0x40] sm:$0xff]
  %v2920 = vld [vmem:[%s4 + $0x48] sm:$0xff]
  %v2921 = vld [vmem:[%s4 + $0x50] sm:$0xff]
  %v2922 = vld [vmem:[%s4 + $0x58] sm:$0xff]
  %v2923 = vld [vmem:[%s4 + $0x60] sm:$0xff]
  %v2924 = vld [vmem:[%s4 + $0x68] sm:$0xff]
  %v2925 = vld [vmem:[%s4 + $0x70] sm:$0xff]
  %v2926 = vld [vmem:[%s4 + $0x78] sm:$0xff]
  %v2928 = vlaneseq
  %v2929 = vshrl.u32 %v2928, 7
  %v2930 = vsub.s32 0, %v2929
  %v2931 = vrot.slane %v2907, %v2930
  %v2933 = vmul.f32 %v2911, %v2931
  %v2934 = vmul.f32 %v2912, %v2931
  %v2935 = vmul.f32 %v2913, %v2931
  %v2936 = vmul.f32 %v2914, %v2931
  %v2937 = vmul.f32 %v2915, %v2931
  %v2938 = vmul.f32 %v2916, %v2931
  %v2939 = vmul.f32 %v2917, %v2931
  %v2940 = vmul.f32 %v2918, %v2931
  %v2941 = vmul.f32 %v2919, %v2931
  %v2942 = vmul.f32 %v2920, %v2931
  %v2943 = vmul.f32 %v2921, %v2931
  %v2944 = vmul.f32 %v2922, %v2931
  %v2945 = vmul.f32 %v2923, %v2931
  %v2946 = vmul.f32 %v2924, %v2931
  %v2947 = vmul.f32 %v2925, %v2931
  %v2948 = vmul.f32 %v2926, %v2931
  %v2950 = vlaneseq
  %v2951 = vshrl.u32 %v2950, 7
  %v2952 = vsub.s32 0, %v2951
  %v2953 = vrot.slane %v2910, %v2952
  %v2955 = vadd.f32 %v2933, %v2953
  %v2956 = vadd.f32 %v2934, %v2953
  %v2957 = vadd.f32 %v2935, %v2953
  %v2958 = vadd.f32 %v2936, %v2953
  %v2959 = vadd.f32 %v2937, %v2953
  %v2960 = vadd.f32 %v2938, %v2953
  %v2961 = vadd.f32 %v2939, %v2953
  %v2962 = vadd.f32 %v2940, %v2953
  %v2963 = vadd.f32 %v2941, %v2953
  %v2964 = vadd.f32 %v2942, %v2953
  %v2965 = vadd.f32 %v2943, %v2953
  %v2966 = vadd.f32 %v2944, %v2953
  %v2967 = vadd.f32 %v2945, %v2953
  %v2968 = vadd.f32 %v2946, %v2953
  %v2969 = vadd.f32 %v2947, %v2953
  %v2970 = vadd.f32 %v2948, %v2953
  %v2971 = vmax.f32 %v2955, 0.0
  %v2972 = vmax.f32 %v2956, 0.0
  %v2973 = vmax.f32 %v2957, 0.0
  %v2974 = vmax.f32 %v2958, 0.0
  %v2975 = vmax.f32 %v2959, 0.0
  %v2976 = vmax.f32 %v2960, 0.0
  %v2977 = vmax.f32 %v2961, 0.0
  %v2978 = vmax.f32 %v2962, 0.0
  %v2979 = vmax.f32 %v2963, 0.0
  %v2980 = vmax.f32 %v2964, 0.0
  %v2981 = vmax.f32 %v2965, 0.0
  %v2982 = vmax.f32 %v2966, 0.0
  %v2983 = vmax.f32 %v2967, 0.0
  %v2984 = vmax.f32 %v2968, 0.0
  %v2985 = vmax.f32 %v2969, 0.0
  %v2986 = vmax.f32 %v2970, 0.0
  %2987 = vst [vmem:[%s4] sm:$0xff] %v2971
  %2988 = vst [vmem:[%s4 + $0x8] sm:$0xff] %v2972
  %2989 = vst [vmem:[%s4 + $0x10] sm:$0xff] %v2973
  %2990 = vst [vmem:[%s4 + $0x18] sm:$0xff] %v2974
  %2991 = vst [vmem:[%s4 + $0x20] sm:$0xff] %v2975
  %2992 = vst [vmem:[%s4 + $0x28] sm:$0xff] %v2976
  %2993 = vst [vmem:[%s4 + $0x30] sm:$0xff] %v2977
  %2994 = vst [vmem:[%s4 + $0x38] sm:$0xff] %v2978
  %2995 = vst [vmem:[%s4 + $0x40] sm:$0xff] %v2979
  %2996 = vst [vmem:[%s4 + $0x48] sm:$0xff] %v2980
  %2997 = vst [vmem:[%s4 + $0x50] sm:$0xff] %v2981
  %2998 = vst [vmem:[%s4 + $0x58] sm:$0xff] %v2982
  %2999 = vst [vmem:[%s4 + $0x60] sm:$0xff] %v2983
  %3000 = vst [vmem:[%s4 + $0x68] sm:$0xff] %v2984
  %3001 = vst [vmem:[%s4 + $0x70] sm:$0xff] %v2985
  %3002 = vst [vmem:[%s4 + $0x78] sm:$0xff] %v2986
  %v3003 = vld [vmem:[%s1380] sm:$0xff]
  %v3004 = vld [vmem:[%s1380 + $0x8] sm:$0xff]
  %v3005 = vld [vmem:[%s1380 + $0x10] sm:$0xff]
  %v3006 = vld [vmem:[%s1380 + $0x18] sm:$0xff]
  %v3007 = vld [vmem:[%s1380 + $0x20] sm:$0xff]
  %v3008 = vld [vmem:[%s1380 + $0x28] sm:$0xff]
  %v3009 = vld [vmem:[%s1380 + $0x30] sm:$0xff]
  %v3010 = vld [vmem:[%s1380 + $0x38] sm:$0xff]
  %v3011 = vld [vmem:[%s1380 + $0x40] sm:$0xff]
  %v3012 = vld [vmem:[%s1380 + $0x48] sm:$0xff]
  %v3013 = vld [vmem:[%s1380 + $0x50] sm:$0xff]
  %v3014 = vld [vmem:[%s1380 + $0x58] sm:$0xff]
  %v3015 = vld [vmem:[%s1380 + $0x60] sm:$0xff]
  %v3016 = vld [vmem:[%s1380 + $0x68] sm:$0xff]
  %v3017 = vld [vmem:[%s1380 + $0x70] sm:$0xff]
  %v3018 = vld [vmem:[%s1380 + $0x78] sm:$0xff]
  %v3019 = vmul.f32 %v3003, %v2931
  %v3020 = vmul.f32 %v3004, %v2931
  %v3021 = vmul.f32 %v3005, %v2931
  %v3022 = vmul.f32 %v3006, %v2931
  %v3023 = vmul.f32 %v3007, %v2931
  %v3024 = vmul.f32 %v3008, %v2931
  %v3025 = vmul.f32 %v3009, %v2931
  %v3026 = vmul.f32 %v3010, %v2931
  %v3027 = vmul.f32 %v3011, %v2931
  %v3028 = vmul.f32 %v3012, %v2931
  %v3029 = vmul.f32 %v3013, %v2931
  %v3030 = vmul.f32 %v3014, %v2931
  %v3031 = vmul.f32 %v3015, %v2931
  %v3032 = vmul.f32 %v3016, %v2931
  %v3033 = vmul.f32 %v3017, %v2931
  %v3034 = vmul.f32 %v3018, %v2931
  %v3035 = vadd.f32 %v3019, %v2953
  %v3036 = vadd.f32 %v3020, %v2953
  %v3037 = vadd.f32 %v3021, %v2953
  %v3038 = vadd.f32 %v3022, %v2953
  %v3039 = vadd.f32 %v3023, %v2953
  %v3040 = vadd.f32 %v3024, %v2953
  %v3041 = vadd.f32 %v3025, %v2953
  %v3042 = vadd.f32 %v3026, %v2953
  %v3043 = vadd.f32 %v3027, %v2953
  %v3044 = vadd.f32 %v3028, %v2953
  %v3045 = vadd.f32 %v3029, %v2953
  %v3046 = vadd.f32 %v3030, %v2953
  %v3047 = vadd.f32 %v3031, %v2953
  %v3048 = vadd.f32 %v3032, %v2953
  %v3049 = vadd.f32 %v3033, %v2953
  %v3050 = vadd.f32 %v3034, %v2953
  %v3051 = vmax.f32 %v3035, 0.0
  %v3052 = vmax.f32 %v3036, 0.0
  %v3053 = vmax.f32 %v3037, 0.0
  %v3054 = vmax.f32 %v3038, 0.0
  %v3055 = vmax.f32 %v3039, 0.0
  %v3056 = vmax.f32 %v3040, 0.0
  %v3057 = vmax.f32 %v3041, 0.0
  %v3058 = vmax.f32 %v3042, 0.0
  %v3059 = vmax.f32 %v3043, 0.0
  %v3060 = vmax.f32 %v3044, 0.0
  %v3061 = vmax.f32 %v3045, 0.0
  %v3062 = vmax.f32 %v3046, 0.0
  %v3063 = vmax.f32 %v3047, 0.0
  %v3064 = vmax.f32 %v3048, 0.0
  %v3065 = vmax.f32 %v3049, 0.0
  %v3066 = vmax.f32 %v3050, 0.0
  %3067 = vst [vmem:[%s1380] sm:$0xff] %v3051
  %3068 = vst [vmem:[%s1380 + $0x8] sm:$0xff] %v3052
  %3069 = vst [vmem:[%s1380 + $0x10] sm:$0xff] %v3053
  %3070 = vst [vmem:[%s1380 + $0x18] sm:$0xff] %v3054
  %3071 = vst [vmem:[%s1380 + $0x20] sm:$0xff] %v3055
  %3072 = vst [vmem:[%s1380 + $0x28] sm:$0xff] %v3056
  %3073 = vst [vmem:[%s1380 + $0x30] sm:$0xff] %v3057
  %3074 = vst [vmem:[%s1380 + $0x38] sm:$0xff] %v3058
  %3075 = vst [vmem:[%s1380 + $0x40] sm:$0xff] %v3059
  %3076 = vst [vmem:[%s1380 + $0x48] sm:$0xff] %v3060
  %3077 = vst [vmem:[%s1380 + $0x50] sm:$0xff] %v3061
  %3078 = vst [vmem:[%s1380 + $0x58] sm:$0xff] %v3062
  %3079 = vst [vmem:[%s1380 + $0x60] sm:$0xff] %v3063
  %3080 = vst [vmem:[%s1380 + $0x68] sm:$0xff] %v3064
  %3081 = vst [vmem:[%s1380 + $0x70] sm:$0xff] %v3065
  %3082 = vst [vmem:[%s1380 + $0x78] sm:$0xff] %v3066
  %v3083 = vld [vmem:[%s2101] sm:$0xff]
  %v3084 = vld [vmem:[%s2101 + $0x8] sm:$0xff]
  %v3085 = vld [vmem:[%s2101 + $0x10] sm:$0xff]
  %v3086 = vld [vmem:[%s2101 + $0x18] sm:$0xff]
  %v3087 = vld [vmem:[%s2101 + $0x20] sm:$0xff]
  %v3088 = vld [vmem:[%s2101 + $0x28] sm:$0xff]
  %v3089 = vld [vmem:[%s2101 + $0x30] sm:$0xff]
  %v3090 = vld [vmem:[%s2101 + $0x38] sm:$0xff]
  %v3091 = vld [vmem:[%s2101 + $0x40] sm:$0xff]
  %v3092 = vld [vmem:[%s2101 + $0x48] sm:$0xff]
  %v3093 = vld [vmem:[%s2101 + $0x50] sm:$0xff]
  %v3094 = vld [vmem:[%s2101 + $0x58] sm:$0xff]
  %v3095 = vld [vmem:[%s2101 + $0x60] sm:$0xff]
  %v3096 = vld [vmem:[%s2101 + $0x68] sm:$0xff]
  %v3097 = vld [vmem:[%s2101 + $0x70] sm:$0xff]
  %v3098 = vld [vmem:[%s2101 + $0x78] sm:$0xff]
  %v3099 = vmul.f32 %v3083, %v2931
  %v3100 = vmul.f32 %v3084, %v2931
  %v3101 = vmul.f32 %v3085, %v2931
  %v3102 = vmul.f32 %v3086, %v2931
  %v3103 = vmul.f32 %v3087, %v2931
  %v3104 = vmul.f32 %v3088, %v2931
  %v3105 = vmul.f32 %v3089, %v2931
  %v3106 = vmul.f32 %v3090, %v2931
  %v3107 = vmul.f32 %v3091, %v2931
  %v3108 = vmul.f32 %v3092, %v2931
  %v3109 = vmul.f32 %v3093, %v2931
  %v3110 = vmul.f32 %v3094, %v2931
  %v3111 = vmul.f32 %v3095, %v2931
  %v3112 = vmul.f32 %v3096, %v2931
  %v3113 = vmul.f32 %v3097, %v2931
  %v3114 = vmul.f32 %v3098, %v2931
  %v3115 = vadd.f32 %v3099, %v2953
  %v3116 = vadd.f32 %v3100, %v2953
  %v3117 = vadd.f32 %v3101, %v2953
  %v3118 = vadd.f32 %v3102, %v2953
  %v3119 = vadd.f32 %v3103, %v2953
  %v3120 = vadd.f32 %v3104, %v2953
  %v3121 = vadd.f32 %v3105, %v2953
  %v3122 = vadd.f32 %v3106, %v2953
  %v3123 = vadd.f32 %v3107, %v2953
  %v3124 = vadd.f32 %v3108, %v2953
  %v3125 = vadd.f32 %v3109, %v2953
  %v3126 = vadd.f32 %v3110, %v2953
  %v3127 = vadd.f32 %v3111, %v2953
  %v3128 = vadd.f32 %v3112, %v2953
  %v3129 = vadd.f32 %v3113, %v2953
  %v3130 = vadd.f32 %v3114, %v2953
  %v3131 = vmax.f32 %v3115, 0.0
  %v3132 = vmax.f32 %v3116, 0.0
  %v3133 = vmax.f32 %v3117, 0.0
  %v3134 = vmax.f32 %v3118, 0.0
  %v3135 = vmax.f32 %v3119, 0.0
  %v3136 = vmax.f32 %v3120, 0.0
  %v3137 = vmax.f32 %v3121, 0.0
  %v3138 = vmax.f32 %v3122, 0.0
  %v3139 = vmax.f32 %v3123, 0.0
  %v3140 = vmax.f32 %v3124, 0.0
  %v3141 = vmax.f32 %v3125, 0.0
  %v3142 = vmax.f32 %v3126, 0.0
  %v3143 = vmax.f32 %v3127, 0.0
  %v3144 = vmax.f32 %v3128, 0.0
  %v3145 = vmax.f32 %v3129, 0.0
  %v3146 = vmax.f32 %v3130, 0.0
  %3147 = vst [vmem:[%s2101] sm:$0xff] %v3131
  %3148 = vst [vmem:[%s2101 + $0x8] sm:$0xff] %v3132
  %3149 = vst [vmem:[%s2101 + $0x10] sm:$0xff] %v3133
  %3150 = vst [vmem:[%s2101 + $0x18] sm:$0xff] %v3134
  %3151 = vst [vmem:[%s2101 + $0x20] sm:$0xff] %v3135
  %3152 = vst [vmem:[%s2101 + $0x28] sm:$0xff] %v3136
  %3153 = vst [vmem:[%s2101 + $0x30] sm:$0xff] %v3137
  %3154 = vst [vmem:[%s2101 + $0x38] sm:$0xff] %v3138
  %3155 = vst [vmem:[%s2101 + $0x40] sm:$0xff] %v3139
  %3156 = vst [vmem:[%s2101 + $0x48] sm:$0xff] %v3140
  %3157 = vst [vmem:[%s2101 + $0x50] sm:$0xff] %v3141
  %3158 = vst [vmem:[%s2101 + $0x58] sm:$0xff] %v3142
  %3159 = vst [vmem:[%s2101 + $0x60] sm:$0xff] %v3143
  %3160 = vst [vmem:[%s2101 + $0x68] sm:$0xff] %v3144
  %3161 = vst [vmem:[%s2101 + $0x70] sm:$0xff] %v3145
  %3162 = vst [vmem:[%s2101 + $0x78] sm:$0xff] %v3146
  %v3163 = vld [vmem:[%s2822] sm:$0xff]
  %v3164 = vld [vmem:[%s2822 + $0x8] sm:$0xff]
  %v3165 = vld [vmem:[%s2822 + $0x10] sm:$0xff]
  %v3166 = vld [vmem:[%s2822 + $0x18] sm:$0xff]
  %v3167 = vld [vmem:[%s2822 + $0x20] sm:$0xff]
  %v3168 = vld [vmem:[%s2822 + $0x28] sm:$0xff]
  %v3169 = vld [vmem:[%s2822 + $0x30] sm:$0xff]
  %v3170 = vld [vmem:[%s2822 + $0x38] sm:$0xff]
  %v3171 = vld [vmem:[%s2822 + $0x40] sm:$0xff]
  %v3172 = vld [vmem:[%s2822 + $0x48] sm:$0xff]
  %v3173 = vld [vmem:[%s2822 + $0x50] sm:$0xff]
  %v3174 = vld [vmem:[%s2822 + $0x58] sm:$0xff]
  %v3175 = vld [vmem:[%s2822 + $0x60] sm:$0xff]
  %v3176 = vld [vmem:[%s2822 + $0x68] sm:$0xff]
  %v3177 = vld [vmem:[%s2822 + $0x70] sm:$0xff]
  %v3178 = vld [vmem:[%s2822 + $0x78] sm:$0xff]
  %v3179 = vmul.f32 %v3163, %v2931
  %v3180 = vmul.f32 %v3164, %v2931
  %v3181 = vmul.f32 %v3165, %v2931
  %v3182 = vmul.f32 %v3166, %v2931
  %v3183 = vmul.f32 %v3167, %v2931
  %v3184 = vmul.f32 %v3168, %v2931
  %v3185 = vmul.f32 %v3169, %v2931
  %v3186 = vmul.f32 %v3170, %v2931
  %v3187 = vmul.f32 %v3171, %v2931
  %v3188 = vmul.f32 %v3172, %v2931
  %v3189 = vmul.f32 %v3173, %v2931
  %v3190 = vmul.f32 %v3174, %v2931
  %v3191 = vmul.f32 %v3175, %v2931
  %v3192 = vmul.f32 %v3176, %v2931
  %v3193 = vmul.f32 %v3177, %v2931
  %v3194 = vmul.f32 %v3178, %v2931
  %v3195 = vadd.f32 %v3179, %v2953
  %v3196 = vadd.f32 %v3180, %v2953
  %v3197 = vadd.f32 %v3181, %v2953
  %v3198 = vadd.f32 %v3182, %v2953
  %v3199 = vadd.f32 %v3183, %v2953
  %v3200 = vadd.f32 %v3184, %v2953
  %v3201 = vadd.f32 %v3185, %v2953
  %v3202 = vadd.f32 %v3186, %v2953
  %v3203 = vadd.f32 %v3187, %v2953
  %v3204 = vadd.f32 %v3188, %v2953
  %v3205 = vadd.f32 %v3189, %v2953
  %v3206 = vadd.f32 %v3190, %v2953
  %v3207 = vadd.f32 %v3191, %v2953
  %v3208 = vadd.f32 %v3192, %v2953
  %v3209 = vadd.f32 %v3193, %v2953
  %v3210 = vadd.f32 %v3194, %v2953
  %v3211 = vmax.f32 %v3195, 0.0
  %v3212 = vmax.f32 %v3196, 0.0
  %v3213 = vmax.f32 %v3197, 0.0
  %v3214 = vmax.f32 %v3198, 0.0
  %v3215 = vmax.f32 %v3199, 0.0
  %v3216 = vmax.f32 %v3200, 0.0
  %v3217 = vmax.f32 %v3201, 0.0
  %v3218 = vmax.f32 %v3202, 0.0
  %v3219 = vmax.f32 %v3203, 0.0
  %v3220 = vmax.f32 %v3204, 0.0
  %v3221 = vmax.f32 %v3205, 0.0
  %v3222 = vmax.f32 %v3206, 0.0
  %v3223 = vmax.f32 %v3207, 0.0
  %v3224 = vmax.f32 %v3208, 0.0
  %v3225 = vmax.f32 %v3209, 0.0
  %v3226 = vmax.f32 %v3210, 0.0
  %3227 = vst [vmem:[%s2822] sm:$0xff] %v3211
  %3228 = vst [vmem:[%s2822 + $0x8] sm:$0xff] %v3212
  %3229 = vst [vmem:[%s2822 + $0x10] sm:$0xff] %v3213
  %3230 = vst [vmem:[%s2822 + $0x18] sm:$0xff] %v3214
  %3231 = vst [vmem:[%s2822 + $0x20] sm:$0xff] %v3215
  %3232 = vst [vmem:[%s2822 + $0x28] sm:$0xff] %v3216
  %3233 = vst [vmem:[%s2822 + $0x30] sm:$0xff] %v3217
  %3234 = vst [vmem:[%s2822 + $0x38] sm:$0xff] %v3218
  %3235 = vst [vmem:[%s2822 + $0x40] sm:$0xff] %v3219
  %3236 = vst [vmem:[%s2822 + $0x48] sm:$0xff] %v3220
  %3237 = vst [vmem:[%s2822 + $0x50] sm:$0xff] %v3221
  %3238 = vst [vmem:[%s2822 + $0x58] sm:$0xff] %v3222
  %3239 = vst [vmem:[%s2822 + $0x60] sm:$0xff] %v3223
  %3240 = vst [vmem:[%s2822 + $0x68] sm:$0xff] %v3224
  %3241 = vst [vmem:[%s2822 + $0x70] sm:$0xff] %v3225
  %3242 = vst [vmem:[%s2822 + $0x78] sm:$0xff] %v3226
  // Predicated region
  $region18: #{generator_forward.6} parent=0 // pred_check
    _
  $region19: #{generator_forward.6} parent=0 // pred_check_branch
    %3244 = sbr.rel (0) target = $region21
  $region20: #{generator_forward.6} parent=0 // pred_region
    _
  $region21: #{generator_forward.6} parent=0 // pred_fallthru
    _
  // Predicated region
  $region22: #{generator_forward.6} parent=0 // pred_check
    _
  $region23: #{generator_forward.6} parent=0 // pred_check_branch
    %3246 = sbr.rel (0) target = $region25
  $region24: #{generator_forward.6} parent=0 // pred_region
    _
  $region25: #{generator_forward.6} parent=0 // pred_fallthru
    _

// kernel: generator_forward.7
$region0: #{generator_forward.7}
  #allocation0 [shape = 'u32[]', space=smem, size = 0x4, offset = 0x4, fixed_abs, tag = 'smem constant byte address 0x4 - core index']
  #allocation1 [shape = 'u32[144,128]{1,0:T(1,128)}', space=vmem, size = 0x12000, scoped, tag = 'internal scratch']
  %s0 = inlined_call_operand.vmem [shape: bf16[4,512,256], index: 0, kind: input, shape index: {}]
  %s1 = inlined_call_operand.vmem [shape: bf16[4,256,128], index: 1, kind: input, shape index: {}]
  %s2 = inlined_call_operand.vmem [shape: f32[4,512,128], index: 2, kind: output, shape index: {}]
  %s3 = sld [smem:[#allocation0]]
  $region41: #{generator_forward.7} parent=0
    _
  %s5 = ssub.s32 1, %s3
  %s6 = scalar_select 0, %s5, %s3
  loop: start=0, step=1, limit=6
  $region2: #{generator_forward.7} parent=0 // loop_pre_header
    _
  $region3: #{generator_forward.7} parent=0 // loop_header
    %s8 = sphi 0, %s12
    %p9 = scmp.ge.s32.totalorder %s8, 6
    %s18 = sphi 0, %s20
    %s21 = sphi 0, %s18
    %s22 = sphi 0, %s21
    %s38 = sphi 0, %s22
    %s44 = sphi 0, %s46
    %s47 = sphi 0, %s44
    %s48 = sphi 0, %s47
    %s64 = sphi 0, %s48
    %s70 = sphi 0, %s72
    %s73 = sphi 0, %s70
    %s74 = sphi 0, %s73
    %s90 = sphi 0, %s74
  $region4: #{generator_forward.7} parent=0 // loop_header_branch
    %11 = sbr.rel (%p9) target = $region8
  $region5: #{generator_forward.7} parent=0 // loop_body
    %s13 = ssub.s32 %s8, 1
    %s14 = ssub.s32 %s8, 2
    %s15 = sadd.s32 %s8, 1
    %s16 = ssub.s32 %s8, %s15
    %p17 = scmp.eq.s32.totalorder %s16, 0
    %s19 = sadd.s32 %s18, 1
    %s20 = scalar_select %p17, %s18, %s19
    %p23 = pneg %p17
    %p24 = scmp.eq.s32.totalorder %s8, 3
    %p25 = por %p23, %p24
    %p26 = scmp.ne.s32.totalorder %s18, %s21
    %p27 = scmp.eq.s32.totalorder %s8, 0
    %p28 = por %p26, %p27
    %p29 = scmp.ne.s32.totalorder %s18, %s21
    %p30 = scmp.eq.s32.totalorder %s13, 3
    %p31 = por %p29, %p30
    %p32 = scmp.ne.s32.totalorder %s21, %s22
    %p33 = scmp.eq.s32.totalorder %s13, 0
    %p34 = por %p32, %p33
    %p35 = scmp.ne.s32.totalorder %s21, %s22
    %p36 = scmp.eq.s32.totalorder %s14, 3
    %p37 = por %p35, %p36
    %p39 = scmp.ne.s32.totalorder %s22, %s38
    %p40 = scmp.eq.s32.totalorder %s14, 0
    %p41 = por %p39, %p40
    %s42 = ssub.s32 %s8, %s15
    %p43 = scmp.eq.s32.totalorder %s42, 0
    %s45 = sadd.s32 %s44, 1
    %s46 = scalar_select %p43, %s44, %s45
    %p49 = pneg %p43
    %p50 = scmp.eq.s32.totalorder %s8, 3
    %p51 = por %p49, %p50
    %p52 = scmp.ne.s32.totalorder %s44, %s47
    %p53 = scmp.eq.s32.totalorder %s8, 0
    %p54 = por %p52, %p53
    %p55 = scmp.ne.s32.totalorder %s44, %s47
    %p56 = scmp.eq.s32.totalorder %s13, 3
    %p57 = por %p55, %p56
    %p58 = scmp.ne.s32.totalorder %s47, %s48
    %p59 = scmp.eq.s32.totalorder %s13, 0
    %p60 = por %p58, %p59
    %p61 = scmp.ne.s32.totalorder %s47, %s48
    %p62 = scmp.eq.s32.totalorder %s14, 3
    %p63 = por %p61, %p62
    %p65 = scmp.ne.s32.totalorder %s48, %s64
    %p66 = scmp.eq.s32.totalorder %s14, 0
    %p67 = por %p65, %p66
    %s68 = ssub.s32 %s8, %s15
    %p69 = scmp.eq.s32.totalorder %s68, 0
    %s71 = sadd.s32 %s70, 1
    %s72 = scalar_select %p69, %s70, %s71
    %p75 = pneg %p69
    %p76 = scmp.eq.s32.totalorder %s8, 3
    %p77 = por %p75, %p76
    %p78 = scmp.ne.s32.totalorder %s70, %s73
    %p79 = scmp.eq.s32.totalorder %s8, 0
    %p80 = por %p78, %p79
    %p81 = scmp.ne.s32.totalorder %s70, %s73
    %p82 = scmp.eq.s32.totalorder %s13, 3
    %p83 = por %p81, %p82
    %p84 = scmp.ne.s32.totalorder %s73, %s74
    %p85 = scmp.eq.s32.totalorder %s13, 0
    %p86 = por %p84, %p85
    %p87 = scmp.ne.s32.totalorder %s73, %s74
    %p88 = scmp.eq.s32.totalorder %s14, 3
    %p89 = por %p87, %p88
    %p91 = scmp.ne.s32.totalorder %s74, %s90
    %p92 = scmp.eq.s32.totalorder %s14, 0
    %p93 = por %p91, %p92
    %p94 = scmp.le.s32.totalorder 1, %s8
    %p95 = scmp.lt.s32.totalorder %s8, 5
    %p96 = pnand %p94, %p95
    %p97 = pneg %p96
    // Predicated region
    $region9: #{generator_forward.7} parent=5 // pred_check
      _
    $region10: #{generator_forward.7} parent=5 // pred_check_branch
      %99 = sbr.rel (%p96) target = $region12
    $region11: #{generator_forward.7} parent=5 // pred_region
      %s100 = ssub.s32 %s8, 1
    $region12: #{generator_forward.7} parent=5 // pred_fallthru
      _
    %p101 = scmp.lt.s32.totalorder %s8, 4
    // Predicated region
    $region13: #{generator_forward.7} parent=5 // pred_check
      %p102 = pneg %p101
    $region14: #{generator_forward.7} parent=5 // pred_check_branch
      %104 = sbr.rel (%p102) target = $region16
    $region15: #{generator_forward.7} parent=5 // pred_region
      // Predicated region
      $region17: #{generator_forward.7} parent=15 // pred_check
        %p105 = pneg %p28
      $region18: #{generator_forward.7} parent=15 // pred_check_branch
        %107 = sbr.rel (%p105) target = $region20
      $region19: #{generator_forward.7} parent=15 // pred_region
        %p108 = scmp.lt.s32.totalorder %s8, 3
        %s109 = scalar_select %p108, %s8, 3
        %s110 = smul.addr %s109, 128
        %s111 = smul.addr %s110, 4
        %s112 = scalar_lea.vmem %s0, %s111
      $region20: #{generator_forward.7} parent=15 // pred_fallthru
        _
      // Predicated region
      $region21: #{generator_forward.7} parent=15 // pred_check
        %p113 = pneg %p54
      $region22: #{generator_forward.7} parent=15 // pred_check_branch
        %115 = sbr.rel (%p113) target = $region24
      $region23: #{generator_forward.7} parent=15 // pred_region
        %p116 = scmp.lt.s32.totalorder %s8, 3
        %s117 = scalar_select %p116, %s8, 3
        %s118 = smul.addr %s117, 32
        %s119 = smul.addr %s118, 4
        %s120 = scalar_lea.vmem %s1, %s119
      $region24: #{generator_forward.7} parent=15 // pred_fallthru
        _
    $region16: #{generator_forward.7} parent=5 // pred_fallthru
      _
    %p121 = scmp.le.s32.totalorder 1, %s8
    %p122 = scmp.lt.s32.totalorder %s8, 5
    %p123 = pnand %p121, %p122
    %p124 = pneg %p123
    // Predicated region
    $region25: #{generator_forward.7} parent=5 // pred_check
      _
    $region26: #{generator_forward.7} parent=5 // pred_check_branch
      %126 = sbr.rel (%p123) target = $region28
    $region27: #{generator_forward.7} parent=5 // pred_region
      %s127 = ssub.s32 %s8, 1
      %p128 = scmp.lt.s32.totalorder %s13, 3
      %s129 = scalar_select %p128, %s13, 3
      %s130 = smul.addr %s129, 128
      %s131 = smul.addr %s130, 4
      %s132 = scalar_lea.vmem %s0, %s131
      %p133 = pneg %p34
      %p134 = pneg %p31
      %p135 = scmp.lt.s32.totalorder %s13, 3
      %s136 = scalar_select %p135, %s13, 3
      %s137 = smul.addr %s136, 32
      %s138 = smul.addr %s137, 4
      %s139 = scalar_lea.vmem %s1, %s138
      %p140 = pneg %p60
      %p141 = pneg %p57
      %p142 = pneg %p86
      %p143 = pneg %p83
      %p144 = scmp.lt.s32.totalorder %s13, 3
      %s145 = scalar_select %p144, %s13, 3
      %s146 = smul.addr %s145, 64
      %s147 = smul.addr %s146, 8
      %s148 = scalar_lea.vmem %s2, %s147
      %p149 = scmp.lt.s32.totalorder %s13, 3
      %s150 = scalar_select %p149, %s13, 3
      %s151 = smul.addr %s150, 128
      %s152 = smul.addr %s151, 4
      %s153 = scalar_lea.vmem %s0, %s152
      %p154 = scmp.lt.s32.totalorder %s13, 3
      %s155 = scalar_select %p154, %s13, 3
      %s156 = smul.addr %s155, 32
      %s157 = smul.addr %s156, 4
      %s158 = scalar_lea.vmem %s1, %s157
      %p159 = scmp.lt.s32.totalorder %s13, 3
      %s160 = scalar_select %p159, %s13, 3
      %s161 = smul.addr %s160, 64
      %s162 = smul.addr %s161, 8
      %s163 = scalar_lea.vmem %s2, %s162
      %v165 = vld [vmem:[%s153] sm:$0xff]
      %v166 = vld [vmem:[%s153 + $0x8] sm:$0xff]
      %v167 = vld [vmem:[%s153 + $0x10] sm:$0xff]
      %v168 = vld [vmem:[%s153 + $0x18] sm:$0xff]
      %v169 = vld [vmem:[%s153 + $0x20] sm:$0xff]
      %v170 = vld [vmem:[%s153 + $0x28] sm:$0xff]
      %v171 = vld [vmem:[%s153 + $0x30] sm:$0xff]
      %v172 = vld [vmem:[%s153 + $0x38] sm:$0xff]
      %v173 = vld [vmem:[%s153 + $0x40] sm:$0xff]
      %v174 = vld [vmem:[%s153 + $0x48] sm:$0xff]
      %v175 = vld [vmem:[%s153 + $0x50] sm:$0xff]
      %v176 = vld [vmem:[%s153 + $0x58] sm:$0xff]
      %v177 = vld [vmem:[%s153 + $0x60] sm:$0xff]
      %v178 = vld [vmem:[%s153 + $0x68] sm:$0xff]
      %v179 = vld [vmem:[%s153 + $0x70] sm:$0xff]
      %v180 = vld [vmem:[%s153 + $0x78] sm:$0xff]
      %v181 = vld [vmem:[%s153 + $0x80] sm:$0xff]
      %v182 = vld [vmem:[%s153 + $0x88] sm:$0xff]
      %v183 = vld [vmem:[%s153 + $0x90] sm:$0xff]
      %v184 = vld [vmem:[%s153 + $0x98] sm:$0xff]
      %v185 = vld [vmem:[%s153 + $0xa0] sm:$0xff]
      %v186 = vld [vmem:[%s153 + $0xa8] sm:$0xff]
      %v187 = vld [vmem:[%s153 + $0xb0] sm:$0xff]
      %v188 = vld [vmem:[%s153 + $0xb8] sm:$0xff]
      %v189 = vld [vmem:[%s153 + $0xc0] sm:$0xff]
      %v190 = vld [vmem:[%s153 + $0xc8] sm:$0xff]
      %v191 = vld [vmem:[%s153 + $0xd0] sm:$0xff]
      %v192 = vld [vmem:[%s153 + $0xd8] sm:$0xff]
      %v193 = vld [vmem:[%s153 + $0xe0] sm:$0xff]
      %v194 = vld [vmem:[%s153 + $0xe8] sm:$0xff]
      %v195 = vld [vmem:[%s153 + $0xf0] sm:$0xff]
      %v196 = vld [vmem:[%s153 + $0xf8] sm:$0xff]
      %v197 = vld [vmem:[%s153 + $0x100] sm:$0xff]
      %v198 = vld [vmem:[%s153 + $0x108] sm:$0xff]
      %v199 = vld [vmem:[%s153 + $0x110] sm:$0xff]
      %v200 = vld [vmem:[%s153 + $0x118] sm:$0xff]
      %v201 = vld [vmem:[%s153 + $0x120] sm:$0xff]
      %v202 = vld [vmem:[%s153 + $0x128] sm:$0xff]
      %v203 = vld [vmem:[%s153 + $0x130] sm:$0xff]
      %v204 = vld [vmem:[%s153 + $0x138] sm:$0xff]
      %v205 = vld [vmem:[%s153 + $0x140] sm:$0xff]
      %v206 = vld [vmem:[%s153 + $0x148] sm:$0xff]
      %v207 = vld [vmem:[%s153 + $0x150] sm:$0xff]
      %v208 = vld [vmem:[%s153 + $0x158] sm:$0xff]
      %v209 = vld [vmem:[%s153 + $0x160] sm:$0xff]
      %v210 = vld [vmem:[%s153 + $0x168] sm:$0xff]
      %v211 = vld [vmem:[%s153 + $0x170] sm:$0xff]
      %v212 = vld [vmem:[%s153 + $0x178] sm:$0xff]
      %v213 = vld [vmem:[%s153 + $0x180] sm:$0xff]
      %v214 = vld [vmem:[%s153 + $0x188] sm:$0xff]
      %v215 = vld [vmem:[%s153 + $0x190] sm:$0xff]
      %v216 = vld [vmem:[%s153 + $0x198] sm:$0xff]
      %v217 = vld [vmem:[%s153 + $0x1a0] sm:$0xff]
      %v218 = vld [vmem:[%s153 + $0x1a8] sm:$0xff]
      %v219 = vld [vmem:[%s153 + $0x1b0] sm:$0xff]
      %v220 = vld [vmem:[%s153 + $0x1b8] sm:$0xff]
      %v221 = vld [vmem:[%s153 + $0x1c0] sm:$0xff]
      %v222 = vld [vmem:[%s153 + $0x1c8] sm:$0xff]
      %v223 = vld [vmem:[%s153 + $0x1d0] sm:$0xff]
      %v224 = vld [vmem:[%s153 + $0x1d8] sm:$0xff]
      %v225 = vld [vmem:[%s153 + $0x1e0] sm:$0xff]
      %v226 = vld [vmem:[%s153 + $0x1e8] sm:$0xff]
      %v227 = vld [vmem:[%s153 + $0x1f0] sm:$0xff]
      %v228 = vld [vmem:[%s153 + $0x1f8] sm:$0xff]
      %v229 = vld [vmem:[%s158] sm:$0xf]
      %v230 = vld [vmem:[%s158 + $0x4] sm:$0xf]
      %v231 = vld [vmem:[%s158 + $0x8] sm:$0xf]
      %v232 = vld [vmem:[%s158 + $0xc] sm:$0xf]
      %v233 = vld [vmem:[%s158 + $0x10] sm:$0xf]
      %v234 = vld [vmem:[%s158 + $0x14] sm:$0xf]
      %v235 = vld [vmem:[%s158 + $0x18] sm:$0xf]
      %v236 = vld [vmem:[%s158 + $0x1c] sm:$0xf]
      %v237 = vld [vmem:[%s158 + $0x20] sm:$0xf]
      %v238 = vld [vmem:[%s158 + $0x24] sm:$0xf]
      %v239 = vld [vmem:[%s158 + $0x28] sm:$0xf]
      %v240 = vld [vmem:[%s158 + $0x2c] sm:$0xf]
      %v241 = vld [vmem:[%s158 + $0x30] sm:$0xf]
      %v242 = vld [vmem:[%s158 + $0x34] sm:$0xf]
      %v243 = vld [vmem:[%s158 + $0x38] sm:$0xf]
      %v244 = vld [vmem:[%s158 + $0x3c] sm:$0xf]
      %v245 = vld [vmem:[%s158 + $0x40] sm:$0xf]
      %v246 = vld [vmem:[%s158 + $0x44] sm:$0xf]
      %v247 = vld [vmem:[%s158 + $0x48] sm:$0xf]
      %v248 = vld [vmem:[%s158 + $0x4c] sm:$0xf]
      %v249 = vld [vmem:[%s158 + $0x50] sm:$0xf]
      %v250 = vld [vmem:[%s158 + $0x54] sm:$0xf]
      %v251 = vld [vmem:[%s158 + $0x58] sm:$0xf]
      %v252 = vld [vmem:[%s158 + $0x5c] sm:$0xf]
      %v253 = vld [vmem:[%s158 + $0x60] sm:$0xf]
      %v254 = vld [vmem:[%s158 + $0x64] sm:$0xf]
      %v255 = vld [vmem:[%s158 + $0x68] sm:$0xf]
      %v256 = vld [vmem:[%s158 + $0x6c] sm:$0xf]
      %v257 = vld [vmem:[%s158 + $0x70] sm:$0xf]
      %v258 = vld [vmem:[%s158 + $0x74] sm:$0xf]
      %v259 = vld [vmem:[%s158 + $0x78] sm:$0xf]
      %v260 = vld [vmem:[%s158 + $0x7c] sm:$0xf]
      %v325 = vunpack.c.l.b16 %v165
      %v326 = vunpack.c.h.b16 %v165
      %v327 = vunpack.c.l.b16 %v166
      %v328 = vunpack.c.h.b16 %v166
      %v329 = vunpack.c.l.b16 %v167
      %v330 = vunpack.c.h.b16 %v167
      %v331 = vunpack.c.l.b16 %v168
      %v332 = vunpack.c.h.b16 %v168
      %v333 = vunpack.c.l.b16 %v169
      %v334 = vunpack.c.h.b16 %v169
      %v335 = vunpack.c.l.b16 %v170
      %v336 = vunpack.c.h.b16 %v170
      %v337 = vunpack.c.l.b16 %v171
      %v338 = vunpack.c.h.b16 %v171
      %v339 = vunpack.c.l.b16 %v172
      %v340 = vunpack.c.h.b16 %v172
      %v341 = vunpack.c.l.b16 %v173
      %v342 = vunpack.c.h.b16 %v173
      %v343 = vunpack.c.l.b16 %v174
      %v344 = vunpack.c.h.b16 %v174
      %v345 = vunpack.c.l.b16 %v175
      %v346 = vunpack.c.h.b16 %v175
      %v347 = vunpack.c.l.b16 %v176
      %v348 = vunpack.c.h.b16 %v176
      %v349 = vunpack.c.l.b16 %v177
      %v350 = vunpack.c.h.b16 %v177
      %v351 = vunpack.c.l.b16 %v178
      %v352 = vunpack.c.h.b16 %v178
      %v353 = vunpack.c.l.b16 %v179
      %v354 = vunpack.c.h.b16 %v179
      %v355 = vunpack.c.l.b16 %v180
      %v356 = vunpack.c.h.b16 %v180
      %v357 = vunpack.c.l.b16 %v181
      %v358 = vunpack.c.h.b16 %v181
      %v359 = vunpack.c.l.b16 %v182
      %v360 = vunpack.c.h.b16 %v182
      %v361 = vunpack.c.l.b16 %v183
      %v362 = vunpack.c.h.b16 %v183
      %v363 = vunpack.c.l.b16 %v184
      %v364 = vunpack.c.h.b16 %v184
      %v365 = vunpack.c.l.b16 %v185
      %v366 = vunpack.c.h.b16 %v185
      %v367 = vunpack.c.l.b16 %v186
      %v368 = vunpack.c.h.b16 %v186
      %v369 = vunpack.c.l.b16 %v187
      %v370 = vunpack.c.h.b16 %v187
      %v371 = vunpack.c.l.b16 %v188
      %v372 = vunpack.c.h.b16 %v188
      %v373 = vunpack.c.l.b16 %v189
      %v374 = vunpack.c.h.b16 %v189
      %v375 = vunpack.c.l.b16 %v190
      %v376 = vunpack.c.h.b16 %v190
      %v377 = vunpack.c.l.b16 %v191
      %v378 = vunpack.c.h.b16 %v191
      %v379 = vunpack.c.l.b16 %v192
      %v380 = vunpack.c.h.b16 %v192
      %v381 = vunpack.c.l.b16 %v193
      %v382 = vunpack.c.h.b16 %v193
      %v383 = vunpack.c.l.b16 %v194
      %v384 = vunpack.c.h.b16 %v194
      %v385 = vunpack.c.l.b16 %v195
      %v386 = vunpack.c.h.b16 %v195
      %v387 = vunpack.c.l.b16 %v196
      %v388 = vunpack.c.h.b16 %v196
      %v389 = vunpack.c.l.b16 %v197
      %v390 = vunpack.c.h.b16 %v197
      %v391 = vunpack.c.l.b16 %v198
      %v392 = vunpack.c.h.b16 %v198
      %v393 = vunpack.c.l.b16 %v199
      %v394 = vunpack.c.h.b16 %v199
      %v395 = vunpack.c.l.b16 %v200
      %v396 = vunpack.c.h.b16 %v200
      %v397 = vunpack.c.l.b16 %v201
      %v398 = vunpack.c.h.b16 %v201
      %v399 = vunpack.c.l.b16 %v202
      %v400 = vunpack.c.h.b16 %v202
      %v401 = vunpack.c.l.b16 %v203
      %v402 = vunpack.c.h.b16 %v203
      %v403 = vunpack.c.l.b16 %v204
      %v404 = vunpack.c.h.b16 %v204
      %v405 = vunpack.c.l.b16 %v205
      %v406 = vunpack.c.h.b16 %v205
      %v407 = vunpack.c.l.b16 %v206
      %v408 = vunpack.c.h.b16 %v206
      %v409 = vunpack.c.l.b16 %v207
      %v410 = vunpack.c.h.b16 %v207
      %v411 = vunpack.c.l.b16 %v208
      %v412 = vunpack.c.h.b16 %v208
      %v413 = vunpack.c.l.b16 %v209
      %v414 = vunpack.c.h.b16 %v209
      %v415 = vunpack.c.l.b16 %v210
      %v416 = vunpack.c.h.b16 %v210
      %v417 = vunpack.c.l.b16 %v211
      %v418 = vunpack.c.h.b16 %v211
      %v419 = vunpack.c.l.b16 %v212
      %v420 = vunpack.c.h.b16 %v212
      %v421 = vunpack.c.l.b16 %v213
      %v422 = vunpack.c.h.b16 %v213
      %v423 = vunpack.c.l.b16 %v214
      %v424 = vunpack.c.h.b16 %v214
      %v425 = vunpack.c.l.b16 %v215
      %v426 = vunpack.c.h.b16 %v215
      %v427 = vunpack.c.l.b16 %v216
      %v428 = vunpack.c.h.b16 %v216
      %v429 = vunpack.c.l.b16 %v217
      %v430 = vunpack.c.h.b16 %v217
      %v431 = vunpack.c.l.b16 %v218
      %v432 = vunpack.c.h.b16 %v218
      %v433 = vunpack.c.l.b16 %v219
      %v434 = vunpack.c.h.b16 %v219
      %v435 = vunpack.c.l.b16 %v220
      %v436 = vunpack.c.h.b16 %v220
      %v437 = vunpack.c.l.b16 %v221
      %v438 = vunpack.c.h.b16 %v221
      %v439 = vunpack.c.l.b16 %v222
      %v440 = vunpack.c.h.b16 %v222
      %v441 = vunpack.c.l.b16 %v223
      %v442 = vunpack.c.h.b16 %v223
      %v443 = vunpack.c.l.b16 %v224
      %v444 = vunpack.c.h.b16 %v224
      %v445 = vunpack.c.l.b16 %v225
      %v446 = vunpack.c.h.b16 %v225
      %v447 = vunpack.c.l.b16 %v226
      %v448 = vunpack.c.h.b16 %v226
      %v449 = vunpack.c.l.b16 %v227
      %v450 = vunpack.c.h.b16 %v227
      %v451 = vunpack.c.l.b16 %v228
      %v452 = vunpack.c.h.b16 %v228
      %v453 = vpack.c.b16 %v327, %v325
      %v454 = vpack.c.b16 %v328, %v326
      %v455 = vpack.c.b16 %v331, %v329
      %v456 = vpack.c.b16 %v332, %v330
      %v457 = vpack.c.b16 %v335, %v333
      %v458 = vpack.c.b16 %v336, %v334
      %v459 = vpack.c.b16 %v339, %v337
      %v460 = vpack.c.b16 %v340, %v338
      %v461 = vpack.c.b16 %v343, %v341
      %v462 = vpack.c.b16 %v344, %v342
      %v463 = vpack.c.b16 %v347, %v345
      %v464 = vpack.c.b16 %v348, %v346
      %v465 = vpack.c.b16 %v351, %v349
      %v466 = vpack.c.b16 %v352, %v350
      %v467 = vpack.c.b16 %v355, %v353
      %v468 = vpack.c.b16 %v356, %v354
      %v469 = vpack.c.b16 %v359, %v357
      %v470 = vpack.c.b16 %v360, %v358
      %v471 = vpack.c.b16 %v363, %v361
      %v472 = vpack.c.b16 %v364, %v362
      %v473 = vpack.c.b16 %v367, %v365
      %v474 = vpack.c.b16 %v368, %v366
      %v475 = vpack.c.b16 %v371, %v369
      %v476 = vpack.c.b16 %v372, %v370
      %v477 = vpack.c.b16 %v375, %v373
      %v478 = vpack.c.b16 %v376, %v374
      %v479 = vpack.c.b16 %v379, %v377
      %v480 = vpack.c.b16 %v380, %v378
      %v481 = vpack.c.b16 %v383, %v381
      %v482 = vpack.c.b16 %v384, %v382
      %v483 = vpack.c.b16 %v387, %v385
      %v484 = vpack.c.b16 %v388, %v386
      %v485 = vpack.c.b16 %v391, %v389
      %v486 = vpack.c.b16 %v392, %v390
      %v487 = vpack.c.b16 %v395, %v393
      %v488 = vpack.c.b16 %v396, %v394
      %v489 = vpack.c.b16 %v399, %v397
      %v490 = vpack.c.b16 %v400, %v398
      %v491 = vpack.c.b16 %v403, %v401
      %v492 = vpack.c.b16 %v404, %v402
      %v493 = vpack.c.b16 %v407, %v405
      %v494 = vpack.c.b16 %v408, %v406
      %v495 = vpack.c.b16 %v411, %v409
      %v496 = vpack.c.b16 %v412, %v410
      %v497 = vpack.c.b16 %v415, %v413
      %v498 = vpack.c.b16 %v416, %v414
      %v499 = vpack.c.b16 %v419, %v417
      %v500 = vpack.c.b16 %v420, %v418
      %v501 = vpack.c.b16 %v423, %v421
      %v502 = vpack.c.b16 %v424, %v422
      %v503 = vpack.c.b16 %v427, %v425
      %v504 = vpack.c.b16 %v428, %v426
      %v505 = vpack.c.b16 %v431, %v429
      %v506 = vpack.c.b16 %v432, %v430
      %v507 = vpack.c.b16 %v435, %v433
      %v508 = vpack.c.b16 %v436, %v434
      %v509 = vpack.c.b16 %v439, %v437
      %v510 = vpack.c.b16 %v440, %v438
      %v511 = vpack.c.b16 %v443, %v441
      %v512 = vpack.c.b16 %v444, %v442
      %v513 = vpack.c.b16 %v447, %v445
      %v514 = vpack.c.b16 %v448, %v446
      %v515 = vpack.c.b16 %v451, %v449
      %v516 = vpack.c.b16 %v452, %v450
      %v613 = vunpack.c.l.b16 %v229
      %v614 = vunpack.c.l.b16 %v230
      %v615 = vunpack.c.l.b16 %v231
      %v616 = vunpack.c.l.b16 %v232
      %v617 = vunpack.c.l.b16 %v233
      %v618 = vunpack.c.l.b16 %v234
      %v619 = vunpack.c.l.b16 %v235
      %v620 = vunpack.c.l.b16 %v236
      %v621 = vunpack.c.l.b16 %v237
      %v622 = vunpack.c.l.b16 %v238
      %v623 = vunpack.c.l.b16 %v239
      %v624 = vunpack.c.l.b16 %v240
      %v625 = vunpack.c.l.b16 %v241
      %v626 = vunpack.c.l.b16 %v242
      %v627 = vunpack.c.l.b16 %v243
      %v628 = vunpack.c.l.b16 %v244
      %v629 = vunpack.c.l.b16 %v245
      %v630 = vunpack.c.l.b16 %v246
      %v631 = vunpack.c.l.b16 %v247
      %v632 = vunpack.c.l.b16 %v248
      %v633 = vunpack.c.l.b16 %v249
      %v634 = vunpack.c.l.b16 %v250
      %v635 = vunpack.c.l.b16 %v251
      %v636 = vunpack.c.l.b16 %v252
      %v637 = vunpack.c.l.b16 %v253
      %v638 = vunpack.c.l.b16 %v254
      %v639 = vunpack.c.l.b16 %v255
      %v640 = vunpack.c.l.b16 %v256
      %v641 = vunpack.c.l.b16 %v257
      %v642 = vunpack.c.l.b16 %v258
      %v643 = vunpack.c.l.b16 %v259
      %v644 = vunpack.c.l.b16 %v260
      %v645 = vpack.c.b16 %v614, %v613
      %v646 = vpack.c.b16 %v616, %v615
      %v647 = vpack.c.b16 %v618, %v617
      %v648 = vpack.c.b16 %v620, %v619
      %v649 = vpack.c.b16 %v622, %v621
      %v650 = vpack.c.b16 %v624, %v623
      %v651 = vpack.c.b16 %v626, %v625
      %v652 = vpack.c.b16 %v628, %v627
      %v653 = vpack.c.b16 %v630, %v629
      %v654 = vpack.c.b16 %v632, %v631
      %v655 = vpack.c.b16 %v634, %v633
      %v656 = vpack.c.b16 %v636, %v635
      %v657 = vpack.c.b16 %v638, %v637
      %v658 = vpack.c.b16 %v640, %v639
      %v659 = vpack.c.b16 %v642, %v641
      %v660 = vpack.c.b16 %v644, %v643
      %677 = vmatprep.subr.bf16.mxu0 0
      %678 = vmatpush1.bf16.msra.mxu0 %v645
      %679 = vmatprep.subr.bf16.mxu0 0
      %680 = vmatpush1.bf16.msra.mxu0 %v646
      %681 = vmatprep.subr.bf16.mxu0 0
      %682 = vmatpush1.bf16.msra.mxu0 %v647
      %683 = vmatprep.subr.bf16.mxu0 0
      %684 = vmatpush1.bf16.msra.mxu0 %v648
      %685 = vmatprep.subr.bf16.mxu0 0
      %686 = vmatpush1.bf16.msra.mxu0 %v649
      %687 = vmatprep.subr.bf16.mxu0 0
      %688 = vmatpush1.bf16.msra.mxu0 %v650
      %689 = vmatprep.subr.bf16.mxu0 0
      %690 = vmatpush1.bf16.msra.mxu0 %v651
      %691 = vmatprep.subr.bf16.mxu0 0
      %692 = vmatpush1.bf16.msra.mxu0 %v652
      %693 = vmatprep.subr.bf16.mxu0 0
      %694 = vmatpush1.bf16.msra.mxu0 %v653
      %695 = vmatprep.subr.bf16.mxu0 0
      %696 = vmatpush1.bf16.msra.mxu0 %v654
      %697 = vmatprep.subr.bf16.mxu0 0
      %698 = vmatpush1.bf16.msra.mxu0 %v655
      %699 = vmatprep.subr.bf16.mxu0 0
      %700 = vmatpush1.bf16.msra.mxu0 %v656
      %701 = vmatprep.subr.bf16.mxu0 0
      %702 = vmatpush1.bf16.msra.mxu0 %v657
      %703 = vmatprep.subr.bf16.mxu0 0
      %704 = vmatpush1.bf16.msra.mxu0 %v658
      %705 = vmatprep.subr.bf16.mxu0 0
      %706 = vmatpush1.bf16.msra.mxu0 %v659
      %707 = vmatprep.subr.bf16.mxu0 0
      %708 = vmatpush1.bf16.msra.mxu0 %v660
      %709 = vmatprep.mubr.bf16.mxu0 %v454
      %710 = vmatmul.mubr.bf16.gmra.mrb[0].mxu0 %v453
      %v711 = vpop.f32.mrb[0].mxu0
      %v712 = vadd.f32 0.0, %v711
      %v713 = vpop.f32.mrb[0].mxu0
      %v714 = vpop.f32.mrb[0].mxu0
      %v715 = vadd.f32 0.0, %v714
      %v716 = vpop.f32.mrb[0].mxu0
      %717 = vmatprep.mubr.bf16.mxu0 %v456
      %718 = vmatmul.mubr.bf16.gmra.mrb[0].mxu0 %v455
      %v719 = vpop.f32.mrb[0].mxu0
      %v720 = vadd.f32 0.0, %v719
      %v721 = vpop.f32.mrb[0].mxu0
      %v722 = vpop.f32.mrb[0].mxu0
      %v723 = vadd.f32 0.0, %v722
      %v724 = vpop.f32.mrb[0].mxu0
      %725 = vmatprep.mubr.bf16.mxu0 %v458
      %726 = vmatmul.mubr.bf16.gmra.mrb[0].mxu0 %v457
      %v727 = vpop.f32.mrb[0].mxu0
      %v728 = vadd.f32 0.0, %v727
      %v729 = vpop.f32.mrb[0].mxu0
      %v730 = vpop.f32.mrb[0].mxu0
      %v731 = vadd.f32 0.0, %v730
      %v732 = vpop.f32.mrb[0].mxu0
      %733 = vmatprep.mubr.bf16.mxu0 %v460
      %734 = vmatmul.mubr.bf16.gmra.mrb[0].mxu0 %v459
      %v735 = vpop.f32.mrb[0].mxu0
      %v736 = vadd.f32 0.0, %v735
      %v737 = vpop.f32.mrb[0].mxu0
      %v738 = vpop.f32.mrb[0].mxu0
      %v739 = vadd.f32 0.0, %v738
      %v740 = vpop.f32.mrb[0].mxu0
      %741 = vmatprep.mubr.bf16.mxu0 %v462
      %742 = vmatmul.mubr.bf16.gmra.mrb[0].mxu0 %v461
      %v743 = vpop.f32.mrb[0].mxu0
      %v744 = vadd.f32 0.0, %v743
      %v745 = vpop.f32.mrb[0].mxu0
      %v746 = vpop.f32.mrb[0].mxu0
      %v747 = vadd.f32 0.0, %v746
      %v748 = vpop.f32.mrb[0].mxu0
      %749 = vmatprep.mubr.bf16.mxu0 %v464
      %750 = vmatmul.mubr.bf16.gmra.mrb[0].mxu0 %v463
      %v751 = vpop.f32.mrb[0].mxu0
      %v752 = vadd.f32 0.0, %v751
      %v753 = vpop.f32.mrb[0].mxu0
      %v754 = vpop.f32.mrb[0].mxu0
      %v755 = vadd.f32 0.0, %v754
      %v756 = vpop.f32.mrb[0].mxu0
      %757 = vmatprep.mubr.bf16.mxu0 %v466
      %758 = vmatmul.mubr.bf16.gmra.mrb[0].mxu0 %v465
      %v759 = vpop.f32.mrb[0].mxu0
      %v760 = vadd.f32 0.0, %v759
      %v761 = vpop.f32.mrb[0].mxu0
      %v762 = vpop.f32.mrb[0].mxu0
      %v763 = vadd.f32 0.0, %v762
      %v764 = vpop.f32.mrb[0].mxu0
      %765 = vmatprep.mubr.bf16.mxu0 %v468
      %766 = vmatmul.mubr.bf16.gmra.mrb[0].mxu0 %v467
      %v767 = vpop.f32.mrb[0].mxu0
      %v768 = vadd.f32 0.0, %v767
      %v769 = vpop.f32.mrb[0].mxu0
      %v770 = vpop.f32.mrb[0].mxu0
      %v771 = vadd.f32 0.0, %v770
      %v772 = vpop.f32.mrb[0].mxu0
      %773 = vmatprep.mubr.bf16.mxu0 %v470
      %774 = vmatmul.mubr.bf16.gmra.mrb[0].mxu0 %v469
      %v775 = vpop.f32.mrb[0].mxu0
      %v776 = vadd.f32 0.0, %v775
      %v777 = vpop.f32.mrb[0].mxu0
      %v778 = vpop.f32.mrb[0].mxu0
      %v779 = vadd.f32 0.0, %v778
      %v780 = vpop.f32.mrb[0].mxu0
      %781 = vmatprep.mubr.bf16.mxu0 %v472
      %782 = vmatmul.mubr.bf16.gmra.mrb[0].mxu0 %v471
      %v783 = vpop.f32.mrb[0].mxu0
      %v784 = vadd.f32 0.0, %v783
      %v785 = vpop.f32.mrb[0].mxu0
      %v786 = vpop.f32.mrb[0].mxu0
      %v787 = vadd.f32 0.0, %v786
      %v788 = vpop.f32.mrb[0].mxu0
      %789 = vmatprep.mubr.bf16.mxu0 %v474
      %790 = vmatmul.mubr.bf16.gmra.mrb[0].mxu0 %v473
      %v791 = vpop.f32.mrb[0].mxu0
      %v792 = vadd.f32 0.0, %v791
      %v793 = vpop.f32.mrb[0].mxu0
      %v794 = vpop.f32.mrb[0].mxu0
      %v795 = vadd.f32 0.0, %v794
      %v796 = vpop.f32.mrb[0].mxu0
      %797 = vmatprep.mubr.bf16.mxu0 %v476
      %798 = vmatmul.mubr.bf16.gmra.mrb[0].mxu0 %v475
      %v799 = vpop.f32.mrb[0].mxu0
      %v800 = vadd.f32 0.0, %v799
      %v801 = vpop.f32.mrb[0].mxu0
      %v802 = vpop.f32.mrb[0].mxu0
      %v803 = vadd.f32 0.0, %v802
      %v804 = vpop.f32.mrb[0].mxu0
      %805 = vmatprep.mubr.bf16.mxu0 %v478
      %806 = vmatmul.mubr.bf16.gmra.mrb[0].mxu0 %v477
      %v807 = vpop.f32.mrb[0].mxu0
      %v808 = vadd.f32 0.0, %v807
      %v809 = vpop.f32.mrb[0].mxu0
      %v810 = vpop.f32.mrb[0].mxu0
      %v811 = vadd.f32 0.0, %v810
      %v812 = vpop.f32.mrb[0].mxu0
      %813 = vmatprep.mubr.bf16.mxu0 %v480
      %814 = vmatmul.mubr.bf16.gmra.mrb[0].mxu0 %v479
      %v815 = vpop.f32.mrb[0].mxu0
      %v816 = vadd.f32 0.0, %v815
      %v817 = vpop.f32.mrb[0].mxu0
      %v818 = vpop.f32.mrb[0].mxu0
      %v819 = vadd.f32 0.0, %v818
      %v820 = vpop.f32.mrb[0].mxu0
      %821 = vmatprep.mubr.bf16.mxu0 %v482
      %822 = vmatmul.mubr.bf16.gmra.mrb[0].mxu0 %v481
      %v823 = vpop.f32.mrb[0].mxu0
      %v824 = vadd.f32 0.0, %v823
      %v825 = vpop.f32.mrb[0].mxu0
      %v826 = vpop.f32.mrb[0].mxu0
      %v827 = vadd.f32 0.0, %v826
      %v828 = vpop.f32.mrb[0].mxu0
      %829 = vmatprep.mubr.bf16.mxu0 %v484
      %830 = vmatmul.mubr.bf16.gmra.mrb[0].mxu0 %v483
      %v831 = vpop.f32.mrb[0].mxu0
      %v832 = vadd.f32 0.0, %v831
      %v833 = vpop.f32.mrb[0].mxu0
      %v834 = vpop.f32.mrb[0].mxu0
      %v835 = vadd.f32 0.0, %v834
      %v836 = vpop.f32.mrb[0].mxu0
      %837 = vmatprep.mubr.bf16.mxu0 %v486
      %838 = vmatmul.mubr.bf16.gmra.mrb[0].mxu0 %v485
      %v839 = vpop.f32.mrb[0].mxu0
      %v840 = vadd.f32 0.0, %v839
      %v841 = vpop.f32.mrb[0].mxu0
      %v842 = vpop.f32.mrb[0].mxu0
      %v843 = vadd.f32 0.0, %v842
      %v844 = vpop.f32.mrb[0].mxu0
      %845 = vmatprep.mubr.bf16.mxu0 %v488
      %846 = vmatmul.mubr.bf16.gmra.mrb[0].mxu0 %v487
      %v847 = vpop.f32.mrb[0].mxu0
      %v848 = vadd.f32 0.0, %v847
      %v849 = vpop.f32.mrb[0].mxu0
      %v850 = vpop.f32.mrb[0].mxu0
      %v851 = vadd.f32 0.0, %v850
      %v852 = vpop.f32.mrb[0].mxu0
      %853 = vmatprep.mubr.bf16.mxu0 %v490
      %854 = vmatmul.mubr.bf16.gmra.mrb[0].mxu0 %v489
      %v855 = vpop.f32.mrb[0].mxu0
      %v856 = vadd.f32 0.0, %v855
      %v857 = vpop.f32.mrb[0].mxu0
      %v858 = vpop.f32.mrb[0].mxu0
      %v859 = vadd.f32 0.0, %v858
      %v860 = vpop.f32.mrb[0].mxu0
      %861 = vmatprep.mubr.bf16.mxu0 %v492
      %862 = vmatmul.mubr.bf16.gmra.mrb[0].mxu0 %v491
      %v863 = vpop.f32.mrb[0].mxu0
      %v864 = vadd.f32 0.0, %v863
      %v865 = vpop.f32.mrb[0].mxu0
      %v866 = vpop.f32.mrb[0].mxu0
      %v867 = vadd.f32 0.0, %v866
      %v868 = vpop.f32.mrb[0].mxu0
      %869 = vmatprep.mubr.bf16.mxu0 %v494
      %870 = vmatmul.mubr.bf16.gmra.mrb[0].mxu0 %v493
      %v871 = vpop.f32.mrb[0].mxu0
      %v872 = vadd.f32 0.0, %v871
      %v873 = vpop.f32.mrb[0].mxu0
      %v874 = vpop.f32.mrb[0].mxu0
      %v875 = vadd.f32 0.0, %v874
      %v876 = vpop.f32.mrb[0].mxu0
      %877 = vmatprep.mubr.bf16.mxu0 %v496
      %878 = vmatmul.mubr.bf16.gmra.mrb[0].mxu0 %v495
      %v879 = vpop.f32.mrb[0].mxu0
      %v880 = vadd.f32 0.0, %v879
      %v881 = vpop.f32.mrb[0].mxu0
      %v882 = vpop.f32.mrb[0].mxu0
      %v883 = vadd.f32 0.0, %v882
      %v884 = vpop.f32.mrb[0].mxu0
      %885 = vmatprep.mubr.bf16.mxu0 %v498
      %886 = vmatmul.mubr.bf16.gmra.mrb[0].mxu0 %v497
      %v887 = vpop.f32.mrb[0].mxu0
      %v888 = vadd.f32 0.0, %v887
      %v889 = vpop.f32.mrb[0].mxu0
      %v890 = vpop.f32.mrb[0].mxu0
      %v891 = vadd.f32 0.0, %v890
      %v892 = vpop.f32.mrb[0].mxu0
      %893 = vmatprep.mubr.bf16.mxu0 %v500
      %894 = vmatmul.mubr.bf16.gmra.mrb[0].mxu0 %v499
      %v895 = vpop.f32.mrb[0].mxu0
      %v896 = vadd.f32 0.0, %v895
      %v897 = vpop.f32.mrb[0].mxu0
      %v898 = vpop.f32.mrb[0].mxu0
      %v899 = vadd.f32 0.0, %v898
      %v900 = vpop.f32.mrb[0].mxu0
      %901 = vmatprep.mubr.bf16.mxu0 %v502
      %902 = vmatmul.mubr.bf16.gmra.mrb[0].mxu0 %v501
      %v903 = vpop.f32.mrb[0].mxu0
      %v904 = vadd.f32 0.0, %v903
      %v905 = vpop.f32.mrb[0].mxu0
      %v906 = vpop.f32.mrb[0].mxu0
      %v907 = vadd.f32 0.0, %v906
      %v908 = vpop.f32.mrb[0].mxu0
      %909 = vmatprep.mubr.bf16.mxu0 %v504
      %910 = vmatmul.mubr.bf16.gmra.mrb[0].mxu0 %v503
      %v911 = vpop.f32.mrb[0].mxu0
      %v912 = vadd.f32 0.0, %v911
      %v913 = vpop.f32.mrb[0].mxu0
      %v914 = vpop.f32.mrb[0].mxu0
      %v915 = vadd.f32 0.0, %v914
      %v916 = vpop.f32.mrb[0].mxu0
      %917 = vmatprep.mubr.bf16.mxu0 %v506
      %918 = vmatmul.mubr.bf16.gmra.mrb[0].mxu0 %v505
      %v919 = vpop.f32.mrb[0].mxu0
      %v920 = vadd.f32 0.0, %v919
      %v921 = vpop.f32.mrb[0].mxu0
      %v922 = vpop.f32.mrb[0].mxu0
      %v923 = vadd.f32 0.0, %v922
      %v924 = vpop.f32.mrb[0].mxu0
      %925 = vmatprep.mubr.bf16.mxu0 %v508
      %926 = vmatmul.mubr.bf16.gmra.mrb[0].mxu0 %v507
      %v927 = vpop.f32.mrb[0].mxu0
      %v928 = vadd.f32 0.0, %v927
      %v929 = vpop.f32.mrb[0].mxu0
      %v930 = vpop.f32.mrb[0].mxu0
      %v931 = vadd.f32 0.0, %v930
      %v932 = vpop.f32.mrb[0].mxu0
      %933 = vmatprep.mubr.bf16.mxu0 %v510
      %934 = vmatmul.mubr.bf16.gmra.mrb[0].mxu0 %v509
      %v935 = vpop.f32.mrb[0].mxu0
      %v936 = vadd.f32 0.0, %v935
      %v937 = vpop.f32.mrb[0].mxu0
      %v938 = vpop.f32.mrb[0].mxu0
      %v939 = vadd.f32 0.0, %v938
      %v940 = vpop.f32.mrb[0].mxu0
      %941 = vmatprep.mubr.bf16.mxu0 %v512
      %942 = vmatmul.mubr.bf16.gmra.mrb[0].mxu0 %v511
      %v943 = vpop.f32.mrb[0].mxu0
      %v944 = vadd.f32 0.0, %v943
      %v945 = vpop.f32.mrb[0].mxu0
      %v946 = vpop.f32.mrb[0].mxu0
      %v947 = vadd.f32 0.0, %v946
      %v948 = vpop.f32.mrb[0].mxu0
      %949 = vmatprep.mubr.bf16.mxu0 %v514
      %950 = vmatmul.mubr.bf16.gmra.mrb[0].mxu0 %v513
      %v951 = vpop.f32.mrb[0].mxu0
      %v952 = vadd.f32 0.0, %v951
      %v953 = vpop.f32.mrb[0].mxu0
      %v954 = vpop.f32.mrb[0].mxu0
      %v955 = vadd.f32 0.0, %v954
      %v956 = vpop.f32.mrb[0].mxu0
      %957 = vmatprep.mubr.bf16.mxu0 %v516
      %958 = vmatmul.mubr.bf16.gmra.mrb[0].mxu0 %v515
      %v959 = vpop.f32.mrb[0].mxu0
      %v960 = vadd.f32 0.0, %v959
      %v961 = vpop.f32.mrb[0].mxu0
      %v962 = vpop.f32.mrb[0].mxu0
      %v963 = vadd.f32 0.0, %v962
      %v964 = vpop.f32.mrb[0].mxu0
      %965 = vdwg.mxu0
      %v966 = vtanh.pop %v712
      %v967 = vtanh.pop %v715
      %v968 = vtanh.pop %v720
      %v969 = vtanh.pop %v723
      %v970 = vtanh.pop %v728
      %v971 = vtanh.pop %v731
      %v972 = vtanh.pop %v736
      %v973 = vtanh.pop %v739
      %v974 = vtanh.pop %v744
      %v975 = vtanh.pop %v747
      %v976 = vtanh.pop %v752
      %v977 = vtanh.pop %v755
      %v978 = vtanh.pop %v760
      %v979 = vtanh.pop %v763
      %v980 = vtanh.pop %v768
      %v981 = vtanh.pop %v771
      %v982 = vtanh.pop %v776
      %v983 = vtanh.pop %v779
      %v984 = vtanh.pop %v784
      %v985 = vtanh.pop %v787
      %v986 = vtanh.pop %v792
      %v987 = vtanh.pop %v795
      %v988 = vtanh.pop %v800
      %v989 = vtanh.pop %v803
      %v990 = vtanh.pop %v808
      %v991 = vtanh.pop %v811
      %v992 = vtanh.pop %v816
      %v993 = vtanh.pop %v819
      %v994 = vtanh.pop %v824
      %v995 = vtanh.pop %v827
      %v996 = vtanh.pop %v832
      %v997 = vtanh.pop %v835
      %v998 = vtanh.pop %v840
      %v999 = vtanh.pop %v843
      %v1000 = vtanh.pop %v848
      %v1001 = vtanh.pop %v851
      %v1002 = vtanh.pop %v856
      %v1003 = vtanh.pop %v859
      %v1004 = vtanh.pop %v864
      %v1005 = vtanh.pop %v867
      %v1006 = vtanh.pop %v872
      %v1007 = vtanh.pop %v875
      %v1008 = vtanh.pop %v880
      %v1009 = vtanh.pop %v883
      %v1010 = vtanh.pop %v888
      %v1011 = vtanh.pop %v891
      %v1012 = vtanh.pop %v896
      %v1013 = vtanh.pop %v899
      %v1014 = vtanh.pop %v904
      %v1015 = vtanh.pop %v907
      %v1016 = vtanh.pop %v912
      %v1017 = vtanh.pop %v915
      %v1018 = vtanh.pop %v920
      %v1019 = vtanh.pop %v923
      %v1020 = vtanh.pop %v928
      %v1021 = vtanh.pop %v931
      %v1022 = vtanh.pop %v936
      %v1023 = vtanh.pop %v939
      %v1024 = vtanh.pop %v944
      %v1025 = vtanh.pop %v947
      %v1026 = vtanh.pop %v952
      %v1027 = vtanh.pop %v955
      %v1028 = vtanh.pop %v960
      %v1029 = vtanh.pop %v963
      %1030 = vst [vmem:[%s163] sm:$0xff] %v966
      %1031 = vst [vmem:[%s163 + $0x8] sm:$0xff] %v967
      %1032 = vst [vmem:[%s163 + $0x10] sm:$0xff] %v968
      %1033 = vst [vmem:[%s163 + $0x18] sm:$0xff] %v969
      %1034 = vst [vmem:[%s163 + $0x20] sm:$0xff] %v970
      %1035 = vst [vmem:[%s163 + $0x28] sm:$0xff] %v971
      %1036 = vst [vmem:[%s163 + $0x30] sm:$0xff] %v972
      %1037 = vst [vmem:[%s163 + $0x38] sm:$0xff] %v973
      %1038 = vst [vmem:[%s163 + $0x40] sm:$0xff] %v974
      %1039 = vst [vmem:[%s163 + $0x48] sm:$0xff] %v975
      %1040 = vst [vmem:[%s163 + $0x50] sm:$0xff] %v976
      %1041 = vst [vmem:[%s163 + $0x58] sm:$0xff] %v977
      %1042 = vst [vmem:[%s163 + $0x60] sm:$0xff] %v978
      %1043 = vst [vmem:[%s163 + $0x68] sm:$0xff] %v979
      %1044 = vst [vmem:[%s163 + $0x70] sm:$0xff] %v980
      %1045 = vst [vmem:[%s163 + $0x78] sm:$0xff] %v981
      %1046 = vst [vmem:[%s163 + $0x80] sm:$0xff] %v982
      %1047 = vst [vmem:[%s163 + $0x88] sm:$0xff] %v983
      %1048 = vst [vmem:[%s163 + $0x90] sm:$0xff] %v984
      %1049 = vst [vmem:[%s163 + $0x98] sm:$0xff] %v985
      %1050 = vst [vmem:[%s163 + $0xa0] sm:$0xff] %v986
      %1051 = vst [vmem:[%s163 + $0xa8] sm:$0xff] %v987
      %1052 = vst [vmem:[%s163 + $0xb0] sm:$0xff] %v988
      %1053 = vst [vmem:[%s163 + $0xb8] sm:$0xff] %v989
      %1054 = vst [vmem:[%s163 + $0xc0] sm:$0xff] %v990
      %1055 = vst [vmem:[%s163 + $0xc8] sm:$0xff] %v991
      %1056 = vst [vmem:[%s163 + $0xd0] sm:$0xff] %v992
      %1057 = vst [vmem:[%s163 + $0xd8] sm:$0xff] %v993
      %1058 = vst [vmem:[%s163 + $0xe0] sm:$0xff] %v994
      %1059 = vst [vmem:[%s163 + $0xe8] sm:$0xff] %v995
      %1060 = vst [vmem:[%s163 + $0xf0] sm:$0xff] %v996
      %1061 = vst [vmem:[%s163 + $0xf8] sm:$0xff] %v997
      %1062 = vst [vmem:[%s163 + $0x100] sm:$0xff] %v998
      %1063 = vst [vmem:[%s163 + $0x108] sm:$0xff] %v999
      %1064 = vst [vmem:[%s163 + $0x110] sm:$0xff] %v1000
      %1065 = vst [vmem:[%s163 + $0x118] sm:$0xff] %v1001
      %1066 = vst [vmem:[%s163 + $0x120] sm:$0xff] %v1002
      %1067 = vst [vmem:[%s163 + $0x128] sm:$0xff] %v1003
      %1068 = vst [vmem:[%s163 + $0x130] sm:$0xff] %v1004
      %1069 = vst [vmem:[%s163 + $0x138] sm:$0xff] %v1005
      %1070 = vst [vmem:[%s163 + $0x140] sm:$0xff] %v1006
      %1071 = vst [vmem:[%s163 + $0x148] sm:$0xff] %v1007
      %1072 = vst [vmem:[%s163 + $0x150] sm:$0xff] %v1008
      %1073 = vst [vmem:[%s163 + $0x158] sm:$0xff] %v1009
      %1074 = vst [vmem:[%s163 + $0x160] sm:$0xff] %v1010
      %1075 = vst [vmem:[%s163 + $0x168] sm:$0xff] %v1011
      %1076 = vst [vmem:[%s163 + $0x170] sm:$0xff] %v1012
      %1077 = vst [vmem:[%s163 + $0x178] sm:$0xff] %v1013
      %1078 = vst [vmem:[%s163 + $0x180] sm:$0xff] %v1014
      %1079 = vst [vmem:[%s163 + $0x188] sm:$0xff] %v1015
      %1080 = vst [vmem:[%s163 + $0x190] sm:$0xff] %v1016
      %1081 = vst [vmem:[%s163 + $0x198] sm:$0xff] %v1017
      %1082 = vst [vmem:[%s163 + $0x1a0] sm:$0xff] %v1018
      %1083 = vst [vmem:[%s163 + $0x1a8] sm:$0xff] %v1019
      %1084 = vst [vmem:[%s163 + $0x1b0] sm:$0xff] %v1020
      %1085 = vst [vmem:[%s163 + $0x1b8] sm:$0xff] %v1021
      %1086 = vst [vmem:[%s163 + $0x1c0] sm:$0xff] %v1022
      %1087 = vst [vmem:[%s163 + $0x1c8] sm:$0xff] %v1023
      %1088 = vst [vmem:[%s163 + $0x1d0] sm:$0xff] %v1024
      %1089 = vst [vmem:[%s163 + $0x1d8] sm:$0xff] %v1025
      %1090 = vst [vmem:[%s163 + $0x1e0] sm:$0xff] %v1026
      %1091 = vst [vmem:[%s163 + $0x1e8] sm:$0xff] %v1027
      %1092 = vst [vmem:[%s163 + $0x1f0] sm:$0xff] %v1028
      %1093 = vst [vmem:[%s163 + $0x1f8] sm:$0xff] %v1029
      %p1094 = scmp.lt.s32.totalorder %s13, 3
      %s1095 = scalar_select %p1094, %s13, 3
      %s1096 = smul.addr %s1095, 64
      %s1097 = smul.addr %s1096, 8
      %s1098 = scalar_lea.vmem %s2, %s1097
      // Predicated region
      $region29: #{generator_forward.7} parent=27 // pred_check
        %p1099 = pneg %p83
      $region30: #{generator_forward.7} parent=27 // pred_check_branch
        %1101 = sbr.rel (%p1099) target = $region32
      $region31: #{generator_forward.7} parent=27 // pred_region
        _
      $region32: #{generator_forward.7} parent=27 // pred_fallthru
        _
    $region28: #{generator_forward.7} parent=5 // pred_fallthru
      _
    %p1102 = scmp.le.s32.totalorder 2, %s8
    // Predicated region
    $region33: #{generator_forward.7} parent=5 // pred_check
      %p1103 = pneg %p1102
    $region34: #{generator_forward.7} parent=5 // pred_check_branch
      %1105 = sbr.rel (%p1103) target = $region36
    $region35: #{generator_forward.7} parent=5 // pred_region
      %s1106 = ssub.s32 %s8, 2
      // Predicated region
      $region37: #{generator_forward.7} parent=35 // pred_check
        %p1107 = pneg %p89
      $region38: #{generator_forward.7} parent=35 // pred_check_branch
        %1109 = sbr.rel (%p1107) target = $region40
      $region39: #{generator_forward.7} parent=35 // pred_region
        %p1110 = scmp.lt.s32.totalorder %s14, 3
        %s1111 = scalar_select %p1110, %s14, 3
        %s1112 = smul.addr %s1111, 64
        %s1113 = smul.addr %s1112, 8
        %s1114 = scalar_lea.vmem %s2, %s1113
      $region40: #{generator_forward.7} parent=35 // pred_fallthru
        _
    $region36: #{generator_forward.7} parent=5 // pred_fallthru
      _
  $region6: #{generator_forward.7} parent=0 // loop_footer
    %s12 = sadd.s32 1, %s8
  $region7: #{generator_forward.7} parent=0 // loop_footer_branch
    %7 = sbr.rel target = $region3
  $region8: #{generator_forward.7} parent=0 // loop_exit
    _

</llo_original>
